<compile_context>
chip_gen: v7x
topology: tpu7x:2x2x1
jax: 0.10.0
libtpu: 0.0.40
codegen_flags: <defaults>
</compile_context>

<pallas_src>
import functools
import math

import jax
import jax.numpy as jnp
from jax.experimental import pallas as pl
from jax.experimental.pallas import tpu as pltpu


# ----------------------------------------------------------------------------
# helpers
# ----------------------------------------------------------------------------

def _round_up(x, m):
    return ((x + m - 1) // m) * m


def _lane_tile(p, max_tile=2048):
    """Lane-tile size keeping blocks (8,128)-legal: full axis, or a 128-multiple divisor."""
    if p <= max_tile:
        return p
    t = (max_tile // 128) * 128
    while t >= 128:
        if p % t == 0:
            return t
        t -= 128
    return p


def make_coordinate_grid(h, w, dtype=jnp.float32):
    x = 2.0 * (jnp.arange(w, dtype=dtype) / (w - 1)) - 1.0
    y = 2.0 * (jnp.arange(h, dtype=dtype) / (h - 1)) - 1.0
    xx = jnp.tile(x[None, :], (h, 1))
    yy = jnp.tile(y[:, None], (1, w))
    return jnp.stack([xx, yy], axis=-1)            # (h, w, 2), last dim = (x, y)


# ----------------------------------------------------------------------------
# Pallas kernels
# ----------------------------------------------------------------------------

def _heatmap_kernel(kp_d_ref, kp_s_ref, grid_ref, sb_ref, o_ref,
                    *, inv_var, inv_norm, difference, num_sb):
    """Fused MovementEmbedding (gaussian heatmaps + bg channel) + SameBlock3d chain.

    kp_d_ref / kp_s_ref : (nkp, 2) keypoint means for one (b, d) slice.
    grid_ref            : (2, TP)   normalized coordinate grid (row 0 = x, row 1 = y).
    sb_ref              : (max(1, num_sb), 2, K1, 1) per-channel affine (BN folded).
    o_ref               : (K1, TP).
    """
    gx = grid_ref[0:1, :]
    gy = grid_ref[1:2, :]

    def gauss(kp):
        dx = gx - kp[:, 0:1]                       # (nkp, TP)
        dy = gy - kp[:, 1:2]
        return jnp.exp(-0.5 * (dx * dx + dy * dy) * inv_var) * inv_norm

    heat = gauss(kp_d_ref[...])
    if difference:
        heat = heat - gauss(kp_s_ref[...])
    h = jnp.concatenate([jnp.zeros_like(heat[:1]), heat], axis=0)      # (K1, TP), bg first
    # Fused SameBlock3d chain: grouped 1x1x1 conv + BN folded to per-channel affine + relu.
    # (The reference's F.leaky_relu after each block is the identity on relu output.)
    for i in range(num_sb):
        h = jnp.maximum(h * sb_ref[i, 0] + sb_ref[i, 1], 0.0)
    o_ref[...] = h.astype(o_ref.dtype)


def _conv3x3_kernel(x_ref, w_ref, b_ref, lr_ref, o_ref, *, H, W, relu):
    """Fused 3x3 same-padding conv for one (batch*depth) slice.

    x_ref : (Cin_p, (H+4)*W) f32 slab -- 2 zero rows above/below the H data rows
            (row 1 / row H+2 are the conv zero-padding, rows 0 / H+3 are shift slop).
    w_ref : (9, Cout_p, Cin_p) bf16, tap-major (dy*3+dx), eval-BN folded in.
    b_ref : (Cout_p, 1) f32, conv bias + BN shift folded.
    lr_ref: (2, H*W) f32 column masks that re-zero the lanes which wrapped across rows
            in the dx=0 / dx=2 shifted loads (implements zero padding along W exactly).
    o_ref : (Cout_p, H*W) f32.
    """
    HW = H * W
    cout_p = o_ref.shape[0]
    acc = jnp.zeros((cout_p, HW), jnp.float32)
    for dy in range(3):
        for dx in range(3):
            s = (dy + 1) * W + (dx - 1)            # static flat shift of this tap
            xt = x_ref[:, s:s + HW]                # (Cin_p, HW) shifted view of the slab
            if dx == 0:
                xt = xt * lr_ref[0:1, :]
            elif dx == 2:
                xt = xt * lr_ref[1:2, :]
            acc = acc + jnp.dot(w_ref[dy * 3 + dx], xt.astype(jnp.bfloat16),
                                preferred_element_type=jnp.float32)
    y = acc + b_ref[...]
    if relu:
        y = jnp.maximum(y, 0.0)
    o_ref[...] = y.astype(o_ref.dtype)


def _mask_deform_kernel(m_ref, dv_ref, o_ref):
    """softmax over the K1 keypoint channels, then weighted sum of the spatially-constant
    difference vectors:  out[c, p] = sum_k softmax(m)[k, p] * dv[k, c]."""
    m = m_ref[...]                                          # (K1, TP) logits
    m = m - jnp.max(m, axis=0, keepdims=True)
    e = jnp.exp(m)
    p = e * pl.reciprocal(jnp.sum(e, axis=0, keepdims=True), approx=True)
    dv = dv_ref[...]                                        # (K1, 2)
    ox = jnp.sum(p * dv[:, 0:1], axis=0, keepdims=True)     # (1, TP)
    oy = jnp.sum(p * dv[:, 1:2], axis=0, keepdims=True)
    o_ref[...] = jnp.concatenate([ox, oy], axis=0).astype(o_ref.dtype)


# ----------------------------------------------------------------------------
# Pallas wrappers
# ----------------------------------------------------------------------------

def mask_embedding(kp_source, kp_driving, h, w, cfg, same_blocks):
    """MovementEmbeddingModule(use_heatmaps=True, add_bg_feature_maps=True) fused with the
    SameBlock3d chain.  kp_*: (B, D, nkp, 2).  Returns (B*D, nkp+1, h, w)."""
    B, D, nkp, _ = kp_driving.shape
    N = B * D
    K1 = nkp + 1
    HW = h * w
    TP = _lane_tile(HW)
    nT = HW // TP

    grid = make_coordinate_grid(h, w)
    grid2 = jnp.stack([grid[..., 0].reshape(HW), grid[..., 1].reshape(HW)], axis=0)

    kd = kp_driving.reshape(N, nkp, 2).astype(jnp.float32)
    ks = kp_source.reshape(N, nkp, 2).astype(jnp.float32)

    num_sb = len(same_blocks)
    if num_sb:
        sb = jnp.stack(
            [jnp.stack([p["w"] * p["bn_scale"],
                        p["b"] * p["bn_scale"] + p["bn_shift"]], axis=0)
             for p in same_blocks], axis=0)                            # (S, 2, K1)
    else:
        sb = jnp.stack([jnp.stack([jnp.ones((K1,), jnp.float32),
                                   jnp.zeros((K1,), jnp.float32)], axis=0)], axis=0)
    sb = sb.reshape(max(1, num_sb), 2, K1, 1).astype(jnp.float32)

    out = pl.pallas_call(
        functools.partial(_heatmap_kernel,
                          inv_var=float(1.0 / cfg["kp_variance"]),
                          inv_norm=float(1.0 / cfg["norm_const"]),
                          difference=(cfg["heatmap_type"] == "difference"),
                          num_sb=num_sb),
        out_shape=jax.ShapeDtypeStruct((N, K1, HW), jnp.float32),
        grid_spec=pltpu.PrefetchScalarGridSpec(
            num_scalar_prefetch=0,
            grid=(N, nT),
            in_specs=[
                pl.BlockSpec((None, nkp, 2), lambda n, t: (n, 0, 0)),
                pl.BlockSpec((None, nkp, 2), lambda n, t: (n, 0, 0)),
                pl.BlockSpec((2, TP), lambda n, t: (0, t)),
                pl.BlockSpec((max(1, num_sb), 2, K1, 1), lambda n, t: (0, 0, 0, 0)),
            ],
            out_specs=pl.BlockSpec((None, K1, TP), lambda n, t: (n, 0, t)),
        ),
        compiler_params=pltpu.CompilerParams(
            dimension_semantics=("parallel", "parallel")),
    )(kd, ks, grid2, sb)
    return out.reshape(N, K1, h, w)
    # TODO(synk): use_deformed_source_image (F.grid_sample warp of the source image) is not
    # implemented; the chosen config disables it.


def conv3x3_bn(x, w, b, bn_scale, bn_shift, *, relu):
    """Conv3d with kernel (1,3,3) / padding (0,1,1) + eval-mode BN + optional ReLU, as one
    Pallas kernel per (batch*depth) slice.  x: (N, Cin, H, W) f32, w: (Cout, Cin, 3, 3)."""
    N, Cin, H, W = x.shape
    Cout = w.shape[0]
    HW = H * W
    Lin = (H + 4) * W
    Cin_p = _round_up(Cin, 8)
    Cout_p = _round_up(Cout, 8)

    # Fold eval-mode BatchNorm into weights / bias; pack taps dy-major; bf16 MXU operands.
    w_f = w.astype(jnp.float32) * bn_scale[:, None, None, None]
    b_f = b.astype(jnp.float32) * bn_scale + bn_shift
    wt = jnp.transpose(w_f, (2, 3, 0, 1)).reshape(9, Cout, Cin)
    wt = jnp.pad(wt, ((0, 0), (0, Cout_p - Cout), (0, Cin_p - Cin))).astype(jnp.bfloat16)
    bt = jnp.pad(b_f, (0, Cout_p - Cout)).reshape(Cout_p, 1)

    # Flat slab: channel pad to a sublane multiple, 2 zero rows above/below, lane-dense.
    xp = jnp.pad(x.astype(jnp.float32),
                 ((0, 0), (0, Cin_p - Cin), (2, 2), (0, 0))).reshape(N, Cin_p, Lin)

    # Masks zeroing lanes that wrapped across rows for the left/right taps.
    cols = jnp.arange(HW) % W
    lr = jnp.stack([(cols != 0), (cols != W - 1)], axis=0).astype(jnp.float32)

    out = pl.pallas_call(
        functools.partial(_conv3x3_kernel, H=H, W=W, relu=relu),
        out_shape=jax.ShapeDtypeStruct((N, Cout_p, HW), jnp.float32),
        grid_spec=pltpu.PrefetchScalarGridSpec(
            num_scalar_prefetch=0,
            grid=(N,),
            in_specs=[
                pl.BlockSpec((None, Cin_p, Lin), lambda n: (n, 0, 0)),
                pl.BlockSpec((9, Cout_p, Cin_p), lambda n: (0, 0, 0)),   # resident weights
                pl.BlockSpec((Cout_p, 1), lambda n: (0, 0)),
                pl.BlockSpec((2, HW), lambda n: (0, 0)),
            ],
            out_specs=pl.BlockSpec((None, Cout_p, HW), lambda n: (n, 0, 0)),
        ),
        compiler_params=pltpu.CompilerParams(
            dimension_semantics=("parallel",)),
    )(xp, wt, bt, lr)
    # Only the <=7 padded channel rows are dropped; the lane (spatial) axis is full width.
    return out[:, :Cout, :].reshape(N, Cout, H, W)
    # TODO(synk): at production resolutions (H*W >> 8K) add a spatial grid axis with halo'd
    # row blocks so the per-step slab / accumulator stays within v7x's 64 MiB VMEM.


def masked_deformation(mask_logits, diff_vec):
    """mask_logits: (N, K1, H, W); diff_vec: (N, K1, 2).  Returns (N, 2, H, W)."""
    N, K1, H, W = mask_logits.shape
    HW = H * W
    TP = _lane_tile(HW)
    nT = HW // TP
    m = mask_logits.reshape(N, K1, HW).astype(jnp.float32)
    dv = diff_vec.astype(jnp.float32)

    out = pl.pallas_call(
        _mask_deform_kernel,
        out_shape=jax.ShapeDtypeStruct((N, 2, HW), jnp.float32),
        grid_spec=pltpu.PrefetchScalarGridSpec(
            num_scalar_prefetch=0,
            grid=(N, nT),
            in_specs=[
                pl.BlockSpec((None, K1, TP), lambda n, t: (n, 0, t)),
                pl.BlockSpec((None, K1, 2), lambda n, t: (n, 0, 0)),
            ],
            out_specs=pl.BlockSpec((None, 2, TP), lambda n, t: (n, 0, t)),
        ),
        compiler_params=pltpu.CompilerParams(
            dimension_semantics=("parallel", "parallel")),
    )(m, dv)
    return out.reshape(N, 2, H, W)


# ----------------------------------------------------------------------------
# JAX glue: pooling / upsampling / hourglass (tiny reshapes stay in XLA)
# ----------------------------------------------------------------------------

def avg_pool_2x2(x):           # AvgPool3d((1,2,2)) on the (N, C, H, W) view
    N, C, H, W = x.shape
    return x.reshape(N, C, H // 2, 2, W // 2, 2).mean(axis=(3, 5))


def upsample_2x2(x):           # F.interpolate(scale_factor=(1,2,2)), nearest
    return jnp.repeat(jnp.repeat(x, 2, axis=2), 2, axis=3)


def hourglass_forward(hg, x):
    outs = [x]
    for p in hg["down_blocks"]:                   # DownBlock3d: conv + BN + relu + avgpool
        y = conv3x3_bn(outs[-1], p["w"], p["b"], p["bn_scale"], p["bn_shift"], relu=True)
        outs.append(avg_pool_2x2(y))
    out = outs.pop()
    for p in hg["up_blocks"]:                     # UpBlock3d: upsample + conv + BN + relu
        out = upsample_2x2(out)
        out = conv3x3_bn(out, p["w"], p["b"], p["bn_scale"], p["bn_shift"], relu=True)
        out = jnp.concatenate([out, outs.pop()], axis=1)     # skip connection
    lc = hg["last_conv"]
    return conv3x3_bn(out, lc["w"], lc["b"], lc["bn_scale"], lc["bn_shift"], relu=False)


# ----------------------------------------------------------------------------
# DenseMotionModule forward
# ----------------------------------------------------------------------------

def dense_motion_forward(params, source_img, kp_source, kp_driving, cfg):
    num_kp = cfg["num_kp"]
    B, _, D, H, W = source_img.shape
    N = B * D

    # MovementEmbeddingModule (heatmaps + bg channel) fused with the SameBlock3d chain.
    feats = mask_embedding(kp_source, kp_driving, H, W, cfg, params["same_blocks"])

    preds = hourglass_forward(params["hourglass"], feats)     # (N, K1*use_mask + 2*use_corr, H, W)

    if cfg["use_mask"]:
        mask_logits = preds[:, :num_kp + 1]
        # The difference embedding is spatially constant per (b, d, kp); only the
        # (N, K1, 2) vectors are passed to the fused softmax-sum kernel.
        # TODO(synk): sign convention (kp_source - kp_driving) follows the earlier port;
        # verify against the reference MovementEmbeddingModule (some variants flip it).
        diff = (kp_source - kp_driving).reshape(N, num_kp, 2).astype(jnp.float32)
        diff = jnp.concatenate([jnp.zeros((N, 1, 2), jnp.float32), diff], axis=1)
        deform = masked_deformation(mask_logits, diff)        # (N, 2, H, W)
        deformation_relative = jnp.transpose(deform.reshape(B, D, 2, H, W), (0, 2, 1, 3, 4))
    else:
        deformation_relative = 0.0

    if cfg["use_correction"]:
        corr = preds[:, -2:]
        correction = jnp.transpose(corr.reshape(B, D, 2, H, W), (0, 2, 1, 3, 4))
    else:
        correction = 0.0

    coordinate_grid = make_coordinate_grid(H, W)[None, None]  # (1, 1, H, W, 2)
    # TODO(synk): the reference forward is truncated after building coordinate_grid
    # (it returns None); we return the computed tensors instead.
    return deformation_relative, correction, coordinate_grid


# ----------------------------------------------------------------------------
# Deterministic parameter construction (synthetic; no checkpoint loading)
# ----------------------------------------------------------------------------

def build_params(key, *, num_kp, block_expansion, num_blocks, max_features,
                 num_group_blocks, use_mask, use_correction, bg_init):
    K1 = num_kp + 1
    eps = 1e-5
    bn_scale = lambda c: jnp.full((c,), 1.0 / math.sqrt(1.0 + eps), jnp.float32)  # eval-mode BN
    bn_shift = lambda c: jnp.zeros((c,), jnp.float32)
    keys = iter(jax.random.split(key, 64))

    params = {"same_blocks": []}
    for _ in range(num_group_blocks):
        params["same_blocks"].append(dict(
            w=0.5 + 0.1 * jax.random.normal(next(keys), (K1,), jnp.float32),
            b=0.1 * jax.random.normal(next(keys), (K1,), jnp.float32),
            bn_scale=bn_scale(K1), bn_shift=bn_shift(K1)))

    hg_in = K1                                   # mask_embedding.out_channels (heatmaps only)
    hg_out = K1 * int(use_mask) + 2 * int(use_correction)

    down = []
    for i in range(num_blocks):
        cin = hg_in if i == 0 else min(max_features, block_expansion * (2 ** i))
        cout = min(max_features, block_expansion * (2 ** (i + 1)))
        down.append(dict(w=0.1 * jax.random.normal(next(keys), (cout, cin, 3, 3), jnp.float32),
                         b=jnp.zeros((cout,), jnp.float32),
                         bn_scale=bn_scale(cout), bn_shift=bn_shift(cout)))
    up = []
    for i in reversed(range(num_blocks)):
        cin = (1 if i == num_blocks - 1 else 2) * min(max_features, block_expansion * (2 ** (i + 1)))
        cout = min(max_features, block_expansion * (2 ** i))
        up.append(dict(w=0.1 * jax.random.normal(next(keys), (cout, cin, 3, 3), jnp.float32),
                       b=jnp.zeros((cout,), jnp.float32),
                       bn_scale=bn_scale(cout), bn_shift=bn_shift(cout)))

    last_in = block_expansion + hg_in
    last_w = jnp.zeros((hg_out, last_in, 3, 3), jnp.float32)      # weight.data.zero_()
    last_b = jnp.array([float(bg_init)] + [0.0] * num_kp + [0.0, 0.0] * int(use_correction),
                       dtype=jnp.float32)                          # bias init from __init__
    params["hourglass"] = dict(
        down_blocks=down, up_blocks=up,
        last_conv=dict(w=last_w, b=last_b,
                       bn_scale=jnp.ones((hg_out,), jnp.float32),
                       bn_shift=jnp.zeros((hg_out,), jnp.float32)))
    return params


# ----------------------------------------------------------------------------
# Main
# ----------------------------------------------------------------------------

if __name__ == "__main__":
    # Constructor configuration for DenseMotionModule
    cfg = dict(
        in_features=3,          # image channels
        num_kp=4,               # out_features
        max_features=32,
        kp_variance=0.01,
        block_expansion=8,
        num_blocks=2,
        norm_const=100.0,       # scalar normalization (not "sum")
        num_group_blocks=1,
        use_mask=True,
        use_correction=True,
        use_heatmaps=True,
        use_deformed_source_image=False,   # grid_sample path disabled
        heatmap_type="gaussian",
        bg_init=2,
    )

    b, c, d, h, w = 2, cfg["in_features"], 1, 16, 16
    num_kp = cfg["num_kp"]

    key = jax.random.PRNGKey(0)
    k1, k2, k3 = jax.random.split(key, 3)
    source_img = jax.random.normal(k1, (b, c, d, h, w), jnp.float32)
    kp_source = jax.random.uniform(k2, (b, d, num_kp, 2), jnp.float32, minval=-0.8, maxval=0.8)
    kp_driving = jax.random.uniform(k3, (b, d, num_kp, 2), jnp.float32, minval=-0.8, maxval=0.8)

    params = build_params(
        jax.random.PRNGKey(42),
        num_kp=num_kp, block_expansion=cfg["block_expansion"], num_blocks=cfg["num_blocks"],
        max_features=cfg["max_features"], num_group_blocks=cfg["num_group_blocks"],
        use_mask=cfg["use_mask"], use_correction=cfg["use_correction"], bg_init=cfg["bg_init"])

    fwd = jax.jit(lambda p, s, ks, kd: dense_motion_forward(p, s, ks, kd, cfg))
    deformation_relative, correction, coordinate_grid = fwd(
        params, source_img, kp_source, kp_driving)

    jax.block_until_ready((deformation_relative, correction, coordinate_grid))
    assert deformation_relative.shape == (b, 2, d, h, w)
    assert correction.shape == (b, 2, d, h, w)
    assert coordinate_grid.shape == (1, 1, h, w, 2)
    print("KERNEL_OK")
</pallas_src>

<mosaic_0001>
module attributes {stable_mosaic.version = 11 : i64} {
  func.func @_heatmap_kernel(%arg0: i32, %arg1: i32, %arg2: memref<1x4x2xf32, #tpu.memory_space<vmem>>, %arg3: memref<1x4x2xf32, #tpu.memory_space<vmem>>, %arg4: memref<2x256xf32, #tpu.memory_space<vmem>>, %arg5: memref<1x2x5x1xf32, #tpu.memory_space<vmem>>, %arg6: memref<1x5x256xf32, #tpu.memory_space<vmem>>) attributes {dimension_semantics = [#tpu.dimension_semantics<parallel>, #tpu.dimension_semantics<parallel>], iteration_bounds = array<i64: 2, 1>, scalar_prefetch = 0 : i64, scratch_operands = 0 : i64, tpu.core_type = #tpu.core_type<tc>, window_params = [{transform_indices = @transform_0, window_bounds = array<i64: 1, 4, 2>}, {transform_indices = @transform_1, window_bounds = array<i64: 1, 4, 2>}, {transform_indices = @transform_2, window_bounds = array<i64: 2, 256>}, {pipeline_mode = #tpu.pipeline_mode<synchronous>, transform_indices = @transform_3, window_bounds = array<i64: 1, 2, 5, 1>}, {transform_indices = @transform_4, window_bounds = array<i64: 1, 5, 256>}]} {
    %c0 = arith.constant 0 : index
    %c0_0 = arith.constant 0 : index
    %0 = vector.load %arg4[%c0, %c0_0] : memref<2x256xf32, #tpu.memory_space<vmem>>, vector<1x256xf32>
    %c1 = arith.constant 1 : index
    %c0_1 = arith.constant 0 : index
    %1 = vector.load %arg4[%c1, %c0_1] : memref<2x256xf32, #tpu.memory_space<vmem>>, vector<1x256xf32>
    %c0_2 = arith.constant 0 : index
    %c0_3 = arith.constant 0 : index
    %c0_4 = arith.constant 0 : index
    %2 = vector.load %arg2[%c0_2, %c0_3, %c0_4] : memref<1x4x2xf32, #tpu.memory_space<vmem>>, vector<1x4x2xf32>
    %3 = vector.shape_cast %2 : vector<1x4x2xf32> to vector<4x2xf32>
    %4 = vector.extract_strided_slice %3 {offsets = [0, 0], sizes = [4, 1], strides = [1, 1]} : vector<4x2xf32> to vector<4x1xf32>
    %5 = vector.broadcast %0 : vector<1x256xf32> to vector<4x256xf32>
    %6 = vector.broadcast %4 : vector<4x1xf32> to vector<4x256xf32>
    %7 = arith.subf %5, %6 : vector<4x256xf32>
    %8 = vector.extract_strided_slice %3 {offsets = [0, 1], sizes = [4, 1], strides = [1, 1]} : vector<4x2xf32> to vector<4x1xf32>
    %9 = vector.broadcast %1 : vector<1x256xf32> to vector<4x256xf32>
    %10 = vector.broadcast %8 : vector<4x1xf32> to vector<4x256xf32>
    %11 = arith.subf %9, %10 : vector<4x256xf32>
    %12 = arith.mulf %7, %7 : vector<4x256xf32>
    %13 = arith.mulf %11, %11 : vector<4x256xf32>
    %14 = arith.addf %12, %13 : vector<4x256xf32>
    %cst = arith.constant -5.000000e-01 : f32
    %15 = vector.broadcast %cst : f32 to vector<4x256xf32>
    %16 = arith.mulf %15, %14 : vector<4x256xf32>
    %cst_5 = arith.constant 1.000000e+02 : f32
    %17 = vector.broadcast %cst_5 : f32 to vector<4x256xf32>
    %18 = arith.mulf %16, %17 : vector<4x256xf32>
    %19 = math.exp %18 : vector<4x256xf32>
    %cst_6 = arith.constant 0.00999999977 : f32
    %20 = vector.broadcast %cst_6 : f32 to vector<4x256xf32>
    %21 = arith.mulf %19, %20 : vector<4x256xf32>
    %cst_7 = arith.constant 0.000000e+00 : f32
    %22 = vector.broadcast %cst_7 : f32 to vector<1x256xf32>
    %23 = tpu.concatenate %22, %21 in 0 : vector<1x256xf32>, vector<4x256xf32> -> vector<5x256xf32>
    %c0_8 = arith.constant 0 : index
    %c0_9 = arith.constant 0 : index
    %c0_10 = arith.constant 0 : index
    %c0_11 = arith.constant 0 : index
    %24 = vector.load %arg5[%c0_8, %c0_9, %c0_10, %c0_11] : memref<1x2x5x1xf32, #tpu.memory_space<vmem>>, vector<1x1x5x1xf32>
    %25 = vector.shape_cast %24 : vector<1x1x5x1xf32> to vector<5x1xf32>
    %26 = vector.broadcast %25 : vector<5x1xf32> to vector<5x256xf32>
    %27 = arith.mulf %23, %26 : vector<5x256xf32>
    %c0_12 = arith.constant 0 : index
    %c1_13 = arith.constant 1 : index
    %c0_14 = arith.constant 0 : index
    %c0_15 = arith.constant 0 : index
    %28 = vector.load %arg5[%c0_12, %c1_13, %c0_14, %c0_15] : memref<1x2x5x1xf32, #tpu.memory_space<vmem>>, vector<1x1x5x1xf32>
    %29 = vector.shape_cast %28 : vector<1x1x5x1xf32> to vector<5x1xf32>
    %30 = vector.broadcast %29 : vector<5x1xf32> to vector<5x256xf32>
    %31 = arith.addf %27, %30 : vector<5x256xf32>
    %cst_16 = arith.constant 0.000000e+00 : f32
    %32 = vector.broadcast %cst_16 : f32 to vector<5x256xf32>
    %33 = arith.maximumf %31, %32 : vector<5x256xf32>
    %c0_17 = arith.constant 0 : index
    %c0_18 = arith.constant 0 : index
    %c0_19 = arith.constant 0 : index
    %34 = vector.load %arg6[%c0_17, %c0_18, %c0_19] : memref<1x5x256xf32, #tpu.memory_space<vmem>>, vector<1x5x256xf32>
    %35 = vector.shape_cast %34 : vector<1x5x256xf32> to vector<5x256xf32>
    %36 = vector.shape_cast %33 : vector<5x256xf32> to vector<1x5x256xf32>
    tpu.vector_store %arg6[%c0_17, %c0_18, %c0_19], %36 {strides = array<i32>} : memref<1x5x256xf32, #tpu.memory_space<vmem>>, vector<1x5x256xf32>,
    return
  }
  func.func @transform_0(%arg0: i32, %arg1: i32) -> (i32, i32, i32) {
    %c0_i32 = arith.constant 0 : i32
    %c0_i32_0 = arith.constant 0 : i32
    %c0_i32_1 = arith.constant 0 : i32
    return %arg0, %c0_i32, %c0_i32_0 : i32, i32, i32
  }
  func.func @transform_1(%arg0: i32, %arg1: i32) -> (i32, i32, i32) {
    %c0_i32 = arith.constant 0 : i32
    %c0_i32_0 = arith.constant 0 : i32
    %c0_i32_1 = arith.constant 0 : i32
    return %arg0, %c0_i32, %c0_i32_0 : i32, i32, i32
  }
  func.func @transform_2(%arg0: i32, %arg1: i32) -> (i32, i32) {
    %c0_i32 = arith.constant 0 : i32
    %c0_i32_0 = arith.constant 0 : i32
    return %c0_i32, %arg1 : i32, i32
  }
  func.func @transform_3(%arg0: i32, %arg1: i32) -> (i32, i32, i32, i32) {
    %c0_i32 = arith.constant 0 : i32
    %c0_i32_0 = arith.constant 0 : i32
    %c0_i32_1 = arith.constant 0 : i32
    %c0_i32_2 = arith.constant 0 : i32
    %c0_i32_3 = arith.constant 0 : i32
    return %c0_i32, %c0_i32_0, %c0_i32_1, %c0_i32_2 : i32, i32, i32, i32
  }
  func.func @transform_4(%arg0: i32, %arg1: i32) -> (i32, i32, i32) {
    %c0_i32 = arith.constant 0 : i32
    %c0_i32_0 = arith.constant 0 : i32
    return %arg0, %c0_i32, %arg1 : i32, i32, i32
  }
}

module attributes {stable_mosaic.version = 11 : i64} {
  func.func @_conv3x3_kernel(%arg0: i32, %arg1: memref<1x8x320xf32, #tpu.memory_space<vmem>>, %arg2: memref<9x16x8xbf16, #tpu.memory_space<vmem>>, %arg3: memref<16x1xf32, #tpu.memory_space<vmem>>, %arg4: memref<2x256xf32, #tpu.memory_space<vmem>>, %arg5: memref<1x16x256xf32, #tpu.memory_space<vmem>>) attributes {dimension_semantics = [#tpu.dimension_semantics<parallel>], iteration_bounds = array<i64: 2>, scalar_prefetch = 0 : i64, scratch_operands = 0 : i64, tpu.core_type = #tpu.core_type<tc>, window_params = [{transform_indices = @transform_0, window_bounds = array<i64: 1, 8, 320>}, {pipeline_mode = #tpu.pipeline_mode<synchronous>, transform_indices = @transform_1, window_bounds = array<i64: 9, 16, 8>}, {pipeline_mode = #tpu.pipeline_mode<synchronous>, transform_indices = @transform_2, window_bounds = array<i64: 16, 1>}, {pipeline_mode = #tpu.pipeline_mode<synchronous>, transform_indices = @transform_3, window_bounds = array<i64: 2, 256>}, {transform_indices = @transform_4, window_bounds = array<i64: 1, 16, 256>}]} {
    %cst = arith.constant 0.000000e+00 : f32
    %0 = vector.broadcast %cst : f32 to vector<16x256xf32>
    %c0 = arith.constant 0 : index
    %c0_0 = arith.constant 0 : index
    %c15 = arith.constant 15 : index
    %1 = vector.load %arg1[%c0, %c0_0, %c15] : memref<1x8x320xf32, #tpu.memory_space<vmem>>, vector<1x8x256xf32>
    %2 = vector.shape_cast %1 : vector<1x8x256xf32> to vector<8x256xf32>
    %c0_1 = arith.constant 0 : index
    %c0_2 = arith.constant 0 : index
    %3 = vector.load %arg4[%c0_1, %c0_2] : memref<2x256xf32, #tpu.memory_space<vmem>>, vector<1x256xf32>
    %4 = vector.broadcast %3 : vector<1x256xf32> to vector<8x256xf32>
    %5 = arith.mulf %2, %4 : vector<8x256xf32>
    %c0_3 = arith.constant 0 : index
    %c0_4 = arith.constant 0 : index
    %c0_5 = arith.constant 0 : index
    %6 = vector.load %arg2[%c0_3, %c0_4, %c0_5] : memref<9x16x8xbf16, #tpu.memory_space<vmem>>, vector<1x16x8xbf16>
    %7 = vector.shape_cast %6 : vector<1x16x8xbf16> to vector<16x8xbf16>
    %8 = arith.truncf %5 : vector<8x256xf32> to vector<8x256xbf16>
    %cst_6 = arith.constant dense<0.000000e+00> : vector<16x256xf32>
    %9 = tpu.matmul %7, %8, %cst_6 {dimension_numbers = #tpu.dot_dimension_numbers<[1], [0], [0], [1], [0, 0, 1, 1], [], []>} : vector<16x8xbf16>, vector<8x256xbf16>, vector<16x256xf32> -> vector<16x256xf32>
    %10 = arith.addf %0, %9 : vector<16x256xf32>
    %c0_7 = arith.constant 0 : index
    %c0_8 = arith.constant 0 : index
    %c16 = arith.constant 16 : index
    %11 = vector.load %arg1[%c0_7, %c0_8, %c16] : memref<1x8x320xf32, #tpu.memory_space<vmem>>, vector<1x8x256xf32>
    %12 = vector.shape_cast %11 : vector<1x8x256xf32> to vector<8x256xf32>
    %c1 = arith.constant 1 : index
    %c0_9 = arith.constant 0 : index
    %c0_10 = arith.constant 0 : index
    %13 = vector.load %arg2[%c1, %c0_9, %c0_10] : memref<9x16x8xbf16, #tpu.memory_space<vmem>>, vector<1x16x8xbf16>
    %14 = vector.shape_cast %13 : vector<1x16x8xbf16> to vector<16x8xbf16>
    %15 = arith.truncf %12 : vector<8x256xf32> to vector<8x256xbf16>
    %cst_11 = arith.constant dense<0.000000e+00> : vector<16x256xf32>
    %16 = tpu.matmul %14, %15, %cst_11 {dimension_numbers = #tpu.dot_dimension_numbers<[1], [0], [0], [1], [0, 0, 1, 1], [], []>} : vector<16x8xbf16>, vector<8x256xbf16>, vector<16x256xf32> -> vector<16x256xf32>
    %17 = arith.addf %10, %16 : vector<16x256xf32>
    %c0_12 = arith.constant 0 : index
    %c0_13 = arith.constant 0 : index
    %c17 = arith.constant 17 : index
    %18 = vector.load %arg1[%c0_12, %c0_13, %c17] : memref<1x8x320xf32, #tpu.memory_space<vmem>>, vector<1x8x256xf32>
    %19 = vector.shape_cast %18 : vector<1x8x256xf32> to vector<8x256xf32>
    %c1_14 = arith.constant 1 : index
    %c0_15 = arith.constant 0 : index
    %20 = vector.load %arg4[%c1_14, %c0_15] : memref<2x256xf32, #tpu.memory_space<vmem>>, vector<1x256xf32>
    %21 = vector.broadcast %20 : vector<1x256xf32> to vector<8x256xf32>
    %22 = arith.mulf %19, %21 : vector<8x256xf32>
    %c2 = arith.constant 2 : index
    %c0_16 = arith.constant 0 : index
    %c0_17 = arith.constant 0 : index
    %23 = vector.load %arg2[%c2, %c0_16, %c0_17] : memref<9x16x8xbf16, #tpu.memory_space<vmem>>, vector<1x16x8xbf16>
    %24 = vector.shape_cast %23 : vector<1x16x8xbf16> to vector<16x8xbf16>
    %25 = arith.truncf %22 : vector<8x256xf32> to vector<8x256xbf16>
    %cst_18 = arith.constant dense<0.000000e+00> : vector<16x256xf32>
    %26 = tpu.matmul %24, %25, %cst_18 {dimension_numbers = #tpu.dot_dimension_numbers<[1], [0], [0], [1], [0, 0, 1, 1], [], []>} : vector<16x8xbf16>, vector<8x256xbf16>, vector<16x256xf32> -> vector<16x256xf32>
    %27 = arith.addf %17, %26 : vector<16x256xf32>
    %c0_19 = arith.constant 0 : index
    %c0_20 = arith.constant 0 : index
    %c31 = arith.constant 31 : index
    %28 = vector.load %arg1[%c0_19, %c0_20, %c31] : memref<1x8x320xf32, #tpu.memory_space<vmem>>, vector<1x8x256xf32>
    %29 = vector.shape_cast %28 : vector<1x8x256xf32> to vector<8x256xf32>
    %c0_21 = arith.constant 0 : index
    %c0_22 = arith.constant 0 : index
    %30 = vector.load %arg4[%c0_21, %c0_22] : memref<2x256xf32, #tpu.memory_space<vmem>>, vector<1x256xf32>
    %31 = vector.broadcast %30 : vector<1x256xf32> to vector<8x256xf32>
    %32 = arith.mulf %29, %31 : vector<8x256xf32>
    %c3 = arith.constant 3 : index
    %c0_23 = arith.constant 0 : index
    %c0_24 = arith.constant 0 : index
    %33 = vector.load %arg2[%c3, %c0_23, %c0_24] : memref<9x16x8xbf16, #tpu.memory_space<vmem>>, vector<1x16x8xbf16>
    %34 = vector.shape_cast %33 : vector<1x16x8xbf16> to vector<16x8xbf16>
    %35 = arith.truncf %32 : vector<8x256xf32> to vector<8x256xbf16>
    %cst_25 = arith.constant dense<0.000000e+00> : vector<16x256xf32>
    %36 = tpu.matmul %34, %35, %cst_25 {dimension_numbers = #tpu.dot_dimension_numbers<[1], [0], [0], [1], [0, 0, 1, 1], [], []>} : vector<16x8xbf16>, vector<8x256xbf16>, vector<16x256xf32> -> vector<16x256xf32>
    %37 = arith.addf %27, %36 : vector<16x256xf32>
    %c0_26 = arith.constant 0 : index
    %c0_27 = arith.constant 0 : index
    %c32 = arith.constant 32 : index
    %38 = vector.load %arg1[%c0_26, %c0_27, %c32] : memref<1x8x320xf32, #tpu.memory_space<vmem>>, vector<1x8x256xf32>
    %39 = vector.shape_cast %38 : vector<1x8x256xf32> to vector<8x256xf32>
    %c4 = arith.constant 4 : index
    %c0_28 = arith.constant 0 : index
    %c0_29 = arith.constant 0 : index
    %40 = vector.load %arg2[%c4, %c0_28, %c0_29] : memref<9x16x8xbf16, #tpu.memory_space<vmem>>, vector<1x16x8xbf16>
    %41 = vector.shape_cast %40 : vector<1x16x8xbf16> to vector<16x8xbf16>
    %42 = arith.truncf %39 : vector<8x256xf32> to vector<8x256xbf16>
    %cst_30 = arith.constant dense<0.000000e+00> : vector<16x256xf32>
    %43 = tpu.matmul %41, %42, %cst_30 {dimension_numbers = #tpu.dot_dimension_numbers<[1], [0], [0], [1], [0, 0, 1, 1], [], []>} : vector<16x8xbf16>, vector<8x256xbf16>, vector<16x256xf32> -> vector<16x256xf32>
    %44 = arith.addf %37, %43 : vector<16x256xf32>
    %c0_31 = arith.constant 0 : index
    %c0_32 = arith.constant 0 : index
    %c33 = arith.constant 33 : index
    %45 = vector.load %arg1[%c0_31, %c0_32, %c33] : memref<1x8x320xf32, #tpu.memory_space<vmem>>, vector<1x8x256xf32>
    %46 = vector.shape_cast %45 : vector<1x8x256xf32> to vector<8x256xf32>
    %c1_33 = arith.constant 1 : index
    %c0_34 = arith.constant 0 : index
    %47 = vector.load %arg4[%c1_33, %c0_34] : memref<2x256xf32, #tpu.memory_space<vmem>>, vector<1x256xf32>
    %48 = vector.broadcast %47 : vector<1x256xf32> to vector<8x256xf32>
    %49 = arith.mulf %46, %48 : vector<8x256xf32>
    %c5 = arith.constant 5 : index
    %c0_35 = arith.constant 0 : index
    %c0_36 = arith.constant 0 : index
    %50 = vector.load %arg2[%c5, %c0_35, %c0_36] : memref<9x16x8xbf16, #tpu.memory_space<vmem>>, vector<1x16x8xbf16>
    %51 = vector.shape_cast %50 : vector<1x16x8xbf16> to vector<16x8xbf16>
    %52 = arith.truncf %49 : vector<8x256xf32> to vector<8x256xbf16>
    %cst_37 = arith.constant dense<0.000000e+00> : vector<16x256xf32>
    %53 = tpu.matmul %51, %52, %cst_37 {dimension_numbers = #tpu.dot_dimension_numbers<[1], [0], [0], [1], [0, 0, 1, 1], [], []>} : vector<16x8xbf16>, vector<8x256xbf16>, vector<16x256xf32> -> vector<16x256xf32>
    %54 = arith.addf %44, %53 : vector<16x256xf32>
    %c0_38 = arith.constant 0 : index
    %c0_39 = arith.constant 0 : index
    %c47 = arith.constant 47 : index
    %55 = vector.load %arg1[%c0_38, %c0_39, %c47] : memref<1x8x320xf32, #tpu.memory_space<vmem>>, vector<1x8x256xf32>
    %56 = vector.shape_cast %55 : vector<1x8x256xf32> to vector<8x256xf32>
    %c0_40 = arith.constant 0 : index
    %c0_41 = arith.constant 0 : index
    %57 = vector.load %arg4[%c0_40, %c0_41] : memref<2x256xf32, #tpu.memory_space<vmem>>, vector<1x256xf32>
    %58 = vector.broadcast %57 : vector<1x256xf32> to vector<8x256xf32>
    %59 = arith.mulf %56, %58 : vector<8x256xf32>
    %c6 = arith.constant 6 : index
    %c0_42 = arith.constant 0 : index
    %c0_43 = arith.constant 0 : index
    %60 = vector.load %arg2[%c6, %c0_42, %c0_43] : memref<9x16x8xbf16, #tpu.memory_space<vmem>>, vector<1x16x8xbf16>
    %61 = vector.shape_cast %60 : vector<1x16x8xbf16> to vector<16x8xbf16>
    %62 = arith.truncf %59 : vector<8x256xf32> to vector<8x256xbf16>
    %cst_44 = arith.constant dense<0.000000e+00> : vector<16x256xf32>
    %63 = tpu.matmul %61, %62, %cst_44 {dimension_numbers = #tpu.dot_dimension_numbers<[1], [0], [0], [1], [0, 0, 1, 1], [], []>} : vector<16x8xbf16>, vector<8x256xbf16>, vector<16x256xf32> -> vector<16x256xf32>
    %64 = arith.addf %54, %63 : vector<16x256xf32>
    %c0_45 = arith.constant 0 : index
    %c0_46 = arith.constant 0 : index
    %c48 = arith.constant 48 : index
    %65 = vector.load %arg1[%c0_45, %c0_46, %c48] : memref<1x8x320xf32, #tpu.memory_space<vmem>>, vector<1x8x256xf32>
    %66 = vector.shape_cast %65 : vector<1x8x256xf32> to vector<8x256xf32>
    %c7 = arith.constant 7 : index
    %c0_47 = arith.constant 0 : index
    %c0_48 = arith.constant 0 : index
    %67 = vector.load %arg2[%c7, %c0_47, %c0_48] : memref<9x16x8xbf16, #tpu.memory_space<vmem>>, vector<1x16x8xbf16>
    %68 = vector.shape_cast %67 : vector<1x16x8xbf16> to vector<16x8xbf16>
    %69 = arith.truncf %66 : vector<8x256xf32> to vector<8x256xbf16>
    %cst_49 = arith.constant dense<0.000000e+00> : vector<16x256xf32>
    %70 = tpu.matmul %68, %69, %cst_49 {dimension_numbers = #tpu.dot_dimension_numbers<[1], [0], [0], [1], [0, 0, 1, 1], [], []>} : vector<16x8xbf16>, vector<8x256xbf16>, vector<16x256xf32> -> vector<16x256xf32>
    %71 = arith.addf %64, %70 : vector<16x256xf32>
    %c0_50 = arith.constant 0 : index
    %c0_51 = arith.constant 0 : index
    %c49 = arith.constant 49 : index
    %72 = vector.load %arg1[%c0_50, %c0_51, %c49] : memref<1x8x320xf32, #tpu.memory_space<vmem>>, vector<1x8x256xf32>
    %73 = vector.shape_cast %72 : vector<1x8x256xf32> to vector<8x256xf32>
    %c1_52 = arith.constant 1 : index
    %c0_53 = arith.constant 0 : index
    %74 = vector.load %arg4[%c1_52, %c0_53] : memref<2x256xf32, #tpu.memory_space<vmem>>, vector<1x256xf32>
    %75 = vector.broadcast %74 : vector<1x256xf32> to vector<8x256xf32>
    %76 = arith.mulf %73, %75 : vector<8x256xf32>
    %c8 = arith.constant 8 : index
    %c0_54 = arith.constant 0 : index
    %c0_55 = arith.constant 0 : index
    %77 = vector.load %arg2[%c8, %c0_54, %c0_55] : memref<9x16x8xbf16, #tpu.memory_space<vmem>>, vector<1x16x8xbf16>
    %78 = vector.shape_cast %77 : vector<1x16x8xbf16> to vector<16x8xbf16>
    %79 = arith.truncf %76 : vector<8x256xf32> to vector<8x256xbf16>
    %cst_56 = arith.constant dense<0.000000e+00> : vector<16x256xf32>
    %80 = tpu.matmul %78, %79, %cst_56 {dimension_numbers = #tpu.dot_dimension_numbers<[1], [0], [0], [1], [0, 0, 1, 1], [], []>} : vector<16x8xbf16>, vector<8x256xbf16>, vector<16x256xf32> -> vector<16x256xf32>
    %81 = arith.addf %71, %80 : vector<16x256xf32>
    %c0_57 = arith.constant 0 : index
    %c0_58 = arith.constant 0 : index
    %82 = vector.load %arg3[%c0_57, %c0_58] : memref<16x1xf32, #tpu.memory_space<vmem>>, vector<16x1xf32>
    %83 = vector.broadcast %82 : vector<16x1xf32> to vector<16x256xf32>
    %84 = arith.addf %81, %83 : vector<16x256xf32>
    %cst_59 = arith.constant 0.000000e+00 : f32
    %85 = vector.broadcast %cst_59 : f32 to vector<16x256xf32>
    %86 = arith.maximumf %84, %85 : vector<16x256xf32>
    %c0_60 = arith.constant 0 : index
    %c0_61 = arith.constant 0 : index
    %c0_62 = arith.constant 0 : index
    %87 = vector.load %arg5[%c0_60, %c0_61, %c0_62] : memref<1x16x256xf32, #tpu.memory_space<vmem>>, vector<1x16x256xf32>
    %88 = vector.shape_cast %87 : vector<1x16x256xf32> to vector<16x256xf32>
    %89 = vector.shape_cast %86 : vector<16x256xf32> to vector<1x16x256xf32>
    tpu.vector_store %arg5[%c0_60, %c0_61, %c0_62], %89 {strides = array<i32>} : memref<1x16x256xf32, #tpu.memory_space<vmem>>, vector<1x16x256xf32>,
    return
  }
  func.func @transform_0(%arg0: i32) -> (i32, i32, i32) {
    %c0_i32 = arith.constant 0 : i32
    %c0_i32_0 = arith.constant 0 : i32
    %c0_i32_1 = arith.constant 0 : i32
    return %arg0, %c0_i32, %c0_i32_0 : i32, i32, i32
  }
  func.func @transform_1(%arg0: i32) -> (i32, i32, i32) {
    %c0_i32 = arith.constant 0 : i32
    %c0_i32_0 = arith.constant 0 : i32
    %c0_i32_1 = arith.constant 0 : i32
    %c0_i32_2 = arith.constant 0 : i32
    return %c0_i32, %c0_i32_0, %c0_i32_1 : i32, i32, i32
  }
  func.func @transform_2(%arg0: i32) -> (i32, i32) {
    %c0_i32 = arith.constant 0 : i32
    %c0_i32_0 = arith.constant 0 : i32
    %c0_i32_1 = arith.constant 0 : i32
    return %c0_i32, %c0_i32_0 : i32, i32
  }
  func.func @transform_3(%arg0: i32) -> (i32, i32) {
    %c0_i32 = arith.constant 0 : i32
    %c0_i32_0 = arith.constant 0 : i32
    %c0_i32_1 = arith.constant 0 : i32
    return %c0_i32, %c0_i32_0 : i32, i32
  }
  func.func @transform_4(%arg0: i32) -> (i32, i32, i32) {
    %c0_i32 = arith.constant 0 : i32
    %c0_i32_0 = arith.constant 0 : i32
    %c0_i32_1 = arith.constant 0 : i32
    return %arg0, %c0_i32, %c0_i32_0 : i32, i32, i32
  }
}

module attributes {stable_mosaic.version = 11 : i64} {
  func.func @_conv3x3_kernel(%arg0: i32, %arg1: memref<1x16x96xf32, #tpu.memory_space<vmem>>, %arg2: memref<9x32x16xbf16, #tpu.memory_space<vmem>>, %arg3: memref<32x1xf32, #tpu.memory_space<vmem>>, %arg4: memref<2x64xf32, #tpu.memory_space<vmem>>, %arg5: memref<1x32x64xf32, #tpu.memory_space<vmem>>) attributes {dimension_semantics = [#tpu.dimension_semantics<parallel>], iteration_bounds = array<i64: 2>, scalar_prefetch = 0 : i64, scratch_operands = 0 : i64, tpu.core_type = #tpu.core_type<tc>, window_params = [{transform_indices = @transform_0, window_bounds = array<i64: 1, 16, 96>}, {pipeline_mode = #tpu.pipeline_mode<synchronous>, transform_indices = @transform_1, window_bounds = array<i64: 9, 32, 16>}, {pipeline_mode = #tpu.pipeline_mode<synchronous>, transform_indices = @transform_2, window_bounds = array<i64: 32, 1>}, {pipeline_mode = #tpu.pipeline_mode<synchronous>, transform_indices = @transform_3, window_bounds = array<i64: 2, 64>}, {transform_indices = @transform_4, window_bounds = array<i64: 1, 32, 64>}]} {
    %cst = arith.constant 0.000000e+00 : f32
    %0 = vector.broadcast %cst : f32 to vector<32x64xf32>
    %c0 = arith.constant 0 : index
    %c0_0 = arith.constant 0 : index
    %c7 = arith.constant 7 : index
    %1 = vector.load %arg1[%c0, %c0_0, %c7] : memref<1x16x96xf32, #tpu.memory_space<vmem>>, vector<1x16x64xf32>
    %2 = vector.shape_cast %1 : vector<1x16x64xf32> to vector<16x64xf32>
    %c0_1 = arith.constant 0 : index
    %c0_2 = arith.constant 0 : index
    %3 = vector.load %arg4[%c0_1, %c0_2] : memref<2x64xf32, #tpu.memory_space<vmem>>, vector<1x64xf32>
    %4 = vector.broadcast %3 : vector<1x64xf32> to vector<16x64xf32>
    %5 = arith.mulf %2, %4 : vector<16x64xf32>
    %c0_3 = arith.constant 0 : index
    %c0_4 = arith.constant 0 : index
    %c0_5 = arith.constant 0 : index
    %6 = vector.load %arg2[%c0_3, %c0_4, %c0_5] : memref<9x32x16xbf16, #tpu.memory_space<vmem>>, vector<1x32x16xbf16>
    %7 = vector.shape_cast %6 : vector<1x32x16xbf16> to vector<32x16xbf16>
    %8 = arith.truncf %5 : vector<16x64xf32> to vector<16x64xbf16>
    %cst_6 = arith.constant dense<0.000000e+00> : vector<32x64xf32>
    %9 = tpu.matmul %7, %8, %cst_6 {dimension_numbers = #tpu.dot_dimension_numbers<[1], [0], [0], [1], [0, 0, 1, 1], [], []>} : vector<32x16xbf16>, vector<16x64xbf16>, vector<32x64xf32> -> vector<32x64xf32>
    %10 = arith.addf %0, %9 : vector<32x64xf32>
    %c0_7 = arith.constant 0 : index
    %c0_8 = arith.constant 0 : index
    %c8 = arith.constant 8 : index
    %11 = vector.load %arg1[%c0_7, %c0_8, %c8] : memref<1x16x96xf32, #tpu.memory_space<vmem>>, vector<1x16x64xf32>
    %12 = vector.shape_cast %11 : vector<1x16x64xf32> to vector<16x64xf32>
    %c1 = arith.constant 1 : index
    %c0_9 = arith.constant 0 : index
    %c0_10 = arith.constant 0 : index
    %13 = vector.load %arg2[%c1, %c0_9, %c0_10] : memref<9x32x16xbf16, #tpu.memory_space<vmem>>, vector<1x32x16xbf16>
    %14 = vector.shape_cast %13 : vector<1x32x16xbf16> to vector<32x16xbf16>
    %15 = arith.truncf %12 : vector<16x64xf32> to vector<16x64xbf16>
    %cst_11 = arith.constant dense<0.000000e+00> : vector<32x64xf32>
    %16 = tpu.matmul %14, %15, %cst_11 {dimension_numbers = #tpu.dot_dimension_numbers<[1], [0], [0], [1], [0, 0, 1, 1], [], []>} : vector<32x16xbf16>, vector<16x64xbf16>, vector<32x64xf32> -> vector<32x64xf32>
    %17 = arith.addf %10, %16 : vector<32x64xf32>
    %c0_12 = arith.constant 0 : index
    %c0_13 = arith.constant 0 : index
    %c9 = arith.constant 9 : index
    %18 = vector.load %arg1[%c0_12, %c0_13, %c9] : memref<1x16x96xf32, #tpu.memory_space<vmem>>, vector<1x16x64xf32>
    %19 = vector.shape_cast %18 : vector<1x16x64xf32> to vector<16x64xf32>
    %c1_14 = arith.constant 1 : index
    %c0_15 = arith.constant 0 : index
    %20 = vector.load %arg4[%c1_14, %c0_15] : memref<2x64xf32, #tpu.memory_space<vmem>>, vector<1x64xf32>
    %21 = vector.broadcast %20 : vector<1x64xf32> to vector<16x64xf32>
    %22 = arith.mulf %19, %21 : vector<16x64xf32>
    %c2 = arith.constant 2 : index
    %c0_16 = arith.constant 0 : index
    %c0_17 = arith.constant 0 : index
    %23 = vector.load %arg2[%c2, %c0_16, %c0_17] : memref<9x32x16xbf16, #tpu.memory_space<vmem>>, vector<1x32x16xbf16>
    %24 = vector.shape_cast %23 : vector<1x32x16xbf16> to vector<32x16xbf16>
    %25 = arith.truncf %22 : vector<16x64xf32> to vector<16x64xbf16>
    %cst_18 = arith.constant dense<0.000000e+00> : vector<32x64xf32>
    %26 = tpu.matmul %24, %25, %cst_18 {dimension_numbers = #tpu.dot_dimension_numbers<[1], [0], [0], [1], [0, 0, 1, 1], [], []>} : vector<32x16xbf16>, vector<16x64xbf16>, vector<32x64xf32> -> vector<32x64xf32>
    %27 = arith.addf %17, %26 : vector<32x64xf32>
    %c0_19 = arith.constant 0 : index
    %c0_20 = arith.constant 0 : index
    %c15 = arith.constant 15 : index
    %28 = vector.load %arg1[%c0_19, %c0_20, %c15] : memref<1x16x96xf32, #tpu.memory_space<vmem>>, vector<1x16x64xf32>
    %29 = vector.shape_cast %28 : vector<1x16x64xf32> to vector<16x64xf32>
    %c0_21 = arith.constant 0 : index
    %c0_22 = arith.constant 0 : index
    %30 = vector.load %arg4[%c0_21, %c0_22] : memref<2x64xf32, #tpu.memory_space<vmem>>, vector<1x64xf32>
    %31 = vector.broadcast %30 : vector<1x64xf32> to vector<16x64xf32>
    %32 = arith.mulf %29, %31 : vector<16x64xf32>
    %c3 = arith.constant 3 : index
    %c0_23 = arith.constant 0 : index
    %c0_24 = arith.constant 0 : index
    %33 = vector.load %arg2[%c3, %c0_23, %c0_24] : memref<9x32x16xbf16, #tpu.memory_space<vmem>>, vector<1x32x16xbf16>
    %34 = vector.shape_cast %33 : vector<1x32x16xbf16> to vector<32x16xbf16>
    %35 = arith.truncf %32 : vector<16x64xf32> to vector<16x64xbf16>
    %cst_25 = arith.constant dense<0.000000e+00> : vector<32x64xf32>
    %36 = tpu.matmul %34, %35, %cst_25 {dimension_numbers = #tpu.dot_dimension_numbers<[1], [0], [0], [1], [0, 0, 1, 1], [], []>} : vector<32x16xbf16>, vector<16x64xbf16>, vector<32x64xf32> -> vector<32x64xf32>
    %37 = arith.addf %27, %36 : vector<32x64xf32>
    %c0_26 = arith.constant 0 : index
    %c0_27 = arith.constant 0 : index
    %c16 = arith.constant 16 : index
    %38 = vector.load %arg1[%c0_26, %c0_27, %c16] : memref<1x16x96xf32, #tpu.memory_space<vmem>>, vector<1x16x64xf32>
    %39 = vector.shape_cast %38 : vector<1x16x64xf32> to vector<16x64xf32>
    %c4 = arith.constant 4 : index
    %c0_28 = arith.constant 0 : index
    %c0_29 = arith.constant 0 : index
    %40 = vector.load %arg2[%c4, %c0_28, %c0_29] : memref<9x32x16xbf16, #tpu.memory_space<vmem>>, vector<1x32x16xbf16>
    %41 = vector.shape_cast %40 : vector<1x32x16xbf16> to vector<32x16xbf16>
    %42 = arith.truncf %39 : vector<16x64xf32> to vector<16x64xbf16>
    %cst_30 = arith.constant dense<0.000000e+00> : vector<32x64xf32>
    %43 = tpu.matmul %41, %42, %cst_30 {dimension_numbers = #tpu.dot_dimension_numbers<[1], [0], [0], [1], [0, 0, 1, 1], [], []>} : vector<32x16xbf16>, vector<16x64xbf16>, vector<32x64xf32> -> vector<32x64xf32>
    %44 = arith.addf %37, %43 : vector<32x64xf32>
    %c0_31 = arith.constant 0 : index
    %c0_32 = arith.constant 0 : index
    %c17 = arith.constant 17 : index
    %45 = vector.load %arg1[%c0_31, %c0_32, %c17] : memref<1x16x96xf32, #tpu.memory_space<vmem>>, vector<1x16x64xf32>
    %46 = vector.shape_cast %45 : vector<1x16x64xf32> to vector<16x64xf32>
    %c1_33 = arith.constant 1 : index
    %c0_34 = arith.constant 0 : index
    %47 = vector.load %arg4[%c1_33, %c0_34] : memref<2x64xf32, #tpu.memory_space<vmem>>, vector<1x64xf32>
    %48 = vector.broadcast %47 : vector<1x64xf32> to vector<16x64xf32>
    %49 = arith.mulf %46, %48 : vector<16x64xf32>
    %c5 = arith.constant 5 : index
    %c0_35 = arith.constant 0 : index
    %c0_36 = arith.constant 0 : index
    %50 = vector.load %arg2[%c5, %c0_35, %c0_36] : memref<9x32x16xbf16, #tpu.memory_space<vmem>>, vector<1x32x16xbf16>
    %51 = vector.shape_cast %50 : vector<1x32x16xbf16> to vector<32x16xbf16>
    %52 = arith.truncf %49 : vector<16x64xf32> to vector<16x64xbf16>
    %cst_37 = arith.constant dense<0.000000e+00> : vector<32x64xf32>
    %53 = tpu.matmul %51, %52, %cst_37 {dimension_numbers = #tpu.dot_dimension_numbers<[1], [0], [0], [1], [0, 0, 1, 1], [], []>} : vector<32x16xbf16>, vector<16x64xbf16>, vector<32x64xf32> -> vector<32x64xf32>
    %54 = arith.addf %44, %53 : vector<32x64xf32>
    %c0_38 = arith.constant 0 : index
    %c0_39 = arith.constant 0 : index
    %c23 = arith.constant 23 : index
    %55 = vector.load %arg1[%c0_38, %c0_39, %c23] : memref<1x16x96xf32, #tpu.memory_space<vmem>>, vector<1x16x64xf32>
    %56 = vector.shape_cast %55 : vector<1x16x64xf32> to vector<16x64xf32>
    %c0_40 = arith.constant 0 : index
    %c0_41 = arith.constant 0 : index
    %57 = vector.load %arg4[%c0_40, %c0_41] : memref<2x64xf32, #tpu.memory_space<vmem>>, vector<1x64xf32>
    %58 = vector.broadcast %57 : vector<1x64xf32> to vector<16x64xf32>
    %59 = arith.mulf %56, %58 : vector<16x64xf32>
    %c6 = arith.constant 6 : index
    %c0_42 = arith.constant 0 : index
    %c0_43 = arith.constant 0 : index
    %60 = vector.load %arg2[%c6, %c0_42, %c0_43] : memref<9x32x16xbf16, #tpu.memory_space<vmem>>, vector<1x32x16xbf16>
    %61 = vector.shape_cast %60 : vector<1x32x16xbf16> to vector<32x16xbf16>
    %62 = arith.truncf %59 : vector<16x64xf32> to vector<16x64xbf16>
    %cst_44 = arith.constant dense<0.000000e+00> : vector<32x64xf32>
    %63 = tpu.matmul %61, %62, %cst_44 {dimension_numbers = #tpu.dot_dimension_numbers<[1], [0], [0], [1], [0, 0, 1, 1], [], []>} : vector<32x16xbf16>, vector<16x64xbf16>, vector<32x64xf32> -> vector<32x64xf32>
    %64 = arith.addf %54, %63 : vector<32x64xf32>
    %c0_45 = arith.constant 0 : index
    %c0_46 = arith.constant 0 : index
    %c24 = arith.constant 24 : index
    %65 = vector.load %arg1[%c0_45, %c0_46, %c24] : memref<1x16x96xf32, #tpu.memory_space<vmem>>, vector<1x16x64xf32>
    %66 = vector.shape_cast %65 : vector<1x16x64xf32> to vector<16x64xf32>
    %c7_47 = arith.constant 7 : index
    %c0_48 = arith.constant 0 : index
    %c0_49 = arith.constant 0 : index
    %67 = vector.load %arg2[%c7_47, %c0_48, %c0_49] : memref<9x32x16xbf16, #tpu.memory_space<vmem>>, vector<1x32x16xbf16>
    %68 = vector.shape_cast %67 : vector<1x32x16xbf16> to vector<32x16xbf16>
    %69 = arith.truncf %66 : vector<16x64xf32> to vector<16x64xbf16>
    %cst_50 = arith.constant dense<0.000000e+00> : vector<32x64xf32>
    %70 = tpu.matmul %68, %69, %cst_50 {dimension_numbers = #tpu.dot_dimension_numbers<[1], [0], [0], [1], [0, 0, 1, 1], [], []>} : vector<32x16xbf16>, vector<16x64xbf16>, vector<32x64xf32> -> vector<32x64xf32>
    %71 = arith.addf %64, %70 : vector<32x64xf32>
    %c0_51 = arith.constant 0 : index
    %c0_52 = arith.constant 0 : index
    %c25 = arith.constant 25 : index
    %72 = vector.load %arg1[%c0_51, %c0_52, %c25] : memref<1x16x96xf32, #tpu.memory_space<vmem>>, vector<1x16x64xf32>
    %73 = vector.shape_cast %72 : vector<1x16x64xf32> to vector<16x64xf32>
    %c1_53 = arith.constant 1 : index
    %c0_54 = arith.constant 0 : index
    %74 = vector.load %arg4[%c1_53, %c0_54] : memref<2x64xf32, #tpu.memory_space<vmem>>, vector<1x64xf32>
    %75 = vector.broadcast %74 : vector<1x64xf32> to vector<16x64xf32>
    %76 = arith.mulf %73, %75 : vector<16x64xf32>
    %c8_55 = arith.constant 8 : index
    %c0_56 = arith.constant 0 : index
    %c0_57 = arith.constant 0 : index
    %77 = vector.load %arg2[%c8_55, %c0_56, %c0_57] : memref<9x32x16xbf16, #tpu.memory_space<vmem>>, vector<1x32x16xbf16>
    %78 = vector.shape_cast %77 : vector<1x32x16xbf16> to vector<32x16xbf16>
    %79 = arith.truncf %76 : vector<16x64xf32> to vector<16x64xbf16>
    %cst_58 = arith.constant dense<0.000000e+00> : vector<32x64xf32>
    %80 = tpu.matmul %78, %79, %cst_58 {dimension_numbers = #tpu.dot_dimension_numbers<[1], [0], [0], [1], [0, 0, 1, 1], [], []>} : vector<32x16xbf16>, vector<16x64xbf16>, vector<32x64xf32> -> vector<32x64xf32>
    %81 = arith.addf %71, %80 : vector<32x64xf32>
    %c0_59 = arith.constant 0 : index
    %c0_60 = arith.constant 0 : index
    %82 = vector.load %arg3[%c0_59, %c0_60] : memref<32x1xf32, #tpu.memory_space<vmem>>, vector<32x1xf32>
    %83 = vector.broadcast %82 : vector<32x1xf32> to vector<32x64xf32>
    %84 = arith.addf %81, %83 : vector<32x64xf32>
    %cst_61 = arith.constant 0.000000e+00 : f32
    %85 = vector.broadcast %cst_61 : f32 to vector<32x64xf32>
    %86 = arith.maximumf %84, %85 : vector<32x64xf32>
    %c0_62 = arith.constant 0 : index
    %c0_63 = arith.constant 0 : index
    %c0_64 = arith.constant 0 : index
    %87 = vector.load %arg5[%c0_62, %c0_63, %c0_64] : memref<1x32x64xf32, #tpu.memory_space<vmem>>, vector<1x32x64xf32>
    %88 = vector.shape_cast %87 : vector<1x32x64xf32> to vector<32x64xf32>
    %89 = vector.shape_cast %86 : vector<32x64xf32> to vector<1x32x64xf32>
    tpu.vector_store %arg5[%c0_62, %c0_63, %c0_64], %89 {strides = array<i32>} : memref<1x32x64xf32, #tpu.memory_space<vmem>>, vector<1x32x64xf32>,
    return
  }
  func.func @transform_0(%arg0: i32) -> (i32, i32, i32) {
    %c0_i32 = arith.constant 0 : i32
    %c0_i32_0 = arith.constant 0 : i32
    %c0_i32_1 = arith.constant 0 : i32
    return %arg0, %c0_i32, %c0_i32_0 : i32, i32, i32
  }
  func.func @transform_1(%arg0: i32) -> (i32, i32, i32) {
    %c0_i32 = arith.constant 0 : i32
    %c0_i32_0 = arith.constant 0 : i32
    %c0_i32_1 = arith.constant 0 : i32
    %c0_i32_2 = arith.constant 0 : i32
    return %c0_i32, %c0_i32_0, %c0_i32_1 : i32, i32, i32
  }
  func.func @transform_2(%arg0: i32) -> (i32, i32) {
    %c0_i32 = arith.constant 0 : i32
    %c0_i32_0 = arith.constant 0 : i32
    %c0_i32_1 = arith.constant 0 : i32
    return %c0_i32, %c0_i32_0 : i32, i32
  }
  func.func @transform_3(%arg0: i32) -> (i32, i32) {
    %c0_i32 = arith.constant 0 : i32
    %c0_i32_0 = arith.constant 0 : i32
    %c0_i32_1 = arith.constant 0 : i32
    return %c0_i32, %c0_i32_0 : i32, i32
  }
  func.func @transform_4(%arg0: i32) -> (i32, i32, i32) {
    %c0_i32 = arith.constant 0 : i32
    %c0_i32_0 = arith.constant 0 : i32
    %c0_i32_1 = arith.constant 0 : i32
    return %arg0, %c0_i32, %c0_i32_0 : i32, i32, i32
  }
}

module attributes {stable_mosaic.version = 11 : i64} {
  func.func @_conv3x3_kernel(%arg0: i32, %arg1: memref<1x32x96xf32, #tpu.memory_space<vmem>>, %arg2: memref<9x16x32xbf16, #tpu.memory_space<vmem>>, %arg3: memref<16x1xf32, #tpu.memory_space<vmem>>, %arg4: memref<2x64xf32, #tpu.memory_space<vmem>>, %arg5: memref<1x16x64xf32, #tpu.memory_space<vmem>>) attributes {dimension_semantics = [#tpu.dimension_semantics<parallel>], iteration_bounds = array<i64: 2>, scalar_prefetch = 0 : i64, scratch_operands = 0 : i64, tpu.core_type = #tpu.core_type<tc>, window_params = [{transform_indices = @transform_0, window_bounds = array<i64: 1, 32, 96>}, {pipeline_mode = #tpu.pipeline_mode<synchronous>, transform_indices = @transform_1, window_bounds = array<i64: 9, 16, 32>}, {pipeline_mode = #tpu.pipeline_mode<synchronous>, transform_indices = @transform_2, window_bounds = array<i64: 16, 1>}, {pipeline_mode = #tpu.pipeline_mode<synchronous>, transform_indices = @transform_3, window_bounds = array<i64: 2, 64>}, {transform_indices = @transform_4, window_bounds = array<i64: 1, 16, 64>}]} {
    %cst = arith.constant 0.000000e+00 : f32
    %0 = vector.broadcast %cst : f32 to vector<16x64xf32>
    %c0 = arith.constant 0 : index
    %c0_0 = arith.constant 0 : index
    %c7 = arith.constant 7 : index
    %1 = vector.load %arg1[%c0, %c0_0, %c7] : memref<1x32x96xf32, #tpu.memory_space<vmem>>, vector<1x32x64xf32>
    %2 = vector.shape_cast %1 : vector<1x32x64xf32> to vector<32x64xf32>
    %c0_1 = arith.constant 0 : index
    %c0_2 = arith.constant 0 : index
    %3 = vector.load %arg4[%c0_1, %c0_2] : memref<2x64xf32, #tpu.memory_space<vmem>>, vector<1x64xf32>
    %4 = vector.broadcast %3 : vector<1x64xf32> to vector<32x64xf32>
    %5 = arith.mulf %2, %4 : vector<32x64xf32>
    %c0_3 = arith.constant 0 : index
    %c0_4 = arith.constant 0 : index
    %c0_5 = arith.constant 0 : index
    %6 = vector.load %arg2[%c0_3, %c0_4, %c0_5] : memref<9x16x32xbf16, #tpu.memory_space<vmem>>, vector<1x16x32xbf16>
    %7 = vector.shape_cast %6 : vector<1x16x32xbf16> to vector<16x32xbf16>
    %8 = arith.truncf %5 : vector<32x64xf32> to vector<32x64xbf16>
    %cst_6 = arith.constant dense<0.000000e+00> : vector<16x64xf32>
    %9 = tpu.matmul %7, %8, %cst_6 {dimension_numbers = #tpu.dot_dimension_numbers<[1], [0], [0], [1], [0, 0, 1, 1], [], []>} : vector<16x32xbf16>, vector<32x64xbf16>, vector<16x64xf32> -> vector<16x64xf32>
    %10 = arith.addf %0, %9 : vector<16x64xf32>
    %c0_7 = arith.constant 0 : index
    %c0_8 = arith.constant 0 : index
    %c8 = arith.constant 8 : index
    %11 = vector.load %arg1[%c0_7, %c0_8, %c8] : memref<1x32x96xf32, #tpu.memory_space<vmem>>, vector<1x32x64xf32>
    %12 = vector.shape_cast %11 : vector<1x32x64xf32> to vector<32x64xf32>
    %c1 = arith.constant 1 : index
    %c0_9 = arith.constant 0 : index
    %c0_10 = arith.constant 0 : index
    %13 = vector.load %arg2[%c1, %c0_9, %c0_10] : memref<9x16x32xbf16, #tpu.memory_space<vmem>>, vector<1x16x32xbf16>
    %14 = vector.shape_cast %13 : vector<1x16x32xbf16> to vector<16x32xbf16>
    %15 = arith.truncf %12 : vector<32x64xf32> to vector<32x64xbf16>
    %cst_11 = arith.constant dense<0.000000e+00> : vector<16x64xf32>
    %16 = tpu.matmul %14, %15, %cst_11 {dimension_numbers = #tpu.dot_dimension_numbers<[1], [0], [0], [1], [0, 0, 1, 1], [], []>} : vector<16x32xbf16>, vector<32x64xbf16>, vector<16x64xf32> -> vector<16x64xf32>
    %17 = arith.addf %10, %16 : vector<16x64xf32>
    %c0_12 = arith.constant 0 : index
    %c0_13 = arith.constant 0 : index
    %c9 = arith.constant 9 : index
    %18 = vector.load %arg1[%c0_12, %c0_13, %c9] : memref<1x32x96xf32, #tpu.memory_space<vmem>>, vector<1x32x64xf32>
    %19 = vector.shape_cast %18 : vector<1x32x64xf32> to vector<32x64xf32>
    %c1_14 = arith.constant 1 : index
    %c0_15 = arith.constant 0 : index
    %20 = vector.load %arg4[%c1_14, %c0_15] : memref<2x64xf32, #tpu.memory_space<vmem>>, vector<1x64xf32>
    %21 = vector.broadcast %20 : vector<1x64xf32> to vector<32x64xf32>
    %22 = arith.mulf %19, %21 : vector<32x64xf32>
    %c2 = arith.constant 2 : index
    %c0_16 = arith.constant 0 : index
    %c0_17 = arith.constant 0 : index
    %23 = vector.load %arg2[%c2, %c0_16, %c0_17] : memref<9x16x32xbf16, #tpu.memory_space<vmem>>, vector<1x16x32xbf16>
    %24 = vector.shape_cast %23 : vector<1x16x32xbf16> to vector<16x32xbf16>
    %25 = arith.truncf %22 : vector<32x64xf32> to vector<32x64xbf16>
    %cst_18 = arith.constant dense<0.000000e+00> : vector<16x64xf32>
    %26 = tpu.matmul %24, %25, %cst_18 {dimension_numbers = #tpu.dot_dimension_numbers<[1], [0], [0], [1], [0, 0, 1, 1], [], []>} : vector<16x32xbf16>, vector<32x64xbf16>, vector<16x64xf32> -> vector<16x64xf32>
    %27 = arith.addf %17, %26 : vector<16x64xf32>
    %c0_19 = arith.constant 0 : index
    %c0_20 = arith.constant 0 : index
    %c15 = arith.constant 15 : index
    %28 = vector.load %arg1[%c0_19, %c0_20, %c15] : memref<1x32x96xf32, #tpu.memory_space<vmem>>, vector<1x32x64xf32>
    %29 = vector.shape_cast %28 : vector<1x32x64xf32> to vector<32x64xf32>
    %c0_21 = arith.constant 0 : index
    %c0_22 = arith.constant 0 : index
    %30 = vector.load %arg4[%c0_21, %c0_22] : memref<2x64xf32, #tpu.memory_space<vmem>>, vector<1x64xf32>
    %31 = vector.broadcast %30 : vector<1x64xf32> to vector<32x64xf32>
    %32 = arith.mulf %29, %31 : vector<32x64xf32>
    %c3 = arith.constant 3 : index
    %c0_23 = arith.constant 0 : index
    %c0_24 = arith.constant 0 : index
    %33 = vector.load %arg2[%c3, %c0_23, %c0_24] : memref<9x16x32xbf16, #tpu.memory_space<vmem>>, vector<1x16x32xbf16>
    %34 = vector.shape_cast %33 : vector<1x16x32xbf16> to vector<16x32xbf16>
    %35 = arith.truncf %32 : vector<32x64xf32> to vector<32x64xbf16>
    %cst_25 = arith.constant dense<0.000000e+00> : vector<16x64xf32>
    %36 = tpu.matmul %34, %35, %cst_25 {dimension_numbers = #tpu.dot_dimension_numbers<[1], [0], [0], [1], [0, 0, 1, 1], [], []>} : vector<16x32xbf16>, vector<32x64xbf16>, vector<16x64xf32> -> vector<16x64xf32>
    %37 = arith.addf %27, %36 : vector<16x64xf32>
    %c0_26 = arith.constant 0 : index
    %c0_27 = arith.constant 0 : index
    %c16 = arith.constant 16 : index
    %38 = vector.load %arg1[%c0_26, %c0_27, %c16] : memref<1x32x96xf32, #tpu.memory_space<vmem>>, vector<1x32x64xf32>
    %39 = vector.shape_cast %38 : vector<1x32x64xf32> to vector<32x64xf32>
    %c4 = arith.constant 4 : index
    %c0_28 = arith.constant 0 : index
    %c0_29 = arith.constant 0 : index
    %40 = vector.load %arg2[%c4, %c0_28, %c0_29] : memref<9x16x32xbf16, #tpu.memory_space<vmem>>, vector<1x16x32xbf16>
    %41 = vector.shape_cast %40 : vector<1x16x32xbf16> to vector<16x32xbf16>
    %42 = arith.truncf %39 : vector<32x64xf32> to vector<32x64xbf16>
    %cst_30 = arith.constant dense<0.000000e+00> : vector<16x64xf32>
    %43 = tpu.matmul %41, %42, %cst_30 {dimension_numbers = #tpu.dot_dimension_numbers<[1], [0], [0], [1], [0, 0, 1, 1], [], []>} : vector<16x32xbf16>, vector<32x64xbf16>, vector<16x64xf32> -> vector<16x64xf32>
    %44 = arith.addf %37, %43 : vector<16x64xf32>
    %c0_31 = arith.constant 0 : index
    %c0_32 = arith.constant 0 : index
    %c17 = arith.constant 17 : index
    %45 = vector.load %arg1[%c0_31, %c0_32, %c17] : memref<1x32x96xf32, #tpu.memory_space<vmem>>, vector<1x32x64xf32>
    %46 = vector.shape_cast %45 : vector<1x32x64xf32> to vector<32x64xf32>
    %c1_33 = arith.constant 1 : index
    %c0_34 = arith.constant 0 : index
    %47 = vector.load %arg4[%c1_33, %c0_34] : memref<2x64xf32, #tpu.memory_space<vmem>>, vector<1x64xf32>
    %48 = vector.broadcast %47 : vector<1x64xf32> to vector<32x64xf32>
    %49 = arith.mulf %46, %48 : vector<32x64xf32>
    %c5 = arith.constant 5 : index
    %c0_35 = arith.constant 0 : index
    %c0_36 = arith.constant 0 : index
    %50 = vector.load %arg2[%c5, %c0_35, %c0_36] : memref<9x16x32xbf16, #tpu.memory_space<vmem>>, vector<1x16x32xbf16>
    %51 = vector.shape_cast %50 : vector<1x16x32xbf16> to vector<16x32xbf16>
    %52 = arith.truncf %49 : vector<32x64xf32> to vector<32x64xbf16>
    %cst_37 = arith.constant dense<0.000000e+00> : vector<16x64xf32>
    %53 = tpu.matmul %51, %52, %cst_37 {dimension_numbers = #tpu.dot_dimension_numbers<[1], [0], [0], [1], [0, 0, 1, 1], [], []>} : vector<16x32xbf16>, vector<32x64xbf16>, vector<16x64xf32> -> vector<16x64xf32>
    %54 = arith.addf %44, %53 : vector<16x64xf32>
    %c0_38 = arith.constant 0 : index
    %c0_39 = arith.constant 0 : index
    %c23 = arith.constant 23 : index
    %55 = vector.load %arg1[%c0_38, %c0_39, %c23] : memref<1x32x96xf32, #tpu.memory_space<vmem>>, vector<1x32x64xf32>
    %56 = vector.shape_cast %55 : vector<1x32x64xf32> to vector<32x64xf32>
    %c0_40 = arith.constant 0 : index
    %c0_41 = arith.constant 0 : index
    %57 = vector.load %arg4[%c0_40, %c0_41] : memref<2x64xf32, #tpu.memory_space<vmem>>, vector<1x64xf32>
    %58 = vector.broadcast %57 : vector<1x64xf32> to vector<32x64xf32>
    %59 = arith.mulf %56, %58 : vector<32x64xf32>
    %c6 = arith.constant 6 : index
    %c0_42 = arith.constant 0 : index
    %c0_43 = arith.constant 0 : index
    %60 = vector.load %arg2[%c6, %c0_42, %c0_43] : memref<9x16x32xbf16, #tpu.memory_space<vmem>>, vector<1x16x32xbf16>
    %61 = vector.shape_cast %60 : vector<1x16x32xbf16> to vector<16x32xbf16>
    %62 = arith.truncf %59 : vector<32x64xf32> to vector<32x64xbf16>
    %cst_44 = arith.constant dense<0.000000e+00> : vector<16x64xf32>
    %63 = tpu.matmul %61, %62, %cst_44 {dimension_numbers = #tpu.dot_dimension_numbers<[1], [0], [0], [1], [0, 0, 1, 1], [], []>} : vector<16x32xbf16>, vector<32x64xbf16>, vector<16x64xf32> -> vector<16x64xf32>
    %64 = arith.addf %54, %63 : vector<16x64xf32>
    %c0_45 = arith.constant 0 : index
    %c0_46 = arith.constant 0 : index
    %c24 = arith.constant 24 : index
    %65 = vector.load %arg1[%c0_45, %c0_46, %c24] : memref<1x32x96xf32, #tpu.memory_space<vmem>>, vector<1x32x64xf32>
    %66 = vector.shape_cast %65 : vector<1x32x64xf32> to vector<32x64xf32>
    %c7_47 = arith.constant 7 : index
    %c0_48 = arith.constant 0 : index
    %c0_49 = arith.constant 0 : index
    %67 = vector.load %arg2[%c7_47, %c0_48, %c0_49] : memref<9x16x32xbf16, #tpu.memory_space<vmem>>, vector<1x16x32xbf16>
    %68 = vector.shape_cast %67 : vector<1x16x32xbf16> to vector<16x32xbf16>
    %69 = arith.truncf %66 : vector<32x64xf32> to vector<32x64xbf16>
    %cst_50 = arith.constant dense<0.000000e+00> : vector<16x64xf32>
    %70 = tpu.matmul %68, %69, %cst_50 {dimension_numbers = #tpu.dot_dimension_numbers<[1], [0], [0], [1], [0, 0, 1, 1], [], []>} : vector<16x32xbf16>, vector<32x64xbf16>, vector<16x64xf32> -> vector<16x64xf32>
    %71 = arith.addf %64, %70 : vector<16x64xf32>
    %c0_51 = arith.constant 0 : index
    %c0_52 = arith.constant 0 : index
    %c25 = arith.constant 25 : index
    %72 = vector.load %arg1[%c0_51, %c0_52, %c25] : memref<1x32x96xf32, #tpu.memory_space<vmem>>, vector<1x32x64xf32>
    %73 = vector.shape_cast %72 : vector<1x32x64xf32> to vector<32x64xf32>
    %c1_53 = arith.constant 1 : index
    %c0_54 = arith.constant 0 : index
    %74 = vector.load %arg4[%c1_53, %c0_54] : memref<2x64xf32, #tpu.memory_space<vmem>>, vector<1x64xf32>
    %75 = vector.broadcast %74 : vector<1x64xf32> to vector<32x64xf32>
    %76 = arith.mulf %73, %75 : vector<32x64xf32>
    %c8_55 = arith.constant 8 : index
    %c0_56 = arith.constant 0 : index
    %c0_57 = arith.constant 0 : index
    %77 = vector.load %arg2[%c8_55, %c0_56, %c0_57] : memref<9x16x32xbf16, #tpu.memory_space<vmem>>, vector<1x16x32xbf16>
    %78 = vector.shape_cast %77 : vector<1x16x32xbf16> to vector<16x32xbf16>
    %79 = arith.truncf %76 : vector<32x64xf32> to vector<32x64xbf16>
    %cst_58 = arith.constant dense<0.000000e+00> : vector<16x64xf32>
    %80 = tpu.matmul %78, %79, %cst_58 {dimension_numbers = #tpu.dot_dimension_numbers<[1], [0], [0], [1], [0, 0, 1, 1], [], []>} : vector<16x32xbf16>, vector<32x64xbf16>, vector<16x64xf32> -> vector<16x64xf32>
    %81 = arith.addf %71, %80 : vector<16x64xf32>
    %c0_59 = arith.constant 0 : index
    %c0_60 = arith.constant 0 : index
    %82 = vector.load %arg3[%c0_59, %c0_60] : memref<16x1xf32, #tpu.memory_space<vmem>>, vector<16x1xf32>
    %83 = vector.broadcast %82 : vector<16x1xf32> to vector<16x64xf32>
    %84 = arith.addf %81, %83 : vector<16x64xf32>
    %cst_61 = arith.constant 0.000000e+00 : f32
    %85 = vector.broadcast %cst_61 : f32 to vector<16x64xf32>
    %86 = arith.maximumf %84, %85 : vector<16x64xf32>
    %c0_62 = arith.constant 0 : index
    %c0_63 = arith.constant 0 : index
    %c0_64 = arith.constant 0 : index
    %87 = vector.load %arg5[%c0_62, %c0_63, %c0_64] : memref<1x16x64xf32, #tpu.memory_space<vmem>>, vector<1x16x64xf32>
    %88 = vector.shape_cast %87 : vector<1x16x64xf32> to vector<16x64xf32>
    %89 = vector.shape_cast %86 : vector<16x64xf32> to vector<1x16x64xf32>
    tpu.vector_store %arg5[%c0_62, %c0_63, %c0_64], %89 {strides = array<i32>} : memref<1x16x64xf32, #tpu.memory_space<vmem>>, vector<1x16x64xf32>,
    return
  }
  func.func @transform_0(%arg0: i32) -> (i32, i32, i32) {
    %c0_i32 = arith.constant 0 : i32
    %c0_i32_0 = arith.constant 0 : i32
    %c0_i32_1 = arith.constant 0 : i32
    return %arg0, %c0_i32, %c0_i32_0 : i32, i32, i32
  }
  func.func @transform_1(%arg0: i32) -> (i32, i32, i32) {
    %c0_i32 = arith.constant 0 : i32
    %c0_i32_0 = arith.constant 0 : i32
    %c0_i32_1 = arith.constant 0 : i32
    %c0_i32_2 = arith.constant 0 : i32
    return %c0_i32, %c0_i32_0, %c0_i32_1 : i32, i32, i32
  }
  func.func @transform_2(%arg0: i32) -> (i32, i32) {
    %c0_i32 = arith.constant 0 : i32
    %c0_i32_0 = arith.constant 0 : i32
    %c0_i32_1 = arith.constant 0 : i32
    return %c0_i32, %c0_i32_0 : i32, i32
  }
  func.func @transform_3(%arg0: i32) -> (i32, i32) {
    %c0_i32 = arith.constant 0 : i32
    %c0_i32_0 = arith.constant 0 : i32
    %c0_i32_1 = arith.constant 0 : i32
    return %c0_i32, %c0_i32_0 : i32, i32
  }
  func.func @transform_4(%arg0: i32) -> (i32, i32, i32) {
    %c0_i32 = arith.constant 0 : i32
    %c0_i32_0 = arith.constant 0 : i32
    %c0_i32_1 = arith.constant 0 : i32
    return %arg0, %c0_i32, %c0_i32_0 : i32, i32, i32
  }
}

module attributes {stable_mosaic.version = 11 : i64} {
  func.func @_conv3x3_kernel(%arg0: i32, %arg1: memref<1x32x320xf32, #tpu.memory_space<vmem>>, %arg2: memref<9x8x32xbf16, #tpu.memory_space<vmem>>, %arg3: memref<8x1xf32, #tpu.memory_space<vmem>>, %arg4: memref<2x256xf32, #tpu.memory_space<vmem>>, %arg5: memref<1x8x256xf32, #tpu.memory_space<vmem>>) attributes {dimension_semantics = [#tpu.dimension_semantics<parallel>], iteration_bounds = array<i64: 2>, scalar_prefetch = 0 : i64, scratch_operands = 0 : i64, tpu.core_type = #tpu.core_type<tc>, window_params = [{transform_indices = @transform_0, window_bounds = array<i64: 1, 32, 320>}, {pipeline_mode = #tpu.pipeline_mode<synchronous>, transform_indices = @transform_1, window_bounds = array<i64: 9, 8, 32>}, {pipeline_mode = #tpu.pipeline_mode<synchronous>, transform_indices = @transform_2, window_bounds = array<i64: 8, 1>}, {pipeline_mode = #tpu.pipeline_mode<synchronous>, transform_indices = @transform_3, window_bounds = array<i64: 2, 256>}, {transform_indices = @transform_4, window_bounds = array<i64: 1, 8, 256>}]} {
    %cst = arith.constant 0.000000e+00 : f32
    %0 = vector.broadcast %cst : f32 to vector<8x256xf32>
    %c0 = arith.constant 0 : index
    %c0_0 = arith.constant 0 : index
    %c15 = arith.constant 15 : index
    %1 = vector.load %arg1[%c0, %c0_0, %c15] : memref<1x32x320xf32, #tpu.memory_space<vmem>>, vector<1x32x256xf32>
    %2 = vector.shape_cast %1 : vector<1x32x256xf32> to vector<32x256xf32>
    %c0_1 = arith.constant 0 : index
    %c0_2 = arith.constant 0 : index
    %3 = vector.load %arg4[%c0_1, %c0_2] : memref<2x256xf32, #tpu.memory_space<vmem>>, vector<1x256xf32>
    %4 = vector.broadcast %3 : vector<1x256xf32> to vector<32x256xf32>
    %5 = arith.mulf %2, %4 : vector<32x256xf32>
    %c0_3 = arith.constant 0 : index
    %c0_4 = arith.constant 0 : index
    %c0_5 = arith.constant 0 : index
    %6 = vector.load %arg2[%c0_3, %c0_4, %c0_5] : memref<9x8x32xbf16, #tpu.memory_space<vmem>>, vector<1x8x32xbf16>
    %7 = vector.shape_cast %6 : vector<1x8x32xbf16> to vector<8x32xbf16>
    %8 = arith.truncf %5 : vector<32x256xf32> to vector<32x256xbf16>
    %cst_6 = arith.constant dense<0.000000e+00> : vector<8x256xf32>
    %9 = tpu.matmul %7, %8, %cst_6 {dimension_numbers = #tpu.dot_dimension_numbers<[1], [0], [0], [1], [0, 0, 1, 1], [], []>} : vector<8x32xbf16>, vector<32x256xbf16>, vector<8x256xf32> -> vector<8x256xf32>
    %10 = arith.addf %0, %9 : vector<8x256xf32>
    %c0_7 = arith.constant 0 : index
    %c0_8 = arith.constant 0 : index
    %c16 = arith.constant 16 : index
    %11 = vector.load %arg1[%c0_7, %c0_8, %c16] : memref<1x32x320xf32, #tpu.memory_space<vmem>>, vector<1x32x256xf32>
    %12 = vector.shape_cast %11 : vector<1x32x256xf32> to vector<32x256xf32>
    %c1 = arith.constant 1 : index
    %c0_9 = arith.constant 0 : index
    %c0_10 = arith.constant 0 : index
    %13 = vector.load %arg2[%c1, %c0_9, %c0_10] : memref<9x8x32xbf16, #tpu.memory_space<vmem>>, vector<1x8x32xbf16>
    %14 = vector.shape_cast %13 : vector<1x8x32xbf16> to vector<8x32xbf16>
    %15 = arith.truncf %12 : vector<32x256xf32> to vector<32x256xbf16>
    %cst_11 = arith.constant dense<0.000000e+00> : vector<8x256xf32>
    %16 = tpu.matmul %14, %15, %cst_11 {dimension_numbers = #tpu.dot_dimension_numbers<[1], [0], [0], [1], [0, 0, 1, 1], [], []>} : vector<8x32xbf16>, vector<32x256xbf16>, vector<8x256xf32> -> vector<8x256xf32>
    %17 = arith.addf %10, %16 : vector<8x256xf32>
    %c0_12 = arith.constant 0 : index
    %c0_13 = arith.constant 0 : index
    %c17 = arith.constant 17 : index
    %18 = vector.load %arg1[%c0_12, %c0_13, %c17] : memref<1x32x320xf32, #tpu.memory_space<vmem>>, vector<1x32x256xf32>
    %19 = vector.shape_cast %18 : vector<1x32x256xf32> to vector<32x256xf32>
    %c1_14 = arith.constant 1 : index
    %c0_15 = arith.constant 0 : index
    %20 = vector.load %arg4[%c1_14, %c0_15] : memref<2x256xf32, #tpu.memory_space<vmem>>, vector<1x256xf32>
    %21 = vector.broadcast %20 : vector<1x256xf32> to vector<32x256xf32>
    %22 = arith.mulf %19, %21 : vector<32x256xf32>
    %c2 = arith.constant 2 : index
    %c0_16 = arith.constant 0 : index
    %c0_17 = arith.constant 0 : index
    %23 = vector.load %arg2[%c2, %c0_16, %c0_17] : memref<9x8x32xbf16, #tpu.memory_space<vmem>>, vector<1x8x32xbf16>
    %24 = vector.shape_cast %23 : vector<1x8x32xbf16> to vector<8x32xbf16>
    %25 = arith.truncf %22 : vector<32x256xf32> to vector<32x256xbf16>
    %cst_18 = arith.constant dense<0.000000e+00> : vector<8x256xf32>
    %26 = tpu.matmul %24, %25, %cst_18 {dimension_numbers = #tpu.dot_dimension_numbers<[1], [0], [0], [1], [0, 0, 1, 1], [], []>} : vector<8x32xbf16>, vector<32x256xbf16>, vector<8x256xf32> -> vector<8x256xf32>
    %27 = arith.addf %17, %26 : vector<8x256xf32>
    %c0_19 = arith.constant 0 : index
    %c0_20 = arith.constant 0 : index
    %c31 = arith.constant 31 : index
    %28 = vector.load %arg1[%c0_19, %c0_20, %c31] : memref<1x32x320xf32, #tpu.memory_space<vmem>>, vector<1x32x256xf32>
    %29 = vector.shape_cast %28 : vector<1x32x256xf32> to vector<32x256xf32>
    %c0_21 = arith.constant 0 : index
    %c0_22 = arith.constant 0 : index
    %30 = vector.load %arg4[%c0_21, %c0_22] : memref<2x256xf32, #tpu.memory_space<vmem>>, vector<1x256xf32>
    %31 = vector.broadcast %30 : vector<1x256xf32> to vector<32x256xf32>
    %32 = arith.mulf %29, %31 : vector<32x256xf32>
    %c3 = arith.constant 3 : index
    %c0_23 = arith.constant 0 : index
    %c0_24 = arith.constant 0 : index
    %33 = vector.load %arg2[%c3, %c0_23, %c0_24] : memref<9x8x32xbf16, #tpu.memory_space<vmem>>, vector<1x8x32xbf16>
    %34 = vector.shape_cast %33 : vector<1x8x32xbf16> to vector<8x32xbf16>
    %35 = arith.truncf %32 : vector<32x256xf32> to vector<32x256xbf16>
    %cst_25 = arith.constant dense<0.000000e+00> : vector<8x256xf32>
    %36 = tpu.matmul %34, %35, %cst_25 {dimension_numbers = #tpu.dot_dimension_numbers<[1], [0], [0], [1], [0, 0, 1, 1], [], []>} : vector<8x32xbf16>, vector<32x256xbf16>, vector<8x256xf32> -> vector<8x256xf32>
    %37 = arith.addf %27, %36 : vector<8x256xf32>
    %c0_26 = arith.constant 0 : index
    %c0_27 = arith.constant 0 : index
    %c32 = arith.constant 32 : index
    %38 = vector.load %arg1[%c0_26, %c0_27, %c32] : memref<1x32x320xf32, #tpu.memory_space<vmem>>, vector<1x32x256xf32>
    %39 = vector.shape_cast %38 : vector<1x32x256xf32> to vector<32x256xf32>
    %c4 = arith.constant 4 : index
    %c0_28 = arith.constant 0 : index
    %c0_29 = arith.constant 0 : index
    %40 = vector.load %arg2[%c4, %c0_28, %c0_29] : memref<9x8x32xbf16, #tpu.memory_space<vmem>>, vector<1x8x32xbf16>
    %41 = vector.shape_cast %40 : vector<1x8x32xbf16> to vector<8x32xbf16>
    %42 = arith.truncf %39 : vector<32x256xf32> to vector<32x256xbf16>
    %cst_30 = arith.constant dense<0.000000e+00> : vector<8x256xf32>
    %43 = tpu.matmul %41, %42, %cst_30 {dimension_numbers = #tpu.dot_dimension_numbers<[1], [0], [0], [1], [0, 0, 1, 1], [], []>} : vector<8x32xbf16>, vector<32x256xbf16>, vector<8x256xf32> -> vector<8x256xf32>
    %44 = arith.addf %37, %43 : vector<8x256xf32>
    %c0_31 = arith.constant 0 : index
    %c0_32 = arith.constant 0 : index
    %c33 = arith.constant 33 : index
    %45 = vector.load %arg1[%c0_31, %c0_32, %c33] : memref<1x32x320xf32, #tpu.memory_space<vmem>>, vector<1x32x256xf32>
    %46 = vector.shape_cast %45 : vector<1x32x256xf32> to vector<32x256xf32>
    %c1_33 = arith.constant 1 : index
    %c0_34 = arith.constant 0 : index
    %47 = vector.load %arg4[%c1_33, %c0_34] : memref<2x256xf32, #tpu.memory_space<vmem>>, vector<1x256xf32>
    %48 = vector.broadcast %47 : vector<1x256xf32> to vector<32x256xf32>
    %49 = arith.mulf %46, %48 : vector<32x256xf32>
    %c5 = arith.constant 5 : index
    %c0_35 = arith.constant 0 : index
    %c0_36 = arith.constant 0 : index
    %50 = vector.load %arg2[%c5, %c0_35, %c0_36] : memref<9x8x32xbf16, #tpu.memory_space<vmem>>, vector<1x8x32xbf16>
    %51 = vector.shape_cast %50 : vector<1x8x32xbf16> to vector<8x32xbf16>
    %52 = arith.truncf %49 : vector<32x256xf32> to vector<32x256xbf16>
    %cst_37 = arith.constant dense<0.000000e+00> : vector<8x256xf32>
    %53 = tpu.matmul %51, %52, %cst_37 {dimension_numbers = #tpu.dot_dimension_numbers<[1], [0], [0], [1], [0, 0, 1, 1], [], []>} : vector<8x32xbf16>, vector<32x256xbf16>, vector<8x256xf32> -> vector<8x256xf32>
    %54 = arith.addf %44, %53 : vector<8x256xf32>
    %c0_38 = arith.constant 0 : index
    %c0_39 = arith.constant 0 : index
    %c47 = arith.constant 47 : index
    %55 = vector.load %arg1[%c0_38, %c0_39, %c47] : memref<1x32x320xf32, #tpu.memory_space<vmem>>, vector<1x32x256xf32>
    %56 = vector.shape_cast %55 : vector<1x32x256xf32> to vector<32x256xf32>
    %c0_40 = arith.constant 0 : index
    %c0_41 = arith.constant 0 : index
    %57 = vector.load %arg4[%c0_40, %c0_41] : memref<2x256xf32, #tpu.memory_space<vmem>>, vector<1x256xf32>
    %58 = vector.broadcast %57 : vector<1x256xf32> to vector<32x256xf32>
    %59 = arith.mulf %56, %58 : vector<32x256xf32>
    %c6 = arith.constant 6 : index
    %c0_42 = arith.constant 0 : index
    %c0_43 = arith.constant 0 : index
    %60 = vector.load %arg2[%c6, %c0_42, %c0_43] : memref<9x8x32xbf16, #tpu.memory_space<vmem>>, vector<1x8x32xbf16>
    %61 = vector.shape_cast %60 : vector<1x8x32xbf16> to vector<8x32xbf16>
    %62 = arith.truncf %59 : vector<32x256xf32> to vector<32x256xbf16>
    %cst_44 = arith.constant dense<0.000000e+00> : vector<8x256xf32>
    %63 = tpu.matmul %61, %62, %cst_44 {dimension_numbers = #tpu.dot_dimension_numbers<[1], [0], [0], [1], [0, 0, 1, 1], [], []>} : vector<8x32xbf16>, vector<32x256xbf16>, vector<8x256xf32> -> vector<8x256xf32>
    %64 = arith.addf %54, %63 : vector<8x256xf32>
    %c0_45 = arith.constant 0 : index
    %c0_46 = arith.constant 0 : index
    %c48 = arith.constant 48 : index
    %65 = vector.load %arg1[%c0_45, %c0_46, %c48] : memref<1x32x320xf32, #tpu.memory_space<vmem>>, vector<1x32x256xf32>
    %66 = vector.shape_cast %65 : vector<1x32x256xf32> to vector<32x256xf32>
    %c7 = arith.constant 7 : index
    %c0_47 = arith.constant 0 : index
    %c0_48 = arith.constant 0 : index
    %67 = vector.load %arg2[%c7, %c0_47, %c0_48] : memref<9x8x32xbf16, #tpu.memory_space<vmem>>, vector<1x8x32xbf16>
    %68 = vector.shape_cast %67 : vector<1x8x32xbf16> to vector<8x32xbf16>
    %69 = arith.truncf %66 : vector<32x256xf32> to vector<32x256xbf16>
    %cst_49 = arith.constant dense<0.000000e+00> : vector<8x256xf32>
    %70 = tpu.matmul %68, %69, %cst_49 {dimension_numbers = #tpu.dot_dimension_numbers<[1], [0], [0], [1], [0, 0, 1, 1], [], []>} : vector<8x32xbf16>, vector<32x256xbf16>, vector<8x256xf32> -> vector<8x256xf32>
    %71 = arith.addf %64, %70 : vector<8x256xf32>
    %c0_50 = arith.constant 0 : index
    %c0_51 = arith.constant 0 : index
    %c49 = arith.constant 49 : index
    %72 = vector.load %arg1[%c0_50, %c0_51, %c49] : memref<1x32x320xf32, #tpu.memory_space<vmem>>, vector<1x32x256xf32>
    %73 = vector.shape_cast %72 : vector<1x32x256xf32> to vector<32x256xf32>
    %c1_52 = arith.constant 1 : index
    %c0_53 = arith.constant 0 : index
    %74 = vector.load %arg4[%c1_52, %c0_53] : memref<2x256xf32, #tpu.memory_space<vmem>>, vector<1x256xf32>
    %75 = vector.broadcast %74 : vector<1x256xf32> to vector<32x256xf32>
    %76 = arith.mulf %73, %75 : vector<32x256xf32>
    %c8 = arith.constant 8 : index
    %c0_54 = arith.constant 0 : index
    %c0_55 = arith.constant 0 : index
    %77 = vector.load %arg2[%c8, %c0_54, %c0_55] : memref<9x8x32xbf16, #tpu.memory_space<vmem>>, vector<1x8x32xbf16>
    %78 = vector.shape_cast %77 : vector<1x8x32xbf16> to vector<8x32xbf16>
    %79 = arith.truncf %76 : vector<32x256xf32> to vector<32x256xbf16>
    %cst_56 = arith.constant dense<0.000000e+00> : vector<8x256xf32>
    %80 = tpu.matmul %78, %79, %cst_56 {dimension_numbers = #tpu.dot_dimension_numbers<[1], [0], [0], [1], [0, 0, 1, 1], [], []>} : vector<8x32xbf16>, vector<32x256xbf16>, vector<8x256xf32> -> vector<8x256xf32>
    %81 = arith.addf %71, %80 : vector<8x256xf32>
    %c0_57 = arith.constant 0 : index
    %c0_58 = arith.constant 0 : index
    %82 = vector.load %arg3[%c0_57, %c0_58] : memref<8x1xf32, #tpu.memory_space<vmem>>, vector<8x1xf32>
    %83 = vector.broadcast %82 : vector<8x1xf32> to vector<8x256xf32>
    %84 = arith.addf %81, %83 : vector<8x256xf32>
    %cst_59 = arith.constant 0.000000e+00 : f32
    %85 = vector.broadcast %cst_59 : f32 to vector<8x256xf32>
    %86 = arith.maximumf %84, %85 : vector<8x256xf32>
    %c0_60 = arith.constant 0 : index
    %c0_61 = arith.constant 0 : index
    %c0_62 = arith.constant 0 : index
    %87 = vector.load %arg5[%c0_60, %c0_61, %c0_62] : memref<1x8x256xf32, #tpu.memory_space<vmem>>, vector<1x8x256xf32>
    %88 = vector.shape_cast %87 : vector<1x8x256xf32> to vector<8x256xf32>
    %89 = vector.shape_cast %86 : vector<8x256xf32> to vector<1x8x256xf32>
    tpu.vector_store %arg5[%c0_60, %c0_61, %c0_62], %89 {strides = array<i32>} : memref<1x8x256xf32, #tpu.memory_space<vmem>>, vector<1x8x256xf32>,
    return
  }
  func.func @transform_0(%arg0: i32) -> (i32, i32, i32) {
    %c0_i32 = arith.constant 0 : i32
    %c0_i32_0 = arith.constant 0 : i32
    %c0_i32_1 = arith.constant 0 : i32
    return %arg0, %c0_i32, %c0_i32_0 : i32, i32, i32
  }
  func.func @transform_1(%arg0: i32) -> (i32, i32, i32) {
    %c0_i32 = arith.constant 0 : i32
    %c0_i32_0 = arith.constant 0 : i32
    %c0_i32_1 = arith.constant 0 : i32
    %c0_i32_2 = arith.constant 0 : i32
    return %c0_i32, %c0_i32_0, %c0_i32_1 : i32, i32, i32
  }
  func.func @transform_2(%arg0: i32) -> (i32, i32) {
    %c0_i32 = arith.constant 0 : i32
    %c0_i32_0 = arith.constant 0 : i32
    %c0_i32_1 = arith.constant 0 : i32
    return %c0_i32, %c0_i32_0 : i32, i32
  }
  func.func @transform_3(%arg0: i32) -> (i32, i32) {
    %c0_i32 = arith.constant 0 : i32
    %c0_i32_0 = arith.constant 0 : i32
    %c0_i32_1 = arith.constant 0 : i32
    return %c0_i32, %c0_i32_0 : i32, i32
  }
  func.func @transform_4(%arg0: i32) -> (i32, i32, i32) {
    %c0_i32 = arith.constant 0 : i32
    %c0_i32_0 = arith.constant 0 : i32
    %c0_i32_1 = arith.constant 0 : i32
    return %arg0, %c0_i32, %c0_i32_0 : i32, i32, i32
  }
}

module attributes {stable_mosaic.version = 11 : i64} {
  func.func @_conv3x3_kernel(%arg0: i32, %arg1: memref<1x16x320xf32, #tpu.memory_space<vmem>>, %arg2: memref<9x8x16xbf16, #tpu.memory_space<vmem>>, %arg3: memref<8x1xf32, #tpu.memory_space<vmem>>, %arg4: memref<2x256xf32, #tpu.memory_space<vmem>>, %arg5: memref<1x8x256xf32, #tpu.memory_space<vmem>>) attributes {dimension_semantics = [#tpu.dimension_semantics<parallel>], iteration_bounds = array<i64: 2>, scalar_prefetch = 0 : i64, scratch_operands = 0 : i64, tpu.core_type = #tpu.core_type<tc>, window_params = [{transform_indices = @transform_0, window_bounds = array<i64: 1, 16, 320>}, {pipeline_mode = #tpu.pipeline_mode<synchronous>, transform_indices = @transform_1, window_bounds = array<i64: 9, 8, 16>}, {pipeline_mode = #tpu.pipeline_mode<synchronous>, transform_indices = @transform_2, window_bounds = array<i64: 8, 1>}, {pipeline_mode = #tpu.pipeline_mode<synchronous>, transform_indices = @transform_3, window_bounds = array<i64: 2, 256>}, {transform_indices = @transform_4, window_bounds = array<i64: 1, 8, 256>}]} {
    %cst = arith.constant 0.000000e+00 : f32
    %0 = vector.broadcast %cst : f32 to vector<8x256xf32>
    %c0 = arith.constant 0 : index
    %c0_0 = arith.constant 0 : index
    %c15 = arith.constant 15 : index
    %1 = vector.load %arg1[%c0, %c0_0, %c15] : memref<1x16x320xf32, #tpu.memory_space<vmem>>, vector<1x16x256xf32>
    %2 = vector.shape_cast %1 : vector<1x16x256xf32> to vector<16x256xf32>
    %c0_1 = arith.constant 0 : index
    %c0_2 = arith.constant 0 : index
    %3 = vector.load %arg4[%c0_1, %c0_2] : memref<2x256xf32, #tpu.memory_space<vmem>>, vector<1x256xf32>
    %4 = vector.broadcast %3 : vector<1x256xf32> to vector<16x256xf32>
    %5 = arith.mulf %2, %4 : vector<16x256xf32>
    %c0_3 = arith.constant 0 : index
    %c0_4 = arith.constant 0 : index
    %c0_5 = arith.constant 0 : index
    %6 = vector.load %arg2[%c0_3, %c0_4, %c0_5] : memref<9x8x16xbf16, #tpu.memory_space<vmem>>, vector<1x8x16xbf16>
    %7 = vector.shape_cast %6 : vector<1x8x16xbf16> to vector<8x16xbf16>
    %8 = arith.truncf %5 : vector<16x256xf32> to vector<16x256xbf16>
    %cst_6 = arith.constant dense<0.000000e+00> : vector<8x256xf32>
    %9 = tpu.matmul %7, %8, %cst_6 {dimension_numbers = #tpu.dot_dimension_numbers<[1], [0], [0], [1], [0, 0, 1, 1], [], []>} : vector<8x16xbf16>, vector<16x256xbf16>, vector<8x256xf32> -> vector<8x256xf32>
    %10 = arith.addf %0, %9 : vector<8x256xf32>
    %c0_7 = arith.constant 0 : index
    %c0_8 = arith.constant 0 : index
    %c16 = arith.constant 16 : index
    %11 = vector.load %arg1[%c0_7, %c0_8, %c16] : memref<1x16x320xf32, #tpu.memory_space<vmem>>, vector<1x16x256xf32>
    %12 = vector.shape_cast %11 : vector<1x16x256xf32> to vector<16x256xf32>
    %c1 = arith.constant 1 : index
    %c0_9 = arith.constant 0 : index
    %c0_10 = arith.constant 0 : index
    %13 = vector.load %arg2[%c1, %c0_9, %c0_10] : memref<9x8x16xbf16, #tpu.memory_space<vmem>>, vector<1x8x16xbf16>
    %14 = vector.shape_cast %13 : vector<1x8x16xbf16> to vector<8x16xbf16>
    %15 = arith.truncf %12 : vector<16x256xf32> to vector<16x256xbf16>
    %cst_11 = arith.constant dense<0.000000e+00> : vector<8x256xf32>
    %16 = tpu.matmul %14, %15, %cst_11 {dimension_numbers = #tpu.dot_dimension_numbers<[1], [0], [0], [1], [0, 0, 1, 1], [], []>} : vector<8x16xbf16>, vector<16x256xbf16>, vector<8x256xf32> -> vector<8x256xf32>
    %17 = arith.addf %10, %16 : vector<8x256xf32>
    %c0_12 = arith.constant 0 : index
    %c0_13 = arith.constant 0 : index
    %c17 = arith.constant 17 : index
    %18 = vector.load %arg1[%c0_12, %c0_13, %c17] : memref<1x16x320xf32, #tpu.memory_space<vmem>>, vector<1x16x256xf32>
    %19 = vector.shape_cast %18 : vector<1x16x256xf32> to vector<16x256xf32>
    %c1_14 = arith.constant 1 : index
    %c0_15 = arith.constant 0 : index
    %20 = vector.load %arg4[%c1_14, %c0_15] : memref<2x256xf32, #tpu.memory_space<vmem>>, vector<1x256xf32>
    %21 = vector.broadcast %20 : vector<1x256xf32> to vector<16x256xf32>
    %22 = arith.mulf %19, %21 : vector<16x256xf32>
    %c2 = arith.constant 2 : index
    %c0_16 = arith.constant 0 : index
    %c0_17 = arith.constant 0 : index
    %23 = vector.load %arg2[%c2, %c0_16, %c0_17] : memref<9x8x16xbf16, #tpu.memory_space<vmem>>, vector<1x8x16xbf16>
    %24 = vector.shape_cast %23 : vector<1x8x16xbf16> to vector<8x16xbf16>
    %25 = arith.truncf %22 : vector<16x256xf32> to vector<16x256xbf16>
    %cst_18 = arith.constant dense<0.000000e+00> : vector<8x256xf32>
    %26 = tpu.matmul %24, %25, %cst_18 {dimension_numbers = #tpu.dot_dimension_numbers<[1], [0], [0], [1], [0, 0, 1, 1], [], []>} : vector<8x16xbf16>, vector<16x256xbf16>, vector<8x256xf32> -> vector<8x256xf32>
    %27 = arith.addf %17, %26 : vector<8x256xf32>
    %c0_19 = arith.constant 0 : index
    %c0_20 = arith.constant 0 : index
    %c31 = arith.constant 31 : index
    %28 = vector.load %arg1[%c0_19, %c0_20, %c31] : memref<1x16x320xf32, #tpu.memory_space<vmem>>, vector<1x16x256xf32>
    %29 = vector.shape_cast %28 : vector<1x16x256xf32> to vector<16x256xf32>
    %c0_21 = arith.constant 0 : index
    %c0_22 = arith.constant 0 : index
    %30 = vector.load %arg4[%c0_21, %c0_22] : memref<2x256xf32, #tpu.memory_space<vmem>>, vector<1x256xf32>
    %31 = vector.broadcast %30 : vector<1x256xf32> to vector<16x256xf32>
    %32 = arith.mulf %29, %31 : vector<16x256xf32>
    %c3 = arith.constant 3 : index
    %c0_23 = arith.constant 0 : index
    %c0_24 = arith.constant 0 : index
    %33 = vector.load %arg2[%c3, %c0_23, %c0_24] : memref<9x8x16xbf16, #tpu.memory_space<vmem>>, vector<1x8x16xbf16>
    %34 = vector.shape_cast %33 : vector<1x8x16xbf16> to vector<8x16xbf16>
    %35 = arith.truncf %32 : vector<16x256xf32> to vector<16x256xbf16>
    %cst_25 = arith.constant dense<0.000000e+00> : vector<8x256xf32>
    %36 = tpu.matmul %34, %35, %cst_25 {dimension_numbers = #tpu.dot_dimension_numbers<[1], [0], [0], [1], [0, 0, 1, 1], [], []>} : vector<8x16xbf16>, vector<16x256xbf16>, vector<8x256xf32> -> vector<8x256xf32>
    %37 = arith.addf %27, %36 : vector<8x256xf32>
    %c0_26 = arith.constant 0 : index
    %c0_27 = arith.constant 0 : index
    %c32 = arith.constant 32 : index
    %38 = vector.load %arg1[%c0_26, %c0_27, %c32] : memref<1x16x320xf32, #tpu.memory_space<vmem>>, vector<1x16x256xf32>
    %39 = vector.shape_cast %38 : vector<1x16x256xf32> to vector<16x256xf32>
    %c4 = arith.constant 4 : index
    %c0_28 = arith.constant 0 : index
    %c0_29 = arith.constant 0 : index
    %40 = vector.load %arg2[%c4, %c0_28, %c0_29] : memref<9x8x16xbf16, #tpu.memory_space<vmem>>, vector<1x8x16xbf16>
    %41 = vector.shape_cast %40 : vector<1x8x16xbf16> to vector<8x16xbf16>
    %42 = arith.truncf %39 : vector<16x256xf32> to vector<16x256xbf16>
    %cst_30 = arith.constant dense<0.000000e+00> : vector<8x256xf32>
    %43 = tpu.matmul %41, %42, %cst_30 {dimension_numbers = #tpu.dot_dimension_numbers<[1], [0], [0], [1], [0, 0, 1, 1], [], []>} : vector<8x16xbf16>, vector<16x256xbf16>, vector<8x256xf32> -> vector<8x256xf32>
    %44 = arith.addf %37, %43 : vector<8x256xf32>
    %c0_31 = arith.constant 0 : index
    %c0_32 = arith.constant 0 : index
    %c33 = arith.constant 33 : index
    %45 = vector.load %arg1[%c0_31, %c0_32, %c33] : memref<1x16x320xf32, #tpu.memory_space<vmem>>, vector<1x16x256xf32>
    %46 = vector.shape_cast %45 : vector<1x16x256xf32> to vector<16x256xf32>
    %c1_33 = arith.constant 1 : index
    %c0_34 = arith.constant 0 : index
    %47 = vector.load %arg4[%c1_33, %c0_34] : memref<2x256xf32, #tpu.memory_space<vmem>>, vector<1x256xf32>
    %48 = vector.broadcast %47 : vector<1x256xf32> to vector<16x256xf32>
    %49 = arith.mulf %46, %48 : vector<16x256xf32>
    %c5 = arith.constant 5 : index
    %c0_35 = arith.constant 0 : index
    %c0_36 = arith.constant 0 : index
    %50 = vector.load %arg2[%c5, %c0_35, %c0_36] : memref<9x8x16xbf16, #tpu.memory_space<vmem>>, vector<1x8x16xbf16>
    %51 = vector.shape_cast %50 : vector<1x8x16xbf16> to vector<8x16xbf16>
    %52 = arith.truncf %49 : vector<16x256xf32> to vector<16x256xbf16>
    %cst_37 = arith.constant dense<0.000000e+00> : vector<8x256xf32>
    %53 = tpu.matmul %51, %52, %cst_37 {dimension_numbers = #tpu.dot_dimension_numbers<[1], [0], [0], [1], [0, 0, 1, 1], [], []>} : vector<8x16xbf16>, vector<16x256xbf16>, vector<8x256xf32> -> vector<8x256xf32>
    %54 = arith.addf %44, %53 : vector<8x256xf32>
    %c0_38 = arith.constant 0 : index
    %c0_39 = arith.constant 0 : index
    %c47 = arith.constant 47 : index
    %55 = vector.load %arg1[%c0_38, %c0_39, %c47] : memref<1x16x320xf32, #tpu.memory_space<vmem>>, vector<1x16x256xf32>
    %56 = vector.shape_cast %55 : vector<1x16x256xf32> to vector<16x256xf32>
    %c0_40 = arith.constant 0 : index
    %c0_41 = arith.constant 0 : index
    %57 = vector.load %arg4[%c0_40, %c0_41] : memref<2x256xf32, #tpu.memory_space<vmem>>, vector<1x256xf32>
    %58 = vector.broadcast %57 : vector<1x256xf32> to vector<16x256xf32>
    %59 = arith.mulf %56, %58 : vector<16x256xf32>
    %c6 = arith.constant 6 : index
    %c0_42 = arith.constant 0 : index
    %c0_43 = arith.constant 0 : index
    %60 = vector.load %arg2[%c6, %c0_42, %c0_43] : memref<9x8x16xbf16, #tpu.memory_space<vmem>>, vector<1x8x16xbf16>
    %61 = vector.shape_cast %60 : vector<1x8x16xbf16> to vector<8x16xbf16>
    %62 = arith.truncf %59 : vector<16x256xf32> to vector<16x256xbf16>
    %cst_44 = arith.constant dense<0.000000e+00> : vector<8x256xf32>
    %63 = tpu.matmul %61, %62, %cst_44 {dimension_numbers = #tpu.dot_dimension_numbers<[1], [0], [0], [1], [0, 0, 1, 1], [], []>} : vector<8x16xbf16>, vector<16x256xbf16>, vector<8x256xf32> -> vector<8x256xf32>
    %64 = arith.addf %54, %63 : vector<8x256xf32>
    %c0_45 = arith.constant 0 : index
    %c0_46 = arith.constant 0 : index
    %c48 = arith.constant 48 : index
    %65 = vector.load %arg1[%c0_45, %c0_46, %c48] : memref<1x16x320xf32, #tpu.memory_space<vmem>>, vector<1x16x256xf32>
    %66 = vector.shape_cast %65 : vector<1x16x256xf32> to vector<16x256xf32>
    %c7 = arith.constant 7 : index
    %c0_47 = arith.constant 0 : index
    %c0_48 = arith.constant 0 : index
    %67 = vector.load %arg2[%c7, %c0_47, %c0_48] : memref<9x8x16xbf16, #tpu.memory_space<vmem>>, vector<1x8x16xbf16>
    %68 = vector.shape_cast %67 : vector<1x8x16xbf16> to vector<8x16xbf16>
    %69 = arith.truncf %66 : vector<16x256xf32> to vector<16x256xbf16>
    %cst_49 = arith.constant dense<0.000000e+00> : vector<8x256xf32>
    %70 = tpu.matmul %68, %69, %cst_49 {dimension_numbers = #tpu.dot_dimension_numbers<[1], [0], [0], [1], [0, 0, 1, 1], [], []>} : vector<8x16xbf16>, vector<16x256xbf16>, vector<8x256xf32> -> vector<8x256xf32>
    %71 = arith.addf %64, %70 : vector<8x256xf32>
    %c0_50 = arith.constant 0 : index
    %c0_51 = arith.constant 0 : index
    %c49 = arith.constant 49 : index
    %72 = vector.load %arg1[%c0_50, %c0_51, %c49] : memref<1x16x320xf32, #tpu.memory_space<vmem>>, vector<1x16x256xf32>
    %73 = vector.shape_cast %72 : vector<1x16x256xf32> to vector<16x256xf32>
    %c1_52 = arith.constant 1 : index
    %c0_53 = arith.constant 0 : index
    %74 = vector.load %arg4[%c1_52, %c0_53] : memref<2x256xf32, #tpu.memory_space<vmem>>, vector<1x256xf32>
    %75 = vector.broadcast %74 : vector<1x256xf32> to vector<16x256xf32>
    %76 = arith.mulf %73, %75 : vector<16x256xf32>
    %c8 = arith.constant 8 : index
    %c0_54 = arith.constant 0 : index
    %c0_55 = arith.constant 0 : index
    %77 = vector.load %arg2[%c8, %c0_54, %c0_55] : memref<9x8x16xbf16, #tpu.memory_space<vmem>>, vector<1x8x16xbf16>
    %78 = vector.shape_cast %77 : vector<1x8x16xbf16> to vector<8x16xbf16>
    %79 = arith.truncf %76 : vector<16x256xf32> to vector<16x256xbf16>
    %cst_56 = arith.constant dense<0.000000e+00> : vector<8x256xf32>
    %80 = tpu.matmul %78, %79, %cst_56 {dimension_numbers = #tpu.dot_dimension_numbers<[1], [0], [0], [1], [0, 0, 1, 1], [], []>} : vector<8x16xbf16>, vector<16x256xbf16>, vector<8x256xf32> -> vector<8x256xf32>
    %81 = arith.addf %71, %80 : vector<8x256xf32>
    %c0_57 = arith.constant 0 : index
    %c0_58 = arith.constant 0 : index
    %82 = vector.load %arg3[%c0_57, %c0_58] : memref<8x1xf32, #tpu.memory_space<vmem>>, vector<8x1xf32>
    %83 = vector.broadcast %82 : vector<8x1xf32> to vector<8x256xf32>
    %84 = arith.addf %81, %83 : vector<8x256xf32>
    %c0_59 = arith.constant 0 : index
    %c0_60 = arith.constant 0 : index
    %c0_61 = arith.constant 0 : index
    %85 = vector.load %arg5[%c0_59, %c0_60, %c0_61] : memref<1x8x256xf32, #tpu.memory_space<vmem>>, vector<1x8x256xf32>
    %86 = vector.shape_cast %85 : vector<1x8x256xf32> to vector<8x256xf32>
    %87 = vector.shape_cast %84 : vector<8x256xf32> to vector<1x8x256xf32>
    tpu.vector_store %arg5[%c0_59, %c0_60, %c0_61], %87 {strides = array<i32>} : memref<1x8x256xf32, #tpu.memory_space<vmem>>, vector<1x8x256xf32>,
    return
  }
  func.func @transform_0(%arg0: i32) -> (i32, i32, i32) {
    %c0_i32 = arith.constant 0 : i32
    %c0_i32_0 = arith.constant 0 : i32
    %c0_i32_1 = arith.constant 0 : i32
    return %arg0, %c0_i32, %c0_i32_0 : i32, i32, i32
  }
  func.func @transform_1(%arg0: i32) -> (i32, i32, i32) {
    %c0_i32 = arith.constant 0 : i32
    %c0_i32_0 = arith.constant 0 : i32
    %c0_i32_1 = arith.constant 0 : i32
    %c0_i32_2 = arith.constant 0 : i32
    return %c0_i32, %c0_i32_0, %c0_i32_1 : i32, i32, i32
  }
  func.func @transform_2(%arg0: i32) -> (i32, i32) {
    %c0_i32 = arith.constant 0 : i32
    %c0_i32_0 = arith.constant 0 : i32
    %c0_i32_1 = arith.constant 0 : i32
    return %c0_i32, %c0_i32_0 : i32, i32
  }
  func.func @transform_3(%arg0: i32) -> (i32, i32) {
    %c0_i32 = arith.constant 0 : i32
    %c0_i32_0 = arith.constant 0 : i32
    %c0_i32_1 = arith.constant 0 : i32
    return %c0_i32, %c0_i32_0 : i32, i32
  }
  func.func @transform_4(%arg0: i32) -> (i32, i32, i32) {
    %c0_i32 = arith.constant 0 : i32
    %c0_i32_0 = arith.constant 0 : i32
    %c0_i32_1 = arith.constant 0 : i32
    return %arg0, %c0_i32, %c0_i32_0 : i32, i32, i32
  }
}

module attributes {stable_mosaic.version = 11 : i64} {
  func.func @_mask_deform_kernel(%arg0: i32, %arg1: i32, %arg2: memref<1x5x256xf32, #tpu.memory_space<vmem>>, %arg3: memref<1x5x2xf32, #tpu.memory_space<vmem>>, %arg4: memref<1x2x256xf32, #tpu.memory_space<vmem>>) attributes {dimension_semantics = [#tpu.dimension_semantics<parallel>, #tpu.dimension_semantics<parallel>], iteration_bounds = array<i64: 2, 1>, scalar_prefetch = 0 : i64, scratch_operands = 0 : i64, tpu.core_type = #tpu.core_type<tc>, window_params = [{transform_indices = @transform_0, window_bounds = array<i64: 1, 5, 256>}, {transform_indices = @transform_1, window_bounds = array<i64: 1, 5, 2>}, {transform_indices = @transform_2, window_bounds = array<i64: 1, 2, 256>}]} {
    %c0 = arith.constant 0 : index
    %c0_0 = arith.constant 0 : index
    %c0_1 = arith.constant 0 : index
    %0 = vector.load %arg2[%c0, %c0_0, %c0_1] : memref<1x5x256xf32, #tpu.memory_space<vmem>>, vector<1x5x256xf32>
    %1 = vector.shape_cast %0 : vector<1x5x256xf32> to vector<5x256xf32>
    %cst = arith.constant dense<0xFF800000> : vector<256xf32>
    %2 = vector.multi_reduction <maximumf>, %1, %cst [0] : vector<5x256xf32> to vector<256xf32>
    %3 = vector.shape_cast %2 : vector<256xf32> to vector<1x256xf32>
    %4 = vector.broadcast %3 : vector<1x256xf32> to vector<5x256xf32>
    %5 = arith.subf %1, %4 : vector<5x256xf32>
    %6 = math.exp %5 : vector<5x256xf32>
    %cst_2 = arith.constant dense<0.000000e+00> : vector<256xf32>
    %7 = vector.multi_reduction <add>, %6, %cst_2 [0] : vector<5x256xf32> to vector<256xf32>
    %8 = vector.shape_cast %7 : vector<256xf32> to vector<1x256xf32>
    %9 = tpu.reciprocal %8 {approx = true} : vector<1x256xf32> -> vector<1x256xf32>
    %10 = vector.broadcast %9 : vector<1x256xf32> to vector<5x256xf32>
    %11 = arith.mulf %6, %10 : vector<5x256xf32>
    %c0_3 = arith.constant 0 : index
    %c0_4 = arith.constant 0 : index
    %c0_5 = arith.constant 0 : index
    %12 = vector.load %arg3[%c0_3, %c0_4, %c0_5] : memref<1x5x2xf32, #tpu.memory_space<vmem>>, vector<1x5x2xf32>
    %13 = vector.shape_cast %12 : vector<1x5x2xf32> to vector<5x2xf32>
    %14 = vector.extract_strided_slice %13 {offsets = [0, 0], sizes = [5, 1], strides = [1, 1]} : vector<5x2xf32> to vector<5x1xf32>
    %15 = vector.broadcast %14 : vector<5x1xf32> to vector<5x256xf32>
    %16 = arith.mulf %11, %15 : vector<5x256xf32>
    %cst_6 = arith.constant dense<0.000000e+00> : vector<256xf32>
    %17 = vector.multi_reduction <add>, %16, %cst_6 [0] : vector<5x256xf32> to vector<256xf32>
    %18 = vector.shape_cast %17 : vector<256xf32> to vector<1x256xf32>
    %19 = vector.extract_strided_slice %13 {offsets = [0, 1], sizes = [5, 1], strides = [1, 1]} : vector<5x2xf32> to vector<5x1xf32>
    %20 = vector.broadcast %19 : vector<5x1xf32> to vector<5x256xf32>
    %21 = arith.mulf %11, %20 : vector<5x256xf32>
    %cst_7 = arith.constant dense<0.000000e+00> : vector<256xf32>
    %22 = vector.multi_reduction <add>, %21, %cst_7 [0] : vector<5x256xf32> to vector<256xf32>
    %23 = vector.shape_cast %22 : vector<256xf32> to vector<1x256xf32>
    %24 = tpu.concatenate %18, %23 in 0 : vector<1x256xf32>, vector<1x256xf32> -> vector<2x256xf32>
    %c0_8 = arith.constant 0 : index
    %c0_9 = arith.constant 0 : index
    %c0_10 = arith.constant 0 : index
    %25 = vector.load %arg4[%c0_8, %c0_9, %c0_10] : memref<1x2x256xf32, #tpu.memory_space<vmem>>, vector<1x2x256xf32>
    %26 = vector.shape_cast %25 : vector<1x2x256xf32> to vector<2x256xf32>
    %27 = vector.shape_cast %24 : vector<2x256xf32> to vector<1x2x256xf32>
    tpu.vector_store %arg4[%c0_8, %c0_9, %c0_10], %27 {strides = array<i32>} : memref<1x2x256xf32, #tpu.memory_space<vmem>>, vector<1x2x256xf32>,
    return
  }
  func.func @transform_0(%arg0: i32, %arg1: i32) -> (i32, i32, i32) {
    %c0_i32 = arith.constant 0 : i32
    %c0_i32_0 = arith.constant 0 : i32
    return %arg0, %c0_i32, %arg1 : i32, i32, i32
  }
  func.func @transform_1(%arg0: i32, %arg1: i32) -> (i32, i32, i32) {
    %c0_i32 = arith.constant 0 : i32
    %c0_i32_0 = arith.constant 0 : i32
    %c0_i32_1 = arith.constant 0 : i32
    return %arg0, %c0_i32, %c0_i32_0 : i32, i32, i32
  }
  func.func @transform_2(%arg0: i32, %arg1: i32) -> (i32, i32, i32) {
    %c0_i32 = arith.constant 0 : i32
    %c0_i32_0 = arith.constant 0 : i32
    return %arg0, %c0_i32, %arg1 : i32, i32, i32
  }
}

</mosaic_0001>

<llo_original>
// kernel: tile.18
$region0: #{tile.18}
  #allocation0 [shape = 's32[1]{0}', space=sflag, size = 0x4, scoped, tag = 'scoped memory for tile.18']
  %s0 = inlined_call_operand.vmem [shape: f32[16], index: 0, kind: input, shape index: {}]
  %s1 = inlined_call_operand.vmem [shape: f32[16,1,1,16], index: 1, kind: output, shape index: {}]
  // Predicated region
  $region2: #{tile.18} parent=0 // pred_check
    _
  $region3: #{tile.18} parent=0 // pred_check_branch
    %3 = sbr.rel (0) target = $region5
  $region4: #{tile.18} parent=0 // pred_region
    _
  $region5: #{tile.18} parent=0 // pred_fallthru
    _
  %v4 = vld [vmem:[%s0] ss:$0 sm:$0xff]
  %5 = vst [vmem:[%s1] sm:$0xff] %v4
  %s6 = scalar_lea.vmem %s1, 8
  %7 = vst [vmem:[%s6] sm:$0xff] %v4

// kernel: tile.22
$region0: #{tile.22}
  %s0 = inlined_call_operand.vmem [shape: f32[16,1,1,16], index: 0, kind: input, shape index: {}]
  %s1 = inlined_call_operand.vmem [shape: f32[1,256], index: 1, kind: output, shape index: {}]
  $region1: #{tile.22} parent=0
    #allocation0 [shape = 'u8[8192]{0}', space=vmem, size = 0x2000, scoped, tag = 'scoped mem for output reshape']
    %s2 = smov 3
    %v3 = vld [vmem:[%s0] ss:$8 sm:%s2]
    %vm4 = vcmask 130048
    %5 = vst.msk [vmem:[#allocation0] ss:$8 sm:$0x3] %vm4, %v3
    %s6 = scalar_lea.vmem %s0, 7
    %s7 = smov 3
    %v8 = vld [vmem:[%s6] ss:$8 sm:%s7]
    %9 = vrot.lane.b32.xlu0 %v8, 112
    %v10 = vpop.permute.xlu0 %9
    %vm11 = vcmask 1048448
    %12 = vst.msk [vmem:[#allocation0] ss:$8 sm:$0x3] %vm11, %v10
    %s13 = scalar_lea.vmem %s0, 6
    %s14 = smov 3
    %v15 = vld [vmem:[%s13] ss:$8 sm:%s14]
    %16 = vrot.lane.b32.xlu0 %v15, 96
    %v17 = vpop.permute.xlu0 %16
    %vm18 = vcmask 917248
    %19 = vst.msk [vmem:[#allocation0] ss:$8 sm:$0x3] %vm18, %v17
    %s20 = scalar_lea.vmem %s0, 5
    %s21 = smov 3
    %v22 = vld [vmem:[%s20] ss:$8 sm:%s21]
    %23 = vrot.lane.b32.xlu0 %v22, 80
    %v24 = vpop.permute.xlu0 %23
    %vm25 = vcmask 786048
    %26 = vst.msk [vmem:[#allocation0] ss:$8 sm:$0x3] %vm25, %v24
    %s27 = scalar_lea.vmem %s0, 4
    %s28 = smov 3
    %v29 = vld [vmem:[%s27] ss:$8 sm:%s28]
    %30 = vrot.lane.b32.xlu0 %v29, 64
    %v31 = vpop.permute.xlu0 %30
    %vm32 = vcmask 654848
    %33 = vst.msk [vmem:[#allocation0] ss:$8 sm:$0x3] %vm32, %v31
    %s34 = scalar_lea.vmem %s0, 3
    %s35 = smov 3
    %v36 = vld [vmem:[%s34] ss:$8 sm:%s35]
    %37 = vrot.lane.b32.xlu0 %v36, 48
    %v38 = vpop.permute.xlu0 %37
    %vm39 = vcmask 523648
    %40 = vst.msk [vmem:[#allocation0] ss:$8 sm:$0x3] %vm39, %v38
    %s41 = scalar_lea.vmem %s0, 2
    %s42 = smov 3
    %v43 = vld [vmem:[%s41] ss:$8 sm:%s42]
    %44 = vrot.lane.b32.xlu0 %v43, 32
    %v45 = vpop.permute.xlu0 %44
    %vm46 = vcmask 392448
    %47 = vst.msk [vmem:[#allocation0] ss:$8 sm:$0x3] %vm46, %v45
    %s48 = scalar_lea.vmem %s0, 1
    %s49 = smov 3
    %v50 = vld [vmem:[%s48] ss:$8 sm:%s49]
    %51 = vrot.lane.b32.xlu0 %v50, 16
    %v52 = vpop.permute.xlu0 %51
    %vm53 = vcmask 261248
    %54 = vst.msk [vmem:[#allocation0] ss:$8 sm:$0x3] %vm53, %v52
    %s56 = sshllo.u32 0, 1
    %v58 = vld [vmem:[#allocation0] sm:%s56]
    %s59 = sshllo.u32 0, 1
    %60 = vst [vmem:[%s1] sm:%s59] %v58
    %s61 = scalar_lea.vmem [#allocation0], 8
    %v62 = vld [vmem:[%s61] sm:%s56]
    %s63 = sshllo.u32 0, 1
    %s64 = scalar_lea.vmem %s1, 1
    %65 = vst [vmem:[%s64] sm:%s63] %v62

// kernel: _lambda_.7
$region0: #{_lambda_.7}
  #allocation0 [shape = 'u32[]', space=smem, size = 0x4, offset = 0x4, fixed_abs, tag = 'smem constant byte address 0x4 - core index']
  #allocation1 [shape = 'u32[144,128]{1,0:T(1,128)}', space=vmem, size = 0x12000, scoped, tag = 'internal scratch']
  %s0 = inlined_call_operand.vmem [shape: f32[2,4,2], index: 0, kind: input, shape index: {}]
  %s1 = inlined_call_operand.vmem [shape: f32[2,4,2], index: 1, kind: input, shape index: {}]
  %s2 = inlined_call_operand.vmem [shape: f32[2,256], index: 2, kind: input, shape index: {}]
  %s3 = inlined_call_operand.vmem [shape: f32[1,2,5,1], index: 3, kind: input, shape index: {}]
  %s4 = inlined_call_operand.vmem [shape: f32[2,5,256], index: 4, kind: output, shape index: {}]
  %s5 = sld [smem:[#allocation0]]
  $region49: #{_lambda_.7} parent=0
    _
  %s7 = ssub.s32 1, %s5
  %s8 = scalar_select 0, %s7, %s5
  loop: start=0, step=1, limit=4
  $region2: #{_lambda_.7} parent=0 // loop_pre_header
    _
  $region3: #{_lambda_.7} parent=0 // loop_header
    %s10 = sphi 0, %s14
    %p11 = scmp.ge.s32.totalorder %s10, 4
    %s17 = sphi 0, %s29
    %s18 = sphi 0, %s25
    %s19 = sphi 0, %s17
    %s20 = sphi 0, %s18
    %s21 = sphi 0, %s19
    %s22 = sphi 0, %s20
    %s32 = sphi 0, %s34
    %s35 = sphi 0, %s32
    %s36 = sphi 0, %s35
    %s52 = sphi 0, %s36
    %s58 = sphi 0, %s60
    %s61 = sphi 0, %s58
    %s62 = sphi 0, %s61
    %s78 = sphi 0, %s62
    %s84 = sphi 0, %s86
    %s87 = sphi 0, %s84
    %s88 = sphi 0, %s87
    %s104 = sphi 0, %s88
    %s108 = sphi 0, %s108
    %s110 = sphi 0, %s108
    %s111 = sphi 0, %s110
    %s125 = sphi 0, %s111
    %s133 = sphi 0, %s135
    %s136 = sphi 0, %s133
    %s137 = sphi 0, %s136
    %s153 = sphi 0, %s137
  $region4: #{_lambda_.7} parent=0 // loop_header_branch
    %13 = sbr.rel (%p11) target = $region8
  $region5: #{_lambda_.7} parent=0 // loop_body
    %s15 = ssub.s32 %s10, 1
    %s16 = ssub.s32 %s10, 2
    %s23 = sadd.s32 1, %s18
    %p24 = scmp.ge.s32.totalorder %s23, 1
    %s25 = scalar_select %p24, 0, %s23
    %s26 = sadd.s32 1, %s17
    %s27 = scalar_select %p24, %s26, %s17
    %p28 = scmp.ge.s32.totalorder %s27, 2
    %s29 = scalar_select %p28, 0, %s27
    %s30 = ssub.s32 %s17, %s29
    %p31 = scmp.eq.s32.totalorder %s30, 0
    %s33 = sadd.s32 %s32, 1
    %s34 = scalar_select %p31, %s32, %s33
    %p37 = pneg %p31
    %p38 = scmp.eq.s32.totalorder %s10, 1
    %p39 = por %p37, %p38
    %p40 = scmp.ne.s32.totalorder %s32, %s35
    %p41 = scmp.eq.s32.totalorder %s10, 0
    %p42 = por %p40, %p41
    %p43 = scmp.ne.s32.totalorder %s32, %s35
    %p44 = scmp.eq.s32.totalorder %s15, 1
    %p45 = por %p43, %p44
    %p46 = scmp.ne.s32.totalorder %s35, %s36
    %p47 = scmp.eq.s32.totalorder %s15, 0
    %p48 = por %p46, %p47
    %p49 = scmp.ne.s32.totalorder %s35, %s36
    %p50 = scmp.eq.s32.totalorder %s16, 1
    %p51 = por %p49, %p50
    %p53 = scmp.ne.s32.totalorder %s36, %s52
    %p54 = scmp.eq.s32.totalorder %s16, 0
    %p55 = por %p53, %p54
    %s56 = ssub.s32 %s17, %s29
    %p57 = scmp.eq.s32.totalorder %s56, 0
    %s59 = sadd.s32 %s58, 1
    %s60 = scalar_select %p57, %s58, %s59
    %p63 = pneg %p57
    %p64 = scmp.eq.s32.totalorder %s10, 1
    %p65 = por %p63, %p64
    %p66 = scmp.ne.s32.totalorder %s58, %s61
    %p67 = scmp.eq.s32.totalorder %s10, 0
    %p68 = por %p66, %p67
    %p69 = scmp.ne.s32.totalorder %s58, %s61
    %p70 = scmp.eq.s32.totalorder %s15, 1
    %p71 = por %p69, %p70
    %p72 = scmp.ne.s32.totalorder %s61, %s62
    %p73 = scmp.eq.s32.totalorder %s15, 0
    %p74 = por %p72, %p73
    %p75 = scmp.ne.s32.totalorder %s61, %s62
    %p76 = scmp.eq.s32.totalorder %s16, 1
    %p77 = por %p75, %p76
    %p79 = scmp.ne.s32.totalorder %s62, %s78
    %p80 = scmp.eq.s32.totalorder %s16, 0
    %p81 = por %p79, %p80
    %s82 = ssub.s32 %s18, %s25
    %p83 = scmp.eq.s32.totalorder %s82, 0
    %s85 = sadd.s32 %s84, 1
    %s86 = scalar_select %p83, %s84, %s85
    %p89 = pneg %p83
    %p90 = scmp.eq.s32.totalorder %s10, 1
    %p91 = por %p89, %p90
    %p92 = scmp.ne.s32.totalorder %s84, %s87
    %p93 = scmp.eq.s32.totalorder %s10, 0
    %p94 = por %p92, %p93
    %p95 = scmp.ne.s32.totalorder %s84, %s87
    %p96 = scmp.eq.s32.totalorder %s15, 1
    %p97 = por %p95, %p96
    %p98 = scmp.ne.s32.totalorder %s87, %s88
    %p99 = scmp.eq.s32.totalorder %s15, 0
    %p100 = por %p98, %p99
    %p101 = scmp.ne.s32.totalorder %s87, %s88
    %p102 = scmp.eq.s32.totalorder %s16, 1
    %p103 = por %p101, %p102
    %p105 = scmp.ne.s32.totalorder %s88, %s104
    %p106 = scmp.eq.s32.totalorder %s16, 0
    %p107 = por %p105, %p106
    %s109 = sadd.s32 %s108, 1
    %p112 = scmp.eq.s32.totalorder %s10, 1
    %p113 = scmp.ne.s32.totalorder %s108, %s110
    %p114 = scmp.eq.s32.totalorder %s10, 0
    %p115 = por %p113, %p114
    %p116 = scmp.ne.s32.totalorder %s108, %s110
    %p117 = scmp.eq.s32.totalorder %s15, 1
    %p118 = por %p116, %p117
    %p119 = scmp.ne.s32.totalorder %s110, %s111
    %p120 = scmp.eq.s32.totalorder %s15, 0
    %p121 = por %p119, %p120
    %p122 = scmp.ne.s32.totalorder %s110, %s111
    %p123 = scmp.eq.s32.totalorder %s16, 1
    %p124 = por %p122, %p123
    %p126 = scmp.ne.s32.totalorder %s111, %s125
    %p127 = scmp.eq.s32.totalorder %s16, 0
    %p128 = por %p126, %p127
    %s129 = ssub.s32 %s17, %s29
    %s130 = ssub.s32 %s18, %s25
    %s131 = sor.u32 %s129, %s130
    %p132 = scmp.eq.s32.totalorder %s131, 0
    %s134 = sadd.s32 %s133, 1
    %s135 = scalar_select %p132, %s133, %s134
    %p138 = pneg %p132
    %p139 = scmp.eq.s32.totalorder %s10, 1
    %p140 = por %p138, %p139
    %p141 = scmp.ne.s32.totalorder %s133, %s136
    %p142 = scmp.eq.s32.totalorder %s10, 0
    %p143 = por %p141, %p142
    %p144 = scmp.ne.s32.totalorder %s133, %s136
    %p145 = scmp.eq.s32.totalorder %s15, 1
    %p146 = por %p144, %p145
    %p147 = scmp.ne.s32.totalorder %s136, %s137
    %p148 = scmp.eq.s32.totalorder %s15, 0
    %p149 = por %p147, %p148
    %p150 = scmp.ne.s32.totalorder %s136, %s137
    %p151 = scmp.eq.s32.totalorder %s16, 1
    %p152 = por %p150, %p151
    %p154 = scmp.ne.s32.totalorder %s137, %s153
    %p155 = scmp.eq.s32.totalorder %s16, 0
    %p156 = por %p154, %p155
    %p157 = scmp.le.s32.totalorder 1, %s10
    %p158 = scmp.lt.s32.totalorder %s10, 3
    %p159 = pnand %p157, %p158
    %p160 = pneg %p159
    // Predicated region
    $region9: #{_lambda_.7} parent=5 // pred_check
      _
    $region10: #{_lambda_.7} parent=5 // pred_check_branch
      %162 = sbr.rel (%p159) target = $region12
    $region11: #{_lambda_.7} parent=5 // pred_region
      %s163 = ssub.s32 %s10, 1
      // Predicated region
      $region13: #{_lambda_.7} parent=11 // pred_check
        %p164 = pneg %p100
      $region14: #{_lambda_.7} parent=11 // pred_check_branch
        %166 = sbr.rel (%p164) target = $region16
      $region15: #{_lambda_.7} parent=11 // pred_region
        %s167 = smul.u32 2, %s20
        %p168 = scmp.lt.s32.totalorder %s167, 1
        %s169 = scalar_select %p168, %s167, 1
        %s170 = smul.addr %s169, 2
        %s171 = scalar_lea.vmem %s2, %s170
        %s172 = smul.u32 2, %s20
      $region16: #{_lambda_.7} parent=11 // pred_fallthru
        _
      // Predicated region
      $region17: #{_lambda_.7} parent=11 // pred_check
        %p173 = pneg %p121
      $region18: #{_lambda_.7} parent=11 // pred_check_branch
        %175 = sbr.rel (%p173) target = $region20
      $region19: #{_lambda_.7} parent=11 // pred_region
        _
      $region20: #{_lambda_.7} parent=11 // pred_fallthru
        _
    $region12: #{_lambda_.7} parent=5 // pred_fallthru
      _
    %p176 = scmp.lt.s32.totalorder %s10, 2
    // Predicated region
    $region21: #{_lambda_.7} parent=5 // pred_check
      %p177 = pneg %p176
    $region22: #{_lambda_.7} parent=5 // pred_check_branch
      %179 = sbr.rel (%p177) target = $region24
    $region23: #{_lambda_.7} parent=5 // pred_region
      // Predicated region
      $region25: #{_lambda_.7} parent=23 // pred_check
        %p180 = pneg %p42
      $region26: #{_lambda_.7} parent=23 // pred_check_branch
        %182 = sbr.rel (%p180) target = $region28
      $region27: #{_lambda_.7} parent=23 // pred_region
        %p183 = scmp.lt.s32.totalorder %s17, 1
        %s184 = scalar_select %p183, %s17, 1
        %s185 = smul.addr %s184, 4
        %s186 = scalar_lea.vmem %s0, %s185
      $region28: #{_lambda_.7} parent=23 // pred_fallthru
        _
      // Predicated region
      $region29: #{_lambda_.7} parent=23 // pred_check
        %p187 = pneg %p68
      $region30: #{_lambda_.7} parent=23 // pred_check_branch
        %189 = sbr.rel (%p187) target = $region32
      $region31: #{_lambda_.7} parent=23 // pred_region
        %p190 = scmp.lt.s32.totalorder %s17, 1
        %s191 = scalar_select %p190, %s17, 1
        %s192 = smul.addr %s191, 4
        %s193 = scalar_lea.vmem %s1, %s192
      $region32: #{_lambda_.7} parent=23 // pred_fallthru
        _
    $region24: #{_lambda_.7} parent=5 // pred_fallthru
      _
    %p194 = scmp.le.s32.totalorder 1, %s10
    %p195 = scmp.lt.s32.totalorder %s10, 3
    %p196 = pnand %p194, %p195
    %p197 = pneg %p196
    // Predicated region
    $region33: #{_lambda_.7} parent=5 // pred_check
      _
    $region34: #{_lambda_.7} parent=5 // pred_check_branch
      %199 = sbr.rel (%p196) target = $region36
    $region35: #{_lambda_.7} parent=5 // pred_region
      %s200 = ssub.s32 %s10, 1
      %p201 = scmp.lt.s32.totalorder %s19, 1
      %s202 = scalar_select %p201, %s19, 1
      %s203 = smul.addr %s202, 4
      %s204 = scalar_lea.vmem %s0, %s203
      %p205 = pneg %p48
      %p206 = pneg %p45
      %p207 = scmp.lt.s32.totalorder %s19, 1
      %s208 = scalar_select %p207, %s19, 1
      %s209 = smul.addr %s208, 4
      %s210 = scalar_lea.vmem %s1, %s209
      %p211 = pneg %p74
      %p212 = pneg %p71
      %s213 = smul.u32 2, %s20
      %p214 = scmp.lt.s32.totalorder %s213, 1
      %s215 = scalar_select %p214, %s213, 1
      %s216 = smul.addr %s215, 2
      %s217 = scalar_lea.vmem %s2, %s216
      %p218 = pneg %p100
      %p219 = pneg %p97
      %p220 = pneg %p121
      %p221 = pneg %p118
      %p222 = pneg %p149
      %p223 = pneg %p146
      %s224 = smul.u32 2, %s20
      %p225 = scmp.lt.s32.totalorder %s19, 1
      %s226 = scalar_select %p225, %s19, 1
      %p227 = scmp.lt.s32.totalorder %s224, 1
      %s228 = scalar_select %p227, %s224, 1
      %s229 = smul.addr %s226, 2
      %s230 = sadd.s32 %s228, %s229
      %s231 = smul.addr %s230, 8
      %s232 = scalar_lea.vmem %s4, %s231
      %p233 = scmp.lt.s32.totalorder %s19, 1
      %s234 = scalar_select %p233, %s19, 1
      %s235 = smul.addr %s234, 4
      %s236 = scalar_lea.vmem %s0, %s235
      %p237 = scmp.lt.s32.totalorder %s19, 1
      %s238 = scalar_select %p237, %s19, 1
      %s239 = smul.addr %s238, 4
      %s240 = scalar_lea.vmem %s1, %s239
      %s241 = smul.u32 2, %s20
      %p242 = scmp.lt.s32.totalorder %s241, 1
      %s243 = scalar_select %p242, %s241, 1
      %s244 = smul.addr %s243, 2
      %s245 = scalar_lea.vmem %s2, %s244
      %s246 = smul.u32 2, %s20
      %s247 = smul.u32 2, %s20
      %p248 = scmp.lt.s32.totalorder %s19, 1
      %s249 = scalar_select %p248, %s19, 1
      %p250 = scmp.lt.s32.totalorder %s247, 1
      %s251 = scalar_select %p250, %s247, 1
      %s252 = smul.addr %s249, 2
      %s253 = sadd.s32 %s251, %s252
      %s254 = smul.addr %s253, 8
      %s255 = scalar_lea.vmem %s4, %s254
      %s256 = smul.u32 2, %s20
      %v257 = vld [vmem:[%s245] ss:$2 sm:$0x3]
      %s258 = scalar_lea.vmem %s245, 1
      %v259 = vld [vmem:[%s258] ss:$2 sm:$0x3]
      %v260 = vld [vmem:[%s236] sm:$0xf]
      %v262 = vlaneseq
      %v263 = vshrl.u32 %v262, 7
      %v264 = vsub.s32 0, %v263
      %v265 = vrot.slane %v257, %v264
      %v266 = vlaneseq
      %v267 = vshrl.u32 %v266, 7
      %v268 = vsub.s32 1, %v267
      %v269 = vrot.slane %v257, %v268
      %273 = vset.pattern.permute.xlu0 0
      %274 = vperm.xlu0 %273, %v260
      %v275 = vpop.permute.xlu0 %274
      %v277 = vsub.f32 %v265, %v275
      %v278 = vsub.f32 %v269, %v275
      %v280 = vlaneseq
      %v281 = vshrl.u32 %v280, 7
      %v282 = vsub.s32 0, %v281
      %v283 = vrot.slane %v259, %v282
      %v284 = vlaneseq
      %v285 = vshrl.u32 %v284, 7
      %v286 = vsub.s32 1, %v285
      %v287 = vrot.slane %v259, %v286
      %290 = vset.pattern.permute.xlu0 1
      %291 = vperm.xlu0 %290, %v260
      %v292 = vpop.permute.xlu0 %291
      %v294 = vsub.f32 %v283, %v292
      %v295 = vsub.f32 %v287, %v292
      %v296 = vmul.f32 %v277, %v277
      %v297 = vmul.f32 %v278, %v278
      %v298 = vmul.f32 %v294, %v294
      %v299 = vmul.f32 %v295, %v295
      %v300 = vadd.f32 %v296, %v298
      %v301 = vadd.f32 %v297, %v299
      %v302 = vmul.f32 %v300, -0.5
      %v303 = vmul.f32 %v301, -0.5
      %v304 = vmul.f32 %v302, 100.0
      %v305 = vmul.f32 %v303, 100.0
      %v306 = vmul.f32 %v304, 1.442695
      %v307 = vpow.pop %v306
      %v308 = vmul.f32 %v305, 1.442695
      %v309 = vpow.pop %v308
      %v310 = vmul.f32 %v307, 0.01
      %v311 = vmul.f32 %v309, 0.01
      %v314 = vrot.slane %v310, 7
      %v315 = vrot.slane %v311, 7
      %vm318 = vcmask 1040384
      %v319 = vsel %vm318, 0.0, %v314
      %v320 = vsel %vm318, 0.0, %v315
      %v321 = vld [vmem:[%s3] sm:$0x1f]
      %323 = vset.pattern.permute.xlu0 0
      %324 = vperm.xlu0 %323, %v321
      %v325 = vpop.permute.xlu0 %324
      %v327 = vmul.f32 %v319, %v325
      %v328 = vmul.f32 %v320, %v325
      %s329 = scalar_lea.vmem %s3, 8
      %v330 = vld [vmem:[%s329] sm:$0x1f]
      %332 = vset.pattern.permute.xlu0 0
      %333 = vperm.xlu0 %332, %v330
      %v334 = vpop.permute.xlu0 %333
      %v336 = vadd.f32 %v327, %v334
      %v337 = vadd.f32 %v328, %v334
      %v338 = vmax.f32 %v336, 0.0
      %v339 = vmax.f32 %v337, 0.0
      %340 = vst [vmem:[%s255] sm:$0x1f] %v338
      %341 = vst [vmem:[%s255 + $0x8] sm:$0x1f] %v339
      %s342 = smul.u32 2, %s20
      %p343 = scmp.lt.s32.totalorder %s19, 1
      %s344 = scalar_select %p343, %s19, 1
      %p345 = scmp.lt.s32.totalorder %s342, 1
      %s346 = scalar_select %p345, %s342, 1
      %s347 = smul.addr %s344, 2
      %s348 = sadd.s32 %s346, %s347
      %s349 = smul.addr %s348, 8
      %s350 = scalar_lea.vmem %s4, %s349
      // Predicated region
      $region37: #{_lambda_.7} parent=35 // pred_check
        %p351 = pneg %p146
      $region38: #{_lambda_.7} parent=35 // pred_check_branch
        %353 = sbr.rel (%p351) target = $region40
      $region39: #{_lambda_.7} parent=35 // pred_region
        %s354 = smul.u32 2, %s20
      $region40: #{_lambda_.7} parent=35 // pred_fallthru
        _
    $region36: #{_lambda_.7} parent=5 // pred_fallthru
      _
    %p355 = scmp.le.s32.totalorder 2, %s10
    // Predicated region
    $region41: #{_lambda_.7} parent=5 // pred_check
      %p356 = pneg %p355
    $region42: #{_lambda_.7} parent=5 // pred_check_branch
      %358 = sbr.rel (%p356) target = $region44
    $region43: #{_lambda_.7} parent=5 // pred_region
      %s359 = ssub.s32 %s10, 2
      // Predicated region
      $region45: #{_lambda_.7} parent=43 // pred_check
        %p360 = pneg %p152
      $region46: #{_lambda_.7} parent=43 // pred_check_branch
        %362 = sbr.rel (%p360) target = $region48
      $region47: #{_lambda_.7} parent=43 // pred_region
        %s363 = smul.u32 2, %s22
        %p364 = scmp.lt.s32.totalorder %s21, 1
        %s365 = scalar_select %p364, %s21, 1
        %p366 = scmp.lt.s32.totalorder %s363, 1
        %s367 = scalar_select %p366, %s363, 1
        %s368 = smul.addr %s365, 2
        %s369 = sadd.s32 %s367, %s368
        %s370 = smul.addr %s369, 8
        %s371 = scalar_lea.vmem %s4, %s370
      $region48: #{_lambda_.7} parent=43 // pred_fallthru
        _
    $region44: #{_lambda_.7} parent=5 // pred_fallthru
      _
  $region6: #{_lambda_.7} parent=0 // loop_footer
    %s14 = sadd.s32 1, %s10
  $region7: #{_lambda_.7} parent=0 // loop_footer_branch
    %9 = sbr.rel target = $region3
  $region8: #{_lambda_.7} parent=0 // loop_exit
    _

// kernel: _lambda_.8
$region0: #{_lambda_.8}
  #allocation0 [shape = 'u32[]', space=smem, size = 0x4, offset = 0x4, fixed_abs, tag = 'smem constant byte address 0x4 - core index']
  #allocation1 [shape = 'u32[144,128]{1,0:T(1,128)}', space=vmem, size = 0x12000, scoped, tag = 'internal scratch']
  %s0 = inlined_call_operand.vmem [shape: f32[2,8,320], index: 0, kind: input, shape index: {}]
  %s1 = inlined_call_operand.vmem [shape: bf16[9,16,8], index: 1, kind: input, shape index: {}]
  %s2 = inlined_call_operand.vmem [shape: f32[16,1], index: 2, kind: input, shape index: {}]
  %s3 = inlined_call_operand.vmem [shape: f32[2,256], index: 3, kind: input, shape index: {}]
  %s4 = inlined_call_operand.vmem [shape: f32[2,16,256], index: 4, kind: output, shape index: {}]
  %s5 = sld [smem:[#allocation0]]
  $region49: #{_lambda_.8} parent=0
    _
  %s7 = ssub.s32 1, %s5
  %s8 = scalar_select 0, %s7, %s5
  loop: start=0, step=1, limit=4
  $region2: #{_lambda_.8} parent=0 // loop_pre_header
    _
  $region3: #{_lambda_.8} parent=0 // loop_header
    %s10 = sphi 0, %s14
    %p11 = scmp.ge.s32.totalorder %s10, 4
    %s20 = sphi 0, %s22
    %s23 = sphi 0, %s20
    %s24 = sphi 0, %s23
    %s40 = sphi 0, %s24
    %s44 = sphi 0, %s44
    %s46 = sphi 0, %s44
    %s47 = sphi 0, %s46
    %s61 = sphi 0, %s47
    %s65 = sphi 0, %s65
    %s67 = sphi 0, %s65
    %s68 = sphi 0, %s67
    %s82 = sphi 0, %s68
    %s86 = sphi 0, %s86
    %s88 = sphi 0, %s86
    %s89 = sphi 0, %s88
    %s103 = sphi 0, %s89
    %s109 = sphi 0, %s111
    %s112 = sphi 0, %s109
    %s113 = sphi 0, %s112
    %s129 = sphi 0, %s113
  $region4: #{_lambda_.8} parent=0 // loop_header_branch
    %13 = sbr.rel (%p11) target = $region8
  $region5: #{_lambda_.8} parent=0 // loop_body
    %s15 = ssub.s32 %s10, 1
    %s16 = ssub.s32 %s10, 2
    %s17 = sadd.s32 %s10, 1
    %s18 = ssub.s32 %s10, %s17
    %p19 = scmp.eq.s32.totalorder %s18, 0
    %s21 = sadd.s32 %s20, 1
    %s22 = scalar_select %p19, %s20, %s21
    %p25 = pneg %p19
    %p26 = scmp.eq.s32.totalorder %s10, 1
    %p27 = por %p25, %p26
    %p28 = scmp.ne.s32.totalorder %s20, %s23
    %p29 = scmp.eq.s32.totalorder %s10, 0
    %p30 = por %p28, %p29
    %p31 = scmp.ne.s32.totalorder %s20, %s23
    %p32 = scmp.eq.s32.totalorder %s15, 1
    %p33 = por %p31, %p32
    %p34 = scmp.ne.s32.totalorder %s23, %s24
    %p35 = scmp.eq.s32.totalorder %s15, 0
    %p36 = por %p34, %p35
    %p37 = scmp.ne.s32.totalorder %s23, %s24
    %p38 = scmp.eq.s32.totalorder %s16, 1
    %p39 = por %p37, %p38
    %p41 = scmp.ne.s32.totalorder %s24, %s40
    %p42 = scmp.eq.s32.totalorder %s16, 0
    %p43 = por %p41, %p42
    %s45 = sadd.s32 %s44, 1
    %p48 = scmp.eq.s32.totalorder %s10, 1
    %p49 = scmp.ne.s32.totalorder %s44, %s46
    %p50 = scmp.eq.s32.totalorder %s10, 0
    %p51 = por %p49, %p50
    %p52 = scmp.ne.s32.totalorder %s44, %s46
    %p53 = scmp.eq.s32.totalorder %s15, 1
    %p54 = por %p52, %p53
    %p55 = scmp.ne.s32.totalorder %s46, %s47
    %p56 = scmp.eq.s32.totalorder %s15, 0
    %p57 = por %p55, %p56
    %p58 = scmp.ne.s32.totalorder %s46, %s47
    %p59 = scmp.eq.s32.totalorder %s16, 1
    %p60 = por %p58, %p59
    %p62 = scmp.ne.s32.totalorder %s47, %s61
    %p63 = scmp.eq.s32.totalorder %s16, 0
    %p64 = por %p62, %p63
    %s66 = sadd.s32 %s65, 1
    %p69 = scmp.eq.s32.totalorder %s10, 1
    %p70 = scmp.ne.s32.totalorder %s65, %s67
    %p71 = scmp.eq.s32.totalorder %s10, 0
    %p72 = por %p70, %p71
    %p73 = scmp.ne.s32.totalorder %s65, %s67
    %p74 = scmp.eq.s32.totalorder %s15, 1
    %p75 = por %p73, %p74
    %p76 = scmp.ne.s32.totalorder %s67, %s68
    %p77 = scmp.eq.s32.totalorder %s15, 0
    %p78 = por %p76, %p77
    %p79 = scmp.ne.s32.totalorder %s67, %s68
    %p80 = scmp.eq.s32.totalorder %s16, 1
    %p81 = por %p79, %p80
    %p83 = scmp.ne.s32.totalorder %s68, %s82
    %p84 = scmp.eq.s32.totalorder %s16, 0
    %p85 = por %p83, %p84
    %s87 = sadd.s32 %s86, 1
    %p90 = scmp.eq.s32.totalorder %s10, 1
    %p91 = scmp.ne.s32.totalorder %s86, %s88
    %p92 = scmp.eq.s32.totalorder %s10, 0
    %p93 = por %p91, %p92
    %p94 = scmp.ne.s32.totalorder %s86, %s88
    %p95 = scmp.eq.s32.totalorder %s15, 1
    %p96 = por %p94, %p95
    %p97 = scmp.ne.s32.totalorder %s88, %s89
    %p98 = scmp.eq.s32.totalorder %s15, 0
    %p99 = por %p97, %p98
    %p100 = scmp.ne.s32.totalorder %s88, %s89
    %p101 = scmp.eq.s32.totalorder %s16, 1
    %p102 = por %p100, %p101
    %p104 = scmp.ne.s32.totalorder %s89, %s103
    %p105 = scmp.eq.s32.totalorder %s16, 0
    %p106 = por %p104, %p105
    %s107 = ssub.s32 %s10, %s17
    %p108 = scmp.eq.s32.totalorder %s107, 0
    %s110 = sadd.s32 %s109, 1
    %s111 = scalar_select %p108, %s109, %s110
    %p114 = pneg %p108
    %p115 = scmp.eq.s32.totalorder %s10, 1
    %p116 = por %p114, %p115
    %p117 = scmp.ne.s32.totalorder %s109, %s112
    %p118 = scmp.eq.s32.totalorder %s10, 0
    %p119 = por %p117, %p118
    %p120 = scmp.ne.s32.totalorder %s109, %s112
    %p121 = scmp.eq.s32.totalorder %s15, 1
    %p122 = por %p120, %p121
    %p123 = scmp.ne.s32.totalorder %s112, %s113
    %p124 = scmp.eq.s32.totalorder %s15, 0
    %p125 = por %p123, %p124
    %p126 = scmp.ne.s32.totalorder %s112, %s113
    %p127 = scmp.eq.s32.totalorder %s16, 1
    %p128 = por %p126, %p127
    %p130 = scmp.ne.s32.totalorder %s113, %s129
    %p131 = scmp.eq.s32.totalorder %s16, 0
    %p132 = por %p130, %p131
    %p133 = scmp.le.s32.totalorder 1, %s10
    %p134 = scmp.lt.s32.totalorder %s10, 3
    %p135 = pnand %p133, %p134
    %p136 = pneg %p135
    // Predicated region
    $region9: #{_lambda_.8} parent=5 // pred_check
      _
    $region10: #{_lambda_.8} parent=5 // pred_check_branch
      %138 = sbr.rel (%p135) target = $region12
    $region11: #{_lambda_.8} parent=5 // pred_region
      %s139 = ssub.s32 %s10, 1
      // Predicated region
      $region13: #{_lambda_.8} parent=11 // pred_check
        %p140 = pneg %p57
      $region14: #{_lambda_.8} parent=11 // pred_check_branch
        %142 = sbr.rel (%p140) target = $region16
      $region15: #{_lambda_.8} parent=11 // pred_region
        _
      $region16: #{_lambda_.8} parent=11 // pred_fallthru
        _
      // Predicated region
      $region17: #{_lambda_.8} parent=11 // pred_check
        %p143 = pneg %p78
      $region18: #{_lambda_.8} parent=11 // pred_check_branch
        %145 = sbr.rel (%p143) target = $region20
      $region19: #{_lambda_.8} parent=11 // pred_region
        _
      $region20: #{_lambda_.8} parent=11 // pred_fallthru
        _
      // Predicated region
      $region21: #{_lambda_.8} parent=11 // pred_check
        %p146 = pneg %p99
      $region22: #{_lambda_.8} parent=11 // pred_check_branch
        %148 = sbr.rel (%p146) target = $region24
      $region23: #{_lambda_.8} parent=11 // pred_region
        _
      $region24: #{_lambda_.8} parent=11 // pred_fallthru
        _
    $region12: #{_lambda_.8} parent=5 // pred_fallthru
      _
    %p149 = scmp.lt.s32.totalorder %s10, 2
    // Predicated region
    $region25: #{_lambda_.8} parent=5 // pred_check
      %p150 = pneg %p149
    $region26: #{_lambda_.8} parent=5 // pred_check_branch
      %152 = sbr.rel (%p150) target = $region28
    $region27: #{_lambda_.8} parent=5 // pred_region
      // Predicated region
      $region29: #{_lambda_.8} parent=27 // pred_check
        %p153 = pneg %p30
      $region30: #{_lambda_.8} parent=27 // pred_check_branch
        %155 = sbr.rel (%p153) target = $region32
      $region31: #{_lambda_.8} parent=27 // pred_region
        %p156 = scmp.lt.s32.totalorder %s10, 1
        %s157 = scalar_select %p156, %s10, 1
        %s158 = smul.addr %s157, 3
        %s159 = smul.addr %s158, 8
        %s160 = scalar_lea.vmem %s0, %s159
      $region32: #{_lambda_.8} parent=27 // pred_fallthru
        _
    $region28: #{_lambda_.8} parent=5 // pred_fallthru
      _
    %p161 = scmp.le.s32.totalorder 1, %s10
    %p162 = scmp.lt.s32.totalorder %s10, 3
    %p163 = pnand %p161, %p162
    %p164 = pneg %p163
    // Predicated region
    $region33: #{_lambda_.8} parent=5 // pred_check
      _
    $region34: #{_lambda_.8} parent=5 // pred_check_branch
      %166 = sbr.rel (%p163) target = $region36
    $region35: #{_lambda_.8} parent=5 // pred_region
      %s167 = ssub.s32 %s10, 1
      %p168 = scmp.lt.s32.totalorder %s15, 1
      %s169 = scalar_select %p168, %s15, 1
      %s170 = smul.addr %s169, 3
      %s171 = smul.addr %s170, 8
      %s172 = scalar_lea.vmem %s0, %s171
      %p173 = pneg %p36
      %p174 = pneg %p33
      %p175 = pneg %p57
      %p176 = pneg %p54
      %p177 = pneg %p78
      %p178 = pneg %p75
      %p179 = pneg %p99
      %p180 = pneg %p96
      %p181 = pneg %p125
      %p182 = pneg %p122
      %p183 = scmp.lt.s32.totalorder %s15, 1
      %s184 = scalar_select %p183, %s15, 1
      %s185 = smul.addr %s184, 4
      %s186 = smul.addr %s185, 8
      %s187 = scalar_lea.vmem %s4, %s186
      %p188 = scmp.lt.s32.totalorder %s15, 1
      %s189 = scalar_select %p188, %s15, 1
      %s190 = smul.addr %s189, 3
      %s191 = smul.addr %s190, 8
      %s192 = scalar_lea.vmem %s0, %s191
      %p193 = scmp.lt.s32.totalorder %s15, 1
      %s194 = scalar_select %p193, %s15, 1
      %s195 = smul.addr %s194, 4
      %s196 = smul.addr %s195, 8
      %s197 = scalar_lea.vmem %s4, %s196
      %v199 = vld [vmem:[%s192] sm:$0xff]
      %v200 = vld [vmem:[%s192 + $0x8] sm:$0xff]
      %v201 = vld [vmem:[%s192 + $0x10] sm:$0xff]
      %v202 = vld [vmem:[%s3] ss:$2 sm:$0x3]
      %v204 = vlaneseq
      %v205 = vshrl.u32 %v204, 7
      %v206 = vsub.s32 0, %v205
      %v207 = vrot.slane %v202, %v206
      %v208 = vlaneseq
      %v209 = vshrl.u32 %v208, 7
      %v210 = vsub.s32 1, %v209
      %v211 = vrot.slane %v202, %v210
      %212 = vrot.lane.b32.xlu0 %v207, 15
      %v213 = vpop.permute.xlu0 %212
      %214 = vrot.lane.b32.xlu0 %v211, 15
      %v215 = vpop.permute.xlu0 %214
      %vm216 = vcmask 121856
      %v217 = vsel %vm216, %v213, %v215
      %v221 = vmul.f32 %v199, %v213
      %v222 = vmul.f32 %v200, %v217
      %v223 = vmul.f32 %v201, %v215
      %v224 = vld [vmem:[%s1] sm:$0xf]
      %v225 = vld [vmem:[%s1 + $0x4] sm:$0xf]
      %v226 = vpack.c.bf16 %v221, %v221
      %v227 = vpack.c.bf16 %v222, %v222
      %v228 = vpack.c.bf16 %v223, %v223
      %s229 = scalar_lea.vmem %s1, 8
      %v230 = vld [vmem:[%s229] sm:$0xf]
      %v231 = vld [vmem:[%s229 + $0x4] sm:$0xf]
      %v232 = vpack.c.bf16 %v199, %v199
      %v233 = vpack.c.bf16 %v200, %v200
      %v234 = vpack.c.bf16 %v201, %v201
      %v237 = vunpack.c.l.b16 %v230
      %v238 = vunpack.c.l.b16 %v231
      %v239 = vpack.c.b16 %v238, %v237
      %243 = vrot.lane.b32.xlu0 %v232, 112
      %v244 = vpop.permute.xlu0 %243
      %245 = vrot.lane.b32.xlu0 %v233, 112
      %v246 = vpop.permute.xlu0 %245
      %247 = vrot.lane.b32.xlu0 %v234, 112
      %v248 = vpop.permute.xlu0 %247
      %vm249 = vcmask 916480
      %v250 = vsel %vm249, %v244, %v246
      %v251 = vsel %vm249, %v246, %v248
      %vm252 = vcmask 64512
      %v254 = vsel %vm252, %v239, 0
      %vm256 = vcmask 1043456
      %v258 = vsel %vm256, %v250, 0
      %v261 = vsel %vm256, %v251, 0
      %263 = vmatprep.subr.bf16.mxu0 %v261
      %264 = vmatpush1.bf16.msra.mxu0 %v258
      %265 = vmatprep.subr.bf16.mxu0 0
      %266 = vmatpush1.bf16.msra.mxu0 0
      %267 = vmatprep.subr.bf16.mxu0 0
      %268 = vmatpush1.bf16.msra.mxu0 0
      %269 = vmatprep.subr.bf16.mxu0 0
      %270 = vmatpush1.bf16.msra.mxu0 0
      %271 = vmatprep.subr.bf16.mxu0 0
      %272 = vmatpush1.bf16.msra.mxu0 0
      %273 = vmatprep.subr.bf16.mxu0 0
      %274 = vmatpush1.bf16.msra.mxu0 0
      %275 = vmatprep.subr.bf16.mxu0 0
      %276 = vmatpush1.bf16.msra.mxu0 0
      %277 = vmatprep.subr.bf16.mxu0 0
      %278 = vmatpush1.bf16.msra.mxu0 0
      %279 = vmatprep.subr.bf16.mxu0 0
      %280 = vmatpush1.bf16.msra.mxu0 0
      %281 = vmatprep.subr.bf16.mxu0 0
      %282 = vmatpush1.bf16.msra.mxu0 0
      %283 = vmatprep.subr.bf16.mxu0 0
      %284 = vmatpush1.bf16.msra.mxu0 0
      %285 = vmatprep.subr.bf16.mxu0 0
      %286 = vmatpush1.bf16.msra.mxu0 0
      %287 = vmatprep.subr.bf16.mxu0 0
      %288 = vmatpush1.bf16.msra.mxu0 0
      %289 = vmatprep.subr.bf16.mxu0 0
      %290 = vmatpush1.bf16.msra.mxu0 0
      %291 = vmatprep.subr.bf16.mxu0 0
      %292 = vmatpush1.bf16.msra.mxu0 0
      %293 = vmatprep.subr.bf16.mxu0 0
      %294 = vmatpush1.bf16.msra.mxu0 0
      %295 = vmatprep.mubr.bf16.mxu0 0
      %296 = vmatmul.mubr.bf16.gmra.mrb[0].mxu0 %v254
      %v297 = vpop.f32.mrb[0].mxu0
      %v298 = vadd.f32 0.0, %v297
      %v299 = vpop.f32.mrb[0].mxu0
      %v300 = vadd.f32 0.0, %v299
      %v301 = vpop.f32.mrb[0].mxu0
      %v302 = vadd.f32 0.0, %v301
      %v303 = vpop.f32.mrb[0].mxu0
      %v304 = vadd.f32 0.0, %v303
      %305 = vdwg.mxu0
      %v308 = vunpack.c.l.b16 %v224
      %v309 = vunpack.c.l.b16 %v225
      %v310 = vpack.c.b16 %v309, %v308
      %314 = vrot.lane.b32.xlu0 %v226, 113
      %v315 = vpop.permute.xlu0 %314
      %316 = vrot.lane.b32.xlu0 %v227, 113
      %v317 = vpop.permute.xlu0 %316
      %318 = vrot.lane.b32.xlu0 %v228, 113
      %v319 = vpop.permute.xlu0 %318
      %vm320 = vcmask 924672
      %v321 = vsel %vm320, %v315, %v317
      %v322 = vsel %vm320, %v317, %v319
      %v324 = vsel %vm252, %v310, 0
      %v327 = vsel %vm256, %v321, 0
      %v330 = vsel %vm256, %v322, 0
      %332 = vmatprep.subr.bf16.mxu0 %v330
      %333 = vmatpush1.bf16.msra.mxu0 %v327
      %334 = vmatprep.subr.bf16.mxu0 0
      %335 = vmatpush1.bf16.msra.mxu0 0
      %336 = vmatprep.subr.bf16.mxu0 0
      %337 = vmatpush1.bf16.msra.mxu0 0
      %338 = vmatprep.subr.bf16.mxu0 0
      %339 = vmatpush1.bf16.msra.mxu0 0
      %340 = vmatprep.subr.bf16.mxu0 0
      %341 = vmatpush1.bf16.msra.mxu0 0
      %342 = vmatprep.subr.bf16.mxu0 0
      %343 = vmatpush1.bf16.msra.mxu0 0
      %344 = vmatprep.subr.bf16.mxu0 0
      %345 = vmatpush1.bf16.msra.mxu0 0
      %346 = vmatprep.subr.bf16.mxu0 0
      %347 = vmatpush1.bf16.msra.mxu0 0
      %348 = vmatprep.subr.bf16.mxu0 0
      %349 = vmatpush1.bf16.msra.mxu0 0
      %350 = vmatprep.subr.bf16.mxu0 0
      %351 = vmatpush1.bf16.msra.mxu0 0
      %352 = vmatprep.subr.bf16.mxu0 0
      %353 = vmatpush1.bf16.msra.mxu0 0
      %354 = vmatprep.subr.bf16.mxu0 0
      %355 = vmatpush1.bf16.msra.mxu0 0
      %356 = vmatprep.subr.bf16.mxu0 0
      %357 = vmatpush1.bf16.msra.mxu0 0
      %358 = vmatprep.subr.bf16.mxu0 0
      %359 = vmatpush1.bf16.msra.mxu0 0
      %360 = vmatprep.subr.bf16.mxu0 0
      %361 = vmatpush1.bf16.msra.mxu0 0
      %362 = vmatprep.subr.bf16.mxu0 0
      %363 = vmatpush1.bf16.msra.mxu0 0
      %364 = vmatprep.mubr.bf16.mxu0 0
      %365 = vmatmul.mubr.bf16.gmra.mrb[0].mxu0 %v324
      %v366 = vpop.f32.mrb[0].mxu0
      %v367 = vadd.f32 %v298, %v366
      %v368 = vpop.f32.mrb[0].mxu0
      %v369 = vadd.f32 %v300, %v368
      %v370 = vpop.f32.mrb[0].mxu0
      %v371 = vadd.f32 %v302, %v370
      %v372 = vpop.f32.mrb[0].mxu0
      %v373 = vadd.f32 %v304, %v372
      %374 = vdwg.mxu0
      %s375 = scalar_lea.vmem %s3, 1
      %v376 = vld [vmem:[%s375] ss:$2 sm:$0x3]
      %v378 = vlaneseq
      %v379 = vshrl.u32 %v378, 7
      %v380 = vsub.s32 0, %v379
      %v381 = vrot.slane %v376, %v380
      %v382 = vlaneseq
      %v383 = vshrl.u32 %v382, 7
      %v384 = vsub.s32 1, %v383
      %v385 = vrot.slane %v376, %v384
      %386 = vrot.lane.b32.xlu0 %v381, 17
      %v387 = vpop.permute.xlu0 %386
      %388 = vrot.lane.b32.xlu0 %v385, 17
      %v389 = vpop.permute.xlu0 %388
      %vm390 = vcmask 138240
      %v391 = vsel %vm390, %v387, %v389
      %v395 = vmul.f32 %v199, %v387
      %v396 = vmul.f32 %v200, %v391
      %v397 = vmul.f32 %v201, %v389
      %s398 = scalar_lea.vmem %s1, 16
      %v399 = vld [vmem:[%s398] sm:$0xf]
      %v400 = vld [vmem:[%s398 + $0x4] sm:$0xf]
      %v401 = vpack.c.bf16 %v395, %v395
      %v402 = vpack.c.bf16 %v396, %v396
      %v403 = vpack.c.bf16 %v397, %v397
      %v406 = vunpack.c.l.b16 %v399
      %v407 = vunpack.c.l.b16 %v400
      %v408 = vpack.c.b16 %v407, %v406
      %412 = vrot.lane.b32.xlu0 %v401, 111
      %v413 = vpop.permute.xlu0 %412
      %414 = vrot.lane.b32.xlu0 %v402, 111
      %v415 = vpop.permute.xlu0 %414
      %416 = vrot.lane.b32.xlu0 %v403, 111
      %v417 = vpop.permute.xlu0 %416
      %vm418 = vcmask 908288
      %v419 = vsel %vm418, %v413, %v415
      %v420 = vsel %vm418, %v415, %v417
      %v422 = vsel %vm252, %v408, 0
      %v425 = vsel %vm256, %v419, 0
      %v428 = vsel %vm256, %v420, 0
      %430 = vmatprep.subr.bf16.mxu0 %v428
      %431 = vmatpush1.bf16.msra.mxu0 %v425
      %432 = vmatprep.subr.bf16.mxu0 0
      %433 = vmatpush1.bf16.msra.mxu0 0
      %434 = vmatprep.subr.bf16.mxu0 0
      %435 = vmatpush1.bf16.msra.mxu0 0
      %436 = vmatprep.subr.bf16.mxu0 0
      %437 = vmatpush1.bf16.msra.mxu0 0
      %438 = vmatprep.subr.bf16.mxu0 0
      %439 = vmatpush1.bf16.msra.mxu0 0
      %440 = vmatprep.subr.bf16.mxu0 0
      %441 = vmatpush1.bf16.msra.mxu0 0
      %442 = vmatprep.subr.bf16.mxu0 0
      %443 = vmatpush1.bf16.msra.mxu0 0
      %444 = vmatprep.subr.bf16.mxu0 0
      %445 = vmatpush1.bf16.msra.mxu0 0
      %446 = vmatprep.subr.bf16.mxu0 0
      %447 = vmatpush1.bf16.msra.mxu0 0
      %448 = vmatprep.subr.bf16.mxu0 0
      %449 = vmatpush1.bf16.msra.mxu0 0
      %450 = vmatprep.subr.bf16.mxu0 0
      %451 = vmatpush1.bf16.msra.mxu0 0
      %452 = vmatprep.subr.bf16.mxu0 0
      %453 = vmatpush1.bf16.msra.mxu0 0
      %454 = vmatprep.subr.bf16.mxu0 0
      %455 = vmatpush1.bf16.msra.mxu0 0
      %456 = vmatprep.subr.bf16.mxu0 0
      %457 = vmatpush1.bf16.msra.mxu0 0
      %458 = vmatprep.subr.bf16.mxu0 0
      %459 = vmatpush1.bf16.msra.mxu0 0
      %460 = vmatprep.subr.bf16.mxu0 0
      %461 = vmatpush1.bf16.msra.mxu0 0
      %462 = vmatprep.mubr.bf16.mxu0 0
      %463 = vmatmul.mubr.bf16.gmra.mrb[0].mxu0 %v422
      %v464 = vpop.f32.mrb[0].mxu0
      %v465 = vadd.f32 0.0, %v464
      %v466 = vpop.f32.mrb[0].mxu0
      %v467 = vadd.f32 0.0, %v466
      %v468 = vpop.f32.mrb[0].mxu0
      %v469 = vadd.f32 0.0, %v468
      %v470 = vpop.f32.mrb[0].mxu0
      %v471 = vadd.f32 0.0, %v470
      %472 = vdwg.mxu0
      %v473 = vadd.f32 %v367, %v465
      %v474 = vadd.f32 %v369, %v467
      %v475 = vadd.f32 %v371, %v469
      %v476 = vadd.f32 %v373, %v471
      %477 = vrot.lane.b32.xlu0 %v207, 31
      %v478 = vpop.permute.xlu0 %477
      %479 = vrot.lane.b32.xlu0 %v211, 31
      %v480 = vpop.permute.xlu0 %479
      %vm481 = vcmask 252928
      %v482 = vsel %vm481, %v478, %v480
      %v486 = vmul.f32 %v199, %v478
      %v487 = vmul.f32 %v200, %v482
      %v488 = vmul.f32 %v201, %v480
      %s489 = scalar_lea.vmem %s1, 24
      %v490 = vld [vmem:[%s489] sm:$0xf]
      %v491 = vld [vmem:[%s489 + $0x4] sm:$0xf]
      %v492 = vpack.c.bf16 %v486, %v486
      %v493 = vpack.c.bf16 %v487, %v487
      %v494 = vpack.c.bf16 %v488, %v488
      %v497 = vunpack.c.l.b16 %v490
      %v498 = vunpack.c.l.b16 %v491
      %v499 = vpack.c.b16 %v498, %v497
      %503 = vrot.lane.b32.xlu0 %v492, 97
      %v504 = vpop.permute.xlu0 %503
      %505 = vrot.lane.b32.xlu0 %v493, 97
      %v506 = vpop.permute.xlu0 %505
      %507 = vrot.lane.b32.xlu0 %v494, 97
      %v508 = vpop.permute.xlu0 %507
      %vm509 = vcmask 793600
      %v510 = vsel %vm509, %v504, %v506
      %v511 = vsel %vm509, %v506, %v508
      %v513 = vsel %vm252, %v499, 0
      %v516 = vsel %vm256, %v510, 0
      %v519 = vsel %vm256, %v511, 0
      %521 = vmatprep.subr.bf16.mxu0 %v519
      %522 = vmatpush1.bf16.msra.mxu0 %v516
      %523 = vmatprep.subr.bf16.mxu0 0
      %524 = vmatpush1.bf16.msra.mxu0 0
      %525 = vmatprep.subr.bf16.mxu0 0
      %526 = vmatpush1.bf16.msra.mxu0 0
      %527 = vmatprep.subr.bf16.mxu0 0
      %528 = vmatpush1.bf16.msra.mxu0 0
      %529 = vmatprep.subr.bf16.mxu0 0
      %530 = vmatpush1.bf16.msra.mxu0 0
      %531 = vmatprep.subr.bf16.mxu0 0
      %532 = vmatpush1.bf16.msra.mxu0 0
      %533 = vmatprep.subr.bf16.mxu0 0
      %534 = vmatpush1.bf16.msra.mxu0 0
      %535 = vmatprep.subr.bf16.mxu0 0
      %536 = vmatpush1.bf16.msra.mxu0 0
      %537 = vmatprep.subr.bf16.mxu0 0
      %538 = vmatpush1.bf16.msra.mxu0 0
      %539 = vmatprep.subr.bf16.mxu0 0
      %540 = vmatpush1.bf16.msra.mxu0 0
      %541 = vmatprep.subr.bf16.mxu0 0
      %542 = vmatpush1.bf16.msra.mxu0 0
      %543 = vmatprep.subr.bf16.mxu0 0
      %544 = vmatpush1.bf16.msra.mxu0 0
      %545 = vmatprep.subr.bf16.mxu0 0
      %546 = vmatpush1.bf16.msra.mxu0 0
      %547 = vmatprep.subr.bf16.mxu0 0
      %548 = vmatpush1.bf16.msra.mxu0 0
      %549 = vmatprep.subr.bf16.mxu0 0
      %550 = vmatpush1.bf16.msra.mxu0 0
      %551 = vmatprep.subr.bf16.mxu0 0
      %552 = vmatpush1.bf16.msra.mxu0 0
      %553 = vmatprep.mubr.bf16.mxu0 0
      %554 = vmatmul.mubr.bf16.gmra.mrb[0].mxu0 %v513
      %v555 = vpop.f32.mrb[0].mxu0
      %v556 = vadd.f32 0.0, %v555
      %v557 = vpop.f32.mrb[0].mxu0
      %v558 = vadd.f32 0.0, %v557
      %v559 = vpop.f32.mrb[0].mxu0
      %v560 = vadd.f32 0.0, %v559
      %v561 = vpop.f32.mrb[0].mxu0
      %v562 = vadd.f32 0.0, %v561
      %563 = vdwg.mxu0
      %v564 = vadd.f32 %v473, %v556
      %v565 = vadd.f32 %v474, %v558
      %v566 = vadd.f32 %v475, %v560
      %v567 = vadd.f32 %v476, %v562
      %s568 = scalar_lea.vmem %s1, 32
      %v569 = vld [vmem:[%s568] sm:$0xf]
      %v570 = vld [vmem:[%s568 + $0x4] sm:$0xf]
      %v573 = vunpack.c.l.b16 %v569
      %v574 = vunpack.c.l.b16 %v570
      %v575 = vpack.c.b16 %v574, %v573
      %576 = vrot.lane.b32.xlu0 %v232, 96
      %v577 = vpop.permute.xlu0 %576
      %578 = vrot.lane.b32.xlu0 %v233, 96
      %v579 = vpop.permute.xlu0 %578
      %580 = vrot.lane.b32.xlu0 %v234, 96
      %v581 = vpop.permute.xlu0 %580
      %vm582 = vcmask 785408
      %v583 = vsel %vm582, %v577, %v579
      %v584 = vsel %vm582, %v579, %v581
      %v586 = vsel %vm252, %v575, 0
      %v589 = vsel %vm256, %v583, 0
      %v592 = vsel %vm256, %v584, 0
      %594 = vmatprep.subr.bf16.mxu0 %v592
      %595 = vmatpush1.bf16.msra.mxu0 %v589
      %596 = vmatprep.subr.bf16.mxu0 0
      %597 = vmatpush1.bf16.msra.mxu0 0
      %598 = vmatprep.subr.bf16.mxu0 0
      %599 = vmatpush1.bf16.msra.mxu0 0
      %600 = vmatprep.subr.bf16.mxu0 0
      %601 = vmatpush1.bf16.msra.mxu0 0
      %602 = vmatprep.subr.bf16.mxu0 0
      %603 = vmatpush1.bf16.msra.mxu0 0
      %604 = vmatprep.subr.bf16.mxu0 0
      %605 = vmatpush1.bf16.msra.mxu0 0
      %606 = vmatprep.subr.bf16.mxu0 0
      %607 = vmatpush1.bf16.msra.mxu0 0
      %608 = vmatprep.subr.bf16.mxu0 0
      %609 = vmatpush1.bf16.msra.mxu0 0
      %610 = vmatprep.subr.bf16.mxu0 0
      %611 = vmatpush1.bf16.msra.mxu0 0
      %612 = vmatprep.subr.bf16.mxu0 0
      %613 = vmatpush1.bf16.msra.mxu0 0
      %614 = vmatprep.subr.bf16.mxu0 0
      %615 = vmatpush1.bf16.msra.mxu0 0
      %616 = vmatprep.subr.bf16.mxu0 0
      %617 = vmatpush1.bf16.msra.mxu0 0
      %618 = vmatprep.subr.bf16.mxu0 0
      %619 = vmatpush1.bf16.msra.mxu0 0
      %620 = vmatprep.subr.bf16.mxu0 0
      %621 = vmatpush1.bf16.msra.mxu0 0
      %622 = vmatprep.subr.bf16.mxu0 0
      %623 = vmatpush1.bf16.msra.mxu0 0
      %624 = vmatprep.subr.bf16.mxu0 0
      %625 = vmatpush1.bf16.msra.mxu0 0
      %626 = vmatprep.mubr.bf16.mxu0 0
      %627 = vmatmul.mubr.bf16.gmra.mrb[0].mxu0 %v586
      %v628 = vpop.f32.mrb[0].mxu0
      %v629 = vadd.f32 0.0, %v628
      %v630 = vpop.f32.mrb[0].mxu0
      %v631 = vadd.f32 0.0, %v630
      %v632 = vpop.f32.mrb[0].mxu0
      %v633 = vadd.f32 0.0, %v632
      %v634 = vpop.f32.mrb[0].mxu0
      %v635 = vadd.f32 0.0, %v634
      %636 = vdwg.mxu0
      %v637 = vadd.f32 %v564, %v629
      %v638 = vadd.f32 %v565, %v631
      %v639 = vadd.f32 %v566, %v633
      %v640 = vadd.f32 %v567, %v635
      %641 = vrot.lane.b32.xlu0 %v381, 33
      %v642 = vpop.permute.xlu0 %641
      %643 = vrot.lane.b32.xlu0 %v385, 33
      %v644 = vpop.permute.xlu0 %643
      %vm645 = vcmask 269312
      %v646 = vsel %vm645, %v642, %v644
      %v650 = vmul.f32 %v199, %v642
      %v651 = vmul.f32 %v200, %v646
      %v652 = vmul.f32 %v201, %v644
      %s653 = scalar_lea.vmem %s1, 40
      %v654 = vld [vmem:[%s653] sm:$0xf]
      %v655 = vld [vmem:[%s653 + $0x4] sm:$0xf]
      %v656 = vpack.c.bf16 %v650, %v650
      %v657 = vpack.c.bf16 %v651, %v651
      %v658 = vpack.c.bf16 %v652, %v652
      %v661 = vunpack.c.l.b16 %v654
      %v662 = vunpack.c.l.b16 %v655
      %v663 = vpack.c.b16 %v662, %v661
      %667 = vrot.lane.b32.xlu0 %v656, 95
      %v668 = vpop.permute.xlu0 %667
      %669 = vrot.lane.b32.xlu0 %v657, 95
      %v670 = vpop.permute.xlu0 %669
      %671 = vrot.lane.b32.xlu0 %v658, 95
      %v672 = vpop.permute.xlu0 %671
      %vm673 = vcmask 777216
      %v674 = vsel %vm673, %v668, %v670
      %v675 = vsel %vm673, %v670, %v672
      %v677 = vsel %vm252, %v663, 0
      %v680 = vsel %vm256, %v674, 0
      %v683 = vsel %vm256, %v675, 0
      %685 = vmatprep.subr.bf16.mxu0 %v683
      %686 = vmatpush1.bf16.msra.mxu0 %v680
      %687 = vmatprep.subr.bf16.mxu0 0
      %688 = vmatpush1.bf16.msra.mxu0 0
      %689 = vmatprep.subr.bf16.mxu0 0
      %690 = vmatpush1.bf16.msra.mxu0 0
      %691 = vmatprep.subr.bf16.mxu0 0
      %692 = vmatpush1.bf16.msra.mxu0 0
      %693 = vmatprep.subr.bf16.mxu0 0
      %694 = vmatpush1.bf16.msra.mxu0 0
      %695 = vmatprep.subr.bf16.mxu0 0
      %696 = vmatpush1.bf16.msra.mxu0 0
      %697 = vmatprep.subr.bf16.mxu0 0
      %698 = vmatpush1.bf16.msra.mxu0 0
      %699 = vmatprep.subr.bf16.mxu0 0
      %700 = vmatpush1.bf16.msra.mxu0 0
      %701 = vmatprep.subr.bf16.mxu0 0
      %702 = vmatpush1.bf16.msra.mxu0 0
      %703 = vmatprep.subr.bf16.mxu0 0
      %704 = vmatpush1.bf16.msra.mxu0 0
      %705 = vmatprep.subr.bf16.mxu0 0
      %706 = vmatpush1.bf16.msra.mxu0 0
      %707 = vmatprep.subr.bf16.mxu0 0
      %708 = vmatpush1.bf16.msra.mxu0 0
      %709 = vmatprep.subr.bf16.mxu0 0
      %710 = vmatpush1.bf16.msra.mxu0 0
      %711 = vmatprep.subr.bf16.mxu0 0
      %712 = vmatpush1.bf16.msra.mxu0 0
      %713 = vmatprep.subr.bf16.mxu0 0
      %714 = vmatpush1.bf16.msra.mxu0 0
      %715 = vmatprep.subr.bf16.mxu0 0
      %716 = vmatpush1.bf16.msra.mxu0 0
      %717 = vmatprep.mubr.bf16.mxu0 0
      %718 = vmatmul.mubr.bf16.gmra.mrb[0].mxu0 %v677
      %v719 = vpop.f32.mrb[0].mxu0
      %v720 = vadd.f32 0.0, %v719
      %v721 = vpop.f32.mrb[0].mxu0
      %v722 = vadd.f32 0.0, %v721
      %v723 = vpop.f32.mrb[0].mxu0
      %v724 = vadd.f32 0.0, %v723
      %v725 = vpop.f32.mrb[0].mxu0
      %v726 = vadd.f32 0.0, %v725
      %727 = vdwg.mxu0
      %v728 = vadd.f32 %v637, %v720
      %v729 = vadd.f32 %v638, %v722
      %v730 = vadd.f32 %v639, %v724
      %v731 = vadd.f32 %v640, %v726
      %732 = vrot.lane.b32.xlu0 %v207, 47
      %v733 = vpop.permute.xlu0 %732
      %734 = vrot.lane.b32.xlu0 %v211, 47
      %v735 = vpop.permute.xlu0 %734
      %vm736 = vcmask 384000
      %v737 = vsel %vm736, %v733, %v735
      %v741 = vmul.f32 %v199, %v733
      %v742 = vmul.f32 %v200, %v737
      %v743 = vmul.f32 %v201, %v735
      %s744 = scalar_lea.vmem %s1, 48
      %v745 = vld [vmem:[%s744] sm:$0xf]
      %v746 = vld [vmem:[%s744 + $0x4] sm:$0xf]
      %v747 = vpack.c.bf16 %v741, %v741
      %v748 = vpack.c.bf16 %v742, %v742
      %v749 = vpack.c.bf16 %v743, %v743
      %v752 = vunpack.c.l.b16 %v745
      %v753 = vunpack.c.l.b16 %v746
      %v754 = vpack.c.b16 %v753, %v752
      %758 = vrot.lane.b32.xlu0 %v747, 81
      %v759 = vpop.permute.xlu0 %758
      %760 = vrot.lane.b32.xlu0 %v748, 81
      %v761 = vpop.permute.xlu0 %760
      %762 = vrot.lane.b32.xlu0 %v749, 81
      %v763 = vpop.permute.xlu0 %762
      %vm764 = vcmask 662528
      %v765 = vsel %vm764, %v759, %v761
      %v766 = vsel %vm764, %v761, %v763
      %v768 = vsel %vm252, %v754, 0
      %v771 = vsel %vm256, %v765, 0
      %v774 = vsel %vm256, %v766, 0
      %776 = vmatprep.subr.bf16.mxu0 %v774
      %777 = vmatpush1.bf16.msra.mxu0 %v771
      %778 = vmatprep.subr.bf16.mxu0 0
      %779 = vmatpush1.bf16.msra.mxu0 0
      %780 = vmatprep.subr.bf16.mxu0 0
      %781 = vmatpush1.bf16.msra.mxu0 0
      %782 = vmatprep.subr.bf16.mxu0 0
      %783 = vmatpush1.bf16.msra.mxu0 0
      %784 = vmatprep.subr.bf16.mxu0 0
      %785 = vmatpush1.bf16.msra.mxu0 0
      %786 = vmatprep.subr.bf16.mxu0 0
      %787 = vmatpush1.bf16.msra.mxu0 0
      %788 = vmatprep.subr.bf16.mxu0 0
      %789 = vmatpush1.bf16.msra.mxu0 0
      %790 = vmatprep.subr.bf16.mxu0 0
      %791 = vmatpush1.bf16.msra.mxu0 0
      %792 = vmatprep.subr.bf16.mxu0 0
      %793 = vmatpush1.bf16.msra.mxu0 0
      %794 = vmatprep.subr.bf16.mxu0 0
      %795 = vmatpush1.bf16.msra.mxu0 0
      %796 = vmatprep.subr.bf16.mxu0 0
      %797 = vmatpush1.bf16.msra.mxu0 0
      %798 = vmatprep.subr.bf16.mxu0 0
      %799 = vmatpush1.bf16.msra.mxu0 0
      %800 = vmatprep.subr.bf16.mxu0 0
      %801 = vmatpush1.bf16.msra.mxu0 0
      %802 = vmatprep.subr.bf16.mxu0 0
      %803 = vmatpush1.bf16.msra.mxu0 0
      %804 = vmatprep.subr.bf16.mxu0 0
      %805 = vmatpush1.bf16.msra.mxu0 0
      %806 = vmatprep.subr.bf16.mxu0 0
      %807 = vmatpush1.bf16.msra.mxu0 0
      %808 = vmatprep.mubr.bf16.mxu0 0
      %809 = vmatmul.mubr.bf16.gmra.mrb[0].mxu0 %v768
      %v810 = vpop.f32.mrb[0].mxu0
      %v811 = vadd.f32 0.0, %v810
      %v812 = vpop.f32.mrb[0].mxu0
      %v813 = vadd.f32 0.0, %v812
      %v814 = vpop.f32.mrb[0].mxu0
      %v815 = vadd.f32 0.0, %v814
      %v816 = vpop.f32.mrb[0].mxu0
      %v817 = vadd.f32 0.0, %v816
      %818 = vdwg.mxu0
      %v819 = vadd.f32 %v728, %v811
      %v820 = vadd.f32 %v729, %v813
      %v821 = vadd.f32 %v730, %v815
      %v822 = vadd.f32 %v731, %v817
      %s823 = scalar_lea.vmem %s1, 56
      %v824 = vld [vmem:[%s823] sm:$0xf]
      %v825 = vld [vmem:[%s823 + $0x4] sm:$0xf]
      %v828 = vunpack.c.l.b16 %v824
      %v829 = vunpack.c.l.b16 %v825
      %v830 = vpack.c.b16 %v829, %v828
      %831 = vrot.lane.b32.xlu0 %v232, 80
      %v832 = vpop.permute.xlu0 %831
      %833 = vrot.lane.b32.xlu0 %v233, 80
      %v834 = vpop.permute.xlu0 %833
      %835 = vrot.lane.b32.xlu0 %v234, 80
      %v836 = vpop.permute.xlu0 %835
      %vm837 = vcmask 654336
      %v838 = vsel %vm837, %v832, %v834
      %v839 = vsel %vm837, %v834, %v836
      %v841 = vsel %vm252, %v830, 0
      %v844 = vsel %vm256, %v838, 0
      %v847 = vsel %vm256, %v839, 0
      %849 = vmatprep.subr.bf16.mxu0 %v847
      %850 = vmatpush1.bf16.msra.mxu0 %v844
      %851 = vmatprep.subr.bf16.mxu0 0
      %852 = vmatpush1.bf16.msra.mxu0 0
      %853 = vmatprep.subr.bf16.mxu0 0
      %854 = vmatpush1.bf16.msra.mxu0 0
      %855 = vmatprep.subr.bf16.mxu0 0
      %856 = vmatpush1.bf16.msra.mxu0 0
      %857 = vmatprep.subr.bf16.mxu0 0
      %858 = vmatpush1.bf16.msra.mxu0 0
      %859 = vmatprep.subr.bf16.mxu0 0
      %860 = vmatpush1.bf16.msra.mxu0 0
      %861 = vmatprep.subr.bf16.mxu0 0
      %862 = vmatpush1.bf16.msra.mxu0 0
      %863 = vmatprep.subr.bf16.mxu0 0
      %864 = vmatpush1.bf16.msra.mxu0 0
      %865 = vmatprep.subr.bf16.mxu0 0
      %866 = vmatpush1.bf16.msra.mxu0 0
      %867 = vmatprep.subr.bf16.mxu0 0
      %868 = vmatpush1.bf16.msra.mxu0 0
      %869 = vmatprep.subr.bf16.mxu0 0
      %870 = vmatpush1.bf16.msra.mxu0 0
      %871 = vmatprep.subr.bf16.mxu0 0
      %872 = vmatpush1.bf16.msra.mxu0 0
      %873 = vmatprep.subr.bf16.mxu0 0
      %874 = vmatpush1.bf16.msra.mxu0 0
      %875 = vmatprep.subr.bf16.mxu0 0
      %876 = vmatpush1.bf16.msra.mxu0 0
      %877 = vmatprep.subr.bf16.mxu0 0
      %878 = vmatpush1.bf16.msra.mxu0 0
      %879 = vmatprep.subr.bf16.mxu0 0
      %880 = vmatpush1.bf16.msra.mxu0 0
      %881 = vmatprep.mubr.bf16.mxu0 0
      %882 = vmatmul.mubr.bf16.gmra.mrb[0].mxu0 %v841
      %v883 = vpop.f32.mrb[0].mxu0
      %v884 = vadd.f32 0.0, %v883
      %v885 = vpop.f32.mrb[0].mxu0
      %v886 = vadd.f32 0.0, %v885
      %v887 = vpop.f32.mrb[0].mxu0
      %v888 = vadd.f32 0.0, %v887
      %v889 = vpop.f32.mrb[0].mxu0
      %v890 = vadd.f32 0.0, %v889
      %891 = vdwg.mxu0
      %v892 = vadd.f32 %v819, %v884
      %v893 = vadd.f32 %v820, %v886
      %v894 = vadd.f32 %v821, %v888
      %v895 = vadd.f32 %v822, %v890
      %896 = vrot.lane.b32.xlu0 %v381, 49
      %v897 = vpop.permute.xlu0 %896
      %898 = vrot.lane.b32.xlu0 %v385, 49
      %v899 = vpop.permute.xlu0 %898
      %vm900 = vcmask 400384
      %v901 = vsel %vm900, %v897, %v899
      %v905 = vmul.f32 %v199, %v897
      %v906 = vmul.f32 %v200, %v901
      %v907 = vmul.f32 %v201, %v899
      %s908 = scalar_lea.vmem %s1, 64
      %v909 = vld [vmem:[%s908] sm:$0xf]
      %v910 = vld [vmem:[%s908 + $0x4] sm:$0xf]
      %v911 = vpack.c.bf16 %v905, %v905
      %v912 = vpack.c.bf16 %v906, %v906
      %v913 = vpack.c.bf16 %v907, %v907
      %v916 = vunpack.c.l.b16 %v909
      %v917 = vunpack.c.l.b16 %v910
      %v918 = vpack.c.b16 %v917, %v916
      %922 = vrot.lane.b32.xlu0 %v911, 79
      %v923 = vpop.permute.xlu0 %922
      %924 = vrot.lane.b32.xlu0 %v912, 79
      %v925 = vpop.permute.xlu0 %924
      %926 = vrot.lane.b32.xlu0 %v913, 79
      %v927 = vpop.permute.xlu0 %926
      %vm928 = vcmask 646144
      %v929 = vsel %vm928, %v923, %v925
      %v930 = vsel %vm928, %v925, %v927
      %v932 = vsel %vm252, %v918, 0
      %v935 = vsel %vm256, %v929, 0
      %v938 = vsel %vm256, %v930, 0
      %940 = vmatprep.subr.bf16.mxu0 %v938
      %941 = vmatpush1.bf16.msra.mxu0 %v935
      %942 = vmatprep.subr.bf16.mxu0 0
      %943 = vmatpush1.bf16.msra.mxu0 0
      %944 = vmatprep.subr.bf16.mxu0 0
      %945 = vmatpush1.bf16.msra.mxu0 0
      %946 = vmatprep.subr.bf16.mxu0 0
      %947 = vmatpush1.bf16.msra.mxu0 0
      %948 = vmatprep.subr.bf16.mxu0 0
      %949 = vmatpush1.bf16.msra.mxu0 0
      %950 = vmatprep.subr.bf16.mxu0 0
      %951 = vmatpush1.bf16.msra.mxu0 0
      %952 = vmatprep.subr.bf16.mxu0 0
      %953 = vmatpush1.bf16.msra.mxu0 0
      %954 = vmatprep.subr.bf16.mxu0 0
      %955 = vmatpush1.bf16.msra.mxu0 0
      %956 = vmatprep.subr.bf16.mxu0 0
      %957 = vmatpush1.bf16.msra.mxu0 0
      %958 = vmatprep.subr.bf16.mxu0 0
      %959 = vmatpush1.bf16.msra.mxu0 0
      %960 = vmatprep.subr.bf16.mxu0 0
      %961 = vmatpush1.bf16.msra.mxu0 0
      %962 = vmatprep.subr.bf16.mxu0 0
      %963 = vmatpush1.bf16.msra.mxu0 0
      %964 = vmatprep.subr.bf16.mxu0 0
      %965 = vmatpush1.bf16.msra.mxu0 0
      %966 = vmatprep.subr.bf16.mxu0 0
      %967 = vmatpush1.bf16.msra.mxu0 0
      %968 = vmatprep.subr.bf16.mxu0 0
      %969 = vmatpush1.bf16.msra.mxu0 0
      %970 = vmatprep.subr.bf16.mxu0 0
      %971 = vmatpush1.bf16.msra.mxu0 0
      %972 = vmatprep.mubr.bf16.mxu0 0
      %973 = vmatmul.mubr.bf16.gmra.mrb[0].mxu0 %v932
      %v974 = vpop.f32.mrb[0].mxu0
      %v975 = vadd.f32 0.0, %v974
      %v976 = vpop.f32.mrb[0].mxu0
      %v977 = vadd.f32 0.0, %v976
      %v978 = vpop.f32.mrb[0].mxu0
      %v979 = vadd.f32 0.0, %v978
      %v980 = vpop.f32.mrb[0].mxu0
      %v981 = vadd.f32 0.0, %v980
      %982 = vdwg.mxu0
      %v983 = vadd.f32 %v892, %v975
      %v984 = vadd.f32 %v893, %v977
      %v985 = vadd.f32 %v894, %v979
      %v986 = vadd.f32 %v895, %v981
      %v987 = vld [vmem:[%s2] sm:$0xff]
      %v988 = vld [vmem:[%s2 + $0x8] sm:$0xff]
      %990 = vset.pattern.permute.xlu0 0
      %991 = vperm.xlu0 %990, %v987
      %v992 = vpop.permute.xlu0 %991
      %995 = vset.pattern.permute.xlu0 0
      %996 = vperm.xlu0 %995, %v988
      %v997 = vpop.permute.xlu0 %996
      %v999 = vadd.f32 %v983, %v992
      %v1000 = vadd.f32 %v984, %v992
      %v1001 = vadd.f32 %v985, %v997
      %v1002 = vadd.f32 %v986, %v997
      %v1003 = vmax.f32 %v999, 0.0
      %v1004 = vmax.f32 %v1000, 0.0
      %v1005 = vmax.f32 %v1001, 0.0
      %v1006 = vmax.f32 %v1002, 0.0
      %1007 = vst [vmem:[%s197] sm:$0xff] %v1003
      %1008 = vst [vmem:[%s197 + $0x8] sm:$0xff] %v1004
      %1009 = vst [vmem:[%s197 + $0x10] sm:$0xff] %v1005
      %1010 = vst [vmem:[%s197 + $0x18] sm:$0xff] %v1006
      %p1011 = scmp.lt.s32.totalorder %s15, 1
      %s1012 = scalar_select %p1011, %s15, 1
      %s1013 = smul.addr %s1012, 4
      %s1014 = smul.addr %s1013, 8
      %s1015 = scalar_lea.vmem %s4, %s1014
      // Predicated region
      $region37: #{_lambda_.8} parent=35 // pred_check
        %p1016 = pneg %p122
      $region38: #{_lambda_.8} parent=35 // pred_check_branch
        %1018 = sbr.rel (%p1016) target = $region40
      $region39: #{_lambda_.8} parent=35 // pred_region
        _
      $region40: #{_lambda_.8} parent=35 // pred_fallthru
        _
    $region36: #{_lambda_.8} parent=5 // pred_fallthru
      _
    %p1019 = scmp.le.s32.totalorder 2, %s10
    // Predicated region
    $region41: #{_lambda_.8} parent=5 // pred_check
      %p1020 = pneg %p1019
    $region42: #{_lambda_.8} parent=5 // pred_check_branch
      %1022 = sbr.rel (%p1020) target = $region44
    $region43: #{_lambda_.8} parent=5 // pred_region
      %s1023 = ssub.s32 %s10, 2
      // Predicated region
      $region45: #{_lambda_.8} parent=43 // pred_check
        %p1024 = pneg %p128
      $region46: #{_lambda_.8} parent=43 // pred_check_branch
        %1026 = sbr.rel (%p1024) target = $region48
      $region47: #{_lambda_.8} parent=43 // pred_region
        %p1027 = scmp.lt.s32.totalorder %s16, 1
        %s1028 = scalar_select %p1027, %s16, 1
        %s1029 = smul.addr %s1028, 4
        %s1030 = smul.addr %s1029, 8
        %s1031 = scalar_lea.vmem %s4, %s1030
      $region48: #{_lambda_.8} parent=43 // pred_fallthru
        _
    $region44: #{_lambda_.8} parent=5 // pred_fallthru
      _
  $region6: #{_lambda_.8} parent=0 // loop_footer
    %s14 = sadd.s32 1, %s10
  $region7: #{_lambda_.8} parent=0 // loop_footer_branch
    %9 = sbr.rel target = $region3
  $region8: #{_lambda_.8} parent=0 // loop_exit
    _

// kernel: _lambda_.9
$region0: #{_lambda_.9}
  #allocation0 [shape = 'u32[]', space=smem, size = 0x4, offset = 0x4, fixed_abs, tag = 'smem constant byte address 0x4 - core index']
  #allocation1 [shape = 'u32[144,128]{1,0:T(1,128)}', space=vmem, size = 0x12000, scoped, tag = 'internal scratch']
  %s0 = inlined_call_operand.vmem [shape: f32[2,16,96], index: 0, kind: input, shape index: {}]
  %s1 = inlined_call_operand.vmem [shape: bf16[9,32,16], index: 1, kind: input, shape index: {}]
  %s2 = inlined_call_operand.vmem [shape: f32[32,1], index: 2, kind: input, shape index: {}]
  %s3 = inlined_call_operand.vmem [shape: f32[2,64], index: 3, kind: input, shape index: {}]
  %s4 = inlined_call_operand.vmem [shape: f32[2,32,64], index: 4, kind: output, shape index: {}]
  %s5 = sld [smem:[#allocation0]]
  $region49: #{_lambda_.9} parent=0
    _
  %s7 = ssub.s32 1, %s5
  %s8 = scalar_select 0, %s7, %s5
  loop: start=0, step=1, limit=4
  $region2: #{_lambda_.9} parent=0 // loop_pre_header
    _
  $region3: #{_lambda_.9} parent=0 // loop_header
    %s10 = sphi 0, %s14
    %p11 = scmp.ge.s32.totalorder %s10, 4
    %s20 = sphi 0, %s22
    %s23 = sphi 0, %s20
    %s24 = sphi 0, %s23
    %s40 = sphi 0, %s24
    %s44 = sphi 0, %s44
    %s46 = sphi 0, %s44
    %s47 = sphi 0, %s46
    %s61 = sphi 0, %s47
    %s65 = sphi 0, %s65
    %s67 = sphi 0, %s65
    %s68 = sphi 0, %s67
    %s82 = sphi 0, %s68
    %s86 = sphi 0, %s86
    %s88 = sphi 0, %s86
    %s89 = sphi 0, %s88
    %s103 = sphi 0, %s89
    %s109 = sphi 0, %s111
    %s112 = sphi 0, %s109
    %s113 = sphi 0, %s112
    %s129 = sphi 0, %s113
  $region4: #{_lambda_.9} parent=0 // loop_header_branch
    %13 = sbr.rel (%p11) target = $region8
  $region5: #{_lambda_.9} parent=0 // loop_body
    %s15 = ssub.s32 %s10, 1
    %s16 = ssub.s32 %s10, 2
    %s17 = sadd.s32 %s10, 1
    %s18 = ssub.s32 %s10, %s17
    %p19 = scmp.eq.s32.totalorder %s18, 0
    %s21 = sadd.s32 %s20, 1
    %s22 = scalar_select %p19, %s20, %s21
    %p25 = pneg %p19
    %p26 = scmp.eq.s32.totalorder %s10, 1
    %p27 = por %p25, %p26
    %p28 = scmp.ne.s32.totalorder %s20, %s23
    %p29 = scmp.eq.s32.totalorder %s10, 0
    %p30 = por %p28, %p29
    %p31 = scmp.ne.s32.totalorder %s20, %s23
    %p32 = scmp.eq.s32.totalorder %s15, 1
    %p33 = por %p31, %p32
    %p34 = scmp.ne.s32.totalorder %s23, %s24
    %p35 = scmp.eq.s32.totalorder %s15, 0
    %p36 = por %p34, %p35
    %p37 = scmp.ne.s32.totalorder %s23, %s24
    %p38 = scmp.eq.s32.totalorder %s16, 1
    %p39 = por %p37, %p38
    %p41 = scmp.ne.s32.totalorder %s24, %s40
    %p42 = scmp.eq.s32.totalorder %s16, 0
    %p43 = por %p41, %p42
    %s45 = sadd.s32 %s44, 1
    %p48 = scmp.eq.s32.totalorder %s10, 1
    %p49 = scmp.ne.s32.totalorder %s44, %s46
    %p50 = scmp.eq.s32.totalorder %s10, 0
    %p51 = por %p49, %p50
    %p52 = scmp.ne.s32.totalorder %s44, %s46
    %p53 = scmp.eq.s32.totalorder %s15, 1
    %p54 = por %p52, %p53
    %p55 = scmp.ne.s32.totalorder %s46, %s47
    %p56 = scmp.eq.s32.totalorder %s15, 0
    %p57 = por %p55, %p56
    %p58 = scmp.ne.s32.totalorder %s46, %s47
    %p59 = scmp.eq.s32.totalorder %s16, 1
    %p60 = por %p58, %p59
    %p62 = scmp.ne.s32.totalorder %s47, %s61
    %p63 = scmp.eq.s32.totalorder %s16, 0
    %p64 = por %p62, %p63
    %s66 = sadd.s32 %s65, 1
    %p69 = scmp.eq.s32.totalorder %s10, 1
    %p70 = scmp.ne.s32.totalorder %s65, %s67
    %p71 = scmp.eq.s32.totalorder %s10, 0
    %p72 = por %p70, %p71
    %p73 = scmp.ne.s32.totalorder %s65, %s67
    %p74 = scmp.eq.s32.totalorder %s15, 1
    %p75 = por %p73, %p74
    %p76 = scmp.ne.s32.totalorder %s67, %s68
    %p77 = scmp.eq.s32.totalorder %s15, 0
    %p78 = por %p76, %p77
    %p79 = scmp.ne.s32.totalorder %s67, %s68
    %p80 = scmp.eq.s32.totalorder %s16, 1
    %p81 = por %p79, %p80
    %p83 = scmp.ne.s32.totalorder %s68, %s82
    %p84 = scmp.eq.s32.totalorder %s16, 0
    %p85 = por %p83, %p84
    %s87 = sadd.s32 %s86, 1
    %p90 = scmp.eq.s32.totalorder %s10, 1
    %p91 = scmp.ne.s32.totalorder %s86, %s88
    %p92 = scmp.eq.s32.totalorder %s10, 0
    %p93 = por %p91, %p92
    %p94 = scmp.ne.s32.totalorder %s86, %s88
    %p95 = scmp.eq.s32.totalorder %s15, 1
    %p96 = por %p94, %p95
    %p97 = scmp.ne.s32.totalorder %s88, %s89
    %p98 = scmp.eq.s32.totalorder %s15, 0
    %p99 = por %p97, %p98
    %p100 = scmp.ne.s32.totalorder %s88, %s89
    %p101 = scmp.eq.s32.totalorder %s16, 1
    %p102 = por %p100, %p101
    %p104 = scmp.ne.s32.totalorder %s89, %s103
    %p105 = scmp.eq.s32.totalorder %s16, 0
    %p106 = por %p104, %p105
    %s107 = ssub.s32 %s10, %s17
    %p108 = scmp.eq.s32.totalorder %s107, 0
    %s110 = sadd.s32 %s109, 1
    %s111 = scalar_select %p108, %s109, %s110
    %p114 = pneg %p108
    %p115 = scmp.eq.s32.totalorder %s10, 1
    %p116 = por %p114, %p115
    %p117 = scmp.ne.s32.totalorder %s109, %s112
    %p118 = scmp.eq.s32.totalorder %s10, 0
    %p119 = por %p117, %p118
    %p120 = scmp.ne.s32.totalorder %s109, %s112
    %p121 = scmp.eq.s32.totalorder %s15, 1
    %p122 = por %p120, %p121
    %p123 = scmp.ne.s32.totalorder %s112, %s113
    %p124 = scmp.eq.s32.totalorder %s15, 0
    %p125 = por %p123, %p124
    %p126 = scmp.ne.s32.totalorder %s112, %s113
    %p127 = scmp.eq.s32.totalorder %s16, 1
    %p128 = por %p126, %p127
    %p130 = scmp.ne.s32.totalorder %s113, %s129
    %p131 = scmp.eq.s32.totalorder %s16, 0
    %p132 = por %p130, %p131
    %p133 = scmp.le.s32.totalorder 1, %s10
    %p134 = scmp.lt.s32.totalorder %s10, 3
    %p135 = pnand %p133, %p134
    %p136 = pneg %p135
    // Predicated region
    $region9: #{_lambda_.9} parent=5 // pred_check
      _
    $region10: #{_lambda_.9} parent=5 // pred_check_branch
      %138 = sbr.rel (%p135) target = $region12
    $region11: #{_lambda_.9} parent=5 // pred_region
      %s139 = ssub.s32 %s10, 1
      // Predicated region
      $region13: #{_lambda_.9} parent=11 // pred_check
        %p140 = pneg %p57
      $region14: #{_lambda_.9} parent=11 // pred_check_branch
        %142 = sbr.rel (%p140) target = $region16
      $region15: #{_lambda_.9} parent=11 // pred_region
        _
      $region16: #{_lambda_.9} parent=11 // pred_fallthru
        _
      // Predicated region
      $region17: #{_lambda_.9} parent=11 // pred_check
        %p143 = pneg %p78
      $region18: #{_lambda_.9} parent=11 // pred_check_branch
        %145 = sbr.rel (%p143) target = $region20
      $region19: #{_lambda_.9} parent=11 // pred_region
        _
      $region20: #{_lambda_.9} parent=11 // pred_fallthru
        _
      // Predicated region
      $region21: #{_lambda_.9} parent=11 // pred_check
        %p146 = pneg %p99
      $region22: #{_lambda_.9} parent=11 // pred_check_branch
        %148 = sbr.rel (%p146) target = $region24
      $region23: #{_lambda_.9} parent=11 // pred_region
        _
      $region24: #{_lambda_.9} parent=11 // pred_fallthru
        _
    $region12: #{_lambda_.9} parent=5 // pred_fallthru
      _
    %p149 = scmp.lt.s32.totalorder %s10, 2
    // Predicated region
    $region25: #{_lambda_.9} parent=5 // pred_check
      %p150 = pneg %p149
    $region26: #{_lambda_.9} parent=5 // pred_check_branch
      %152 = sbr.rel (%p150) target = $region28
    $region27: #{_lambda_.9} parent=5 // pred_region
      // Predicated region
      $region29: #{_lambda_.9} parent=27 // pred_check
        %p153 = pneg %p30
      $region30: #{_lambda_.9} parent=27 // pred_check_branch
        %155 = sbr.rel (%p153) target = $region32
      $region31: #{_lambda_.9} parent=27 // pred_region
        %p156 = scmp.lt.s32.totalorder %s10, 1
        %s157 = scalar_select %p156, %s10, 1
        %s158 = smul.addr %s157, 2
        %s159 = smul.addr %s158, 8
        %s160 = scalar_lea.vmem %s0, %s159
      $region32: #{_lambda_.9} parent=27 // pred_fallthru
        _
    $region28: #{_lambda_.9} parent=5 // pred_fallthru
      _
    %p161 = scmp.le.s32.totalorder 1, %s10
    %p162 = scmp.lt.s32.totalorder %s10, 3
    %p163 = pnand %p161, %p162
    %p164 = pneg %p163
    // Predicated region
    $region33: #{_lambda_.9} parent=5 // pred_check
      _
    $region34: #{_lambda_.9} parent=5 // pred_check_branch
      %166 = sbr.rel (%p163) target = $region36
    $region35: #{_lambda_.9} parent=5 // pred_region
      %s167 = ssub.s32 %s10, 1
      %p168 = scmp.lt.s32.totalorder %s15, 1
      %s169 = scalar_select %p168, %s15, 1
      %s170 = smul.addr %s169, 2
      %s171 = smul.addr %s170, 8
      %s172 = scalar_lea.vmem %s0, %s171
      %p173 = pneg %p36
      %p174 = pneg %p33
      %p175 = pneg %p57
      %p176 = pneg %p54
      %p177 = pneg %p78
      %p178 = pneg %p75
      %p179 = pneg %p99
      %p180 = pneg %p96
      %p181 = pneg %p125
      %p182 = pneg %p122
      %p183 = scmp.lt.s32.totalorder %s15, 1
      %s184 = scalar_select %p183, %s15, 1
      %s185 = smul.addr %s184, 4
      %s186 = smul.addr %s185, 8
      %s187 = scalar_lea.vmem %s4, %s186
      %p188 = scmp.lt.s32.totalorder %s15, 1
      %s189 = scalar_select %p188, %s15, 1
      %s190 = smul.addr %s189, 2
      %s191 = smul.addr %s190, 8
      %s192 = scalar_lea.vmem %s0, %s191
      %p193 = scmp.lt.s32.totalorder %s15, 1
      %s194 = scalar_select %p193, %s15, 1
      %s195 = smul.addr %s194, 4
      %s196 = smul.addr %s195, 8
      %s197 = scalar_lea.vmem %s4, %s196
      %v199 = vld [vmem:[%s192] sm:$0xff]
      %v200 = vld [vmem:[%s192 + $0x8] sm:$0xff]
      %v201 = vld [vmem:[%s3] sm:$0x1]
      %v202 = vlaneseq
      %v203 = vshrl.u32 %v202, 7
      %v204 = vsub.s32 0, %v203
      %v205 = vrot.slane %v201, %v204
      %207 = vrot.lane.b32.xlu0 %v205, 7
      %v208 = vpop.permute.xlu0 %207
      %v210 = vmul.f32 %v199, %v208
      %v211 = vmul.f32 %v200, %v208
      %v212 = vld [vmem:[%s1] sm:$0xf]
      %v213 = vld [vmem:[%s1 + $0x4] sm:$0xf]
      %v214 = vld [vmem:[%s1 + $0x8] sm:$0xf]
      %v215 = vld [vmem:[%s1 + $0xc] sm:$0xf]
      %v216 = vpack.c.bf16 %v211, %v210
      %s217 = scalar_lea.vmem %s1, 16
      %v218 = vld [vmem:[%s217] sm:$0xf]
      %v219 = vld [vmem:[%s217 + $0x4] sm:$0xf]
      %v220 = vld [vmem:[%s217 + $0x8] sm:$0xf]
      %v221 = vld [vmem:[%s217 + $0xc] sm:$0xf]
      %v222 = vpack.c.bf16 %v200, %v199
      %v227 = vunpack.c.l.b16 %v218
      %v228 = vunpack.c.l.b16 %v219
      %v229 = vunpack.c.l.b16 %v220
      %v230 = vunpack.c.l.b16 %v221
      %v231 = vpack.c.b16 %v228, %v227
      %v232 = vpack.c.b16 %v230, %v229
      %234 = vrot.lane.b32.xlu0 %v222, 120
      %v235 = vpop.permute.xlu0 %234
      %vm237 = vcmask 130048
      %v239 = vsel %vm237, %v231, 0
      %v242 = vsel %vm237, %v232, 0
      %244 = vmatprep.subr.bf16.mxu0 0
      %245 = vmatpush1.bf16.msra.mxu0 %v235
      %246 = vmatprep.subr.bf16.mxu0 0
      %247 = vmatpush1.bf16.msra.mxu0 0
      %248 = vmatprep.subr.bf16.mxu0 0
      %249 = vmatpush1.bf16.msra.mxu0 0
      %250 = vmatprep.subr.bf16.mxu0 0
      %251 = vmatpush1.bf16.msra.mxu0 0
      %252 = vmatprep.subr.bf16.mxu0 0
      %253 = vmatpush1.bf16.msra.mxu0 0
      %254 = vmatprep.subr.bf16.mxu0 0
      %255 = vmatpush1.bf16.msra.mxu0 0
      %256 = vmatprep.subr.bf16.mxu0 0
      %257 = vmatpush1.bf16.msra.mxu0 0
      %258 = vmatprep.subr.bf16.mxu0 0
      %259 = vmatpush1.bf16.msra.mxu0 0
      %260 = vmatprep.subr.bf16.mxu0 0
      %261 = vmatpush1.bf16.msra.mxu0 0
      %262 = vmatprep.subr.bf16.mxu0 0
      %263 = vmatpush1.bf16.msra.mxu0 0
      %264 = vmatprep.subr.bf16.mxu0 0
      %265 = vmatpush1.bf16.msra.mxu0 0
      %266 = vmatprep.subr.bf16.mxu0 0
      %267 = vmatpush1.bf16.msra.mxu0 0
      %268 = vmatprep.subr.bf16.mxu0 0
      %269 = vmatpush1.bf16.msra.mxu0 0
      %270 = vmatprep.subr.bf16.mxu0 0
      %271 = vmatpush1.bf16.msra.mxu0 0
      %272 = vmatprep.subr.bf16.mxu0 0
      %273 = vmatpush1.bf16.msra.mxu0 0
      %274 = vmatprep.subr.bf16.mxu0 0
      %275 = vmatpush1.bf16.msra.mxu0 0
      %276 = vmatprep.mubr.bf16.mxu0 0
      %277 = vmatmul.mubr.bf16.gmra.mrb[0].mxu0 %v239
      %v278 = vpop.f32.mrb[0].mxu0
      %v279 = vadd.f32 0.0, %v278
      %v280 = vpop.f32.mrb[0].mxu0
      %v281 = vpop.f32.mrb[0].mxu0
      %v282 = vadd.f32 0.0, %v281
      %v283 = vpop.f32.mrb[0].mxu0
      %284 = vmatprep.mubr.bf16.mxu0 0
      %285 = vmatmul.mubr.bf16.gmra.mrb[0].mxu0 %v242
      %v286 = vpop.f32.mrb[0].mxu0
      %v287 = vadd.f32 0.0, %v286
      %v288 = vpop.f32.mrb[0].mxu0
      %v289 = vpop.f32.mrb[0].mxu0
      %v290 = vadd.f32 0.0, %v289
      %v291 = vpop.f32.mrb[0].mxu0
      %292 = vdwg.mxu0
      %v297 = vunpack.c.l.b16 %v212
      %v298 = vunpack.c.l.b16 %v213
      %v299 = vunpack.c.l.b16 %v214
      %v300 = vunpack.c.l.b16 %v215
      %v301 = vpack.c.b16 %v298, %v297
      %v302 = vpack.c.b16 %v300, %v299
      %304 = vrot.lane.b32.xlu0 %v216, 121
      %v305 = vpop.permute.xlu0 %304
      %v308 = vsel %vm237, %v301, 0
      %v311 = vsel %vm237, %v302, 0
      %313 = vmatprep.subr.bf16.mxu0 0
      %314 = vmatpush1.bf16.msra.mxu0 %v305
      %315 = vmatprep.subr.bf16.mxu0 0
      %316 = vmatpush1.bf16.msra.mxu0 0
      %317 = vmatprep.subr.bf16.mxu0 0
      %318 = vmatpush1.bf16.msra.mxu0 0
      %319 = vmatprep.subr.bf16.mxu0 0
      %320 = vmatpush1.bf16.msra.mxu0 0
      %321 = vmatprep.subr.bf16.mxu0 0
      %322 = vmatpush1.bf16.msra.mxu0 0
      %323 = vmatprep.subr.bf16.mxu0 0
      %324 = vmatpush1.bf16.msra.mxu0 0
      %325 = vmatprep.subr.bf16.mxu0 0
      %326 = vmatpush1.bf16.msra.mxu0 0
      %327 = vmatprep.subr.bf16.mxu0 0
      %328 = vmatpush1.bf16.msra.mxu0 0
      %329 = vmatprep.subr.bf16.mxu0 0
      %330 = vmatpush1.bf16.msra.mxu0 0
      %331 = vmatprep.subr.bf16.mxu0 0
      %332 = vmatpush1.bf16.msra.mxu0 0
      %333 = vmatprep.subr.bf16.mxu0 0
      %334 = vmatpush1.bf16.msra.mxu0 0
      %335 = vmatprep.subr.bf16.mxu0 0
      %336 = vmatpush1.bf16.msra.mxu0 0
      %337 = vmatprep.subr.bf16.mxu0 0
      %338 = vmatpush1.bf16.msra.mxu0 0
      %339 = vmatprep.subr.bf16.mxu0 0
      %340 = vmatpush1.bf16.msra.mxu0 0
      %341 = vmatprep.subr.bf16.mxu0 0
      %342 = vmatpush1.bf16.msra.mxu0 0
      %343 = vmatprep.subr.bf16.mxu0 0
      %344 = vmatpush1.bf16.msra.mxu0 0
      %345 = vmatprep.mubr.bf16.mxu0 0
      %346 = vmatmul.mubr.bf16.gmra.mrb[0].mxu0 %v308
      %v347 = vpop.f32.mrb[0].mxu0
      %v348 = vadd.f32 %v279, %v347
      %v349 = vpop.f32.mrb[0].mxu0
      %v350 = vpop.f32.mrb[0].mxu0
      %v351 = vadd.f32 %v282, %v350
      %v352 = vpop.f32.mrb[0].mxu0
      %353 = vmatprep.mubr.bf16.mxu0 0
      %354 = vmatmul.mubr.bf16.gmra.mrb[0].mxu0 %v311
      %v355 = vpop.f32.mrb[0].mxu0
      %v356 = vadd.f32 %v287, %v355
      %v357 = vpop.f32.mrb[0].mxu0
      %v358 = vpop.f32.mrb[0].mxu0
      %v359 = vadd.f32 %v290, %v358
      %v360 = vpop.f32.mrb[0].mxu0
      %361 = vdwg.mxu0
      %v362 = vld [vmem:[%s3 + $0x1] sm:$0x1]
      %v363 = vlaneseq
      %v364 = vshrl.u32 %v363, 7
      %v365 = vsub.s32 0, %v364
      %v366 = vrot.slane %v362, %v365
      %368 = vrot.lane.b32.xlu0 %v366, 9
      %v369 = vpop.permute.xlu0 %368
      %v371 = vmul.f32 %v199, %v369
      %v372 = vmul.f32 %v200, %v369
      %s373 = scalar_lea.vmem %s1, 32
      %v374 = vld [vmem:[%s373] sm:$0xf]
      %v375 = vld [vmem:[%s373 + $0x4] sm:$0xf]
      %v376 = vld [vmem:[%s373 + $0x8] sm:$0xf]
      %v377 = vld [vmem:[%s373 + $0xc] sm:$0xf]
      %v378 = vpack.c.bf16 %v372, %v371
      %v383 = vunpack.c.l.b16 %v374
      %v384 = vunpack.c.l.b16 %v375
      %v385 = vunpack.c.l.b16 %v376
      %v386 = vunpack.c.l.b16 %v377
      %v387 = vpack.c.b16 %v384, %v383
      %v388 = vpack.c.b16 %v386, %v385
      %390 = vrot.lane.b32.xlu0 %v378, 119
      %v391 = vpop.permute.xlu0 %390
      %v394 = vsel %vm237, %v387, 0
      %v397 = vsel %vm237, %v388, 0
      %399 = vmatprep.subr.bf16.mxu0 0
      %400 = vmatpush1.bf16.msra.mxu0 %v391
      %401 = vmatprep.subr.bf16.mxu0 0
      %402 = vmatpush1.bf16.msra.mxu0 0
      %403 = vmatprep.subr.bf16.mxu0 0
      %404 = vmatpush1.bf16.msra.mxu0 0
      %405 = vmatprep.subr.bf16.mxu0 0
      %406 = vmatpush1.bf16.msra.mxu0 0
      %407 = vmatprep.subr.bf16.mxu0 0
      %408 = vmatpush1.bf16.msra.mxu0 0
      %409 = vmatprep.subr.bf16.mxu0 0
      %410 = vmatpush1.bf16.msra.mxu0 0
      %411 = vmatprep.subr.bf16.mxu0 0
      %412 = vmatpush1.bf16.msra.mxu0 0
      %413 = vmatprep.subr.bf16.mxu0 0
      %414 = vmatpush1.bf16.msra.mxu0 0
      %415 = vmatprep.subr.bf16.mxu0 0
      %416 = vmatpush1.bf16.msra.mxu0 0
      %417 = vmatprep.subr.bf16.mxu0 0
      %418 = vmatpush1.bf16.msra.mxu0 0
      %419 = vmatprep.subr.bf16.mxu0 0
      %420 = vmatpush1.bf16.msra.mxu0 0
      %421 = vmatprep.subr.bf16.mxu0 0
      %422 = vmatpush1.bf16.msra.mxu0 0
      %423 = vmatprep.subr.bf16.mxu0 0
      %424 = vmatpush1.bf16.msra.mxu0 0
      %425 = vmatprep.subr.bf16.mxu0 0
      %426 = vmatpush1.bf16.msra.mxu0 0
      %427 = vmatprep.subr.bf16.mxu0 0
      %428 = vmatpush1.bf16.msra.mxu0 0
      %429 = vmatprep.subr.bf16.mxu0 0
      %430 = vmatpush1.bf16.msra.mxu0 0
      %431 = vmatprep.mubr.bf16.mxu0 0
      %432 = vmatmul.mubr.bf16.gmra.mrb[0].mxu0 %v394
      %v433 = vpop.f32.mrb[0].mxu0
      %v434 = vadd.f32 0.0, %v433
      %v435 = vpop.f32.mrb[0].mxu0
      %v436 = vpop.f32.mrb[0].mxu0
      %v437 = vadd.f32 0.0, %v436
      %v438 = vpop.f32.mrb[0].mxu0
      %439 = vmatprep.mubr.bf16.mxu0 0
      %440 = vmatmul.mubr.bf16.gmra.mrb[0].mxu0 %v397
      %v441 = vpop.f32.mrb[0].mxu0
      %v442 = vadd.f32 0.0, %v441
      %v443 = vpop.f32.mrb[0].mxu0
      %v444 = vpop.f32.mrb[0].mxu0
      %v445 = vadd.f32 0.0, %v444
      %v446 = vpop.f32.mrb[0].mxu0
      %447 = vdwg.mxu0
      %v448 = vadd.f32 %v348, %v434
      %v449 = vadd.f32 %v351, %v437
      %v450 = vadd.f32 %v356, %v442
      %v451 = vadd.f32 %v359, %v445
      %452 = vrot.lane.b32.xlu0 %v205, 15
      %v453 = vpop.permute.xlu0 %452
      %v455 = vmul.f32 %v199, %v453
      %v456 = vmul.f32 %v200, %v453
      %s457 = scalar_lea.vmem %s1, 48
      %v458 = vld [vmem:[%s457] sm:$0xf]
      %v459 = vld [vmem:[%s457 + $0x4] sm:$0xf]
      %v460 = vld [vmem:[%s457 + $0x8] sm:$0xf]
      %v461 = vld [vmem:[%s457 + $0xc] sm:$0xf]
      %v462 = vpack.c.bf16 %v456, %v455
      %v467 = vunpack.c.l.b16 %v458
      %v468 = vunpack.c.l.b16 %v459
      %v469 = vunpack.c.l.b16 %v460
      %v470 = vunpack.c.l.b16 %v461
      %v471 = vpack.c.b16 %v468, %v467
      %v472 = vpack.c.b16 %v470, %v469
      %474 = vrot.lane.b32.xlu0 %v462, 113
      %v475 = vpop.permute.xlu0 %474
      %v478 = vsel %vm237, %v471, 0
      %v481 = vsel %vm237, %v472, 0
      %483 = vmatprep.subr.bf16.mxu0 0
      %484 = vmatpush1.bf16.msra.mxu0 %v475
      %485 = vmatprep.subr.bf16.mxu0 0
      %486 = vmatpush1.bf16.msra.mxu0 0
      %487 = vmatprep.subr.bf16.mxu0 0
      %488 = vmatpush1.bf16.msra.mxu0 0
      %489 = vmatprep.subr.bf16.mxu0 0
      %490 = vmatpush1.bf16.msra.mxu0 0
      %491 = vmatprep.subr.bf16.mxu0 0
      %492 = vmatpush1.bf16.msra.mxu0 0
      %493 = vmatprep.subr.bf16.mxu0 0
      %494 = vmatpush1.bf16.msra.mxu0 0
      %495 = vmatprep.subr.bf16.mxu0 0
      %496 = vmatpush1.bf16.msra.mxu0 0
      %497 = vmatprep.subr.bf16.mxu0 0
      %498 = vmatpush1.bf16.msra.mxu0 0
      %499 = vmatprep.subr.bf16.mxu0 0
      %500 = vmatpush1.bf16.msra.mxu0 0
      %501 = vmatprep.subr.bf16.mxu0 0
      %502 = vmatpush1.bf16.msra.mxu0 0
      %503 = vmatprep.subr.bf16.mxu0 0
      %504 = vmatpush1.bf16.msra.mxu0 0
      %505 = vmatprep.subr.bf16.mxu0 0
      %506 = vmatpush1.bf16.msra.mxu0 0
      %507 = vmatprep.subr.bf16.mxu0 0
      %508 = vmatpush1.bf16.msra.mxu0 0
      %509 = vmatprep.subr.bf16.mxu0 0
      %510 = vmatpush1.bf16.msra.mxu0 0
      %511 = vmatprep.subr.bf16.mxu0 0
      %512 = vmatpush1.bf16.msra.mxu0 0
      %513 = vmatprep.subr.bf16.mxu0 0
      %514 = vmatpush1.bf16.msra.mxu0 0
      %515 = vmatprep.mubr.bf16.mxu0 0
      %516 = vmatmul.mubr.bf16.gmra.mrb[0].mxu0 %v478
      %v517 = vpop.f32.mrb[0].mxu0
      %v518 = vadd.f32 0.0, %v517
      %v519 = vpop.f32.mrb[0].mxu0
      %v520 = vpop.f32.mrb[0].mxu0
      %v521 = vadd.f32 0.0, %v520
      %v522 = vpop.f32.mrb[0].mxu0
      %523 = vmatprep.mubr.bf16.mxu0 0
      %524 = vmatmul.mubr.bf16.gmra.mrb[0].mxu0 %v481
      %v525 = vpop.f32.mrb[0].mxu0
      %v526 = vadd.f32 0.0, %v525
      %v527 = vpop.f32.mrb[0].mxu0
      %v528 = vpop.f32.mrb[0].mxu0
      %v529 = vadd.f32 0.0, %v528
      %v530 = vpop.f32.mrb[0].mxu0
      %531 = vdwg.mxu0
      %v532 = vadd.f32 %v448, %v518
      %v533 = vadd.f32 %v449, %v521
      %v534 = vadd.f32 %v450, %v526
      %v535 = vadd.f32 %v451, %v529
      %s536 = scalar_lea.vmem %s1, 64
      %v537 = vld [vmem:[%s536] sm:$0xf]
      %v538 = vld [vmem:[%s536 + $0x4] sm:$0xf]
      %v539 = vld [vmem:[%s536 + $0x8] sm:$0xf]
      %v540 = vld [vmem:[%s536 + $0xc] sm:$0xf]
      %v545 = vunpack.c.l.b16 %v537
      %v546 = vunpack.c.l.b16 %v538
      %v547 = vunpack.c.l.b16 %v539
      %v548 = vunpack.c.l.b16 %v540
      %v549 = vpack.c.b16 %v546, %v545
      %v550 = vpack.c.b16 %v548, %v547
      %551 = vrot.lane.b32.xlu0 %v222, 112
      %v552 = vpop.permute.xlu0 %551
      %v555 = vsel %vm237, %v549, 0
      %v558 = vsel %vm237, %v550, 0
      %560 = vmatprep.subr.bf16.mxu0 0
      %561 = vmatpush1.bf16.msra.mxu0 %v552
      %562 = vmatprep.subr.bf16.mxu0 0
      %563 = vmatpush1.bf16.msra.mxu0 0
      %564 = vmatprep.subr.bf16.mxu0 0
      %565 = vmatpush1.bf16.msra.mxu0 0
      %566 = vmatprep.subr.bf16.mxu0 0
      %567 = vmatpush1.bf16.msra.mxu0 0
      %568 = vmatprep.subr.bf16.mxu0 0
      %569 = vmatpush1.bf16.msra.mxu0 0
      %570 = vmatprep.subr.bf16.mxu0 0
      %571 = vmatpush1.bf16.msra.mxu0 0
      %572 = vmatprep.subr.bf16.mxu0 0
      %573 = vmatpush1.bf16.msra.mxu0 0
      %574 = vmatprep.subr.bf16.mxu0 0
      %575 = vmatpush1.bf16.msra.mxu0 0
      %576 = vmatprep.subr.bf16.mxu0 0
      %577 = vmatpush1.bf16.msra.mxu0 0
      %578 = vmatprep.subr.bf16.mxu0 0
      %579 = vmatpush1.bf16.msra.mxu0 0
      %580 = vmatprep.subr.bf16.mxu0 0
      %581 = vmatpush1.bf16.msra.mxu0 0
      %582 = vmatprep.subr.bf16.mxu0 0
      %583 = vmatpush1.bf16.msra.mxu0 0
      %584 = vmatprep.subr.bf16.mxu0 0
      %585 = vmatpush1.bf16.msra.mxu0 0
      %586 = vmatprep.subr.bf16.mxu0 0
      %587 = vmatpush1.bf16.msra.mxu0 0
      %588 = vmatprep.subr.bf16.mxu0 0
      %589 = vmatpush1.bf16.msra.mxu0 0
      %590 = vmatprep.subr.bf16.mxu0 0
      %591 = vmatpush1.bf16.msra.mxu0 0
      %592 = vmatprep.mubr.bf16.mxu0 0
      %593 = vmatmul.mubr.bf16.gmra.mrb[0].mxu0 %v555
      %v594 = vpop.f32.mrb[0].mxu0
      %v595 = vadd.f32 0.0, %v594
      %v596 = vpop.f32.mrb[0].mxu0
      %v597 = vpop.f32.mrb[0].mxu0
      %v598 = vadd.f32 0.0, %v597
      %v599 = vpop.f32.mrb[0].mxu0
      %600 = vmatprep.mubr.bf16.mxu0 0
      %601 = vmatmul.mubr.bf16.gmra.mrb[0].mxu0 %v558
      %v602 = vpop.f32.mrb[0].mxu0
      %v603 = vadd.f32 0.0, %v602
      %v604 = vpop.f32.mrb[0].mxu0
      %v605 = vpop.f32.mrb[0].mxu0
      %v606 = vadd.f32 0.0, %v605
      %v607 = vpop.f32.mrb[0].mxu0
      %608 = vdwg.mxu0
      %v609 = vadd.f32 %v532, %v595
      %v610 = vadd.f32 %v533, %v598
      %v611 = vadd.f32 %v534, %v603
      %v612 = vadd.f32 %v535, %v606
      %613 = vrot.lane.b32.xlu0 %v366, 17
      %v614 = vpop.permute.xlu0 %613
      %v616 = vmul.f32 %v199, %v614
      %v617 = vmul.f32 %v200, %v614
      %s618 = scalar_lea.vmem %s1, 80
      %v619 = vld [vmem:[%s618] sm:$0xf]
      %v620 = vld [vmem:[%s618 + $0x4] sm:$0xf]
      %v621 = vld [vmem:[%s618 + $0x8] sm:$0xf]
      %v622 = vld [vmem:[%s618 + $0xc] sm:$0xf]
      %v623 = vpack.c.bf16 %v617, %v616
      %v628 = vunpack.c.l.b16 %v619
      %v629 = vunpack.c.l.b16 %v620
      %v630 = vunpack.c.l.b16 %v621
      %v631 = vunpack.c.l.b16 %v622
      %v632 = vpack.c.b16 %v629, %v628
      %v633 = vpack.c.b16 %v631, %v630
      %635 = vrot.lane.b32.xlu0 %v623, 111
      %v636 = vpop.permute.xlu0 %635
      %v639 = vsel %vm237, %v632, 0
      %v642 = vsel %vm237, %v633, 0
      %644 = vmatprep.subr.bf16.mxu0 0
      %645 = vmatpush1.bf16.msra.mxu0 %v636
      %646 = vmatprep.subr.bf16.mxu0 0
      %647 = vmatpush1.bf16.msra.mxu0 0
      %648 = vmatprep.subr.bf16.mxu0 0
      %649 = vmatpush1.bf16.msra.mxu0 0
      %650 = vmatprep.subr.bf16.mxu0 0
      %651 = vmatpush1.bf16.msra.mxu0 0
      %652 = vmatprep.subr.bf16.mxu0 0
      %653 = vmatpush1.bf16.msra.mxu0 0
      %654 = vmatprep.subr.bf16.mxu0 0
      %655 = vmatpush1.bf16.msra.mxu0 0
      %656 = vmatprep.subr.bf16.mxu0 0
      %657 = vmatpush1.bf16.msra.mxu0 0
      %658 = vmatprep.subr.bf16.mxu0 0
      %659 = vmatpush1.bf16.msra.mxu0 0
      %660 = vmatprep.subr.bf16.mxu0 0
      %661 = vmatpush1.bf16.msra.mxu0 0
      %662 = vmatprep.subr.bf16.mxu0 0
      %663 = vmatpush1.bf16.msra.mxu0 0
      %664 = vmatprep.subr.bf16.mxu0 0
      %665 = vmatpush1.bf16.msra.mxu0 0
      %666 = vmatprep.subr.bf16.mxu0 0
      %667 = vmatpush1.bf16.msra.mxu0 0
      %668 = vmatprep.subr.bf16.mxu0 0
      %669 = vmatpush1.bf16.msra.mxu0 0
      %670 = vmatprep.subr.bf16.mxu0 0
      %671 = vmatpush1.bf16.msra.mxu0 0
      %672 = vmatprep.subr.bf16.mxu0 0
      %673 = vmatpush1.bf16.msra.mxu0 0
      %674 = vmatprep.subr.bf16.mxu0 0
      %675 = vmatpush1.bf16.msra.mxu0 0
      %676 = vmatprep.mubr.bf16.mxu0 0
      %677 = vmatmul.mubr.bf16.gmra.mrb[0].mxu0 %v639
      %v678 = vpop.f32.mrb[0].mxu0
      %v679 = vadd.f32 0.0, %v678
      %v680 = vpop.f32.mrb[0].mxu0
      %v681 = vpop.f32.mrb[0].mxu0
      %v682 = vadd.f32 0.0, %v681
      %v683 = vpop.f32.mrb[0].mxu0
      %684 = vmatprep.mubr.bf16.mxu0 0
      %685 = vmatmul.mubr.bf16.gmra.mrb[0].mxu0 %v642
      %v686 = vpop.f32.mrb[0].mxu0
      %v687 = vadd.f32 0.0, %v686
      %v688 = vpop.f32.mrb[0].mxu0
      %v689 = vpop.f32.mrb[0].mxu0
      %v690 = vadd.f32 0.0, %v689
      %v691 = vpop.f32.mrb[0].mxu0
      %692 = vdwg.mxu0
      %v693 = vadd.f32 %v609, %v679
      %v694 = vadd.f32 %v610, %v682
      %v695 = vadd.f32 %v611, %v687
      %v696 = vadd.f32 %v612, %v690
      %697 = vrot.lane.b32.xlu0 %v205, 23
      %v698 = vpop.permute.xlu0 %697
      %v700 = vmul.f32 %v199, %v698
      %v701 = vmul.f32 %v200, %v698
      %s702 = scalar_lea.vmem %s1, 96
      %v703 = vld [vmem:[%s702] sm:$0xf]
      %v704 = vld [vmem:[%s702 + $0x4] sm:$0xf]
      %v705 = vld [vmem:[%s702 + $0x8] sm:$0xf]
      %v706 = vld [vmem:[%s702 + $0xc] sm:$0xf]
      %v707 = vpack.c.bf16 %v701, %v700
      %v712 = vunpack.c.l.b16 %v703
      %v713 = vunpack.c.l.b16 %v704
      %v714 = vunpack.c.l.b16 %v705
      %v715 = vunpack.c.l.b16 %v706
      %v716 = vpack.c.b16 %v713, %v712
      %v717 = vpack.c.b16 %v715, %v714
      %719 = vrot.lane.b32.xlu0 %v707, 105
      %v720 = vpop.permute.xlu0 %719
      %v723 = vsel %vm237, %v716, 0
      %v726 = vsel %vm237, %v717, 0
      %728 = vmatprep.subr.bf16.mxu0 0
      %729 = vmatpush1.bf16.msra.mxu0 %v720
      %730 = vmatprep.subr.bf16.mxu0 0
      %731 = vmatpush1.bf16.msra.mxu0 0
      %732 = vmatprep.subr.bf16.mxu0 0
      %733 = vmatpush1.bf16.msra.mxu0 0
      %734 = vmatprep.subr.bf16.mxu0 0
      %735 = vmatpush1.bf16.msra.mxu0 0
      %736 = vmatprep.subr.bf16.mxu0 0
      %737 = vmatpush1.bf16.msra.mxu0 0
      %738 = vmatprep.subr.bf16.mxu0 0
      %739 = vmatpush1.bf16.msra.mxu0 0
      %740 = vmatprep.subr.bf16.mxu0 0
      %741 = vmatpush1.bf16.msra.mxu0 0
      %742 = vmatprep.subr.bf16.mxu0 0
      %743 = vmatpush1.bf16.msra.mxu0 0
      %744 = vmatprep.subr.bf16.mxu0 0
      %745 = vmatpush1.bf16.msra.mxu0 0
      %746 = vmatprep.subr.bf16.mxu0 0
      %747 = vmatpush1.bf16.msra.mxu0 0
      %748 = vmatprep.subr.bf16.mxu0 0
      %749 = vmatpush1.bf16.msra.mxu0 0
      %750 = vmatprep.subr.bf16.mxu0 0
      %751 = vmatpush1.bf16.msra.mxu0 0
      %752 = vmatprep.subr.bf16.mxu0 0
      %753 = vmatpush1.bf16.msra.mxu0 0
      %754 = vmatprep.subr.bf16.mxu0 0
      %755 = vmatpush1.bf16.msra.mxu0 0
      %756 = vmatprep.subr.bf16.mxu0 0
      %757 = vmatpush1.bf16.msra.mxu0 0
      %758 = vmatprep.subr.bf16.mxu0 0
      %759 = vmatpush1.bf16.msra.mxu0 0
      %760 = vmatprep.mubr.bf16.mxu0 0
      %761 = vmatmul.mubr.bf16.gmra.mrb[0].mxu0 %v723
      %v762 = vpop.f32.mrb[0].mxu0
      %v763 = vadd.f32 0.0, %v762
      %v764 = vpop.f32.mrb[0].mxu0
      %v765 = vpop.f32.mrb[0].mxu0
      %v766 = vadd.f32 0.0, %v765
      %v767 = vpop.f32.mrb[0].mxu0
      %768 = vmatprep.mubr.bf16.mxu0 0
      %769 = vmatmul.mubr.bf16.gmra.mrb[0].mxu0 %v726
      %v770 = vpop.f32.mrb[0].mxu0
      %v771 = vadd.f32 0.0, %v770
      %v772 = vpop.f32.mrb[0].mxu0
      %v773 = vpop.f32.mrb[0].mxu0
      %v774 = vadd.f32 0.0, %v773
      %v775 = vpop.f32.mrb[0].mxu0
      %776 = vdwg.mxu0
      %v777 = vadd.f32 %v693, %v763
      %v778 = vadd.f32 %v694, %v766
      %v779 = vadd.f32 %v695, %v771
      %v780 = vadd.f32 %v696, %v774
      %s781 = scalar_lea.vmem %s1, 112
      %v782 = vld [vmem:[%s781] sm:$0xf]
      %v783 = vld [vmem:[%s781 + $0x4] sm:$0xf]
      %v784 = vld [vmem:[%s781 + $0x8] sm:$0xf]
      %v785 = vld [vmem:[%s781 + $0xc] sm:$0xf]
      %v790 = vunpack.c.l.b16 %v782
      %v791 = vunpack.c.l.b16 %v783
      %v792 = vunpack.c.l.b16 %v784
      %v793 = vunpack.c.l.b16 %v785
      %v794 = vpack.c.b16 %v791, %v790
      %v795 = vpack.c.b16 %v793, %v792
      %796 = vrot.lane.b32.xlu0 %v222, 104
      %v797 = vpop.permute.xlu0 %796
      %v800 = vsel %vm237, %v794, 0
      %v803 = vsel %vm237, %v795, 0
      %805 = vmatprep.subr.bf16.mxu0 0
      %806 = vmatpush1.bf16.msra.mxu0 %v797
      %807 = vmatprep.subr.bf16.mxu0 0
      %808 = vmatpush1.bf16.msra.mxu0 0
      %809 = vmatprep.subr.bf16.mxu0 0
      %810 = vmatpush1.bf16.msra.mxu0 0
      %811 = vmatprep.subr.bf16.mxu0 0
      %812 = vmatpush1.bf16.msra.mxu0 0
      %813 = vmatprep.subr.bf16.mxu0 0
      %814 = vmatpush1.bf16.msra.mxu0 0
      %815 = vmatprep.subr.bf16.mxu0 0
      %816 = vmatpush1.bf16.msra.mxu0 0
      %817 = vmatprep.subr.bf16.mxu0 0
      %818 = vmatpush1.bf16.msra.mxu0 0
      %819 = vmatprep.subr.bf16.mxu0 0
      %820 = vmatpush1.bf16.msra.mxu0 0
      %821 = vmatprep.subr.bf16.mxu0 0
      %822 = vmatpush1.bf16.msra.mxu0 0
      %823 = vmatprep.subr.bf16.mxu0 0
      %824 = vmatpush1.bf16.msra.mxu0 0
      %825 = vmatprep.subr.bf16.mxu0 0
      %826 = vmatpush1.bf16.msra.mxu0 0
      %827 = vmatprep.subr.bf16.mxu0 0
      %828 = vmatpush1.bf16.msra.mxu0 0
      %829 = vmatprep.subr.bf16.mxu0 0
      %830 = vmatpush1.bf16.msra.mxu0 0
      %831 = vmatprep.subr.bf16.mxu0 0
      %832 = vmatpush1.bf16.msra.mxu0 0
      %833 = vmatprep.subr.bf16.mxu0 0
      %834 = vmatpush1.bf16.msra.mxu0 0
      %835 = vmatprep.subr.bf16.mxu0 0
      %836 = vmatpush1.bf16.msra.mxu0 0
      %837 = vmatprep.mubr.bf16.mxu0 0
      %838 = vmatmul.mubr.bf16.gmra.mrb[0].mxu0 %v800
      %v839 = vpop.f32.mrb[0].mxu0
      %v840 = vadd.f32 0.0, %v839
      %v841 = vpop.f32.mrb[0].mxu0
      %v842 = vpop.f32.mrb[0].mxu0
      %v843 = vadd.f32 0.0, %v842
      %v844 = vpop.f32.mrb[0].mxu0
      %845 = vmatprep.mubr.bf16.mxu0 0
      %846 = vmatmul.mubr.bf16.gmra.mrb[0].mxu0 %v803
      %v847 = vpop.f32.mrb[0].mxu0
      %v848 = vadd.f32 0.0, %v847
      %v849 = vpop.f32.mrb[0].mxu0
      %v850 = vpop.f32.mrb[0].mxu0
      %v851 = vadd.f32 0.0, %v850
      %v852 = vpop.f32.mrb[0].mxu0
      %853 = vdwg.mxu0
      %v854 = vadd.f32 %v777, %v840
      %v855 = vadd.f32 %v778, %v843
      %v856 = vadd.f32 %v779, %v848
      %v857 = vadd.f32 %v780, %v851
      %858 = vrot.lane.b32.xlu0 %v366, 25
      %v859 = vpop.permute.xlu0 %858
      %v861 = vmul.f32 %v199, %v859
      %v862 = vmul.f32 %v200, %v859
      %s863 = scalar_lea.vmem %s1, 128
      %v864 = vld [vmem:[%s863] sm:$0xf]
      %v865 = vld [vmem:[%s863 + $0x4] sm:$0xf]
      %v866 = vld [vmem:[%s863 + $0x8] sm:$0xf]
      %v867 = vld [vmem:[%s863 + $0xc] sm:$0xf]
      %v868 = vpack.c.bf16 %v862, %v861
      %v873 = vunpack.c.l.b16 %v864
      %v874 = vunpack.c.l.b16 %v865
      %v875 = vunpack.c.l.b16 %v866
      %v876 = vunpack.c.l.b16 %v867
      %v877 = vpack.c.b16 %v874, %v873
      %v878 = vpack.c.b16 %v876, %v875
      %880 = vrot.lane.b32.xlu0 %v868, 103
      %v881 = vpop.permute.xlu0 %880
      %v884 = vsel %vm237, %v877, 0
      %v887 = vsel %vm237, %v878, 0
      %889 = vmatprep.subr.bf16.mxu0 0
      %890 = vmatpush1.bf16.msra.mxu0 %v881
      %891 = vmatprep.subr.bf16.mxu0 0
      %892 = vmatpush1.bf16.msra.mxu0 0
      %893 = vmatprep.subr.bf16.mxu0 0
      %894 = vmatpush1.bf16.msra.mxu0 0
      %895 = vmatprep.subr.bf16.mxu0 0
      %896 = vmatpush1.bf16.msra.mxu0 0
      %897 = vmatprep.subr.bf16.mxu0 0
      %898 = vmatpush1.bf16.msra.mxu0 0
      %899 = vmatprep.subr.bf16.mxu0 0
      %900 = vmatpush1.bf16.msra.mxu0 0
      %901 = vmatprep.subr.bf16.mxu0 0
      %902 = vmatpush1.bf16.msra.mxu0 0
      %903 = vmatprep.subr.bf16.mxu0 0
      %904 = vmatpush1.bf16.msra.mxu0 0
      %905 = vmatprep.subr.bf16.mxu0 0
      %906 = vmatpush1.bf16.msra.mxu0 0
      %907 = vmatprep.subr.bf16.mxu0 0
      %908 = vmatpush1.bf16.msra.mxu0 0
      %909 = vmatprep.subr.bf16.mxu0 0
      %910 = vmatpush1.bf16.msra.mxu0 0
      %911 = vmatprep.subr.bf16.mxu0 0
      %912 = vmatpush1.bf16.msra.mxu0 0
      %913 = vmatprep.subr.bf16.mxu0 0
      %914 = vmatpush1.bf16.msra.mxu0 0
      %915 = vmatprep.subr.bf16.mxu0 0
      %916 = vmatpush1.bf16.msra.mxu0 0
      %917 = vmatprep.subr.bf16.mxu0 0
      %918 = vmatpush1.bf16.msra.mxu0 0
      %919 = vmatprep.subr.bf16.mxu0 0
      %920 = vmatpush1.bf16.msra.mxu0 0
      %921 = vmatprep.mubr.bf16.mxu0 0
      %922 = vmatmul.mubr.bf16.gmra.mrb[0].mxu0 %v884
      %v923 = vpop.f32.mrb[0].mxu0
      %v924 = vadd.f32 0.0, %v923
      %v925 = vpop.f32.mrb[0].mxu0
      %v926 = vpop.f32.mrb[0].mxu0
      %v927 = vadd.f32 0.0, %v926
      %v928 = vpop.f32.mrb[0].mxu0
      %929 = vmatprep.mubr.bf16.mxu0 0
      %930 = vmatmul.mubr.bf16.gmra.mrb[0].mxu0 %v887
      %v931 = vpop.f32.mrb[0].mxu0
      %v932 = vadd.f32 0.0, %v931
      %v933 = vpop.f32.mrb[0].mxu0
      %v934 = vpop.f32.mrb[0].mxu0
      %v935 = vadd.f32 0.0, %v934
      %v936 = vpop.f32.mrb[0].mxu0
      %937 = vdwg.mxu0
      %v938 = vadd.f32 %v854, %v924
      %v939 = vadd.f32 %v855, %v927
      %v940 = vadd.f32 %v856, %v932
      %v941 = vadd.f32 %v857, %v935
      %v942 = vld [vmem:[%s2] sm:$0xff]
      %v943 = vld [vmem:[%s2 + $0x8] sm:$0xff]
      %v944 = vld [vmem:[%s2 + $0x10] sm:$0xff]
      %v945 = vld [vmem:[%s2 + $0x18] sm:$0xff]
      %947 = vset.pattern.permute.xlu0 0
      %948 = vperm.xlu0 %947, %v942
      %v949 = vpop.permute.xlu0 %948
      %952 = vset.pattern.permute.xlu0 0
      %953 = vperm.xlu0 %952, %v943
      %v954 = vpop.permute.xlu0 %953
      %957 = vset.pattern.permute.xlu0 0
      %958 = vperm.xlu0 %957, %v944
      %v959 = vpop.permute.xlu0 %958
      %962 = vset.pattern.permute.xlu0 0
      %963 = vperm.xlu0 %962, %v945
      %v964 = vpop.permute.xlu0 %963
      %v966 = vadd.f32 %v938, %v949
      %v967 = vadd.f32 %v939, %v954
      %v968 = vadd.f32 %v940, %v959
      %v969 = vadd.f32 %v941, %v964
      %v970 = vmax.f32 %v966, 0.0
      %v971 = vmax.f32 %v967, 0.0
      %v972 = vmax.f32 %v968, 0.0
      %v973 = vmax.f32 %v969, 0.0
      %vm974 = vcmask 523264
      %975 = vst.msk [vmem:[%s197] sm:$0xff] %vm974, %v970
      %976 = vst.msk [vmem:[%s197 + $0x8] sm:$0xff] %vm974, %v971
      %977 = vst.msk [vmem:[%s197 + $0x10] sm:$0xff] %vm974, %v972
      %978 = vst.msk [vmem:[%s197 + $0x18] sm:$0xff] %vm974, %v973
      %p979 = scmp.lt.s32.totalorder %s15, 1
      %s980 = scalar_select %p979, %s15, 1
      %s981 = smul.addr %s980, 4
      %s982 = smul.addr %s981, 8
      %s983 = scalar_lea.vmem %s4, %s982
      // Predicated region
      $region37: #{_lambda_.9} parent=35 // pred_check
        %p984 = pneg %p122
      $region38: #{_lambda_.9} parent=35 // pred_check_branch
        %986 = sbr.rel (%p984) target = $region40
      $region39: #{_lambda_.9} parent=35 // pred_region
        _
      $region40: #{_lambda_.9} parent=35 // pred_fallthru
        _
    $region36: #{_lambda_.9} parent=5 // pred_fallthru
      _
    %p987 = scmp.le.s32.totalorder 2, %s10
    // Predicated region
    $region41: #{_lambda_.9} parent=5 // pred_check
      %p988 = pneg %p987
    $region42: #{_lambda_.9} parent=5 // pred_check_branch
      %990 = sbr.rel (%p988) target = $region44
    $region43: #{_lambda_.9} parent=5 // pred_region
      %s991 = ssub.s32 %s10, 2
      // Predicated region
      $region45: #{_lambda_.9} parent=43 // pred_check
        %p992 = pneg %p128
      $region46: #{_lambda_.9} parent=43 // pred_check_branch
        %994 = sbr.rel (%p992) target = $region48
      $region47: #{_lambda_.9} parent=43 // pred_region
        %p995 = scmp.lt.s32.totalorder %s16, 1
        %s996 = scalar_select %p995, %s16, 1
        %s997 = smul.addr %s996, 4
        %s998 = smul.addr %s997, 8
        %s999 = scalar_lea.vmem %s4, %s998
      $region48: #{_lambda_.9} parent=43 // pred_fallthru
        _
    $region44: #{_lambda_.9} parent=5 // pred_fallthru
      _
  $region6: #{_lambda_.9} parent=0 // loop_footer
    %s14 = sadd.s32 1, %s10
  $region7: #{_lambda_.9} parent=0 // loop_footer_branch
    %9 = sbr.rel target = $region3
  $region8: #{_lambda_.9} parent=0 // loop_exit
    _

// kernel: _lambda_.10
$region0: #{_lambda_.10}
  #allocation0 [shape = 'u32[]', space=smem, size = 0x4, offset = 0x4, fixed_abs, tag = 'smem constant byte address 0x4 - core index']
  #allocation1 [shape = 'u32[144,128]{1,0:T(1,128)}', space=vmem, size = 0x12000, scoped, tag = 'internal scratch']
  %s0 = inlined_call_operand.vmem [shape: f32[2,32,96], index: 0, kind: input, shape index: {}]
  %s1 = inlined_call_operand.vmem [shape: bf16[9,16,32], index: 1, kind: input, shape index: {}]
  %s2 = inlined_call_operand.vmem [shape: f32[16,1], index: 2, kind: input, shape index: {}]
  %s3 = inlined_call_operand.vmem [shape: f32[2,64], index: 3, kind: input, shape index: {}]
  %s4 = inlined_call_operand.vmem [shape: f32[2,16,64], index: 4, kind: output, shape index: {}]
  %s5 = sld [smem:[#allocation0]]
  $region49: #{_lambda_.10} parent=0
    _
  %s7 = ssub.s32 1, %s5
  %s8 = scalar_select 0, %s7, %s5
  loop: start=0, step=1, limit=4
  $region2: #{_lambda_.10} parent=0 // loop_pre_header
    _
  $region3: #{_lambda_.10} parent=0 // loop_header
    %s10 = sphi 0, %s14
    %p11 = scmp.ge.s32.totalorder %s10, 4
    %s20 = sphi 0, %s22
    %s23 = sphi 0, %s20
    %s24 = sphi 0, %s23
    %s40 = sphi 0, %s24
    %s44 = sphi 0, %s44
    %s46 = sphi 0, %s44
    %s47 = sphi 0, %s46
    %s61 = sphi 0, %s47
    %s65 = sphi 0, %s65
    %s67 = sphi 0, %s65
    %s68 = sphi 0, %s67
    %s82 = sphi 0, %s68
    %s86 = sphi 0, %s86
    %s88 = sphi 0, %s86
    %s89 = sphi 0, %s88
    %s103 = sphi 0, %s89
    %s109 = sphi 0, %s111
    %s112 = sphi 0, %s109
    %s113 = sphi 0, %s112
    %s129 = sphi 0, %s113
  $region4: #{_lambda_.10} parent=0 // loop_header_branch
    %13 = sbr.rel (%p11) target = $region8
  $region5: #{_lambda_.10} parent=0 // loop_body
    %s15 = ssub.s32 %s10, 1
    %s16 = ssub.s32 %s10, 2
    %s17 = sadd.s32 %s10, 1
    %s18 = ssub.s32 %s10, %s17
    %p19 = scmp.eq.s32.totalorder %s18, 0
    %s21 = sadd.s32 %s20, 1
    %s22 = scalar_select %p19, %s20, %s21
    %p25 = pneg %p19
    %p26 = scmp.eq.s32.totalorder %s10, 1
    %p27 = por %p25, %p26
    %p28 = scmp.ne.s32.totalorder %s20, %s23
    %p29 = scmp.eq.s32.totalorder %s10, 0
    %p30 = por %p28, %p29
    %p31 = scmp.ne.s32.totalorder %s20, %s23
    %p32 = scmp.eq.s32.totalorder %s15, 1
    %p33 = por %p31, %p32
    %p34 = scmp.ne.s32.totalorder %s23, %s24
    %p35 = scmp.eq.s32.totalorder %s15, 0
    %p36 = por %p34, %p35
    %p37 = scmp.ne.s32.totalorder %s23, %s24
    %p38 = scmp.eq.s32.totalorder %s16, 1
    %p39 = por %p37, %p38
    %p41 = scmp.ne.s32.totalorder %s24, %s40
    %p42 = scmp.eq.s32.totalorder %s16, 0
    %p43 = por %p41, %p42
    %s45 = sadd.s32 %s44, 1
    %p48 = scmp.eq.s32.totalorder %s10, 1
    %p49 = scmp.ne.s32.totalorder %s44, %s46
    %p50 = scmp.eq.s32.totalorder %s10, 0
    %p51 = por %p49, %p50
    %p52 = scmp.ne.s32.totalorder %s44, %s46
    %p53 = scmp.eq.s32.totalorder %s15, 1
    %p54 = por %p52, %p53
    %p55 = scmp.ne.s32.totalorder %s46, %s47
    %p56 = scmp.eq.s32.totalorder %s15, 0
    %p57 = por %p55, %p56
    %p58 = scmp.ne.s32.totalorder %s46, %s47
    %p59 = scmp.eq.s32.totalorder %s16, 1
    %p60 = por %p58, %p59
    %p62 = scmp.ne.s32.totalorder %s47, %s61
    %p63 = scmp.eq.s32.totalorder %s16, 0
    %p64 = por %p62, %p63
    %s66 = sadd.s32 %s65, 1
    %p69 = scmp.eq.s32.totalorder %s10, 1
    %p70 = scmp.ne.s32.totalorder %s65, %s67
    %p71 = scmp.eq.s32.totalorder %s10, 0
    %p72 = por %p70, %p71
    %p73 = scmp.ne.s32.totalorder %s65, %s67
    %p74 = scmp.eq.s32.totalorder %s15, 1
    %p75 = por %p73, %p74
    %p76 = scmp.ne.s32.totalorder %s67, %s68
    %p77 = scmp.eq.s32.totalorder %s15, 0
    %p78 = por %p76, %p77
    %p79 = scmp.ne.s32.totalorder %s67, %s68
    %p80 = scmp.eq.s32.totalorder %s16, 1
    %p81 = por %p79, %p80
    %p83 = scmp.ne.s32.totalorder %s68, %s82
    %p84 = scmp.eq.s32.totalorder %s16, 0
    %p85 = por %p83, %p84
    %s87 = sadd.s32 %s86, 1
    %p90 = scmp.eq.s32.totalorder %s10, 1
    %p91 = scmp.ne.s32.totalorder %s86, %s88
    %p92 = scmp.eq.s32.totalorder %s10, 0
    %p93 = por %p91, %p92
    %p94 = scmp.ne.s32.totalorder %s86, %s88
    %p95 = scmp.eq.s32.totalorder %s15, 1
    %p96 = por %p94, %p95
    %p97 = scmp.ne.s32.totalorder %s88, %s89
    %p98 = scmp.eq.s32.totalorder %s15, 0
    %p99 = por %p97, %p98
    %p100 = scmp.ne.s32.totalorder %s88, %s89
    %p101 = scmp.eq.s32.totalorder %s16, 1
    %p102 = por %p100, %p101
    %p104 = scmp.ne.s32.totalorder %s89, %s103
    %p105 = scmp.eq.s32.totalorder %s16, 0
    %p106 = por %p104, %p105
    %s107 = ssub.s32 %s10, %s17
    %p108 = scmp.eq.s32.totalorder %s107, 0
    %s110 = sadd.s32 %s109, 1
    %s111 = scalar_select %p108, %s109, %s110
    %p114 = pneg %p108
    %p115 = scmp.eq.s32.totalorder %s10, 1
    %p116 = por %p114, %p115
    %p117 = scmp.ne.s32.totalorder %s109, %s112
    %p118 = scmp.eq.s32.totalorder %s10, 0
    %p119 = por %p117, %p118
    %p120 = scmp.ne.s32.totalorder %s109, %s112
    %p121 = scmp.eq.s32.totalorder %s15, 1
    %p122 = por %p120, %p121
    %p123 = scmp.ne.s32.totalorder %s112, %s113
    %p124 = scmp.eq.s32.totalorder %s15, 0
    %p125 = por %p123, %p124
    %p126 = scmp.ne.s32.totalorder %s112, %s113
    %p127 = scmp.eq.s32.totalorder %s16, 1
    %p128 = por %p126, %p127
    %p130 = scmp.ne.s32.totalorder %s113, %s129
    %p131 = scmp.eq.s32.totalorder %s16, 0
    %p132 = por %p130, %p131
    %p133 = scmp.le.s32.totalorder 1, %s10
    %p134 = scmp.lt.s32.totalorder %s10, 3
    %p135 = pnand %p133, %p134
    %p136 = pneg %p135
    // Predicated region
    $region9: #{_lambda_.10} parent=5 // pred_check
      _
    $region10: #{_lambda_.10} parent=5 // pred_check_branch
      %138 = sbr.rel (%p135) target = $region12
    $region11: #{_lambda_.10} parent=5 // pred_region
      %s139 = ssub.s32 %s10, 1
      // Predicated region
      $region13: #{_lambda_.10} parent=11 // pred_check
        %p140 = pneg %p57
      $region14: #{_lambda_.10} parent=11 // pred_check_branch
        %142 = sbr.rel (%p140) target = $region16
      $region15: #{_lambda_.10} parent=11 // pred_region
        _
      $region16: #{_lambda_.10} parent=11 // pred_fallthru
        _
      // Predicated region
      $region17: #{_lambda_.10} parent=11 // pred_check
        %p143 = pneg %p78
      $region18: #{_lambda_.10} parent=11 // pred_check_branch
        %145 = sbr.rel (%p143) target = $region20
      $region19: #{_lambda_.10} parent=11 // pred_region
        _
      $region20: #{_lambda_.10} parent=11 // pred_fallthru
        _
      // Predicated region
      $region21: #{_lambda_.10} parent=11 // pred_check
        %p146 = pneg %p99
      $region22: #{_lambda_.10} parent=11 // pred_check_branch
        %148 = sbr.rel (%p146) target = $region24
      $region23: #{_lambda_.10} parent=11 // pred_region
        _
      $region24: #{_lambda_.10} parent=11 // pred_fallthru
        _
    $region12: #{_lambda_.10} parent=5 // pred_fallthru
      _
    %p149 = scmp.lt.s32.totalorder %s10, 2
    // Predicated region
    $region25: #{_lambda_.10} parent=5 // pred_check
      %p150 = pneg %p149
    $region26: #{_lambda_.10} parent=5 // pred_check_branch
      %152 = sbr.rel (%p150) target = $region28
    $region27: #{_lambda_.10} parent=5 // pred_region
      // Predicated region
      $region29: #{_lambda_.10} parent=27 // pred_check
        %p153 = pneg %p30
      $region30: #{_lambda_.10} parent=27 // pred_check_branch
        %155 = sbr.rel (%p153) target = $region32
      $region31: #{_lambda_.10} parent=27 // pred_region
        %p156 = scmp.lt.s32.totalorder %s10, 1
        %s157 = scalar_select %p156, %s10, 1
        %s158 = smul.addr %s157, 4
        %s159 = smul.addr %s158, 8
        %s160 = scalar_lea.vmem %s0, %s159
      $region32: #{_lambda_.10} parent=27 // pred_fallthru
        _
    $region28: #{_lambda_.10} parent=5 // pred_fallthru
      _
    %p161 = scmp.le.s32.totalorder 1, %s10
    %p162 = scmp.lt.s32.totalorder %s10, 3
    %p163 = pnand %p161, %p162
    %p164 = pneg %p163
    // Predicated region
    $region33: #{_lambda_.10} parent=5 // pred_check
      _
    $region34: #{_lambda_.10} parent=5 // pred_check_branch
      %166 = sbr.rel (%p163) target = $region36
    $region35: #{_lambda_.10} parent=5 // pred_region
      %s167 = ssub.s32 %s10, 1
      %p168 = scmp.lt.s32.totalorder %s15, 1
      %s169 = scalar_select %p168, %s15, 1
      %s170 = smul.addr %s169, 4
      %s171 = smul.addr %s170, 8
      %s172 = scalar_lea.vmem %s0, %s171
      %p173 = pneg %p36
      %p174 = pneg %p33
      %p175 = pneg %p57
      %p176 = pneg %p54
      %p177 = pneg %p78
      %p178 = pneg %p75
      %p179 = pneg %p99
      %p180 = pneg %p96
      %p181 = pneg %p125
      %p182 = pneg %p122
      %p183 = scmp.lt.s32.totalorder %s15, 1
      %s184 = scalar_select %p183, %s15, 1
      %s185 = smul.addr %s184, 2
      %s186 = smul.addr %s185, 8
      %s187 = scalar_lea.vmem %s4, %s186
      %p188 = scmp.lt.s32.totalorder %s15, 1
      %s189 = scalar_select %p188, %s15, 1
      %s190 = smul.addr %s189, 4
      %s191 = smul.addr %s190, 8
      %s192 = scalar_lea.vmem %s0, %s191
      %p193 = scmp.lt.s32.totalorder %s15, 1
      %s194 = scalar_select %p193, %s15, 1
      %s195 = smul.addr %s194, 2
      %s196 = smul.addr %s195, 8
      %s197 = scalar_lea.vmem %s4, %s196
      %v199 = vld [vmem:[%s192] sm:$0xff]
      %v200 = vld [vmem:[%s192 + $0x8] sm:$0xff]
      %v201 = vld [vmem:[%s192 + $0x10] sm:$0xff]
      %v202 = vld [vmem:[%s192 + $0x18] sm:$0xff]
      %v203 = vld [vmem:[%s3] sm:$0x1]
      %v204 = vlaneseq
      %v205 = vshrl.u32 %v204, 7
      %v206 = vsub.s32 0, %v205
      %v207 = vrot.slane %v203, %v206
      %209 = vrot.lane.b32.xlu0 %v207, 7
      %v210 = vpop.permute.xlu0 %209
      %v212 = vmul.f32 %v199, %v210
      %v213 = vmul.f32 %v200, %v210
      %v214 = vmul.f32 %v201, %v210
      %v215 = vmul.f32 %v202, %v210
      %v216 = vld [vmem:[%s1] sm:$0xf]
      %v217 = vld [vmem:[%s1 + $0x4] sm:$0xf]
      %v218 = vpack.c.bf16 %v213, %v212
      %v219 = vpack.c.bf16 %v215, %v214
      %s220 = scalar_lea.vmem %s1, 8
      %v221 = vld [vmem:[%s220] sm:$0xf]
      %v222 = vld [vmem:[%s220 + $0x4] sm:$0xf]
      %v223 = vpack.c.bf16 %v200, %v199
      %v224 = vpack.c.bf16 %v202, %v201
      %v227 = vunpack.c.l.b16 %v221
      %v228 = vunpack.c.l.b16 %v222
      %v229 = vpack.c.b16 %v228, %v227
      %232 = vrot.lane.b32.xlu0 %v223, 120
      %v233 = vpop.permute.xlu0 %232
      %234 = vrot.lane.b32.xlu0 %v224, 120
      %v235 = vpop.permute.xlu0 %234
      %vm238 = vcmask 261120
      %v240 = vsel %vm238, %v229, 0
      %242 = vmatprep.subr.bf16.mxu0 0
      %243 = vmatpush1.bf16.msra.mxu0 %v233
      %244 = vmatprep.subr.bf16.mxu0 0
      %245 = vmatpush1.bf16.msra.mxu0 %v235
      %246 = vmatprep.subr.bf16.mxu0 0
      %247 = vmatpush1.bf16.msra.mxu0 0
      %248 = vmatprep.subr.bf16.mxu0 0
      %249 = vmatpush1.bf16.msra.mxu0 0
      %250 = vmatprep.subr.bf16.mxu0 0
      %251 = vmatpush1.bf16.msra.mxu0 0
      %252 = vmatprep.subr.bf16.mxu0 0
      %253 = vmatpush1.bf16.msra.mxu0 0
      %254 = vmatprep.subr.bf16.mxu0 0
      %255 = vmatpush1.bf16.msra.mxu0 0
      %256 = vmatprep.subr.bf16.mxu0 0
      %257 = vmatpush1.bf16.msra.mxu0 0
      %258 = vmatprep.subr.bf16.mxu0 0
      %259 = vmatpush1.bf16.msra.mxu0 0
      %260 = vmatprep.subr.bf16.mxu0 0
      %261 = vmatpush1.bf16.msra.mxu0 0
      %262 = vmatprep.subr.bf16.mxu0 0
      %263 = vmatpush1.bf16.msra.mxu0 0
      %264 = vmatprep.subr.bf16.mxu0 0
      %265 = vmatpush1.bf16.msra.mxu0 0
      %266 = vmatprep.subr.bf16.mxu0 0
      %267 = vmatpush1.bf16.msra.mxu0 0
      %268 = vmatprep.subr.bf16.mxu0 0
      %269 = vmatpush1.bf16.msra.mxu0 0
      %270 = vmatprep.subr.bf16.mxu0 0
      %271 = vmatpush1.bf16.msra.mxu0 0
      %272 = vmatprep.subr.bf16.mxu0 0
      %273 = vmatpush1.bf16.msra.mxu0 0
      %274 = vmatprep.mubr.bf16.mxu0 0
      %275 = vmatmul.mubr.bf16.gmra.mrb[0].mxu0 %v240
      %v276 = vpop.f32.mrb[0].mxu0
      %v277 = vadd.f32 0.0, %v276
      %v278 = vpop.f32.mrb[0].mxu0
      %v279 = vpop.f32.mrb[0].mxu0
      %v280 = vadd.f32 0.0, %v279
      %v281 = vpop.f32.mrb[0].mxu0
      %282 = vdwg.mxu0
      %v285 = vunpack.c.l.b16 %v216
      %v286 = vunpack.c.l.b16 %v217
      %v287 = vpack.c.b16 %v286, %v285
      %290 = vrot.lane.b32.xlu0 %v218, 121
      %v291 = vpop.permute.xlu0 %290
      %292 = vrot.lane.b32.xlu0 %v219, 121
      %v293 = vpop.permute.xlu0 %292
      %v297 = vsel %vm238, %v287, 0
      %299 = vmatprep.subr.bf16.mxu0 0
      %300 = vmatpush1.bf16.msra.mxu0 %v291
      %301 = vmatprep.subr.bf16.mxu0 0
      %302 = vmatpush1.bf16.msra.mxu0 %v293
      %303 = vmatprep.subr.bf16.mxu0 0
      %304 = vmatpush1.bf16.msra.mxu0 0
      %305 = vmatprep.subr.bf16.mxu0 0
      %306 = vmatpush1.bf16.msra.mxu0 0
      %307 = vmatprep.subr.bf16.mxu0 0
      %308 = vmatpush1.bf16.msra.mxu0 0
      %309 = vmatprep.subr.bf16.mxu0 0
      %310 = vmatpush1.bf16.msra.mxu0 0
      %311 = vmatprep.subr.bf16.mxu0 0
      %312 = vmatpush1.bf16.msra.mxu0 0
      %313 = vmatprep.subr.bf16.mxu0 0
      %314 = vmatpush1.bf16.msra.mxu0 0
      %315 = vmatprep.subr.bf16.mxu0 0
      %316 = vmatpush1.bf16.msra.mxu0 0
      %317 = vmatprep.subr.bf16.mxu0 0
      %318 = vmatpush1.bf16.msra.mxu0 0
      %319 = vmatprep.subr.bf16.mxu0 0
      %320 = vmatpush1.bf16.msra.mxu0 0
      %321 = vmatprep.subr.bf16.mxu0 0
      %322 = vmatpush1.bf16.msra.mxu0 0
      %323 = vmatprep.subr.bf16.mxu0 0
      %324 = vmatpush1.bf16.msra.mxu0 0
      %325 = vmatprep.subr.bf16.mxu0 0
      %326 = vmatpush1.bf16.msra.mxu0 0
      %327 = vmatprep.subr.bf16.mxu0 0
      %328 = vmatpush1.bf16.msra.mxu0 0
      %329 = vmatprep.subr.bf16.mxu0 0
      %330 = vmatpush1.bf16.msra.mxu0 0
      %331 = vmatprep.mubr.bf16.mxu0 0
      %332 = vmatmul.mubr.bf16.gmra.mrb[0].mxu0 %v297
      %v333 = vpop.f32.mrb[0].mxu0
      %v334 = vadd.f32 %v277, %v333
      %v335 = vpop.f32.mrb[0].mxu0
      %v336 = vpop.f32.mrb[0].mxu0
      %v337 = vadd.f32 %v280, %v336
      %v338 = vpop.f32.mrb[0].mxu0
      %339 = vdwg.mxu0
      %v340 = vld [vmem:[%s3 + $0x1] sm:$0x1]
      %v341 = vlaneseq
      %v342 = vshrl.u32 %v341, 7
      %v343 = vsub.s32 0, %v342
      %v344 = vrot.slane %v340, %v343
      %346 = vrot.lane.b32.xlu0 %v344, 9
      %v347 = vpop.permute.xlu0 %346
      %v349 = vmul.f32 %v199, %v347
      %v350 = vmul.f32 %v200, %v347
      %v351 = vmul.f32 %v201, %v347
      %v352 = vmul.f32 %v202, %v347
      %s353 = scalar_lea.vmem %s1, 16
      %v354 = vld [vmem:[%s353] sm:$0xf]
      %v355 = vld [vmem:[%s353 + $0x4] sm:$0xf]
      %v356 = vpack.c.bf16 %v350, %v349
      %v357 = vpack.c.bf16 %v352, %v351
      %v360 = vunpack.c.l.b16 %v354
      %v361 = vunpack.c.l.b16 %v355
      %v362 = vpack.c.b16 %v361, %v360
      %365 = vrot.lane.b32.xlu0 %v356, 119
      %v366 = vpop.permute.xlu0 %365
      %367 = vrot.lane.b32.xlu0 %v357, 119
      %v368 = vpop.permute.xlu0 %367
      %v372 = vsel %vm238, %v362, 0
      %374 = vmatprep.subr.bf16.mxu0 0
      %375 = vmatpush1.bf16.msra.mxu0 %v366
      %376 = vmatprep.subr.bf16.mxu0 0
      %377 = vmatpush1.bf16.msra.mxu0 %v368
      %378 = vmatprep.subr.bf16.mxu0 0
      %379 = vmatpush1.bf16.msra.mxu0 0
      %380 = vmatprep.subr.bf16.mxu0 0
      %381 = vmatpush1.bf16.msra.mxu0 0
      %382 = vmatprep.subr.bf16.mxu0 0
      %383 = vmatpush1.bf16.msra.mxu0 0
      %384 = vmatprep.subr.bf16.mxu0 0
      %385 = vmatpush1.bf16.msra.mxu0 0
      %386 = vmatprep.subr.bf16.mxu0 0
      %387 = vmatpush1.bf16.msra.mxu0 0
      %388 = vmatprep.subr.bf16.mxu0 0
      %389 = vmatpush1.bf16.msra.mxu0 0
      %390 = vmatprep.subr.bf16.mxu0 0
      %391 = vmatpush1.bf16.msra.mxu0 0
      %392 = vmatprep.subr.bf16.mxu0 0
      %393 = vmatpush1.bf16.msra.mxu0 0
      %394 = vmatprep.subr.bf16.mxu0 0
      %395 = vmatpush1.bf16.msra.mxu0 0
      %396 = vmatprep.subr.bf16.mxu0 0
      %397 = vmatpush1.bf16.msra.mxu0 0
      %398 = vmatprep.subr.bf16.mxu0 0
      %399 = vmatpush1.bf16.msra.mxu0 0
      %400 = vmatprep.subr.bf16.mxu0 0
      %401 = vmatpush1.bf16.msra.mxu0 0
      %402 = vmatprep.subr.bf16.mxu0 0
      %403 = vmatpush1.bf16.msra.mxu0 0
      %404 = vmatprep.subr.bf16.mxu0 0
      %405 = vmatpush1.bf16.msra.mxu0 0
      %406 = vmatprep.mubr.bf16.mxu0 0
      %407 = vmatmul.mubr.bf16.gmra.mrb[0].mxu0 %v372
      %v408 = vpop.f32.mrb[0].mxu0
      %v409 = vadd.f32 0.0, %v408
      %v410 = vpop.f32.mrb[0].mxu0
      %v411 = vpop.f32.mrb[0].mxu0
      %v412 = vadd.f32 0.0, %v411
      %v413 = vpop.f32.mrb[0].mxu0
      %414 = vdwg.mxu0
      %v415 = vadd.f32 %v334, %v409
      %v416 = vadd.f32 %v337, %v412
      %417 = vrot.lane.b32.xlu0 %v207, 15
      %v418 = vpop.permute.xlu0 %417
      %v420 = vmul.f32 %v199, %v418
      %v421 = vmul.f32 %v200, %v418
      %v422 = vmul.f32 %v201, %v418
      %v423 = vmul.f32 %v202, %v418
      %s424 = scalar_lea.vmem %s1, 24
      %v425 = vld [vmem:[%s424] sm:$0xf]
      %v426 = vld [vmem:[%s424 + $0x4] sm:$0xf]
      %v427 = vpack.c.bf16 %v421, %v420
      %v428 = vpack.c.bf16 %v423, %v422
      %v431 = vunpack.c.l.b16 %v425
      %v432 = vunpack.c.l.b16 %v426
      %v433 = vpack.c.b16 %v432, %v431
      %436 = vrot.lane.b32.xlu0 %v427, 113
      %v437 = vpop.permute.xlu0 %436
      %438 = vrot.lane.b32.xlu0 %v428, 113
      %v439 = vpop.permute.xlu0 %438
      %v443 = vsel %vm238, %v433, 0
      %445 = vmatprep.subr.bf16.mxu0 0
      %446 = vmatpush1.bf16.msra.mxu0 %v437
      %447 = vmatprep.subr.bf16.mxu0 0
      %448 = vmatpush1.bf16.msra.mxu0 %v439
      %449 = vmatprep.subr.bf16.mxu0 0
      %450 = vmatpush1.bf16.msra.mxu0 0
      %451 = vmatprep.subr.bf16.mxu0 0
      %452 = vmatpush1.bf16.msra.mxu0 0
      %453 = vmatprep.subr.bf16.mxu0 0
      %454 = vmatpush1.bf16.msra.mxu0 0
      %455 = vmatprep.subr.bf16.mxu0 0
      %456 = vmatpush1.bf16.msra.mxu0 0
      %457 = vmatprep.subr.bf16.mxu0 0
      %458 = vmatpush1.bf16.msra.mxu0 0
      %459 = vmatprep.subr.bf16.mxu0 0
      %460 = vmatpush1.bf16.msra.mxu0 0
      %461 = vmatprep.subr.bf16.mxu0 0
      %462 = vmatpush1.bf16.msra.mxu0 0
      %463 = vmatprep.subr.bf16.mxu0 0
      %464 = vmatpush1.bf16.msra.mxu0 0
      %465 = vmatprep.subr.bf16.mxu0 0
      %466 = vmatpush1.bf16.msra.mxu0 0
      %467 = vmatprep.subr.bf16.mxu0 0
      %468 = vmatpush1.bf16.msra.mxu0 0
      %469 = vmatprep.subr.bf16.mxu0 0
      %470 = vmatpush1.bf16.msra.mxu0 0
      %471 = vmatprep.subr.bf16.mxu0 0
      %472 = vmatpush1.bf16.msra.mxu0 0
      %473 = vmatprep.subr.bf16.mxu0 0
      %474 = vmatpush1.bf16.msra.mxu0 0
      %475 = vmatprep.subr.bf16.mxu0 0
      %476 = vmatpush1.bf16.msra.mxu0 0
      %477 = vmatprep.mubr.bf16.mxu0 0
      %478 = vmatmul.mubr.bf16.gmra.mrb[0].mxu0 %v443
      %v479 = vpop.f32.mrb[0].mxu0
      %v480 = vadd.f32 0.0, %v479
      %v481 = vpop.f32.mrb[0].mxu0
      %v482 = vpop.f32.mrb[0].mxu0
      %v483 = vadd.f32 0.0, %v482
      %v484 = vpop.f32.mrb[0].mxu0
      %485 = vdwg.mxu0
      %v486 = vadd.f32 %v415, %v480
      %v487 = vadd.f32 %v416, %v483
      %s488 = scalar_lea.vmem %s1, 32
      %v489 = vld [vmem:[%s488] sm:$0xf]
      %v490 = vld [vmem:[%s488 + $0x4] sm:$0xf]
      %v493 = vunpack.c.l.b16 %v489
      %v494 = vunpack.c.l.b16 %v490
      %v495 = vpack.c.b16 %v494, %v493
      %496 = vrot.lane.b32.xlu0 %v223, 112
      %v497 = vpop.permute.xlu0 %496
      %498 = vrot.lane.b32.xlu0 %v224, 112
      %v499 = vpop.permute.xlu0 %498
      %v503 = vsel %vm238, %v495, 0
      %505 = vmatprep.subr.bf16.mxu0 0
      %506 = vmatpush1.bf16.msra.mxu0 %v497
      %507 = vmatprep.subr.bf16.mxu0 0
      %508 = vmatpush1.bf16.msra.mxu0 %v499
      %509 = vmatprep.subr.bf16.mxu0 0
      %510 = vmatpush1.bf16.msra.mxu0 0
      %511 = vmatprep.subr.bf16.mxu0 0
      %512 = vmatpush1.bf16.msra.mxu0 0
      %513 = vmatprep.subr.bf16.mxu0 0
      %514 = vmatpush1.bf16.msra.mxu0 0
      %515 = vmatprep.subr.bf16.mxu0 0
      %516 = vmatpush1.bf16.msra.mxu0 0
      %517 = vmatprep.subr.bf16.mxu0 0
      %518 = vmatpush1.bf16.msra.mxu0 0
      %519 = vmatprep.subr.bf16.mxu0 0
      %520 = vmatpush1.bf16.msra.mxu0 0
      %521 = vmatprep.subr.bf16.mxu0 0
      %522 = vmatpush1.bf16.msra.mxu0 0
      %523 = vmatprep.subr.bf16.mxu0 0
      %524 = vmatpush1.bf16.msra.mxu0 0
      %525 = vmatprep.subr.bf16.mxu0 0
      %526 = vmatpush1.bf16.msra.mxu0 0
      %527 = vmatprep.subr.bf16.mxu0 0
      %528 = vmatpush1.bf16.msra.mxu0 0
      %529 = vmatprep.subr.bf16.mxu0 0
      %530 = vmatpush1.bf16.msra.mxu0 0
      %531 = vmatprep.subr.bf16.mxu0 0
      %532 = vmatpush1.bf16.msra.mxu0 0
      %533 = vmatprep.subr.bf16.mxu0 0
      %534 = vmatpush1.bf16.msra.mxu0 0
      %535 = vmatprep.subr.bf16.mxu0 0
      %536 = vmatpush1.bf16.msra.mxu0 0
      %537 = vmatprep.mubr.bf16.mxu0 0
      %538 = vmatmul.mubr.bf16.gmra.mrb[0].mxu0 %v503
      %v539 = vpop.f32.mrb[0].mxu0
      %v540 = vadd.f32 0.0, %v539
      %v541 = vpop.f32.mrb[0].mxu0
      %v542 = vpop.f32.mrb[0].mxu0
      %v543 = vadd.f32 0.0, %v542
      %v544 = vpop.f32.mrb[0].mxu0
      %545 = vdwg.mxu0
      %v546 = vadd.f32 %v486, %v540
      %v547 = vadd.f32 %v487, %v543
      %548 = vrot.lane.b32.xlu0 %v344, 17
      %v549 = vpop.permute.xlu0 %548
      %v551 = vmul.f32 %v199, %v549
      %v552 = vmul.f32 %v200, %v549
      %v553 = vmul.f32 %v201, %v549
      %v554 = vmul.f32 %v202, %v549
      %s555 = scalar_lea.vmem %s1, 40
      %v556 = vld [vmem:[%s555] sm:$0xf]
      %v557 = vld [vmem:[%s555 + $0x4] sm:$0xf]
      %v558 = vpack.c.bf16 %v552, %v551
      %v559 = vpack.c.bf16 %v554, %v553
      %v562 = vunpack.c.l.b16 %v556
      %v563 = vunpack.c.l.b16 %v557
      %v564 = vpack.c.b16 %v563, %v562
      %567 = vrot.lane.b32.xlu0 %v558, 111
      %v568 = vpop.permute.xlu0 %567
      %569 = vrot.lane.b32.xlu0 %v559, 111
      %v570 = vpop.permute.xlu0 %569
      %v574 = vsel %vm238, %v564, 0
      %576 = vmatprep.subr.bf16.mxu0 0
      %577 = vmatpush1.bf16.msra.mxu0 %v568
      %578 = vmatprep.subr.bf16.mxu0 0
      %579 = vmatpush1.bf16.msra.mxu0 %v570
      %580 = vmatprep.subr.bf16.mxu0 0
      %581 = vmatpush1.bf16.msra.mxu0 0
      %582 = vmatprep.subr.bf16.mxu0 0
      %583 = vmatpush1.bf16.msra.mxu0 0
      %584 = vmatprep.subr.bf16.mxu0 0
      %585 = vmatpush1.bf16.msra.mxu0 0
      %586 = vmatprep.subr.bf16.mxu0 0
      %587 = vmatpush1.bf16.msra.mxu0 0
      %588 = vmatprep.subr.bf16.mxu0 0
      %589 = vmatpush1.bf16.msra.mxu0 0
      %590 = vmatprep.subr.bf16.mxu0 0
      %591 = vmatpush1.bf16.msra.mxu0 0
      %592 = vmatprep.subr.bf16.mxu0 0
      %593 = vmatpush1.bf16.msra.mxu0 0
      %594 = vmatprep.subr.bf16.mxu0 0
      %595 = vmatpush1.bf16.msra.mxu0 0
      %596 = vmatprep.subr.bf16.mxu0 0
      %597 = vmatpush1.bf16.msra.mxu0 0
      %598 = vmatprep.subr.bf16.mxu0 0
      %599 = vmatpush1.bf16.msra.mxu0 0
      %600 = vmatprep.subr.bf16.mxu0 0
      %601 = vmatpush1.bf16.msra.mxu0 0
      %602 = vmatprep.subr.bf16.mxu0 0
      %603 = vmatpush1.bf16.msra.mxu0 0
      %604 = vmatprep.subr.bf16.mxu0 0
      %605 = vmatpush1.bf16.msra.mxu0 0
      %606 = vmatprep.subr.bf16.mxu0 0
      %607 = vmatpush1.bf16.msra.mxu0 0
      %608 = vmatprep.mubr.bf16.mxu0 0
      %609 = vmatmul.mubr.bf16.gmra.mrb[0].mxu0 %v574
      %v610 = vpop.f32.mrb[0].mxu0
      %v611 = vadd.f32 0.0, %v610
      %v612 = vpop.f32.mrb[0].mxu0
      %v613 = vpop.f32.mrb[0].mxu0
      %v614 = vadd.f32 0.0, %v613
      %v615 = vpop.f32.mrb[0].mxu0
      %616 = vdwg.mxu0
      %v617 = vadd.f32 %v546, %v611
      %v618 = vadd.f32 %v547, %v614
      %619 = vrot.lane.b32.xlu0 %v207, 23
      %v620 = vpop.permute.xlu0 %619
      %v622 = vmul.f32 %v199, %v620
      %v623 = vmul.f32 %v200, %v620
      %v624 = vmul.f32 %v201, %v620
      %v625 = vmul.f32 %v202, %v620
      %s626 = scalar_lea.vmem %s1, 48
      %v627 = vld [vmem:[%s626] sm:$0xf]
      %v628 = vld [vmem:[%s626 + $0x4] sm:$0xf]
      %v629 = vpack.c.bf16 %v623, %v622
      %v630 = vpack.c.bf16 %v625, %v624
      %v633 = vunpack.c.l.b16 %v627
      %v634 = vunpack.c.l.b16 %v628
      %v635 = vpack.c.b16 %v634, %v633
      %638 = vrot.lane.b32.xlu0 %v629, 105
      %v639 = vpop.permute.xlu0 %638
      %640 = vrot.lane.b32.xlu0 %v630, 105
      %v641 = vpop.permute.xlu0 %640
      %v645 = vsel %vm238, %v635, 0
      %647 = vmatprep.subr.bf16.mxu0 0
      %648 = vmatpush1.bf16.msra.mxu0 %v639
      %649 = vmatprep.subr.bf16.mxu0 0
      %650 = vmatpush1.bf16.msra.mxu0 %v641
      %651 = vmatprep.subr.bf16.mxu0 0
      %652 = vmatpush1.bf16.msra.mxu0 0
      %653 = vmatprep.subr.bf16.mxu0 0
      %654 = vmatpush1.bf16.msra.mxu0 0
      %655 = vmatprep.subr.bf16.mxu0 0
      %656 = vmatpush1.bf16.msra.mxu0 0
      %657 = vmatprep.subr.bf16.mxu0 0
      %658 = vmatpush1.bf16.msra.mxu0 0
      %659 = vmatprep.subr.bf16.mxu0 0
      %660 = vmatpush1.bf16.msra.mxu0 0
      %661 = vmatprep.subr.bf16.mxu0 0
      %662 = vmatpush1.bf16.msra.mxu0 0
      %663 = vmatprep.subr.bf16.mxu0 0
      %664 = vmatpush1.bf16.msra.mxu0 0
      %665 = vmatprep.subr.bf16.mxu0 0
      %666 = vmatpush1.bf16.msra.mxu0 0
      %667 = vmatprep.subr.bf16.mxu0 0
      %668 = vmatpush1.bf16.msra.mxu0 0
      %669 = vmatprep.subr.bf16.mxu0 0
      %670 = vmatpush1.bf16.msra.mxu0 0
      %671 = vmatprep.subr.bf16.mxu0 0
      %672 = vmatpush1.bf16.msra.mxu0 0
      %673 = vmatprep.subr.bf16.mxu0 0
      %674 = vmatpush1.bf16.msra.mxu0 0
      %675 = vmatprep.subr.bf16.mxu0 0
      %676 = vmatpush1.bf16.msra.mxu0 0
      %677 = vmatprep.subr.bf16.mxu0 0
      %678 = vmatpush1.bf16.msra.mxu0 0
      %679 = vmatprep.mubr.bf16.mxu0 0
      %680 = vmatmul.mubr.bf16.gmra.mrb[0].mxu0 %v645
      %v681 = vpop.f32.mrb[0].mxu0
      %v682 = vadd.f32 0.0, %v681
      %v683 = vpop.f32.mrb[0].mxu0
      %v684 = vpop.f32.mrb[0].mxu0
      %v685 = vadd.f32 0.0, %v684
      %v686 = vpop.f32.mrb[0].mxu0
      %687 = vdwg.mxu0
      %v688 = vadd.f32 %v617, %v682
      %v689 = vadd.f32 %v618, %v685
      %s690 = scalar_lea.vmem %s1, 56
      %v691 = vld [vmem:[%s690] sm:$0xf]
      %v692 = vld [vmem:[%s690 + $0x4] sm:$0xf]
      %v695 = vunpack.c.l.b16 %v691
      %v696 = vunpack.c.l.b16 %v692
      %v697 = vpack.c.b16 %v696, %v695
      %698 = vrot.lane.b32.xlu0 %v223, 104
      %v699 = vpop.permute.xlu0 %698
      %700 = vrot.lane.b32.xlu0 %v224, 104
      %v701 = vpop.permute.xlu0 %700
      %v705 = vsel %vm238, %v697, 0
      %707 = vmatprep.subr.bf16.mxu0 0
      %708 = vmatpush1.bf16.msra.mxu0 %v699
      %709 = vmatprep.subr.bf16.mxu0 0
      %710 = vmatpush1.bf16.msra.mxu0 %v701
      %711 = vmatprep.subr.bf16.mxu0 0
      %712 = vmatpush1.bf16.msra.mxu0 0
      %713 = vmatprep.subr.bf16.mxu0 0
      %714 = vmatpush1.bf16.msra.mxu0 0
      %715 = vmatprep.subr.bf16.mxu0 0
      %716 = vmatpush1.bf16.msra.mxu0 0
      %717 = vmatprep.subr.bf16.mxu0 0
      %718 = vmatpush1.bf16.msra.mxu0 0
      %719 = vmatprep.subr.bf16.mxu0 0
      %720 = vmatpush1.bf16.msra.mxu0 0
      %721 = vmatprep.subr.bf16.mxu0 0
      %722 = vmatpush1.bf16.msra.mxu0 0
      %723 = vmatprep.subr.bf16.mxu0 0
      %724 = vmatpush1.bf16.msra.mxu0 0
      %725 = vmatprep.subr.bf16.mxu0 0
      %726 = vmatpush1.bf16.msra.mxu0 0
      %727 = vmatprep.subr.bf16.mxu0 0
      %728 = vmatpush1.bf16.msra.mxu0 0
      %729 = vmatprep.subr.bf16.mxu0 0
      %730 = vmatpush1.bf16.msra.mxu0 0
      %731 = vmatprep.subr.bf16.mxu0 0
      %732 = vmatpush1.bf16.msra.mxu0 0
      %733 = vmatprep.subr.bf16.mxu0 0
      %734 = vmatpush1.bf16.msra.mxu0 0
      %735 = vmatprep.subr.bf16.mxu0 0
      %736 = vmatpush1.bf16.msra.mxu0 0
      %737 = vmatprep.subr.bf16.mxu0 0
      %738 = vmatpush1.bf16.msra.mxu0 0
      %739 = vmatprep.mubr.bf16.mxu0 0
      %740 = vmatmul.mubr.bf16.gmra.mrb[0].mxu0 %v705
      %v741 = vpop.f32.mrb[0].mxu0
      %v742 = vadd.f32 0.0, %v741
      %v743 = vpop.f32.mrb[0].mxu0
      %v744 = vpop.f32.mrb[0].mxu0
      %v745 = vadd.f32 0.0, %v744
      %v746 = vpop.f32.mrb[0].mxu0
      %747 = vdwg.mxu0
      %v748 = vadd.f32 %v688, %v742
      %v749 = vadd.f32 %v689, %v745
      %750 = vrot.lane.b32.xlu0 %v344, 25
      %v751 = vpop.permute.xlu0 %750
      %v753 = vmul.f32 %v199, %v751
      %v754 = vmul.f32 %v200, %v751
      %v755 = vmul.f32 %v201, %v751
      %v756 = vmul.f32 %v202, %v751
      %s757 = scalar_lea.vmem %s1, 64
      %v758 = vld [vmem:[%s757] sm:$0xf]
      %v759 = vld [vmem:[%s757 + $0x4] sm:$0xf]
      %v760 = vpack.c.bf16 %v754, %v753
      %v761 = vpack.c.bf16 %v756, %v755
      %v764 = vunpack.c.l.b16 %v758
      %v765 = vunpack.c.l.b16 %v759
      %v766 = vpack.c.b16 %v765, %v764
      %769 = vrot.lane.b32.xlu0 %v760, 103
      %v770 = vpop.permute.xlu0 %769
      %771 = vrot.lane.b32.xlu0 %v761, 103
      %v772 = vpop.permute.xlu0 %771
      %v776 = vsel %vm238, %v766, 0
      %778 = vmatprep.subr.bf16.mxu0 0
      %779 = vmatpush1.bf16.msra.mxu0 %v770
      %780 = vmatprep.subr.bf16.mxu0 0
      %781 = vmatpush1.bf16.msra.mxu0 %v772
      %782 = vmatprep.subr.bf16.mxu0 0
      %783 = vmatpush1.bf16.msra.mxu0 0
      %784 = vmatprep.subr.bf16.mxu0 0
      %785 = vmatpush1.bf16.msra.mxu0 0
      %786 = vmatprep.subr.bf16.mxu0 0
      %787 = vmatpush1.bf16.msra.mxu0 0
      %788 = vmatprep.subr.bf16.mxu0 0
      %789 = vmatpush1.bf16.msra.mxu0 0
      %790 = vmatprep.subr.bf16.mxu0 0
      %791 = vmatpush1.bf16.msra.mxu0 0
      %792 = vmatprep.subr.bf16.mxu0 0
      %793 = vmatpush1.bf16.msra.mxu0 0
      %794 = vmatprep.subr.bf16.mxu0 0
      %795 = vmatpush1.bf16.msra.mxu0 0
      %796 = vmatprep.subr.bf16.mxu0 0
      %797 = vmatpush1.bf16.msra.mxu0 0
      %798 = vmatprep.subr.bf16.mxu0 0
      %799 = vmatpush1.bf16.msra.mxu0 0
      %800 = vmatprep.subr.bf16.mxu0 0
      %801 = vmatpush1.bf16.msra.mxu0 0
      %802 = vmatprep.subr.bf16.mxu0 0
      %803 = vmatpush1.bf16.msra.mxu0 0
      %804 = vmatprep.subr.bf16.mxu0 0
      %805 = vmatpush1.bf16.msra.mxu0 0
      %806 = vmatprep.subr.bf16.mxu0 0
      %807 = vmatpush1.bf16.msra.mxu0 0
      %808 = vmatprep.subr.bf16.mxu0 0
      %809 = vmatpush1.bf16.msra.mxu0 0
      %810 = vmatprep.mubr.bf16.mxu0 0
      %811 = vmatmul.mubr.bf16.gmra.mrb[0].mxu0 %v776
      %v812 = vpop.f32.mrb[0].mxu0
      %v813 = vadd.f32 0.0, %v812
      %v814 = vpop.f32.mrb[0].mxu0
      %v815 = vpop.f32.mrb[0].mxu0
      %v816 = vadd.f32 0.0, %v815
      %v817 = vpop.f32.mrb[0].mxu0
      %818 = vdwg.mxu0
      %v819 = vadd.f32 %v748, %v813
      %v820 = vadd.f32 %v749, %v816
      %v821 = vld [vmem:[%s2] sm:$0xff]
      %v822 = vld [vmem:[%s2 + $0x8] sm:$0xff]
      %824 = vset.pattern.permute.xlu0 0
      %825 = vperm.xlu0 %824, %v821
      %v826 = vpop.permute.xlu0 %825
      %829 = vset.pattern.permute.xlu0 0
      %830 = vperm.xlu0 %829, %v822
      %v831 = vpop.permute.xlu0 %830
      %v833 = vadd.f32 %v819, %v826
      %v834 = vadd.f32 %v820, %v831
      %v835 = vmax.f32 %v833, 0.0
      %v836 = vmax.f32 %v834, 0.0
      %vm837 = vcmask 523264
      %838 = vst.msk [vmem:[%s197] sm:$0xff] %vm837, %v835
      %839 = vst.msk [vmem:[%s197 + $0x8] sm:$0xff] %vm837, %v836
      %p840 = scmp.lt.s32.totalorder %s15, 1
      %s841 = scalar_select %p840, %s15, 1
      %s842 = smul.addr %s841, 2
      %s843 = smul.addr %s842, 8
      %s844 = scalar_lea.vmem %s4, %s843
      // Predicated region
      $region37: #{_lambda_.10} parent=35 // pred_check
        %p845 = pneg %p122
      $region38: #{_lambda_.10} parent=35 // pred_check_branch
        %847 = sbr.rel (%p845) target = $region40
      $region39: #{_lambda_.10} parent=35 // pred_region
        _
      $region40: #{_lambda_.10} parent=35 // pred_fallthru
        _
    $region36: #{_lambda_.10} parent=5 // pred_fallthru
      _
    %p848 = scmp.le.s32.totalorder 2, %s10
    // Predicated region
    $region41: #{_lambda_.10} parent=5 // pred_check
      %p849 = pneg %p848
    $region42: #{_lambda_.10} parent=5 // pred_check_branch
      %851 = sbr.rel (%p849) target = $region44
    $region43: #{_lambda_.10} parent=5 // pred_region
      %s852 = ssub.s32 %s10, 2
      // Predicated region
      $region45: #{_lambda_.10} parent=43 // pred_check
        %p853 = pneg %p128
      $region46: #{_lambda_.10} parent=43 // pred_check_branch
        %855 = sbr.rel (%p853) target = $region48
      $region47: #{_lambda_.10} parent=43 // pred_region
        %p856 = scmp.lt.s32.totalorder %s16, 1
        %s857 = scalar_select %p856, %s16, 1
        %s858 = smul.addr %s857, 2
        %s859 = smul.addr %s858, 8
        %s860 = scalar_lea.vmem %s4, %s859
      $region48: #{_lambda_.10} parent=43 // pred_fallthru
        _
    $region44: #{_lambda_.10} parent=5 // pred_fallthru
      _
  $region6: #{_lambda_.10} parent=0 // loop_footer
    %s14 = sadd.s32 1, %s10
  $region7: #{_lambda_.10} parent=0 // loop_footer_branch
    %9 = sbr.rel target = $region3
  $region8: #{_lambda_.10} parent=0 // loop_exit
    _

// kernel: _lambda_.11
$region0: #{_lambda_.11}
  #allocation0 [shape = 'u32[]', space=smem, size = 0x4, offset = 0x4, fixed_abs, tag = 'smem constant byte address 0x4 - core index']
  #allocation1 [shape = 'u32[144,128]{1,0:T(1,128)}', space=vmem, size = 0x12000, scoped, tag = 'internal scratch']
  %s0 = inlined_call_operand.vmem [shape: f32[2,32,320], index: 0, kind: input, shape index: {}]
  %s1 = inlined_call_operand.vmem [shape: bf16[9,8,32], index: 1, kind: input, shape index: {}]
  %s2 = inlined_call_operand.vmem [shape: f32[8,1], index: 2, kind: input, shape index: {}]
  %s3 = inlined_call_operand.vmem [shape: f32[2,256], index: 3, kind: input, shape index: {}]
  %s4 = inlined_call_operand.vmem [shape: f32[2,8,256], index: 4, kind: output, shape index: {}]
  %s5 = sld [smem:[#allocation0]]
  $region49: #{_lambda_.11} parent=0
    _
  %s7 = ssub.s32 1, %s5
  %s8 = scalar_select 0, %s7, %s5
  loop: start=0, step=1, limit=4
  $region2: #{_lambda_.11} parent=0 // loop_pre_header
    _
  $region3: #{_lambda_.11} parent=0 // loop_header
    %s10 = sphi 0, %s14
    %p11 = scmp.ge.s32.totalorder %s10, 4
    %s20 = sphi 0, %s22
    %s23 = sphi 0, %s20
    %s24 = sphi 0, %s23
    %s40 = sphi 0, %s24
    %s44 = sphi 0, %s44
    %s46 = sphi 0, %s44
    %s47 = sphi 0, %s46
    %s61 = sphi 0, %s47
    %s65 = sphi 0, %s65
    %s67 = sphi 0, %s65
    %s68 = sphi 0, %s67
    %s82 = sphi 0, %s68
    %s86 = sphi 0, %s86
    %s88 = sphi 0, %s86
    %s89 = sphi 0, %s88
    %s103 = sphi 0, %s89
    %s109 = sphi 0, %s111
    %s112 = sphi 0, %s109
    %s113 = sphi 0, %s112
    %s129 = sphi 0, %s113
  $region4: #{_lambda_.11} parent=0 // loop_header_branch
    %13 = sbr.rel (%p11) target = $region8
  $region5: #{_lambda_.11} parent=0 // loop_body
    %s15 = ssub.s32 %s10, 1
    %s16 = ssub.s32 %s10, 2
    %s17 = sadd.s32 %s10, 1
    %s18 = ssub.s32 %s10, %s17
    %p19 = scmp.eq.s32.totalorder %s18, 0
    %s21 = sadd.s32 %s20, 1
    %s22 = scalar_select %p19, %s20, %s21
    %p25 = pneg %p19
    %p26 = scmp.eq.s32.totalorder %s10, 1
    %p27 = por %p25, %p26
    %p28 = scmp.ne.s32.totalorder %s20, %s23
    %p29 = scmp.eq.s32.totalorder %s10, 0
    %p30 = por %p28, %p29
    %p31 = scmp.ne.s32.totalorder %s20, %s23
    %p32 = scmp.eq.s32.totalorder %s15, 1
    %p33 = por %p31, %p32
    %p34 = scmp.ne.s32.totalorder %s23, %s24
    %p35 = scmp.eq.s32.totalorder %s15, 0
    %p36 = por %p34, %p35
    %p37 = scmp.ne.s32.totalorder %s23, %s24
    %p38 = scmp.eq.s32.totalorder %s16, 1
    %p39 = por %p37, %p38
    %p41 = scmp.ne.s32.totalorder %s24, %s40
    %p42 = scmp.eq.s32.totalorder %s16, 0
    %p43 = por %p41, %p42
    %s45 = sadd.s32 %s44, 1
    %p48 = scmp.eq.s32.totalorder %s10, 1
    %p49 = scmp.ne.s32.totalorder %s44, %s46
    %p50 = scmp.eq.s32.totalorder %s10, 0
    %p51 = por %p49, %p50
    %p52 = scmp.ne.s32.totalorder %s44, %s46
    %p53 = scmp.eq.s32.totalorder %s15, 1
    %p54 = por %p52, %p53
    %p55 = scmp.ne.s32.totalorder %s46, %s47
    %p56 = scmp.eq.s32.totalorder %s15, 0
    %p57 = por %p55, %p56
    %p58 = scmp.ne.s32.totalorder %s46, %s47
    %p59 = scmp.eq.s32.totalorder %s16, 1
    %p60 = por %p58, %p59
    %p62 = scmp.ne.s32.totalorder %s47, %s61
    %p63 = scmp.eq.s32.totalorder %s16, 0
    %p64 = por %p62, %p63
    %s66 = sadd.s32 %s65, 1
    %p69 = scmp.eq.s32.totalorder %s10, 1
    %p70 = scmp.ne.s32.totalorder %s65, %s67
    %p71 = scmp.eq.s32.totalorder %s10, 0
    %p72 = por %p70, %p71
    %p73 = scmp.ne.s32.totalorder %s65, %s67
    %p74 = scmp.eq.s32.totalorder %s15, 1
    %p75 = por %p73, %p74
    %p76 = scmp.ne.s32.totalorder %s67, %s68
    %p77 = scmp.eq.s32.totalorder %s15, 0
    %p78 = por %p76, %p77
    %p79 = scmp.ne.s32.totalorder %s67, %s68
    %p80 = scmp.eq.s32.totalorder %s16, 1
    %p81 = por %p79, %p80
    %p83 = scmp.ne.s32.totalorder %s68, %s82
    %p84 = scmp.eq.s32.totalorder %s16, 0
    %p85 = por %p83, %p84
    %s87 = sadd.s32 %s86, 1
    %p90 = scmp.eq.s32.totalorder %s10, 1
    %p91 = scmp.ne.s32.totalorder %s86, %s88
    %p92 = scmp.eq.s32.totalorder %s10, 0
    %p93 = por %p91, %p92
    %p94 = scmp.ne.s32.totalorder %s86, %s88
    %p95 = scmp.eq.s32.totalorder %s15, 1
    %p96 = por %p94, %p95
    %p97 = scmp.ne.s32.totalorder %s88, %s89
    %p98 = scmp.eq.s32.totalorder %s15, 0
    %p99 = por %p97, %p98
    %p100 = scmp.ne.s32.totalorder %s88, %s89
    %p101 = scmp.eq.s32.totalorder %s16, 1
    %p102 = por %p100, %p101
    %p104 = scmp.ne.s32.totalorder %s89, %s103
    %p105 = scmp.eq.s32.totalorder %s16, 0
    %p106 = por %p104, %p105
    %s107 = ssub.s32 %s10, %s17
    %p108 = scmp.eq.s32.totalorder %s107, 0
    %s110 = sadd.s32 %s109, 1
    %s111 = scalar_select %p108, %s109, %s110
    %p114 = pneg %p108
    %p115 = scmp.eq.s32.totalorder %s10, 1
    %p116 = por %p114, %p115
    %p117 = scmp.ne.s32.totalorder %s109, %s112
    %p118 = scmp.eq.s32.totalorder %s10, 0
    %p119 = por %p117, %p118
    %p120 = scmp.ne.s32.totalorder %s109, %s112
    %p121 = scmp.eq.s32.totalorder %s15, 1
    %p122 = por %p120, %p121
    %p123 = scmp.ne.s32.totalorder %s112, %s113
    %p124 = scmp.eq.s32.totalorder %s15, 0
    %p125 = por %p123, %p124
    %p126 = scmp.ne.s32.totalorder %s112, %s113
    %p127 = scmp.eq.s32.totalorder %s16, 1
    %p128 = por %p126, %p127
    %p130 = scmp.ne.s32.totalorder %s113, %s129
    %p131 = scmp.eq.s32.totalorder %s16, 0
    %p132 = por %p130, %p131
    %p133 = scmp.le.s32.totalorder 1, %s10
    %p134 = scmp.lt.s32.totalorder %s10, 3
    %p135 = pnand %p133, %p134
    %p136 = pneg %p135
    // Predicated region
    $region9: #{_lambda_.11} parent=5 // pred_check
      _
    $region10: #{_lambda_.11} parent=5 // pred_check_branch
      %138 = sbr.rel (%p135) target = $region12
    $region11: #{_lambda_.11} parent=5 // pred_region
      %s139 = ssub.s32 %s10, 1
      // Predicated region
      $region13: #{_lambda_.11} parent=11 // pred_check
        %p140 = pneg %p57
      $region14: #{_lambda_.11} parent=11 // pred_check_branch
        %142 = sbr.rel (%p140) target = $region16
      $region15: #{_lambda_.11} parent=11 // pred_region
        _
      $region16: #{_lambda_.11} parent=11 // pred_fallthru
        _
      // Predicated region
      $region17: #{_lambda_.11} parent=11 // pred_check
        %p143 = pneg %p78
      $region18: #{_lambda_.11} parent=11 // pred_check_branch
        %145 = sbr.rel (%p143) target = $region20
      $region19: #{_lambda_.11} parent=11 // pred_region
        _
      $region20: #{_lambda_.11} parent=11 // pred_fallthru
        _
      // Predicated region
      $region21: #{_lambda_.11} parent=11 // pred_check
        %p146 = pneg %p99
      $region22: #{_lambda_.11} parent=11 // pred_check_branch
        %148 = sbr.rel (%p146) target = $region24
      $region23: #{_lambda_.11} parent=11 // pred_region
        _
      $region24: #{_lambda_.11} parent=11 // pred_fallthru
        _
    $region12: #{_lambda_.11} parent=5 // pred_fallthru
      _
    %p149 = scmp.lt.s32.totalorder %s10, 2
    // Predicated region
    $region25: #{_lambda_.11} parent=5 // pred_check
      %p150 = pneg %p149
    $region26: #{_lambda_.11} parent=5 // pred_check_branch
      %152 = sbr.rel (%p150) target = $region28
    $region27: #{_lambda_.11} parent=5 // pred_region
      // Predicated region
      $region29: #{_lambda_.11} parent=27 // pred_check
        %p153 = pneg %p30
      $region30: #{_lambda_.11} parent=27 // pred_check_branch
        %155 = sbr.rel (%p153) target = $region32
      $region31: #{_lambda_.11} parent=27 // pred_region
        %p156 = scmp.lt.s32.totalorder %s10, 1
        %s157 = scalar_select %p156, %s10, 1
        %s158 = smul.addr %s157, 12
        %s159 = smul.addr %s158, 8
        %s160 = scalar_lea.vmem %s0, %s159
      $region32: #{_lambda_.11} parent=27 // pred_fallthru
        _
    $region28: #{_lambda_.11} parent=5 // pred_fallthru
      _
    %p161 = scmp.le.s32.totalorder 1, %s10
    %p162 = scmp.lt.s32.totalorder %s10, 3
    %p163 = pnand %p161, %p162
    %p164 = pneg %p163
    // Predicated region
    $region33: #{_lambda_.11} parent=5 // pred_check
      _
    $region34: #{_lambda_.11} parent=5 // pred_check_branch
      %166 = sbr.rel (%p163) target = $region36
    $region35: #{_lambda_.11} parent=5 // pred_region
      %s167 = ssub.s32 %s10, 1
      %p168 = scmp.lt.s32.totalorder %s15, 1
      %s169 = scalar_select %p168, %s15, 1
      %s170 = smul.addr %s169, 12
      %s171 = smul.addr %s170, 8
      %s172 = scalar_lea.vmem %s0, %s171
      %p173 = pneg %p36
      %p174 = pneg %p33
      %p175 = pneg %p57
      %p176 = pneg %p54
      %p177 = pneg %p78
      %p178 = pneg %p75
      %p179 = pneg %p99
      %p180 = pneg %p96
      %p181 = pneg %p125
      %p182 = pneg %p122
      %p183 = scmp.lt.s32.totalorder %s15, 1
      %s184 = scalar_select %p183, %s15, 1
      %s185 = smul.addr %s184, 2
      %s186 = smul.addr %s185, 8
      %s187 = scalar_lea.vmem %s4, %s186
      %p188 = scmp.lt.s32.totalorder %s15, 1
      %s189 = scalar_select %p188, %s15, 1
      %s190 = smul.addr %s189, 12
      %s191 = smul.addr %s190, 8
      %s192 = scalar_lea.vmem %s0, %s191
      %p193 = scmp.lt.s32.totalorder %s15, 1
      %s194 = scalar_select %p193, %s15, 1
      %s195 = smul.addr %s194, 2
      %s196 = smul.addr %s195, 8
      %s197 = scalar_lea.vmem %s4, %s196
      %v199 = vld [vmem:[%s192] sm:$0xff]
      %v200 = vld [vmem:[%s192 + $0x8] sm:$0xff]
      %v201 = vld [vmem:[%s192 + $0x10] sm:$0xff]
      %v202 = vld [vmem:[%s192 + $0x18] sm:$0xff]
      %v203 = vld [vmem:[%s192 + $0x20] sm:$0xff]
      %v204 = vld [vmem:[%s192 + $0x28] sm:$0xff]
      %v205 = vld [vmem:[%s192 + $0x30] sm:$0xff]
      %v206 = vld [vmem:[%s192 + $0x38] sm:$0xff]
      %v207 = vld [vmem:[%s192 + $0x40] sm:$0xff]
      %v208 = vld [vmem:[%s192 + $0x48] sm:$0xff]
      %v209 = vld [vmem:[%s192 + $0x50] sm:$0xff]
      %v210 = vld [vmem:[%s192 + $0x58] sm:$0xff]
      %v211 = vld [vmem:[%s3] ss:$2 sm:$0x3]
      %v213 = vlaneseq
      %v214 = vshrl.u32 %v213, 7
      %v215 = vsub.s32 0, %v214
      %v216 = vrot.slane %v211, %v215
      %v217 = vlaneseq
      %v218 = vshrl.u32 %v217, 7
      %v219 = vsub.s32 1, %v218
      %v220 = vrot.slane %v211, %v219
      %221 = vrot.lane.b32.xlu0 %v216, 15
      %v222 = vpop.permute.xlu0 %221
      %223 = vrot.lane.b32.xlu0 %v220, 15
      %v224 = vpop.permute.xlu0 %223
      %vm225 = vcmask 121856
      %v226 = vsel %vm225, %v222, %v224
      %v230 = vmul.f32 %v199, %v222
      %v231 = vmul.f32 %v200, %v226
      %v232 = vmul.f32 %v201, %v224
      %v233 = vmul.f32 %v202, %v222
      %v234 = vmul.f32 %v203, %v226
      %v235 = vmul.f32 %v204, %v224
      %v236 = vmul.f32 %v205, %v222
      %v237 = vmul.f32 %v206, %v226
      %v238 = vmul.f32 %v207, %v224
      %v239 = vmul.f32 %v208, %v222
      %v240 = vmul.f32 %v209, %v226
      %v241 = vmul.f32 %v210, %v224
      %v242 = vld [vmem:[%s1] sm:$0xf]
      %v243 = vpack.c.bf16 %v233, %v230
      %v244 = vpack.c.bf16 %v234, %v231
      %v245 = vpack.c.bf16 %v235, %v232
      %v246 = vpack.c.bf16 %v239, %v236
      %v247 = vpack.c.bf16 %v240, %v237
      %v248 = vpack.c.bf16 %v241, %v238
      %s249 = scalar_lea.vmem %s1, 4
      %v250 = vld [vmem:[%s249] sm:$0xf]
      %v251 = vpack.c.bf16 %v202, %v199
      %v252 = vpack.c.bf16 %v203, %v200
      %v253 = vpack.c.bf16 %v204, %v201
      %v254 = vpack.c.bf16 %v208, %v205
      %v255 = vpack.c.bf16 %v209, %v206
      %v256 = vpack.c.bf16 %v210, %v207
      %263 = vrot.lane.b32.xlu0 %v251, 112
      %v264 = vpop.permute.xlu0 %263
      %265 = vrot.lane.b32.xlu0 %v252, 112
      %v266 = vpop.permute.xlu0 %265
      %267 = vrot.lane.b32.xlu0 %v253, 112
      %v268 = vpop.permute.xlu0 %267
      %269 = vrot.lane.b32.xlu0 %v254, 112
      %v270 = vpop.permute.xlu0 %269
      %271 = vrot.lane.b32.xlu0 %v255, 112
      %v272 = vpop.permute.xlu0 %271
      %273 = vrot.lane.b32.xlu0 %v256, 112
      %v274 = vpop.permute.xlu0 %273
      %vm275 = vcmask 916480
      %v276 = vsel %vm275, %v264, %v266
      %v277 = vsel %vm275, %v266, %v268
      %v278 = vsel %vm275, %v270, %v272
      %v279 = vsel %vm275, %v272, %v274
      %vm284 = vcmask 261120
      %v286 = vsel %vm284, %v250, 0
      %288 = vmatprep.subr.bf16.mxu0 %v277
      %289 = vmatpush1.bf16.msra.mxu0 %v276
      %290 = vmatprep.subr.bf16.mxu0 %v279
      %291 = vmatpush1.bf16.msra.mxu0 %v278
      %292 = vmatprep.subr.bf16.mxu0 0
      %293 = vmatpush1.bf16.msra.mxu0 0
      %294 = vmatprep.subr.bf16.mxu0 0
      %295 = vmatpush1.bf16.msra.mxu0 0
      %296 = vmatprep.subr.bf16.mxu0 0
      %297 = vmatpush1.bf16.msra.mxu0 0
      %298 = vmatprep.subr.bf16.mxu0 0
      %299 = vmatpush1.bf16.msra.mxu0 0
      %300 = vmatprep.subr.bf16.mxu0 0
      %301 = vmatpush1.bf16.msra.mxu0 0
      %302 = vmatprep.subr.bf16.mxu0 0
      %303 = vmatpush1.bf16.msra.mxu0 0
      %304 = vmatprep.subr.bf16.mxu0 0
      %305 = vmatpush1.bf16.msra.mxu0 0
      %306 = vmatprep.subr.bf16.mxu0 0
      %307 = vmatpush1.bf16.msra.mxu0 0
      %308 = vmatprep.subr.bf16.mxu0 0
      %309 = vmatpush1.bf16.msra.mxu0 0
      %310 = vmatprep.subr.bf16.mxu0 0
      %311 = vmatpush1.bf16.msra.mxu0 0
      %312 = vmatprep.subr.bf16.mxu0 0
      %313 = vmatpush1.bf16.msra.mxu0 0
      %314 = vmatprep.subr.bf16.mxu0 0
      %315 = vmatpush1.bf16.msra.mxu0 0
      %316 = vmatprep.subr.bf16.mxu0 0
      %317 = vmatpush1.bf16.msra.mxu0 0
      %318 = vmatprep.subr.bf16.mxu0 0
      %319 = vmatpush1.bf16.msra.mxu0 0
      %320 = vmatprep.mubr.bf16.mxu0 0
      %321 = vmatmul.mubr.bf16.gmra.mrb[0].mxu0 %v286
      %v322 = vpop.f32.mrb[0].mxu0
      %v323 = vadd.f32 0.0, %v322
      %v324 = vpop.f32.mrb[0].mxu0
      %v325 = vadd.f32 0.0, %v324
      %v326 = vpop.f32.mrb[0].mxu0
      %v327 = vpop.f32.mrb[0].mxu0
      %328 = vdwg.mxu0
      %335 = vrot.lane.b32.xlu0 %v243, 113
      %v336 = vpop.permute.xlu0 %335
      %337 = vrot.lane.b32.xlu0 %v244, 113
      %v338 = vpop.permute.xlu0 %337
      %339 = vrot.lane.b32.xlu0 %v245, 113
      %v340 = vpop.permute.xlu0 %339
      %341 = vrot.lane.b32.xlu0 %v246, 113
      %v342 = vpop.permute.xlu0 %341
      %343 = vrot.lane.b32.xlu0 %v247, 113
      %v344 = vpop.permute.xlu0 %343
      %345 = vrot.lane.b32.xlu0 %v248, 113
      %v346 = vpop.permute.xlu0 %345
      %vm347 = vcmask 924672
      %v348 = vsel %vm347, %v336, %v338
      %v349 = vsel %vm347, %v338, %v340
      %v350 = vsel %vm347, %v342, %v344
      %v351 = vsel %vm347, %v344, %v346
      %v357 = vsel %vm284, %v242, 0
      %359 = vmatprep.subr.bf16.mxu0 %v349
      %360 = vmatpush1.bf16.msra.mxu0 %v348
      %361 = vmatprep.subr.bf16.mxu0 %v351
      %362 = vmatpush1.bf16.msra.mxu0 %v350
      %363 = vmatprep.subr.bf16.mxu0 0
      %364 = vmatpush1.bf16.msra.mxu0 0
      %365 = vmatprep.subr.bf16.mxu0 0
      %366 = vmatpush1.bf16.msra.mxu0 0
      %367 = vmatprep.subr.bf16.mxu0 0
      %368 = vmatpush1.bf16.msra.mxu0 0
      %369 = vmatprep.subr.bf16.mxu0 0
      %370 = vmatpush1.bf16.msra.mxu0 0
      %371 = vmatprep.subr.bf16.mxu0 0
      %372 = vmatpush1.bf16.msra.mxu0 0
      %373 = vmatprep.subr.bf16.mxu0 0
      %374 = vmatpush1.bf16.msra.mxu0 0
      %375 = vmatprep.subr.bf16.mxu0 0
      %376 = vmatpush1.bf16.msra.mxu0 0
      %377 = vmatprep.subr.bf16.mxu0 0
      %378 = vmatpush1.bf16.msra.mxu0 0
      %379 = vmatprep.subr.bf16.mxu0 0
      %380 = vmatpush1.bf16.msra.mxu0 0
      %381 = vmatprep.subr.bf16.mxu0 0
      %382 = vmatpush1.bf16.msra.mxu0 0
      %383 = vmatprep.subr.bf16.mxu0 0
      %384 = vmatpush1.bf16.msra.mxu0 0
      %385 = vmatprep.subr.bf16.mxu0 0
      %386 = vmatpush1.bf16.msra.mxu0 0
      %387 = vmatprep.subr.bf16.mxu0 0
      %388 = vmatpush1.bf16.msra.mxu0 0
      %389 = vmatprep.subr.bf16.mxu0 0
      %390 = vmatpush1.bf16.msra.mxu0 0
      %391 = vmatprep.mubr.bf16.mxu0 0
      %392 = vmatmul.mubr.bf16.gmra.mrb[0].mxu0 %v357
      %v393 = vpop.f32.mrb[0].mxu0
      %v394 = vadd.f32 %v323, %v393
      %v395 = vpop.f32.mrb[0].mxu0
      %v396 = vadd.f32 %v325, %v395
      %v397 = vpop.f32.mrb[0].mxu0
      %v398 = vpop.f32.mrb[0].mxu0
      %399 = vdwg.mxu0
      %s400 = scalar_lea.vmem %s3, 1
      %v401 = vld [vmem:[%s400] ss:$2 sm:$0x3]
      %v403 = vlaneseq
      %v404 = vshrl.u32 %v403, 7
      %v405 = vsub.s32 0, %v404
      %v406 = vrot.slane %v401, %v405
      %v407 = vlaneseq
      %v408 = vshrl.u32 %v407, 7
      %v409 = vsub.s32 1, %v408
      %v410 = vrot.slane %v401, %v409
      %411 = vrot.lane.b32.xlu0 %v406, 17
      %v412 = vpop.permute.xlu0 %411
      %413 = vrot.lane.b32.xlu0 %v410, 17
      %v414 = vpop.permute.xlu0 %413
      %vm415 = vcmask 138240
      %v416 = vsel %vm415, %v412, %v414
      %v420 = vmul.f32 %v199, %v412
      %v421 = vmul.f32 %v200, %v416
      %v422 = vmul.f32 %v201, %v414
      %v423 = vmul.f32 %v202, %v412
      %v424 = vmul.f32 %v203, %v416
      %v425 = vmul.f32 %v204, %v414
      %v426 = vmul.f32 %v205, %v412
      %v427 = vmul.f32 %v206, %v416
      %v428 = vmul.f32 %v207, %v414
      %v429 = vmul.f32 %v208, %v412
      %v430 = vmul.f32 %v209, %v416
      %v431 = vmul.f32 %v210, %v414
      %s432 = scalar_lea.vmem %s1, 8
      %v433 = vld [vmem:[%s432] sm:$0xf]
      %v434 = vpack.c.bf16 %v423, %v420
      %v435 = vpack.c.bf16 %v424, %v421
      %v436 = vpack.c.bf16 %v425, %v422
      %v437 = vpack.c.bf16 %v429, %v426
      %v438 = vpack.c.bf16 %v430, %v427
      %v439 = vpack.c.bf16 %v431, %v428
      %446 = vrot.lane.b32.xlu0 %v434, 111
      %v447 = vpop.permute.xlu0 %446
      %448 = vrot.lane.b32.xlu0 %v435, 111
      %v449 = vpop.permute.xlu0 %448
      %450 = vrot.lane.b32.xlu0 %v436, 111
      %v451 = vpop.permute.xlu0 %450
      %452 = vrot.lane.b32.xlu0 %v437, 111
      %v453 = vpop.permute.xlu0 %452
      %454 = vrot.lane.b32.xlu0 %v438, 111
      %v455 = vpop.permute.xlu0 %454
      %456 = vrot.lane.b32.xlu0 %v439, 111
      %v457 = vpop.permute.xlu0 %456
      %vm458 = vcmask 908288
      %v459 = vsel %vm458, %v447, %v449
      %v460 = vsel %vm458, %v449, %v451
      %v461 = vsel %vm458, %v453, %v455
      %v462 = vsel %vm458, %v455, %v457
      %v468 = vsel %vm284, %v433, 0
      %470 = vmatprep.subr.bf16.mxu0 %v460
      %471 = vmatpush1.bf16.msra.mxu0 %v459
      %472 = vmatprep.subr.bf16.mxu0 %v462
      %473 = vmatpush1.bf16.msra.mxu0 %v461
      %474 = vmatprep.subr.bf16.mxu0 0
      %475 = vmatpush1.bf16.msra.mxu0 0
      %476 = vmatprep.subr.bf16.mxu0 0
      %477 = vmatpush1.bf16.msra.mxu0 0
      %478 = vmatprep.subr.bf16.mxu0 0
      %479 = vmatpush1.bf16.msra.mxu0 0
      %480 = vmatprep.subr.bf16.mxu0 0
      %481 = vmatpush1.bf16.msra.mxu0 0
      %482 = vmatprep.subr.bf16.mxu0 0
      %483 = vmatpush1.bf16.msra.mxu0 0
      %484 = vmatprep.subr.bf16.mxu0 0
      %485 = vmatpush1.bf16.msra.mxu0 0
      %486 = vmatprep.subr.bf16.mxu0 0
      %487 = vmatpush1.bf16.msra.mxu0 0
      %488 = vmatprep.subr.bf16.mxu0 0
      %489 = vmatpush1.bf16.msra.mxu0 0
      %490 = vmatprep.subr.bf16.mxu0 0
      %491 = vmatpush1.bf16.msra.mxu0 0
      %492 = vmatprep.subr.bf16.mxu0 0
      %493 = vmatpush1.bf16.msra.mxu0 0
      %494 = vmatprep.subr.bf16.mxu0 0
      %495 = vmatpush1.bf16.msra.mxu0 0
      %496 = vmatprep.subr.bf16.mxu0 0
      %497 = vmatpush1.bf16.msra.mxu0 0
      %498 = vmatprep.subr.bf16.mxu0 0
      %499 = vmatpush1.bf16.msra.mxu0 0
      %500 = vmatprep.subr.bf16.mxu0 0
      %501 = vmatpush1.bf16.msra.mxu0 0
      %502 = vmatprep.mubr.bf16.mxu0 0
      %503 = vmatmul.mubr.bf16.gmra.mrb[0].mxu0 %v468
      %v504 = vpop.f32.mrb[0].mxu0
      %v505 = vadd.f32 0.0, %v504
      %v506 = vpop.f32.mrb[0].mxu0
      %v507 = vadd.f32 0.0, %v506
      %v508 = vpop.f32.mrb[0].mxu0
      %v509 = vpop.f32.mrb[0].mxu0
      %510 = vdwg.mxu0
      %v511 = vadd.f32 %v394, %v505
      %v512 = vadd.f32 %v396, %v507
      %513 = vrot.lane.b32.xlu0 %v216, 31
      %v514 = vpop.permute.xlu0 %513
      %515 = vrot.lane.b32.xlu0 %v220, 31
      %v516 = vpop.permute.xlu0 %515
      %vm517 = vcmask 252928
      %v518 = vsel %vm517, %v514, %v516
      %v522 = vmul.f32 %v199, %v514
      %v523 = vmul.f32 %v200, %v518
      %v524 = vmul.f32 %v201, %v516
      %v525 = vmul.f32 %v202, %v514
      %v526 = vmul.f32 %v203, %v518
      %v527 = vmul.f32 %v204, %v516
      %v528 = vmul.f32 %v205, %v514
      %v529 = vmul.f32 %v206, %v518
      %v530 = vmul.f32 %v207, %v516
      %v531 = vmul.f32 %v208, %v514
      %v532 = vmul.f32 %v209, %v518
      %v533 = vmul.f32 %v210, %v516
      %s534 = scalar_lea.vmem %s1, 12
      %v535 = vld [vmem:[%s534] sm:$0xf]
      %v536 = vpack.c.bf16 %v525, %v522
      %v537 = vpack.c.bf16 %v526, %v523
      %v538 = vpack.c.bf16 %v527, %v524
      %v539 = vpack.c.bf16 %v531, %v528
      %v540 = vpack.c.bf16 %v532, %v529
      %v541 = vpack.c.bf16 %v533, %v530
      %548 = vrot.lane.b32.xlu0 %v536, 97
      %v549 = vpop.permute.xlu0 %548
      %550 = vrot.lane.b32.xlu0 %v537, 97
      %v551 = vpop.permute.xlu0 %550
      %552 = vrot.lane.b32.xlu0 %v538, 97
      %v553 = vpop.permute.xlu0 %552
      %554 = vrot.lane.b32.xlu0 %v539, 97
      %v555 = vpop.permute.xlu0 %554
      %556 = vrot.lane.b32.xlu0 %v540, 97
      %v557 = vpop.permute.xlu0 %556
      %558 = vrot.lane.b32.xlu0 %v541, 97
      %v559 = vpop.permute.xlu0 %558
      %vm560 = vcmask 793600
      %v561 = vsel %vm560, %v549, %v551
      %v562 = vsel %vm560, %v551, %v553
      %v563 = vsel %vm560, %v555, %v557
      %v564 = vsel %vm560, %v557, %v559
      %v570 = vsel %vm284, %v535, 0
      %572 = vmatprep.subr.bf16.mxu0 %v562
      %573 = vmatpush1.bf16.msra.mxu0 %v561
      %574 = vmatprep.subr.bf16.mxu0 %v564
      %575 = vmatpush1.bf16.msra.mxu0 %v563
      %576 = vmatprep.subr.bf16.mxu0 0
      %577 = vmatpush1.bf16.msra.mxu0 0
      %578 = vmatprep.subr.bf16.mxu0 0
      %579 = vmatpush1.bf16.msra.mxu0 0
      %580 = vmatprep.subr.bf16.mxu0 0
      %581 = vmatpush1.bf16.msra.mxu0 0
      %582 = vmatprep.subr.bf16.mxu0 0
      %583 = vmatpush1.bf16.msra.mxu0 0
      %584 = vmatprep.subr.bf16.mxu0 0
      %585 = vmatpush1.bf16.msra.mxu0 0
      %586 = vmatprep.subr.bf16.mxu0 0
      %587 = vmatpush1.bf16.msra.mxu0 0
      %588 = vmatprep.subr.bf16.mxu0 0
      %589 = vmatpush1.bf16.msra.mxu0 0
      %590 = vmatprep.subr.bf16.mxu0 0
      %591 = vmatpush1.bf16.msra.mxu0 0
      %592 = vmatprep.subr.bf16.mxu0 0
      %593 = vmatpush1.bf16.msra.mxu0 0
      %594 = vmatprep.subr.bf16.mxu0 0
      %595 = vmatpush1.bf16.msra.mxu0 0
      %596 = vmatprep.subr.bf16.mxu0 0
      %597 = vmatpush1.bf16.msra.mxu0 0
      %598 = vmatprep.subr.bf16.mxu0 0
      %599 = vmatpush1.bf16.msra.mxu0 0
      %600 = vmatprep.subr.bf16.mxu0 0
      %601 = vmatpush1.bf16.msra.mxu0 0
      %602 = vmatprep.subr.bf16.mxu0 0
      %603 = vmatpush1.bf16.msra.mxu0 0
      %604 = vmatprep.mubr.bf16.mxu0 0
      %605 = vmatmul.mubr.bf16.gmra.mrb[0].mxu0 %v570
      %v606 = vpop.f32.mrb[0].mxu0
      %v607 = vadd.f32 0.0, %v606
      %v608 = vpop.f32.mrb[0].mxu0
      %v609 = vadd.f32 0.0, %v608
      %v610 = vpop.f32.mrb[0].mxu0
      %v611 = vpop.f32.mrb[0].mxu0
      %612 = vdwg.mxu0
      %v613 = vadd.f32 %v511, %v607
      %v614 = vadd.f32 %v512, %v609
      %s615 = scalar_lea.vmem %s1, 16
      %v616 = vld [vmem:[%s615] sm:$0xf]
      %617 = vrot.lane.b32.xlu0 %v251, 96
      %v618 = vpop.permute.xlu0 %617
      %619 = vrot.lane.b32.xlu0 %v252, 96
      %v620 = vpop.permute.xlu0 %619
      %621 = vrot.lane.b32.xlu0 %v253, 96
      %v622 = vpop.permute.xlu0 %621
      %623 = vrot.lane.b32.xlu0 %v254, 96
      %v624 = vpop.permute.xlu0 %623
      %625 = vrot.lane.b32.xlu0 %v255, 96
      %v626 = vpop.permute.xlu0 %625
      %627 = vrot.lane.b32.xlu0 %v256, 96
      %v628 = vpop.permute.xlu0 %627
      %vm629 = vcmask 785408
      %v630 = vsel %vm629, %v618, %v620
      %v631 = vsel %vm629, %v620, %v622
      %v632 = vsel %vm629, %v624, %v626
      %v633 = vsel %vm629, %v626, %v628
      %v639 = vsel %vm284, %v616, 0
      %641 = vmatprep.subr.bf16.mxu0 %v631
      %642 = vmatpush1.bf16.msra.mxu0 %v630
      %643 = vmatprep.subr.bf16.mxu0 %v633
      %644 = vmatpush1.bf16.msra.mxu0 %v632
      %645 = vmatprep.subr.bf16.mxu0 0
      %646 = vmatpush1.bf16.msra.mxu0 0
      %647 = vmatprep.subr.bf16.mxu0 0
      %648 = vmatpush1.bf16.msra.mxu0 0
      %649 = vmatprep.subr.bf16.mxu0 0
      %650 = vmatpush1.bf16.msra.mxu0 0
      %651 = vmatprep.subr.bf16.mxu0 0
      %652 = vmatpush1.bf16.msra.mxu0 0
      %653 = vmatprep.subr.bf16.mxu0 0
      %654 = vmatpush1.bf16.msra.mxu0 0
      %655 = vmatprep.subr.bf16.mxu0 0
      %656 = vmatpush1.bf16.msra.mxu0 0
      %657 = vmatprep.subr.bf16.mxu0 0
      %658 = vmatpush1.bf16.msra.mxu0 0
      %659 = vmatprep.subr.bf16.mxu0 0
      %660 = vmatpush1.bf16.msra.mxu0 0
      %661 = vmatprep.subr.bf16.mxu0 0
      %662 = vmatpush1.bf16.msra.mxu0 0
      %663 = vmatprep.subr.bf16.mxu0 0
      %664 = vmatpush1.bf16.msra.mxu0 0
      %665 = vmatprep.subr.bf16.mxu0 0
      %666 = vmatpush1.bf16.msra.mxu0 0
      %667 = vmatprep.subr.bf16.mxu0 0
      %668 = vmatpush1.bf16.msra.mxu0 0
      %669 = vmatprep.subr.bf16.mxu0 0
      %670 = vmatpush1.bf16.msra.mxu0 0
      %671 = vmatprep.subr.bf16.mxu0 0
      %672 = vmatpush1.bf16.msra.mxu0 0
      %673 = vmatprep.mubr.bf16.mxu0 0
      %674 = vmatmul.mubr.bf16.gmra.mrb[0].mxu0 %v639
      %v675 = vpop.f32.mrb[0].mxu0
      %v676 = vadd.f32 0.0, %v675
      %v677 = vpop.f32.mrb[0].mxu0
      %v678 = vadd.f32 0.0, %v677
      %v679 = vpop.f32.mrb[0].mxu0
      %v680 = vpop.f32.mrb[0].mxu0
      %681 = vdwg.mxu0
      %v682 = vadd.f32 %v613, %v676
      %v683 = vadd.f32 %v614, %v678
      %684 = vrot.lane.b32.xlu0 %v406, 33
      %v685 = vpop.permute.xlu0 %684
      %686 = vrot.lane.b32.xlu0 %v410, 33
      %v687 = vpop.permute.xlu0 %686
      %vm688 = vcmask 269312
      %v689 = vsel %vm688, %v685, %v687
      %v693 = vmul.f32 %v199, %v685
      %v694 = vmul.f32 %v200, %v689
      %v695 = vmul.f32 %v201, %v687
      %v696 = vmul.f32 %v202, %v685
      %v697 = vmul.f32 %v203, %v689
      %v698 = vmul.f32 %v204, %v687
      %v699 = vmul.f32 %v205, %v685
      %v700 = vmul.f32 %v206, %v689
      %v701 = vmul.f32 %v207, %v687
      %v702 = vmul.f32 %v208, %v685
      %v703 = vmul.f32 %v209, %v689
      %v704 = vmul.f32 %v210, %v687
      %s705 = scalar_lea.vmem %s1, 20
      %v706 = vld [vmem:[%s705] sm:$0xf]
      %v707 = vpack.c.bf16 %v696, %v693
      %v708 = vpack.c.bf16 %v697, %v694
      %v709 = vpack.c.bf16 %v698, %v695
      %v710 = vpack.c.bf16 %v702, %v699
      %v711 = vpack.c.bf16 %v703, %v700
      %v712 = vpack.c.bf16 %v704, %v701
      %719 = vrot.lane.b32.xlu0 %v707, 95
      %v720 = vpop.permute.xlu0 %719
      %721 = vrot.lane.b32.xlu0 %v708, 95
      %v722 = vpop.permute.xlu0 %721
      %723 = vrot.lane.b32.xlu0 %v709, 95
      %v724 = vpop.permute.xlu0 %723
      %725 = vrot.lane.b32.xlu0 %v710, 95
      %v726 = vpop.permute.xlu0 %725
      %727 = vrot.lane.b32.xlu0 %v711, 95
      %v728 = vpop.permute.xlu0 %727
      %729 = vrot.lane.b32.xlu0 %v712, 95
      %v730 = vpop.permute.xlu0 %729
      %vm731 = vcmask 777216
      %v732 = vsel %vm731, %v720, %v722
      %v733 = vsel %vm731, %v722, %v724
      %v734 = vsel %vm731, %v726, %v728
      %v735 = vsel %vm731, %v728, %v730
      %v741 = vsel %vm284, %v706, 0
      %743 = vmatprep.subr.bf16.mxu0 %v733
      %744 = vmatpush1.bf16.msra.mxu0 %v732
      %745 = vmatprep.subr.bf16.mxu0 %v735
      %746 = vmatpush1.bf16.msra.mxu0 %v734
      %747 = vmatprep.subr.bf16.mxu0 0
      %748 = vmatpush1.bf16.msra.mxu0 0
      %749 = vmatprep.subr.bf16.mxu0 0
      %750 = vmatpush1.bf16.msra.mxu0 0
      %751 = vmatprep.subr.bf16.mxu0 0
      %752 = vmatpush1.bf16.msra.mxu0 0
      %753 = vmatprep.subr.bf16.mxu0 0
      %754 = vmatpush1.bf16.msra.mxu0 0
      %755 = vmatprep.subr.bf16.mxu0 0
      %756 = vmatpush1.bf16.msra.mxu0 0
      %757 = vmatprep.subr.bf16.mxu0 0
      %758 = vmatpush1.bf16.msra.mxu0 0
      %759 = vmatprep.subr.bf16.mxu0 0
      %760 = vmatpush1.bf16.msra.mxu0 0
      %761 = vmatprep.subr.bf16.mxu0 0
      %762 = vmatpush1.bf16.msra.mxu0 0
      %763 = vmatprep.subr.bf16.mxu0 0
      %764 = vmatpush1.bf16.msra.mxu0 0
      %765 = vmatprep.subr.bf16.mxu0 0
      %766 = vmatpush1.bf16.msra.mxu0 0
      %767 = vmatprep.subr.bf16.mxu0 0
      %768 = vmatpush1.bf16.msra.mxu0 0
      %769 = vmatprep.subr.bf16.mxu0 0
      %770 = vmatpush1.bf16.msra.mxu0 0
      %771 = vmatprep.subr.bf16.mxu0 0
      %772 = vmatpush1.bf16.msra.mxu0 0
      %773 = vmatprep.subr.bf16.mxu0 0
      %774 = vmatpush1.bf16.msra.mxu0 0
      %775 = vmatprep.mubr.bf16.mxu0 0
      %776 = vmatmul.mubr.bf16.gmra.mrb[0].mxu0 %v741
      %v777 = vpop.f32.mrb[0].mxu0
      %v778 = vadd.f32 0.0, %v777
      %v779 = vpop.f32.mrb[0].mxu0
      %v780 = vadd.f32 0.0, %v779
      %v781 = vpop.f32.mrb[0].mxu0
      %v782 = vpop.f32.mrb[0].mxu0
      %783 = vdwg.mxu0
      %v784 = vadd.f32 %v682, %v778
      %v785 = vadd.f32 %v683, %v780
      %786 = vrot.lane.b32.xlu0 %v216, 47
      %v787 = vpop.permute.xlu0 %786
      %788 = vrot.lane.b32.xlu0 %v220, 47
      %v789 = vpop.permute.xlu0 %788
      %vm790 = vcmask 384000
      %v791 = vsel %vm790, %v787, %v789
      %v795 = vmul.f32 %v199, %v787
      %v796 = vmul.f32 %v200, %v791
      %v797 = vmul.f32 %v201, %v789
      %v798 = vmul.f32 %v202, %v787
      %v799 = vmul.f32 %v203, %v791
      %v800 = vmul.f32 %v204, %v789
      %v801 = vmul.f32 %v205, %v787
      %v802 = vmul.f32 %v206, %v791
      %v803 = vmul.f32 %v207, %v789
      %v804 = vmul.f32 %v208, %v787
      %v805 = vmul.f32 %v209, %v791
      %v806 = vmul.f32 %v210, %v789
      %s807 = scalar_lea.vmem %s1, 24
      %v808 = vld [vmem:[%s807] sm:$0xf]
      %v809 = vpack.c.bf16 %v798, %v795
      %v810 = vpack.c.bf16 %v799, %v796
      %v811 = vpack.c.bf16 %v800, %v797
      %v812 = vpack.c.bf16 %v804, %v801
      %v813 = vpack.c.bf16 %v805, %v802
      %v814 = vpack.c.bf16 %v806, %v803
      %821 = vrot.lane.b32.xlu0 %v809, 81
      %v822 = vpop.permute.xlu0 %821
      %823 = vrot.lane.b32.xlu0 %v810, 81
      %v824 = vpop.permute.xlu0 %823
      %825 = vrot.lane.b32.xlu0 %v811, 81
      %v826 = vpop.permute.xlu0 %825
      %827 = vrot.lane.b32.xlu0 %v812, 81
      %v828 = vpop.permute.xlu0 %827
      %829 = vrot.lane.b32.xlu0 %v813, 81
      %v830 = vpop.permute.xlu0 %829
      %831 = vrot.lane.b32.xlu0 %v814, 81
      %v832 = vpop.permute.xlu0 %831
      %vm833 = vcmask 662528
      %v834 = vsel %vm833, %v822, %v824
      %v835 = vsel %vm833, %v824, %v826
      %v836 = vsel %vm833, %v828, %v830
      %v837 = vsel %vm833, %v830, %v832
      %v843 = vsel %vm284, %v808, 0
      %845 = vmatprep.subr.bf16.mxu0 %v835
      %846 = vmatpush1.bf16.msra.mxu0 %v834
      %847 = vmatprep.subr.bf16.mxu0 %v837
      %848 = vmatpush1.bf16.msra.mxu0 %v836
      %849 = vmatprep.subr.bf16.mxu0 0
      %850 = vmatpush1.bf16.msra.mxu0 0
      %851 = vmatprep.subr.bf16.mxu0 0
      %852 = vmatpush1.bf16.msra.mxu0 0
      %853 = vmatprep.subr.bf16.mxu0 0
      %854 = vmatpush1.bf16.msra.mxu0 0
      %855 = vmatprep.subr.bf16.mxu0 0
      %856 = vmatpush1.bf16.msra.mxu0 0
      %857 = vmatprep.subr.bf16.mxu0 0
      %858 = vmatpush1.bf16.msra.mxu0 0
      %859 = vmatprep.subr.bf16.mxu0 0
      %860 = vmatpush1.bf16.msra.mxu0 0
      %861 = vmatprep.subr.bf16.mxu0 0
      %862 = vmatpush1.bf16.msra.mxu0 0
      %863 = vmatprep.subr.bf16.mxu0 0
      %864 = vmatpush1.bf16.msra.mxu0 0
      %865 = vmatprep.subr.bf16.mxu0 0
      %866 = vmatpush1.bf16.msra.mxu0 0
      %867 = vmatprep.subr.bf16.mxu0 0
      %868 = vmatpush1.bf16.msra.mxu0 0
      %869 = vmatprep.subr.bf16.mxu0 0
      %870 = vmatpush1.bf16.msra.mxu0 0
      %871 = vmatprep.subr.bf16.mxu0 0
      %872 = vmatpush1.bf16.msra.mxu0 0
      %873 = vmatprep.subr.bf16.mxu0 0
      %874 = vmatpush1.bf16.msra.mxu0 0
      %875 = vmatprep.subr.bf16.mxu0 0
      %876 = vmatpush1.bf16.msra.mxu0 0
      %877 = vmatprep.mubr.bf16.mxu0 0
      %878 = vmatmul.mubr.bf16.gmra.mrb[0].mxu0 %v843
      %v879 = vpop.f32.mrb[0].mxu0
      %v880 = vadd.f32 0.0, %v879
      %v881 = vpop.f32.mrb[0].mxu0
      %v882 = vadd.f32 0.0, %v881
      %v883 = vpop.f32.mrb[0].mxu0
      %v884 = vpop.f32.mrb[0].mxu0
      %885 = vdwg.mxu0
      %v886 = vadd.f32 %v784, %v880
      %v887 = vadd.f32 %v785, %v882
      %s888 = scalar_lea.vmem %s1, 28
      %v889 = vld [vmem:[%s888] sm:$0xf]
      %890 = vrot.lane.b32.xlu0 %v251, 80
      %v891 = vpop.permute.xlu0 %890
      %892 = vrot.lane.b32.xlu0 %v252, 80
      %v893 = vpop.permute.xlu0 %892
      %894 = vrot.lane.b32.xlu0 %v253, 80
      %v895 = vpop.permute.xlu0 %894
      %896 = vrot.lane.b32.xlu0 %v254, 80
      %v897 = vpop.permute.xlu0 %896
      %898 = vrot.lane.b32.xlu0 %v255, 80
      %v899 = vpop.permute.xlu0 %898
      %900 = vrot.lane.b32.xlu0 %v256, 80
      %v901 = vpop.permute.xlu0 %900
      %vm902 = vcmask 654336
      %v903 = vsel %vm902, %v891, %v893
      %v904 = vsel %vm902, %v893, %v895
      %v905 = vsel %vm902, %v897, %v899
      %v906 = vsel %vm902, %v899, %v901
      %v912 = vsel %vm284, %v889, 0
      %914 = vmatprep.subr.bf16.mxu0 %v904
      %915 = vmatpush1.bf16.msra.mxu0 %v903
      %916 = vmatprep.subr.bf16.mxu0 %v906
      %917 = vmatpush1.bf16.msra.mxu0 %v905
      %918 = vmatprep.subr.bf16.mxu0 0
      %919 = vmatpush1.bf16.msra.mxu0 0
      %920 = vmatprep.subr.bf16.mxu0 0
      %921 = vmatpush1.bf16.msra.mxu0 0
      %922 = vmatprep.subr.bf16.mxu0 0
      %923 = vmatpush1.bf16.msra.mxu0 0
      %924 = vmatprep.subr.bf16.mxu0 0
      %925 = vmatpush1.bf16.msra.mxu0 0
      %926 = vmatprep.subr.bf16.mxu0 0
      %927 = vmatpush1.bf16.msra.mxu0 0
      %928 = vmatprep.subr.bf16.mxu0 0
      %929 = vmatpush1.bf16.msra.mxu0 0
      %930 = vmatprep.subr.bf16.mxu0 0
      %931 = vmatpush1.bf16.msra.mxu0 0
      %932 = vmatprep.subr.bf16.mxu0 0
      %933 = vmatpush1.bf16.msra.mxu0 0
      %934 = vmatprep.subr.bf16.mxu0 0
      %935 = vmatpush1.bf16.msra.mxu0 0
      %936 = vmatprep.subr.bf16.mxu0 0
      %937 = vmatpush1.bf16.msra.mxu0 0
      %938 = vmatprep.subr.bf16.mxu0 0
      %939 = vmatpush1.bf16.msra.mxu0 0
      %940 = vmatprep.subr.bf16.mxu0 0
      %941 = vmatpush1.bf16.msra.mxu0 0
      %942 = vmatprep.subr.bf16.mxu0 0
      %943 = vmatpush1.bf16.msra.mxu0 0
      %944 = vmatprep.subr.bf16.mxu0 0
      %945 = vmatpush1.bf16.msra.mxu0 0
      %946 = vmatprep.mubr.bf16.mxu0 0
      %947 = vmatmul.mubr.bf16.gmra.mrb[0].mxu0 %v912
      %v948 = vpop.f32.mrb[0].mxu0
      %v949 = vadd.f32 0.0, %v948
      %v950 = vpop.f32.mrb[0].mxu0
      %v951 = vadd.f32 0.0, %v950
      %v952 = vpop.f32.mrb[0].mxu0
      %v953 = vpop.f32.mrb[0].mxu0
      %954 = vdwg.mxu0
      %v955 = vadd.f32 %v886, %v949
      %v956 = vadd.f32 %v887, %v951
      %957 = vrot.lane.b32.xlu0 %v406, 49
      %v958 = vpop.permute.xlu0 %957
      %959 = vrot.lane.b32.xlu0 %v410, 49
      %v960 = vpop.permute.xlu0 %959
      %vm961 = vcmask 400384
      %v962 = vsel %vm961, %v958, %v960
      %v966 = vmul.f32 %v199, %v958
      %v967 = vmul.f32 %v200, %v962
      %v968 = vmul.f32 %v201, %v960
      %v969 = vmul.f32 %v202, %v958
      %v970 = vmul.f32 %v203, %v962
      %v971 = vmul.f32 %v204, %v960
      %v972 = vmul.f32 %v205, %v958
      %v973 = vmul.f32 %v206, %v962
      %v974 = vmul.f32 %v207, %v960
      %v975 = vmul.f32 %v208, %v958
      %v976 = vmul.f32 %v209, %v962
      %v977 = vmul.f32 %v210, %v960
      %s978 = scalar_lea.vmem %s1, 32
      %v979 = vld [vmem:[%s978] sm:$0xf]
      %v980 = vpack.c.bf16 %v969, %v966
      %v981 = vpack.c.bf16 %v970, %v967
      %v982 = vpack.c.bf16 %v971, %v968
      %v983 = vpack.c.bf16 %v975, %v972
      %v984 = vpack.c.bf16 %v976, %v973
      %v985 = vpack.c.bf16 %v977, %v974
      %992 = vrot.lane.b32.xlu0 %v980, 79
      %v993 = vpop.permute.xlu0 %992
      %994 = vrot.lane.b32.xlu0 %v981, 79
      %v995 = vpop.permute.xlu0 %994
      %996 = vrot.lane.b32.xlu0 %v982, 79
      %v997 = vpop.permute.xlu0 %996
      %998 = vrot.lane.b32.xlu0 %v983, 79
      %v999 = vpop.permute.xlu0 %998
      %1000 = vrot.lane.b32.xlu0 %v984, 79
      %v1001 = vpop.permute.xlu0 %1000
      %1002 = vrot.lane.b32.xlu0 %v985, 79
      %v1003 = vpop.permute.xlu0 %1002
      %vm1004 = vcmask 646144
      %v1005 = vsel %vm1004, %v993, %v995
      %v1006 = vsel %vm1004, %v995, %v997
      %v1007 = vsel %vm1004, %v999, %v1001
      %v1008 = vsel %vm1004, %v1001, %v1003
      %v1014 = vsel %vm284, %v979, 0
      %1016 = vmatprep.subr.bf16.mxu0 %v1006
      %1017 = vmatpush1.bf16.msra.mxu0 %v1005
      %1018 = vmatprep.subr.bf16.mxu0 %v1008
      %1019 = vmatpush1.bf16.msra.mxu0 %v1007
      %1020 = vmatprep.subr.bf16.mxu0 0
      %1021 = vmatpush1.bf16.msra.mxu0 0
      %1022 = vmatprep.subr.bf16.mxu0 0
      %1023 = vmatpush1.bf16.msra.mxu0 0
      %1024 = vmatprep.subr.bf16.mxu0 0
      %1025 = vmatpush1.bf16.msra.mxu0 0
      %1026 = vmatprep.subr.bf16.mxu0 0
      %1027 = vmatpush1.bf16.msra.mxu0 0
      %1028 = vmatprep.subr.bf16.mxu0 0
      %1029 = vmatpush1.bf16.msra.mxu0 0
      %1030 = vmatprep.subr.bf16.mxu0 0
      %1031 = vmatpush1.bf16.msra.mxu0 0
      %1032 = vmatprep.subr.bf16.mxu0 0
      %1033 = vmatpush1.bf16.msra.mxu0 0
      %1034 = vmatprep.subr.bf16.mxu0 0
      %1035 = vmatpush1.bf16.msra.mxu0 0
      %1036 = vmatprep.subr.bf16.mxu0 0
      %1037 = vmatpush1.bf16.msra.mxu0 0
      %1038 = vmatprep.subr.bf16.mxu0 0
      %1039 = vmatpush1.bf16.msra.mxu0 0
      %1040 = vmatprep.subr.bf16.mxu0 0
      %1041 = vmatpush1.bf16.msra.mxu0 0
      %1042 = vmatprep.subr.bf16.mxu0 0
      %1043 = vmatpush1.bf16.msra.mxu0 0
      %1044 = vmatprep.subr.bf16.mxu0 0
      %1045 = vmatpush1.bf16.msra.mxu0 0
      %1046 = vmatprep.subr.bf16.mxu0 0
      %1047 = vmatpush1.bf16.msra.mxu0 0
      %1048 = vmatprep.mubr.bf16.mxu0 0
      %1049 = vmatmul.mubr.bf16.gmra.mrb[0].mxu0 %v1014
      %v1050 = vpop.f32.mrb[0].mxu0
      %v1051 = vadd.f32 0.0, %v1050
      %v1052 = vpop.f32.mrb[0].mxu0
      %v1053 = vadd.f32 0.0, %v1052
      %v1054 = vpop.f32.mrb[0].mxu0
      %v1055 = vpop.f32.mrb[0].mxu0
      %1056 = vdwg.mxu0
      %v1057 = vadd.f32 %v955, %v1051
      %v1058 = vadd.f32 %v956, %v1053
      %v1059 = vld [vmem:[%s2] sm:$0xff]
      %1061 = vset.pattern.permute.xlu0 0
      %1062 = vperm.xlu0 %1061, %v1059
      %v1063 = vpop.permute.xlu0 %1062
      %v1065 = vadd.f32 %v1057, %v1063
      %v1066 = vadd.f32 %v1058, %v1063
      %v1067 = vmax.f32 %v1065, 0.0
      %v1068 = vmax.f32 %v1066, 0.0
      %1069 = vst [vmem:[%s197] sm:$0xff] %v1067
      %1070 = vst [vmem:[%s197 + $0x8] sm:$0xff] %v1068
      %p1071 = scmp.lt.s32.totalorder %s15, 1
      %s1072 = scalar_select %p1071, %s15, 1
      %s1073 = smul.addr %s1072, 2
      %s1074 = smul.addr %s1073, 8
      %s1075 = scalar_lea.vmem %s4, %s1074
      // Predicated region
      $region37: #{_lambda_.11} parent=35 // pred_check
        %p1076 = pneg %p122
      $region38: #{_lambda_.11} parent=35 // pred_check_branch
        %1078 = sbr.rel (%p1076) target = $region40
      $region39: #{_lambda_.11} parent=35 // pred_region
        _
      $region40: #{_lambda_.11} parent=35 // pred_fallthru
        _
    $region36: #{_lambda_.11} parent=5 // pred_fallthru
      _
    %p1079 = scmp.le.s32.totalorder 2, %s10
    // Predicated region
    $region41: #{_lambda_.11} parent=5 // pred_check
      %p1080 = pneg %p1079
    $region42: #{_lambda_.11} parent=5 // pred_check_branch
      %1082 = sbr.rel (%p1080) target = $region44
    $region43: #{_lambda_.11} parent=5 // pred_region
      %s1083 = ssub.s32 %s10, 2
      // Predicated region
      $region45: #{_lambda_.11} parent=43 // pred_check
        %p1084 = pneg %p128
      $region46: #{_lambda_.11} parent=43 // pred_check_branch
        %1086 = sbr.rel (%p1084) target = $region48
      $region47: #{_lambda_.11} parent=43 // pred_region
        %p1087 = scmp.lt.s32.totalorder %s16, 1
        %s1088 = scalar_select %p1087, %s16, 1
        %s1089 = smul.addr %s1088, 2
        %s1090 = smul.addr %s1089, 8
        %s1091 = scalar_lea.vmem %s4, %s1090
      $region48: #{_lambda_.11} parent=43 // pred_fallthru
        _
    $region44: #{_lambda_.11} parent=5 // pred_fallthru
      _
  $region6: #{_lambda_.11} parent=0 // loop_footer
    %s14 = sadd.s32 1, %s10
  $region7: #{_lambda_.11} parent=0 // loop_footer_branch
    %9 = sbr.rel target = $region3
  $region8: #{_lambda_.11} parent=0 // loop_exit
    _

// kernel: _lambda_.12
$region0: #{_lambda_.12}
  #allocation0 [shape = 'u32[]', space=smem, size = 0x4, offset = 0x4, fixed_abs, tag = 'smem constant byte address 0x4 - core index']
  #allocation1 [shape = 'u32[144,128]{1,0:T(1,128)}', space=vmem, size = 0x12000, scoped, tag = 'internal scratch']
  %s0 = inlined_call_operand.vmem [shape: f32[2,16,320], index: 0, kind: input, shape index: {}]
  %s1 = inlined_call_operand.vmem [shape: bf16[9,8,16], index: 1, kind: input, shape index: {}]
  %s2 = inlined_call_operand.vmem [shape: f32[8,1], index: 2, kind: input, shape index: {}]
  %s3 = inlined_call_operand.vmem [shape: f32[2,256], index: 3, kind: input, shape index: {}]
  %s4 = inlined_call_operand.vmem [shape: f32[2,8,256], index: 4, kind: output, shape index: {}]
  %s5 = sld [smem:[#allocation0]]
  $region49: #{_lambda_.12} parent=0
    _
  %s7 = ssub.s32 1, %s5
  %s8 = scalar_select 0, %s7, %s5
  loop: start=0, step=1, limit=4
  $region2: #{_lambda_.12} parent=0 // loop_pre_header
    _
  $region3: #{_lambda_.12} parent=0 // loop_header
    %s10 = sphi 0, %s14
    %p11 = scmp.ge.s32.totalorder %s10, 4
    %s20 = sphi 0, %s22
    %s23 = sphi 0, %s20
    %s24 = sphi 0, %s23
    %s40 = sphi 0, %s24
    %s44 = sphi 0, %s44
    %s46 = sphi 0, %s44
    %s47 = sphi 0, %s46
    %s61 = sphi 0, %s47
    %s65 = sphi 0, %s65
    %s67 = sphi 0, %s65
    %s68 = sphi 0, %s67
    %s82 = sphi 0, %s68
    %s86 = sphi 0, %s86
    %s88 = sphi 0, %s86
    %s89 = sphi 0, %s88
    %s103 = sphi 0, %s89
    %s109 = sphi 0, %s111
    %s112 = sphi 0, %s109
    %s113 = sphi 0, %s112
    %s129 = sphi 0, %s113
  $region4: #{_lambda_.12} parent=0 // loop_header_branch
    %13 = sbr.rel (%p11) target = $region8
  $region5: #{_lambda_.12} parent=0 // loop_body
    %s15 = ssub.s32 %s10, 1
    %s16 = ssub.s32 %s10, 2
    %s17 = sadd.s32 %s10, 1
    %s18 = ssub.s32 %s10, %s17
    %p19 = scmp.eq.s32.totalorder %s18, 0
    %s21 = sadd.s32 %s20, 1
    %s22 = scalar_select %p19, %s20, %s21
    %p25 = pneg %p19
    %p26 = scmp.eq.s32.totalorder %s10, 1
    %p27 = por %p25, %p26
    %p28 = scmp.ne.s32.totalorder %s20, %s23
    %p29 = scmp.eq.s32.totalorder %s10, 0
    %p30 = por %p28, %p29
    %p31 = scmp.ne.s32.totalorder %s20, %s23
    %p32 = scmp.eq.s32.totalorder %s15, 1
    %p33 = por %p31, %p32
    %p34 = scmp.ne.s32.totalorder %s23, %s24
    %p35 = scmp.eq.s32.totalorder %s15, 0
    %p36 = por %p34, %p35
    %p37 = scmp.ne.s32.totalorder %s23, %s24
    %p38 = scmp.eq.s32.totalorder %s16, 1
    %p39 = por %p37, %p38
    %p41 = scmp.ne.s32.totalorder %s24, %s40
    %p42 = scmp.eq.s32.totalorder %s16, 0
    %p43 = por %p41, %p42
    %s45 = sadd.s32 %s44, 1
    %p48 = scmp.eq.s32.totalorder %s10, 1
    %p49 = scmp.ne.s32.totalorder %s44, %s46
    %p50 = scmp.eq.s32.totalorder %s10, 0
    %p51 = por %p49, %p50
    %p52 = scmp.ne.s32.totalorder %s44, %s46
    %p53 = scmp.eq.s32.totalorder %s15, 1
    %p54 = por %p52, %p53
    %p55 = scmp.ne.s32.totalorder %s46, %s47
    %p56 = scmp.eq.s32.totalorder %s15, 0
    %p57 = por %p55, %p56
    %p58 = scmp.ne.s32.totalorder %s46, %s47
    %p59 = scmp.eq.s32.totalorder %s16, 1
    %p60 = por %p58, %p59
    %p62 = scmp.ne.s32.totalorder %s47, %s61
    %p63 = scmp.eq.s32.totalorder %s16, 0
    %p64 = por %p62, %p63
    %s66 = sadd.s32 %s65, 1
    %p69 = scmp.eq.s32.totalorder %s10, 1
    %p70 = scmp.ne.s32.totalorder %s65, %s67
    %p71 = scmp.eq.s32.totalorder %s10, 0
    %p72 = por %p70, %p71
    %p73 = scmp.ne.s32.totalorder %s65, %s67
    %p74 = scmp.eq.s32.totalorder %s15, 1
    %p75 = por %p73, %p74
    %p76 = scmp.ne.s32.totalorder %s67, %s68
    %p77 = scmp.eq.s32.totalorder %s15, 0
    %p78 = por %p76, %p77
    %p79 = scmp.ne.s32.totalorder %s67, %s68
    %p80 = scmp.eq.s32.totalorder %s16, 1
    %p81 = por %p79, %p80
    %p83 = scmp.ne.s32.totalorder %s68, %s82
    %p84 = scmp.eq.s32.totalorder %s16, 0
    %p85 = por %p83, %p84
    %s87 = sadd.s32 %s86, 1
    %p90 = scmp.eq.s32.totalorder %s10, 1
    %p91 = scmp.ne.s32.totalorder %s86, %s88
    %p92 = scmp.eq.s32.totalorder %s10, 0
    %p93 = por %p91, %p92
    %p94 = scmp.ne.s32.totalorder %s86, %s88
    %p95 = scmp.eq.s32.totalorder %s15, 1
    %p96 = por %p94, %p95
    %p97 = scmp.ne.s32.totalorder %s88, %s89
    %p98 = scmp.eq.s32.totalorder %s15, 0
    %p99 = por %p97, %p98
    %p100 = scmp.ne.s32.totalorder %s88, %s89
    %p101 = scmp.eq.s32.totalorder %s16, 1
    %p102 = por %p100, %p101
    %p104 = scmp.ne.s32.totalorder %s89, %s103
    %p105 = scmp.eq.s32.totalorder %s16, 0
    %p106 = por %p104, %p105
    %s107 = ssub.s32 %s10, %s17
    %p108 = scmp.eq.s32.totalorder %s107, 0
    %s110 = sadd.s32 %s109, 1
    %s111 = scalar_select %p108, %s109, %s110
    %p114 = pneg %p108
    %p115 = scmp.eq.s32.totalorder %s10, 1
    %p116 = por %p114, %p115
    %p117 = scmp.ne.s32.totalorder %s109, %s112
    %p118 = scmp.eq.s32.totalorder %s10, 0
    %p119 = por %p117, %p118
    %p120 = scmp.ne.s32.totalorder %s109, %s112
    %p121 = scmp.eq.s32.totalorder %s15, 1
    %p122 = por %p120, %p121
    %p123 = scmp.ne.s32.totalorder %s112, %s113
    %p124 = scmp.eq.s32.totalorder %s15, 0
    %p125 = por %p123, %p124
    %p126 = scmp.ne.s32.totalorder %s112, %s113
    %p127 = scmp.eq.s32.totalorder %s16, 1
    %p128 = por %p126, %p127
    %p130 = scmp.ne.s32.totalorder %s113, %s129
    %p131 = scmp.eq.s32.totalorder %s16, 0
    %p132 = por %p130, %p131
    %p133 = scmp.le.s32.totalorder 1, %s10
    %p134 = scmp.lt.s32.totalorder %s10, 3
    %p135 = pnand %p133, %p134
    %p136 = pneg %p135
    // Predicated region
    $region9: #{_lambda_.12} parent=5 // pred_check
      _
    $region10: #{_lambda_.12} parent=5 // pred_check_branch
      %138 = sbr.rel (%p135) target = $region12
    $region11: #{_lambda_.12} parent=5 // pred_region
      %s139 = ssub.s32 %s10, 1
      // Predicated region
      $region13: #{_lambda_.12} parent=11 // pred_check
        %p140 = pneg %p57
      $region14: #{_lambda_.12} parent=11 // pred_check_branch
        %142 = sbr.rel (%p140) target = $region16
      $region15: #{_lambda_.12} parent=11 // pred_region
        _
      $region16: #{_lambda_.12} parent=11 // pred_fallthru
        _
      // Predicated region
      $region17: #{_lambda_.12} parent=11 // pred_check
        %p143 = pneg %p78
      $region18: #{_lambda_.12} parent=11 // pred_check_branch
        %145 = sbr.rel (%p143) target = $region20
      $region19: #{_lambda_.12} parent=11 // pred_region
        _
      $region20: #{_lambda_.12} parent=11 // pred_fallthru
        _
      // Predicated region
      $region21: #{_lambda_.12} parent=11 // pred_check
        %p146 = pneg %p99
      $region22: #{_lambda_.12} parent=11 // pred_check_branch
        %148 = sbr.rel (%p146) target = $region24
      $region23: #{_lambda_.12} parent=11 // pred_region
        _
      $region24: #{_lambda_.12} parent=11 // pred_fallthru
        _
    $region12: #{_lambda_.12} parent=5 // pred_fallthru
      _
    %p149 = scmp.lt.s32.totalorder %s10, 2
    // Predicated region
    $region25: #{_lambda_.12} parent=5 // pred_check
      %p150 = pneg %p149
    $region26: #{_lambda_.12} parent=5 // pred_check_branch
      %152 = sbr.rel (%p150) target = $region28
    $region27: #{_lambda_.12} parent=5 // pred_region
      // Predicated region
      $region29: #{_lambda_.12} parent=27 // pred_check
        %p153 = pneg %p30
      $region30: #{_lambda_.12} parent=27 // pred_check_branch
        %155 = sbr.rel (%p153) target = $region32
      $region31: #{_lambda_.12} parent=27 // pred_region
        %p156 = scmp.lt.s32.totalorder %s10, 1
        %s157 = scalar_select %p156, %s10, 1
        %s158 = smul.addr %s157, 6
        %s159 = smul.addr %s158, 8
        %s160 = scalar_lea.vmem %s0, %s159
      $region32: #{_lambda_.12} parent=27 // pred_fallthru
        _
    $region28: #{_lambda_.12} parent=5 // pred_fallthru
      _
    %p161 = scmp.le.s32.totalorder 1, %s10
    %p162 = scmp.lt.s32.totalorder %s10, 3
    %p163 = pnand %p161, %p162
    %p164 = pneg %p163
    // Predicated region
    $region33: #{_lambda_.12} parent=5 // pred_check
      _
    $region34: #{_lambda_.12} parent=5 // pred_check_branch
      %166 = sbr.rel (%p163) target = $region36
    $region35: #{_lambda_.12} parent=5 // pred_region
      %s167 = ssub.s32 %s10, 1
      %p168 = scmp.lt.s32.totalorder %s15, 1
      %s169 = scalar_select %p168, %s15, 1
      %s170 = smul.addr %s169, 6
      %s171 = smul.addr %s170, 8
      %s172 = scalar_lea.vmem %s0, %s171
      %p173 = pneg %p36
      %p174 = pneg %p33
      %p175 = pneg %p57
      %p176 = pneg %p54
      %p177 = pneg %p78
      %p178 = pneg %p75
      %p179 = pneg %p99
      %p180 = pneg %p96
      %p181 = pneg %p125
      %p182 = pneg %p122
      %p183 = scmp.lt.s32.totalorder %s15, 1
      %s184 = scalar_select %p183, %s15, 1
      %s185 = smul.addr %s184, 2
      %s186 = smul.addr %s185, 8
      %s187 = scalar_lea.vmem %s4, %s186
      %p188 = scmp.lt.s32.totalorder %s15, 1
      %s189 = scalar_select %p188, %s15, 1
      %s190 = smul.addr %s189, 6
      %s191 = smul.addr %s190, 8
      %s192 = scalar_lea.vmem %s0, %s191
      %p193 = scmp.lt.s32.totalorder %s15, 1
      %s194 = scalar_select %p193, %s15, 1
      %s195 = smul.addr %s194, 2
      %s196 = smul.addr %s195, 8
      %s197 = scalar_lea.vmem %s4, %s196
      %v199 = vld [vmem:[%s192] sm:$0xff]
      %v200 = vld [vmem:[%s192 + $0x8] sm:$0xff]
      %v201 = vld [vmem:[%s192 + $0x10] sm:$0xff]
      %v202 = vld [vmem:[%s192 + $0x18] sm:$0xff]
      %v203 = vld [vmem:[%s192 + $0x20] sm:$0xff]
      %v204 = vld [vmem:[%s192 + $0x28] sm:$0xff]
      %v205 = vld [vmem:[%s3] ss:$2 sm:$0x3]
      %v207 = vlaneseq
      %v208 = vshrl.u32 %v207, 7
      %v209 = vsub.s32 0, %v208
      %v210 = vrot.slane %v205, %v209
      %v211 = vlaneseq
      %v212 = vshrl.u32 %v211, 7
      %v213 = vsub.s32 1, %v212
      %v214 = vrot.slane %v205, %v213
      %215 = vrot.lane.b32.xlu0 %v210, 15
      %v216 = vpop.permute.xlu0 %215
      %217 = vrot.lane.b32.xlu0 %v214, 15
      %v218 = vpop.permute.xlu0 %217
      %vm219 = vcmask 121856
      %v220 = vsel %vm219, %v216, %v218
      %v224 = vmul.f32 %v199, %v216
      %v225 = vmul.f32 %v200, %v220
      %v226 = vmul.f32 %v201, %v218
      %v227 = vmul.f32 %v202, %v216
      %v228 = vmul.f32 %v203, %v220
      %v229 = vmul.f32 %v204, %v218
      %v230 = vld [vmem:[%s1] sm:$0xf]
      %v231 = vpack.c.bf16 %v227, %v224
      %v232 = vpack.c.bf16 %v228, %v225
      %v233 = vpack.c.bf16 %v229, %v226
      %s234 = scalar_lea.vmem %s1, 4
      %v235 = vld [vmem:[%s234] sm:$0xf]
      %v236 = vpack.c.bf16 %v202, %v199
      %v237 = vpack.c.bf16 %v203, %v200
      %v238 = vpack.c.bf16 %v204, %v201
      %242 = vrot.lane.b32.xlu0 %v236, 112
      %v243 = vpop.permute.xlu0 %242
      %244 = vrot.lane.b32.xlu0 %v237, 112
      %v245 = vpop.permute.xlu0 %244
      %246 = vrot.lane.b32.xlu0 %v238, 112
      %v247 = vpop.permute.xlu0 %246
      %vm248 = vcmask 916480
      %v249 = vsel %vm248, %v243, %v245
      %v250 = vsel %vm248, %v245, %v247
      %vm253 = vcmask 130048
      %v255 = vsel %vm253, %v235, 0
      %257 = vmatprep.subr.bf16.mxu0 %v250
      %258 = vmatpush1.bf16.msra.mxu0 %v249
      %259 = vmatprep.subr.bf16.mxu0 0
      %260 = vmatpush1.bf16.msra.mxu0 0
      %261 = vmatprep.subr.bf16.mxu0 0
      %262 = vmatpush1.bf16.msra.mxu0 0
      %263 = vmatprep.subr.bf16.mxu0 0
      %264 = vmatpush1.bf16.msra.mxu0 0
      %265 = vmatprep.subr.bf16.mxu0 0
      %266 = vmatpush1.bf16.msra.mxu0 0
      %267 = vmatprep.subr.bf16.mxu0 0
      %268 = vmatpush1.bf16.msra.mxu0 0
      %269 = vmatprep.subr.bf16.mxu0 0
      %270 = vmatpush1.bf16.msra.mxu0 0
      %271 = vmatprep.subr.bf16.mxu0 0
      %272 = vmatpush1.bf16.msra.mxu0 0
      %273 = vmatprep.subr.bf16.mxu0 0
      %274 = vmatpush1.bf16.msra.mxu0 0
      %275 = vmatprep.subr.bf16.mxu0 0
      %276 = vmatpush1.bf16.msra.mxu0 0
      %277 = vmatprep.subr.bf16.mxu0 0
      %278 = vmatpush1.bf16.msra.mxu0 0
      %279 = vmatprep.subr.bf16.mxu0 0
      %280 = vmatpush1.bf16.msra.mxu0 0
      %281 = vmatprep.subr.bf16.mxu0 0
      %282 = vmatpush1.bf16.msra.mxu0 0
      %283 = vmatprep.subr.bf16.mxu0 0
      %284 = vmatpush1.bf16.msra.mxu0 0
      %285 = vmatprep.subr.bf16.mxu0 0
      %286 = vmatpush1.bf16.msra.mxu0 0
      %287 = vmatprep.subr.bf16.mxu0 0
      %288 = vmatpush1.bf16.msra.mxu0 0
      %289 = vmatprep.mubr.bf16.mxu0 0
      %290 = vmatmul.mubr.bf16.gmra.mrb[0].mxu0 %v255
      %v291 = vpop.f32.mrb[0].mxu0
      %v292 = vadd.f32 0.0, %v291
      %v293 = vpop.f32.mrb[0].mxu0
      %v294 = vadd.f32 0.0, %v293
      %v295 = vpop.f32.mrb[0].mxu0
      %v296 = vpop.f32.mrb[0].mxu0
      %297 = vdwg.mxu0
      %301 = vrot.lane.b32.xlu0 %v231, 113
      %v302 = vpop.permute.xlu0 %301
      %303 = vrot.lane.b32.xlu0 %v232, 113
      %v304 = vpop.permute.xlu0 %303
      %305 = vrot.lane.b32.xlu0 %v233, 113
      %v306 = vpop.permute.xlu0 %305
      %vm307 = vcmask 924672
      %v308 = vsel %vm307, %v302, %v304
      %v309 = vsel %vm307, %v304, %v306
      %v313 = vsel %vm253, %v230, 0
      %315 = vmatprep.subr.bf16.mxu0 %v309
      %316 = vmatpush1.bf16.msra.mxu0 %v308
      %317 = vmatprep.subr.bf16.mxu0 0
      %318 = vmatpush1.bf16.msra.mxu0 0
      %319 = vmatprep.subr.bf16.mxu0 0
      %320 = vmatpush1.bf16.msra.mxu0 0
      %321 = vmatprep.subr.bf16.mxu0 0
      %322 = vmatpush1.bf16.msra.mxu0 0
      %323 = vmatprep.subr.bf16.mxu0 0
      %324 = vmatpush1.bf16.msra.mxu0 0
      %325 = vmatprep.subr.bf16.mxu0 0
      %326 = vmatpush1.bf16.msra.mxu0 0
      %327 = vmatprep.subr.bf16.mxu0 0
      %328 = vmatpush1.bf16.msra.mxu0 0
      %329 = vmatprep.subr.bf16.mxu0 0
      %330 = vmatpush1.bf16.msra.mxu0 0
      %331 = vmatprep.subr.bf16.mxu0 0
      %332 = vmatpush1.bf16.msra.mxu0 0
      %333 = vmatprep.subr.bf16.mxu0 0
      %334 = vmatpush1.bf16.msra.mxu0 0
      %335 = vmatprep.subr.bf16.mxu0 0
      %336 = vmatpush1.bf16.msra.mxu0 0
      %337 = vmatprep.subr.bf16.mxu0 0
      %338 = vmatpush1.bf16.msra.mxu0 0
      %339 = vmatprep.subr.bf16.mxu0 0
      %340 = vmatpush1.bf16.msra.mxu0 0
      %341 = vmatprep.subr.bf16.mxu0 0
      %342 = vmatpush1.bf16.msra.mxu0 0
      %343 = vmatprep.subr.bf16.mxu0 0
      %344 = vmatpush1.bf16.msra.mxu0 0
      %345 = vmatprep.subr.bf16.mxu0 0
      %346 = vmatpush1.bf16.msra.mxu0 0
      %347 = vmatprep.mubr.bf16.mxu0 0
      %348 = vmatmul.mubr.bf16.gmra.mrb[0].mxu0 %v313
      %v349 = vpop.f32.mrb[0].mxu0
      %v350 = vadd.f32 %v292, %v349
      %v351 = vpop.f32.mrb[0].mxu0
      %v352 = vadd.f32 %v294, %v351
      %v353 = vpop.f32.mrb[0].mxu0
      %v354 = vpop.f32.mrb[0].mxu0
      %355 = vdwg.mxu0
      %s356 = scalar_lea.vmem %s3, 1
      %v357 = vld [vmem:[%s356] ss:$2 sm:$0x3]
      %v359 = vlaneseq
      %v360 = vshrl.u32 %v359, 7
      %v361 = vsub.s32 0, %v360
      %v362 = vrot.slane %v357, %v361
      %v363 = vlaneseq
      %v364 = vshrl.u32 %v363, 7
      %v365 = vsub.s32 1, %v364
      %v366 = vrot.slane %v357, %v365
      %367 = vrot.lane.b32.xlu0 %v362, 17
      %v368 = vpop.permute.xlu0 %367
      %369 = vrot.lane.b32.xlu0 %v366, 17
      %v370 = vpop.permute.xlu0 %369
      %vm371 = vcmask 138240
      %v372 = vsel %vm371, %v368, %v370
      %v376 = vmul.f32 %v199, %v368
      %v377 = vmul.f32 %v200, %v372
      %v378 = vmul.f32 %v201, %v370
      %v379 = vmul.f32 %v202, %v368
      %v380 = vmul.f32 %v203, %v372
      %v381 = vmul.f32 %v204, %v370
      %s382 = scalar_lea.vmem %s1, 8
      %v383 = vld [vmem:[%s382] sm:$0xf]
      %v384 = vpack.c.bf16 %v379, %v376
      %v385 = vpack.c.bf16 %v380, %v377
      %v386 = vpack.c.bf16 %v381, %v378
      %390 = vrot.lane.b32.xlu0 %v384, 111
      %v391 = vpop.permute.xlu0 %390
      %392 = vrot.lane.b32.xlu0 %v385, 111
      %v393 = vpop.permute.xlu0 %392
      %394 = vrot.lane.b32.xlu0 %v386, 111
      %v395 = vpop.permute.xlu0 %394
      %vm396 = vcmask 908288
      %v397 = vsel %vm396, %v391, %v393
      %v398 = vsel %vm396, %v393, %v395
      %v402 = vsel %vm253, %v383, 0
      %404 = vmatprep.subr.bf16.mxu0 %v398
      %405 = vmatpush1.bf16.msra.mxu0 %v397
      %406 = vmatprep.subr.bf16.mxu0 0
      %407 = vmatpush1.bf16.msra.mxu0 0
      %408 = vmatprep.subr.bf16.mxu0 0
      %409 = vmatpush1.bf16.msra.mxu0 0
      %410 = vmatprep.subr.bf16.mxu0 0
      %411 = vmatpush1.bf16.msra.mxu0 0
      %412 = vmatprep.subr.bf16.mxu0 0
      %413 = vmatpush1.bf16.msra.mxu0 0
      %414 = vmatprep.subr.bf16.mxu0 0
      %415 = vmatpush1.bf16.msra.mxu0 0
      %416 = vmatprep.subr.bf16.mxu0 0
      %417 = vmatpush1.bf16.msra.mxu0 0
      %418 = vmatprep.subr.bf16.mxu0 0
      %419 = vmatpush1.bf16.msra.mxu0 0
      %420 = vmatprep.subr.bf16.mxu0 0
      %421 = vmatpush1.bf16.msra.mxu0 0
      %422 = vmatprep.subr.bf16.mxu0 0
      %423 = vmatpush1.bf16.msra.mxu0 0
      %424 = vmatprep.subr.bf16.mxu0 0
      %425 = vmatpush1.bf16.msra.mxu0 0
      %426 = vmatprep.subr.bf16.mxu0 0
      %427 = vmatpush1.bf16.msra.mxu0 0
      %428 = vmatprep.subr.bf16.mxu0 0
      %429 = vmatpush1.bf16.msra.mxu0 0
      %430 = vmatprep.subr.bf16.mxu0 0
      %431 = vmatpush1.bf16.msra.mxu0 0
      %432 = vmatprep.subr.bf16.mxu0 0
      %433 = vmatpush1.bf16.msra.mxu0 0
      %434 = vmatprep.subr.bf16.mxu0 0
      %435 = vmatpush1.bf16.msra.mxu0 0
      %436 = vmatprep.mubr.bf16.mxu0 0
      %437 = vmatmul.mubr.bf16.gmra.mrb[0].mxu0 %v402
      %v438 = vpop.f32.mrb[0].mxu0
      %v439 = vadd.f32 0.0, %v438
      %v440 = vpop.f32.mrb[0].mxu0
      %v441 = vadd.f32 0.0, %v440
      %v442 = vpop.f32.mrb[0].mxu0
      %v443 = vpop.f32.mrb[0].mxu0
      %444 = vdwg.mxu0
      %v445 = vadd.f32 %v350, %v439
      %v446 = vadd.f32 %v352, %v441
      %447 = vrot.lane.b32.xlu0 %v210, 31
      %v448 = vpop.permute.xlu0 %447
      %449 = vrot.lane.b32.xlu0 %v214, 31
      %v450 = vpop.permute.xlu0 %449
      %vm451 = vcmask 252928
      %v452 = vsel %vm451, %v448, %v450
      %v456 = vmul.f32 %v199, %v448
      %v457 = vmul.f32 %v200, %v452
      %v458 = vmul.f32 %v201, %v450
      %v459 = vmul.f32 %v202, %v448
      %v460 = vmul.f32 %v203, %v452
      %v461 = vmul.f32 %v204, %v450
      %s462 = scalar_lea.vmem %s1, 12
      %v463 = vld [vmem:[%s462] sm:$0xf]
      %v464 = vpack.c.bf16 %v459, %v456
      %v465 = vpack.c.bf16 %v460, %v457
      %v466 = vpack.c.bf16 %v461, %v458
      %470 = vrot.lane.b32.xlu0 %v464, 97
      %v471 = vpop.permute.xlu0 %470
      %472 = vrot.lane.b32.xlu0 %v465, 97
      %v473 = vpop.permute.xlu0 %472
      %474 = vrot.lane.b32.xlu0 %v466, 97
      %v475 = vpop.permute.xlu0 %474
      %vm476 = vcmask 793600
      %v477 = vsel %vm476, %v471, %v473
      %v478 = vsel %vm476, %v473, %v475
      %v482 = vsel %vm253, %v463, 0
      %484 = vmatprep.subr.bf16.mxu0 %v478
      %485 = vmatpush1.bf16.msra.mxu0 %v477
      %486 = vmatprep.subr.bf16.mxu0 0
      %487 = vmatpush1.bf16.msra.mxu0 0
      %488 = vmatprep.subr.bf16.mxu0 0
      %489 = vmatpush1.bf16.msra.mxu0 0
      %490 = vmatprep.subr.bf16.mxu0 0
      %491 = vmatpush1.bf16.msra.mxu0 0
      %492 = vmatprep.subr.bf16.mxu0 0
      %493 = vmatpush1.bf16.msra.mxu0 0
      %494 = vmatprep.subr.bf16.mxu0 0
      %495 = vmatpush1.bf16.msra.mxu0 0
      %496 = vmatprep.subr.bf16.mxu0 0
      %497 = vmatpush1.bf16.msra.mxu0 0
      %498 = vmatprep.subr.bf16.mxu0 0
      %499 = vmatpush1.bf16.msra.mxu0 0
      %500 = vmatprep.subr.bf16.mxu0 0
      %501 = vmatpush1.bf16.msra.mxu0 0
      %502 = vmatprep.subr.bf16.mxu0 0
      %503 = vmatpush1.bf16.msra.mxu0 0
      %504 = vmatprep.subr.bf16.mxu0 0
      %505 = vmatpush1.bf16.msra.mxu0 0
      %506 = vmatprep.subr.bf16.mxu0 0
      %507 = vmatpush1.bf16.msra.mxu0 0
      %508 = vmatprep.subr.bf16.mxu0 0
      %509 = vmatpush1.bf16.msra.mxu0 0
      %510 = vmatprep.subr.bf16.mxu0 0
      %511 = vmatpush1.bf16.msra.mxu0 0
      %512 = vmatprep.subr.bf16.mxu0 0
      %513 = vmatpush1.bf16.msra.mxu0 0
      %514 = vmatprep.subr.bf16.mxu0 0
      %515 = vmatpush1.bf16.msra.mxu0 0
      %516 = vmatprep.mubr.bf16.mxu0 0
      %517 = vmatmul.mubr.bf16.gmra.mrb[0].mxu0 %v482
      %v518 = vpop.f32.mrb[0].mxu0
      %v519 = vadd.f32 0.0, %v518
      %v520 = vpop.f32.mrb[0].mxu0
      %v521 = vadd.f32 0.0, %v520
      %v522 = vpop.f32.mrb[0].mxu0
      %v523 = vpop.f32.mrb[0].mxu0
      %524 = vdwg.mxu0
      %v525 = vadd.f32 %v445, %v519
      %v526 = vadd.f32 %v446, %v521
      %s527 = scalar_lea.vmem %s1, 16
      %v528 = vld [vmem:[%s527] sm:$0xf]
      %529 = vrot.lane.b32.xlu0 %v236, 96
      %v530 = vpop.permute.xlu0 %529
      %531 = vrot.lane.b32.xlu0 %v237, 96
      %v532 = vpop.permute.xlu0 %531
      %533 = vrot.lane.b32.xlu0 %v238, 96
      %v534 = vpop.permute.xlu0 %533
      %vm535 = vcmask 785408
      %v536 = vsel %vm535, %v530, %v532
      %v537 = vsel %vm535, %v532, %v534
      %v541 = vsel %vm253, %v528, 0
      %543 = vmatprep.subr.bf16.mxu0 %v537
      %544 = vmatpush1.bf16.msra.mxu0 %v536
      %545 = vmatprep.subr.bf16.mxu0 0
      %546 = vmatpush1.bf16.msra.mxu0 0
      %547 = vmatprep.subr.bf16.mxu0 0
      %548 = vmatpush1.bf16.msra.mxu0 0
      %549 = vmatprep.subr.bf16.mxu0 0
      %550 = vmatpush1.bf16.msra.mxu0 0
      %551 = vmatprep.subr.bf16.mxu0 0
      %552 = vmatpush1.bf16.msra.mxu0 0
      %553 = vmatprep.subr.bf16.mxu0 0
      %554 = vmatpush1.bf16.msra.mxu0 0
      %555 = vmatprep.subr.bf16.mxu0 0
      %556 = vmatpush1.bf16.msra.mxu0 0
      %557 = vmatprep.subr.bf16.mxu0 0
      %558 = vmatpush1.bf16.msra.mxu0 0
      %559 = vmatprep.subr.bf16.mxu0 0
      %560 = vmatpush1.bf16.msra.mxu0 0
      %561 = vmatprep.subr.bf16.mxu0 0
      %562 = vmatpush1.bf16.msra.mxu0 0
      %563 = vmatprep.subr.bf16.mxu0 0
      %564 = vmatpush1.bf16.msra.mxu0 0
      %565 = vmatprep.subr.bf16.mxu0 0
      %566 = vmatpush1.bf16.msra.mxu0 0
      %567 = vmatprep.subr.bf16.mxu0 0
      %568 = vmatpush1.bf16.msra.mxu0 0
      %569 = vmatprep.subr.bf16.mxu0 0
      %570 = vmatpush1.bf16.msra.mxu0 0
      %571 = vmatprep.subr.bf16.mxu0 0
      %572 = vmatpush1.bf16.msra.mxu0 0
      %573 = vmatprep.subr.bf16.mxu0 0
      %574 = vmatpush1.bf16.msra.mxu0 0
      %575 = vmatprep.mubr.bf16.mxu0 0
      %576 = vmatmul.mubr.bf16.gmra.mrb[0].mxu0 %v541
      %v577 = vpop.f32.mrb[0].mxu0
      %v578 = vadd.f32 0.0, %v577
      %v579 = vpop.f32.mrb[0].mxu0
      %v580 = vadd.f32 0.0, %v579
      %v581 = vpop.f32.mrb[0].mxu0
      %v582 = vpop.f32.mrb[0].mxu0
      %583 = vdwg.mxu0
      %v584 = vadd.f32 %v525, %v578
      %v585 = vadd.f32 %v526, %v580
      %586 = vrot.lane.b32.xlu0 %v362, 33
      %v587 = vpop.permute.xlu0 %586
      %588 = vrot.lane.b32.xlu0 %v366, 33
      %v589 = vpop.permute.xlu0 %588
      %vm590 = vcmask 269312
      %v591 = vsel %vm590, %v587, %v589
      %v595 = vmul.f32 %v199, %v587
      %v596 = vmul.f32 %v200, %v591
      %v597 = vmul.f32 %v201, %v589
      %v598 = vmul.f32 %v202, %v587
      %v599 = vmul.f32 %v203, %v591
      %v600 = vmul.f32 %v204, %v589
      %s601 = scalar_lea.vmem %s1, 20
      %v602 = vld [vmem:[%s601] sm:$0xf]
      %v603 = vpack.c.bf16 %v598, %v595
      %v604 = vpack.c.bf16 %v599, %v596
      %v605 = vpack.c.bf16 %v600, %v597
      %609 = vrot.lane.b32.xlu0 %v603, 95
      %v610 = vpop.permute.xlu0 %609
      %611 = vrot.lane.b32.xlu0 %v604, 95
      %v612 = vpop.permute.xlu0 %611
      %613 = vrot.lane.b32.xlu0 %v605, 95
      %v614 = vpop.permute.xlu0 %613
      %vm615 = vcmask 777216
      %v616 = vsel %vm615, %v610, %v612
      %v617 = vsel %vm615, %v612, %v614
      %v621 = vsel %vm253, %v602, 0
      %623 = vmatprep.subr.bf16.mxu0 %v617
      %624 = vmatpush1.bf16.msra.mxu0 %v616
      %625 = vmatprep.subr.bf16.mxu0 0
      %626 = vmatpush1.bf16.msra.mxu0 0
      %627 = vmatprep.subr.bf16.mxu0 0
      %628 = vmatpush1.bf16.msra.mxu0 0
      %629 = vmatprep.subr.bf16.mxu0 0
      %630 = vmatpush1.bf16.msra.mxu0 0
      %631 = vmatprep.subr.bf16.mxu0 0
      %632 = vmatpush1.bf16.msra.mxu0 0
      %633 = vmatprep.subr.bf16.mxu0 0
      %634 = vmatpush1.bf16.msra.mxu0 0
      %635 = vmatprep.subr.bf16.mxu0 0
      %636 = vmatpush1.bf16.msra.mxu0 0
      %637 = vmatprep.subr.bf16.mxu0 0
      %638 = vmatpush1.bf16.msra.mxu0 0
      %639 = vmatprep.subr.bf16.mxu0 0
      %640 = vmatpush1.bf16.msra.mxu0 0
      %641 = vmatprep.subr.bf16.mxu0 0
      %642 = vmatpush1.bf16.msra.mxu0 0
      %643 = vmatprep.subr.bf16.mxu0 0
      %644 = vmatpush1.bf16.msra.mxu0 0
      %645 = vmatprep.subr.bf16.mxu0 0
      %646 = vmatpush1.bf16.msra.mxu0 0
      %647 = vmatprep.subr.bf16.mxu0 0
      %648 = vmatpush1.bf16.msra.mxu0 0
      %649 = vmatprep.subr.bf16.mxu0 0
      %650 = vmatpush1.bf16.msra.mxu0 0
      %651 = vmatprep.subr.bf16.mxu0 0
      %652 = vmatpush1.bf16.msra.mxu0 0
      %653 = vmatprep.subr.bf16.mxu0 0
      %654 = vmatpush1.bf16.msra.mxu0 0
      %655 = vmatprep.mubr.bf16.mxu0 0
      %656 = vmatmul.mubr.bf16.gmra.mrb[0].mxu0 %v621
      %v657 = vpop.f32.mrb[0].mxu0
      %v658 = vadd.f32 0.0, %v657
      %v659 = vpop.f32.mrb[0].mxu0
      %v660 = vadd.f32 0.0, %v659
      %v661 = vpop.f32.mrb[0].mxu0
      %v662 = vpop.f32.mrb[0].mxu0
      %663 = vdwg.mxu0
      %v664 = vadd.f32 %v584, %v658
      %v665 = vadd.f32 %v585, %v660
      %666 = vrot.lane.b32.xlu0 %v210, 47
      %v667 = vpop.permute.xlu0 %666
      %668 = vrot.lane.b32.xlu0 %v214, 47
      %v669 = vpop.permute.xlu0 %668
      %vm670 = vcmask 384000
      %v671 = vsel %vm670, %v667, %v669
      %v675 = vmul.f32 %v199, %v667
      %v676 = vmul.f32 %v200, %v671
      %v677 = vmul.f32 %v201, %v669
      %v678 = vmul.f32 %v202, %v667
      %v679 = vmul.f32 %v203, %v671
      %v680 = vmul.f32 %v204, %v669
      %s681 = scalar_lea.vmem %s1, 24
      %v682 = vld [vmem:[%s681] sm:$0xf]
      %v683 = vpack.c.bf16 %v678, %v675
      %v684 = vpack.c.bf16 %v679, %v676
      %v685 = vpack.c.bf16 %v680, %v677
      %689 = vrot.lane.b32.xlu0 %v683, 81
      %v690 = vpop.permute.xlu0 %689
      %691 = vrot.lane.b32.xlu0 %v684, 81
      %v692 = vpop.permute.xlu0 %691
      %693 = vrot.lane.b32.xlu0 %v685, 81
      %v694 = vpop.permute.xlu0 %693
      %vm695 = vcmask 662528
      %v696 = vsel %vm695, %v690, %v692
      %v697 = vsel %vm695, %v692, %v694
      %v701 = vsel %vm253, %v682, 0
      %703 = vmatprep.subr.bf16.mxu0 %v697
      %704 = vmatpush1.bf16.msra.mxu0 %v696
      %705 = vmatprep.subr.bf16.mxu0 0
      %706 = vmatpush1.bf16.msra.mxu0 0
      %707 = vmatprep.subr.bf16.mxu0 0
      %708 = vmatpush1.bf16.msra.mxu0 0
      %709 = vmatprep.subr.bf16.mxu0 0
      %710 = vmatpush1.bf16.msra.mxu0 0
      %711 = vmatprep.subr.bf16.mxu0 0
      %712 = vmatpush1.bf16.msra.mxu0 0
      %713 = vmatprep.subr.bf16.mxu0 0
      %714 = vmatpush1.bf16.msra.mxu0 0
      %715 = vmatprep.subr.bf16.mxu0 0
      %716 = vmatpush1.bf16.msra.mxu0 0
      %717 = vmatprep.subr.bf16.mxu0 0
      %718 = vmatpush1.bf16.msra.mxu0 0
      %719 = vmatprep.subr.bf16.mxu0 0
      %720 = vmatpush1.bf16.msra.mxu0 0
      %721 = vmatprep.subr.bf16.mxu0 0
      %722 = vmatpush1.bf16.msra.mxu0 0
      %723 = vmatprep.subr.bf16.mxu0 0
      %724 = vmatpush1.bf16.msra.mxu0 0
      %725 = vmatprep.subr.bf16.mxu0 0
      %726 = vmatpush1.bf16.msra.mxu0 0
      %727 = vmatprep.subr.bf16.mxu0 0
      %728 = vmatpush1.bf16.msra.mxu0 0
      %729 = vmatprep.subr.bf16.mxu0 0
      %730 = vmatpush1.bf16.msra.mxu0 0
      %731 = vmatprep.subr.bf16.mxu0 0
      %732 = vmatpush1.bf16.msra.mxu0 0
      %733 = vmatprep.subr.bf16.mxu0 0
      %734 = vmatpush1.bf16.msra.mxu0 0
      %735 = vmatprep.mubr.bf16.mxu0 0
      %736 = vmatmul.mubr.bf16.gmra.mrb[0].mxu0 %v701
      %v737 = vpop.f32.mrb[0].mxu0
      %v738 = vadd.f32 0.0, %v737
      %v739 = vpop.f32.mrb[0].mxu0
      %v740 = vadd.f32 0.0, %v739
      %v741 = vpop.f32.mrb[0].mxu0
      %v742 = vpop.f32.mrb[0].mxu0
      %743 = vdwg.mxu0
      %v744 = vadd.f32 %v664, %v738
      %v745 = vadd.f32 %v665, %v740
      %s746 = scalar_lea.vmem %s1, 28
      %v747 = vld [vmem:[%s746] sm:$0xf]
      %748 = vrot.lane.b32.xlu0 %v236, 80
      %v749 = vpop.permute.xlu0 %748
      %750 = vrot.lane.b32.xlu0 %v237, 80
      %v751 = vpop.permute.xlu0 %750
      %752 = vrot.lane.b32.xlu0 %v238, 80
      %v753 = vpop.permute.xlu0 %752
      %vm754 = vcmask 654336
      %v755 = vsel %vm754, %v749, %v751
      %v756 = vsel %vm754, %v751, %v753
      %v760 = vsel %vm253, %v747, 0
      %762 = vmatprep.subr.bf16.mxu0 %v756
      %763 = vmatpush1.bf16.msra.mxu0 %v755
      %764 = vmatprep.subr.bf16.mxu0 0
      %765 = vmatpush1.bf16.msra.mxu0 0
      %766 = vmatprep.subr.bf16.mxu0 0
      %767 = vmatpush1.bf16.msra.mxu0 0
      %768 = vmatprep.subr.bf16.mxu0 0
      %769 = vmatpush1.bf16.msra.mxu0 0
      %770 = vmatprep.subr.bf16.mxu0 0
      %771 = vmatpush1.bf16.msra.mxu0 0
      %772 = vmatprep.subr.bf16.mxu0 0
      %773 = vmatpush1.bf16.msra.mxu0 0
      %774 = vmatprep.subr.bf16.mxu0 0
      %775 = vmatpush1.bf16.msra.mxu0 0
      %776 = vmatprep.subr.bf16.mxu0 0
      %777 = vmatpush1.bf16.msra.mxu0 0
      %778 = vmatprep.subr.bf16.mxu0 0
      %779 = vmatpush1.bf16.msra.mxu0 0
      %780 = vmatprep.subr.bf16.mxu0 0
      %781 = vmatpush1.bf16.msra.mxu0 0
      %782 = vmatprep.subr.bf16.mxu0 0
      %783 = vmatpush1.bf16.msra.mxu0 0
      %784 = vmatprep.subr.bf16.mxu0 0
      %785 = vmatpush1.bf16.msra.mxu0 0
      %786 = vmatprep.subr.bf16.mxu0 0
      %787 = vmatpush1.bf16.msra.mxu0 0
      %788 = vmatprep.subr.bf16.mxu0 0
      %789 = vmatpush1.bf16.msra.mxu0 0
      %790 = vmatprep.subr.bf16.mxu0 0
      %791 = vmatpush1.bf16.msra.mxu0 0
      %792 = vmatprep.subr.bf16.mxu0 0
      %793 = vmatpush1.bf16.msra.mxu0 0
      %794 = vmatprep.mubr.bf16.mxu0 0
      %795 = vmatmul.mubr.bf16.gmra.mrb[0].mxu0 %v760
      %v796 = vpop.f32.mrb[0].mxu0
      %v797 = vadd.f32 0.0, %v796
      %v798 = vpop.f32.mrb[0].mxu0
      %v799 = vadd.f32 0.0, %v798
      %v800 = vpop.f32.mrb[0].mxu0
      %v801 = vpop.f32.mrb[0].mxu0
      %802 = vdwg.mxu0
      %v803 = vadd.f32 %v744, %v797
      %v804 = vadd.f32 %v745, %v799
      %805 = vrot.lane.b32.xlu0 %v362, 49
      %v806 = vpop.permute.xlu0 %805
      %807 = vrot.lane.b32.xlu0 %v366, 49
      %v808 = vpop.permute.xlu0 %807
      %vm809 = vcmask 400384
      %v810 = vsel %vm809, %v806, %v808
      %v814 = vmul.f32 %v199, %v806
      %v815 = vmul.f32 %v200, %v810
      %v816 = vmul.f32 %v201, %v808
      %v817 = vmul.f32 %v202, %v806
      %v818 = vmul.f32 %v203, %v810
      %v819 = vmul.f32 %v204, %v808
      %s820 = scalar_lea.vmem %s1, 32
      %v821 = vld [vmem:[%s820] sm:$0xf]
      %v822 = vpack.c.bf16 %v817, %v814
      %v823 = vpack.c.bf16 %v818, %v815
      %v824 = vpack.c.bf16 %v819, %v816
      %828 = vrot.lane.b32.xlu0 %v822, 79
      %v829 = vpop.permute.xlu0 %828
      %830 = vrot.lane.b32.xlu0 %v823, 79
      %v831 = vpop.permute.xlu0 %830
      %832 = vrot.lane.b32.xlu0 %v824, 79
      %v833 = vpop.permute.xlu0 %832
      %vm834 = vcmask 646144
      %v835 = vsel %vm834, %v829, %v831
      %v836 = vsel %vm834, %v831, %v833
      %v840 = vsel %vm253, %v821, 0
      %842 = vmatprep.subr.bf16.mxu0 %v836
      %843 = vmatpush1.bf16.msra.mxu0 %v835
      %844 = vmatprep.subr.bf16.mxu0 0
      %845 = vmatpush1.bf16.msra.mxu0 0
      %846 = vmatprep.subr.bf16.mxu0 0
      %847 = vmatpush1.bf16.msra.mxu0 0
      %848 = vmatprep.subr.bf16.mxu0 0
      %849 = vmatpush1.bf16.msra.mxu0 0
      %850 = vmatprep.subr.bf16.mxu0 0
      %851 = vmatpush1.bf16.msra.mxu0 0
      %852 = vmatprep.subr.bf16.mxu0 0
      %853 = vmatpush1.bf16.msra.mxu0 0
      %854 = vmatprep.subr.bf16.mxu0 0
      %855 = vmatpush1.bf16.msra.mxu0 0
      %856 = vmatprep.subr.bf16.mxu0 0
      %857 = vmatpush1.bf16.msra.mxu0 0
      %858 = vmatprep.subr.bf16.mxu0 0
      %859 = vmatpush1.bf16.msra.mxu0 0
      %860 = vmatprep.subr.bf16.mxu0 0
      %861 = vmatpush1.bf16.msra.mxu0 0
      %862 = vmatprep.subr.bf16.mxu0 0
      %863 = vmatpush1.bf16.msra.mxu0 0
      %864 = vmatprep.subr.bf16.mxu0 0
      %865 = vmatpush1.bf16.msra.mxu0 0
      %866 = vmatprep.subr.bf16.mxu0 0
      %867 = vmatpush1.bf16.msra.mxu0 0
      %868 = vmatprep.subr.bf16.mxu0 0
      %869 = vmatpush1.bf16.msra.mxu0 0
      %870 = vmatprep.subr.bf16.mxu0 0
      %871 = vmatpush1.bf16.msra.mxu0 0
      %872 = vmatprep.subr.bf16.mxu0 0
      %873 = vmatpush1.bf16.msra.mxu0 0
      %874 = vmatprep.mubr.bf16.mxu0 0
      %875 = vmatmul.mubr.bf16.gmra.mrb[0].mxu0 %v840
      %v876 = vpop.f32.mrb[0].mxu0
      %v877 = vadd.f32 0.0, %v876
      %v878 = vpop.f32.mrb[0].mxu0
      %v879 = vadd.f32 0.0, %v878
      %v880 = vpop.f32.mrb[0].mxu0
      %v881 = vpop.f32.mrb[0].mxu0
      %882 = vdwg.mxu0
      %v883 = vadd.f32 %v803, %v877
      %v884 = vadd.f32 %v804, %v879
      %v885 = vld [vmem:[%s2] sm:$0xff]
      %887 = vset.pattern.permute.xlu0 0
      %888 = vperm.xlu0 %887, %v885
      %v889 = vpop.permute.xlu0 %888
      %v891 = vadd.f32 %v883, %v889
      %v892 = vadd.f32 %v884, %v889
      %893 = vst [vmem:[%s197] sm:$0xff] %v891
      %894 = vst [vmem:[%s197 + $0x8] sm:$0xff] %v892
      %p895 = scmp.lt.s32.totalorder %s15, 1
      %s896 = scalar_select %p895, %s15, 1
      %s897 = smul.addr %s896, 2
      %s898 = smul.addr %s897, 8
      %s899 = scalar_lea.vmem %s4, %s898
      // Predicated region
      $region37: #{_lambda_.12} parent=35 // pred_check
        %p900 = pneg %p122
      $region38: #{_lambda_.12} parent=35 // pred_check_branch
        %902 = sbr.rel (%p900) target = $region40
      $region39: #{_lambda_.12} parent=35 // pred_region
        _
      $region40: #{_lambda_.12} parent=35 // pred_fallthru
        _
    $region36: #{_lambda_.12} parent=5 // pred_fallthru
      _
    %p903 = scmp.le.s32.totalorder 2, %s10
    // Predicated region
    $region41: #{_lambda_.12} parent=5 // pred_check
      %p904 = pneg %p903
    $region42: #{_lambda_.12} parent=5 // pred_check_branch
      %906 = sbr.rel (%p904) target = $region44
    $region43: #{_lambda_.12} parent=5 // pred_region
      %s907 = ssub.s32 %s10, 2
      // Predicated region
      $region45: #{_lambda_.12} parent=43 // pred_check
        %p908 = pneg %p128
      $region46: #{_lambda_.12} parent=43 // pred_check_branch
        %910 = sbr.rel (%p908) target = $region48
      $region47: #{_lambda_.12} parent=43 // pred_region
        %p911 = scmp.lt.s32.totalorder %s16, 1
        %s912 = scalar_select %p911, %s16, 1
        %s913 = smul.addr %s912, 2
        %s914 = smul.addr %s913, 8
        %s915 = scalar_lea.vmem %s4, %s914
      $region48: #{_lambda_.12} parent=43 // pred_fallthru
        _
    $region44: #{_lambda_.12} parent=5 // pred_fallthru
      _
  $region6: #{_lambda_.12} parent=0 // loop_footer
    %s14 = sadd.s32 1, %s10
  $region7: #{_lambda_.12} parent=0 // loop_footer_branch
    %9 = sbr.rel target = $region3
  $region8: #{_lambda_.12} parent=0 // loop_exit
    _

// kernel: _lambda_.13
$region0: #{_lambda_.13}
  #allocation0 [shape = 'u32[]', space=smem, size = 0x4, offset = 0x4, fixed_abs, tag = 'smem constant byte address 0x4 - core index']
  #allocation1 [shape = 'u32[144,128]{1,0:T(1,128)}', space=vmem, size = 0x12000, scoped, tag = 'internal scratch']
  %s0 = inlined_call_operand.vmem [shape: f32[2,5,256], index: 0, kind: input, shape index: {}]
  %s1 = inlined_call_operand.vmem [shape: f32[2,5,2], index: 1, kind: input, shape index: {}]
  %s2 = inlined_call_operand.vmem [shape: f32[2,2,256], index: 2, kind: output, shape index: {}]
  %s3 = sld [smem:[#allocation0]]
  $region41: #{_lambda_.13} parent=0
    _
  %s5 = ssub.s32 1, %s3
  %s6 = scalar_select 0, %s5, %s3
  loop: start=0, step=1, limit=4
  $region2: #{_lambda_.13} parent=0 // loop_pre_header
    _
  $region3: #{_lambda_.13} parent=0 // loop_header
    %s8 = sphi 0, %s12
    %p9 = scmp.ge.s32.totalorder %s8, 4
    %s15 = sphi 0, %s27
    %s16 = sphi 0, %s23
    %s17 = sphi 0, %s15
    %s18 = sphi 0, %s16
    %s19 = sphi 0, %s17
    %s20 = sphi 0, %s18
    %s32 = sphi 0, %s34
    %s35 = sphi 0, %s32
    %s36 = sphi 0, %s35
    %s52 = sphi 0, %s36
    %s58 = sphi 0, %s60
    %s61 = sphi 0, %s58
    %s62 = sphi 0, %s61
    %s78 = sphi 0, %s62
    %s86 = sphi 0, %s88
    %s89 = sphi 0, %s86
    %s90 = sphi 0, %s89
    %s106 = sphi 0, %s90
  $region4: #{_lambda_.13} parent=0 // loop_header_branch
    %11 = sbr.rel (%p9) target = $region8
  $region5: #{_lambda_.13} parent=0 // loop_body
    %s13 = ssub.s32 %s8, 1
    %s14 = ssub.s32 %s8, 2
    %s21 = sadd.s32 1, %s16
    %p22 = scmp.ge.s32.totalorder %s21, 1
    %s23 = scalar_select %p22, 0, %s21
    %s24 = sadd.s32 1, %s15
    %s25 = scalar_select %p22, %s24, %s15
    %p26 = scmp.ge.s32.totalorder %s25, 2
    %s27 = scalar_select %p26, 0, %s25
    %s28 = ssub.s32 %s15, %s27
    %s29 = ssub.s32 %s16, %s23
    %s30 = sor.u32 %s28, %s29
    %p31 = scmp.eq.s32.totalorder %s30, 0
    %s33 = sadd.s32 %s32, 1
    %s34 = scalar_select %p31, %s32, %s33
    %p37 = pneg %p31
    %p38 = scmp.eq.s32.totalorder %s8, 1
    %p39 = por %p37, %p38
    %p40 = scmp.ne.s32.totalorder %s32, %s35
    %p41 = scmp.eq.s32.totalorder %s8, 0
    %p42 = por %p40, %p41
    %p43 = scmp.ne.s32.totalorder %s32, %s35
    %p44 = scmp.eq.s32.totalorder %s13, 1
    %p45 = por %p43, %p44
    %p46 = scmp.ne.s32.totalorder %s35, %s36
    %p47 = scmp.eq.s32.totalorder %s13, 0
    %p48 = por %p46, %p47
    %p49 = scmp.ne.s32.totalorder %s35, %s36
    %p50 = scmp.eq.s32.totalorder %s14, 1
    %p51 = por %p49, %p50
    %p53 = scmp.ne.s32.totalorder %s36, %s52
    %p54 = scmp.eq.s32.totalorder %s14, 0
    %p55 = por %p53, %p54
    %s56 = ssub.s32 %s15, %s27
    %p57 = scmp.eq.s32.totalorder %s56, 0
    %s59 = sadd.s32 %s58, 1
    %s60 = scalar_select %p57, %s58, %s59
    %p63 = pneg %p57
    %p64 = scmp.eq.s32.totalorder %s8, 1
    %p65 = por %p63, %p64
    %p66 = scmp.ne.s32.totalorder %s58, %s61
    %p67 = scmp.eq.s32.totalorder %s8, 0
    %p68 = por %p66, %p67
    %p69 = scmp.ne.s32.totalorder %s58, %s61
    %p70 = scmp.eq.s32.totalorder %s13, 1
    %p71 = por %p69, %p70
    %p72 = scmp.ne.s32.totalorder %s61, %s62
    %p73 = scmp.eq.s32.totalorder %s13, 0
    %p74 = por %p72, %p73
    %p75 = scmp.ne.s32.totalorder %s61, %s62
    %p76 = scmp.eq.s32.totalorder %s14, 1
    %p77 = por %p75, %p76
    %p79 = scmp.ne.s32.totalorder %s62, %s78
    %p80 = scmp.eq.s32.totalorder %s14, 0
    %p81 = por %p79, %p80
    %s82 = ssub.s32 %s15, %s27
    %s83 = ssub.s32 %s16, %s23
    %s84 = sor.u32 %s82, %s83
    %p85 = scmp.eq.s32.totalorder %s84, 0
    %s87 = sadd.s32 %s86, 1
    %s88 = scalar_select %p85, %s86, %s87
    %p91 = pneg %p85
    %p92 = scmp.eq.s32.totalorder %s8, 1
    %p93 = por %p91, %p92
    %p94 = scmp.ne.s32.totalorder %s86, %s89
    %p95 = scmp.eq.s32.totalorder %s8, 0
    %p96 = por %p94, %p95
    %p97 = scmp.ne.s32.totalorder %s86, %s89
    %p98 = scmp.eq.s32.totalorder %s13, 1
    %p99 = por %p97, %p98
    %p100 = scmp.ne.s32.totalorder %s89, %s90
    %p101 = scmp.eq.s32.totalorder %s13, 0
    %p102 = por %p100, %p101
    %p103 = scmp.ne.s32.totalorder %s89, %s90
    %p104 = scmp.eq.s32.totalorder %s14, 1
    %p105 = por %p103, %p104
    %p107 = scmp.ne.s32.totalorder %s90, %s106
    %p108 = scmp.eq.s32.totalorder %s14, 0
    %p109 = por %p107, %p108
    %p110 = scmp.le.s32.totalorder 1, %s8
    %p111 = scmp.lt.s32.totalorder %s8, 3
    %p112 = pnand %p110, %p111
    %p113 = pneg %p112
    // Predicated region
    $region9: #{_lambda_.13} parent=5 // pred_check
      _
    $region10: #{_lambda_.13} parent=5 // pred_check_branch
      %115 = sbr.rel (%p112) target = $region12
    $region11: #{_lambda_.13} parent=5 // pred_region
      %s116 = ssub.s32 %s8, 1
    $region12: #{_lambda_.13} parent=5 // pred_fallthru
      _
    %p117 = scmp.lt.s32.totalorder %s8, 2
    // Predicated region
    $region13: #{_lambda_.13} parent=5 // pred_check
      %p118 = pneg %p117
    $region14: #{_lambda_.13} parent=5 // pred_check_branch
      %120 = sbr.rel (%p118) target = $region16
    $region15: #{_lambda_.13} parent=5 // pred_region
      // Predicated region
      $region17: #{_lambda_.13} parent=15 // pred_check
        %p121 = pneg %p42
      $region18: #{_lambda_.13} parent=15 // pred_check_branch
        %123 = sbr.rel (%p121) target = $region20
      $region19: #{_lambda_.13} parent=15 // pred_region
        %s124 = smul.u32 2, %s16
        %p125 = scmp.lt.s32.totalorder %s15, 1
        %s126 = scalar_select %p125, %s15, 1
        %p127 = scmp.lt.s32.totalorder %s124, 1
        %s128 = scalar_select %p127, %s124, 1
        %s129 = smul.addr %s126, 2
        %s130 = sadd.s32 %s128, %s129
        %s131 = smul.addr %s130, 8
        %s132 = scalar_lea.vmem %s0, %s131
        %s133 = smul.u32 2, %s16
      $region20: #{_lambda_.13} parent=15 // pred_fallthru
        _
      // Predicated region
      $region21: #{_lambda_.13} parent=15 // pred_check
        %p134 = pneg %p68
      $region22: #{_lambda_.13} parent=15 // pred_check_branch
        %136 = sbr.rel (%p134) target = $region24
      $region23: #{_lambda_.13} parent=15 // pred_region
        %p137 = scmp.lt.s32.totalorder %s15, 1
        %s138 = scalar_select %p137, %s15, 1
        %s139 = smul.addr %s138, 8
        %s140 = scalar_lea.vmem %s1, %s139
      $region24: #{_lambda_.13} parent=15 // pred_fallthru
        _
    $region16: #{_lambda_.13} parent=5 // pred_fallthru
      _
    %p141 = scmp.le.s32.totalorder 1, %s8
    %p142 = scmp.lt.s32.totalorder %s8, 3
    %p143 = pnand %p141, %p142
    %p144 = pneg %p143
    // Predicated region
    $region25: #{_lambda_.13} parent=5 // pred_check
      _
    $region26: #{_lambda_.13} parent=5 // pred_check_branch
      %146 = sbr.rel (%p143) target = $region28
    $region27: #{_lambda_.13} parent=5 // pred_region
      %s147 = ssub.s32 %s8, 1
      %s148 = smul.u32 2, %s18
      %p149 = scmp.lt.s32.totalorder %s17, 1
      %s150 = scalar_select %p149, %s17, 1
      %p151 = scmp.lt.s32.totalorder %s148, 1
      %s152 = scalar_select %p151, %s148, 1
      %s153 = smul.addr %s150, 2
      %s154 = sadd.s32 %s152, %s153
      %s155 = smul.addr %s154, 8
      %s156 = scalar_lea.vmem %s0, %s155
      %p157 = pneg %p48
      %p158 = pneg %p45
      %p159 = scmp.lt.s32.totalorder %s17, 1
      %s160 = scalar_select %p159, %s17, 1
      %s161 = smul.addr %s160, 8
      %s162 = scalar_lea.vmem %s1, %s161
      %p163 = pneg %p74
      %p164 = pneg %p71
      %p165 = pneg %p102
      %p166 = pneg %p99
      %s167 = smul.u32 2, %s18
      %p168 = scmp.lt.s32.totalorder %s17, 1
      %s169 = scalar_select %p168, %s17, 1
      %p170 = scmp.lt.s32.totalorder %s167, 1
      %s171 = scalar_select %p170, %s167, 1
      %s172 = smul.addr %s169, 2
      %s173 = sadd.s32 %s171, %s172
      %s174 = smul.addr %s173, 2
      %s175 = scalar_lea.vmem %s2, %s174
      %s176 = smul.u32 2, %s18
      %p177 = scmp.lt.s32.totalorder %s17, 1
      %s178 = scalar_select %p177, %s17, 1
      %p179 = scmp.lt.s32.totalorder %s176, 1
      %s180 = scalar_select %p179, %s176, 1
      %s181 = smul.addr %s178, 2
      %s182 = sadd.s32 %s180, %s181
      %s183 = smul.addr %s182, 8
      %s184 = scalar_lea.vmem %s0, %s183
      %s185 = smul.u32 2, %s18
      %p186 = scmp.lt.s32.totalorder %s17, 1
      %s187 = scalar_select %p186, %s17, 1
      %s188 = smul.addr %s187, 8
      %s189 = scalar_lea.vmem %s1, %s188
      %s190 = smul.u32 2, %s18
      %p191 = scmp.lt.s32.totalorder %s17, 1
      %s192 = scalar_select %p191, %s17, 1
      %p193 = scmp.lt.s32.totalorder %s190, 1
      %s194 = scalar_select %p193, %s190, 1
      %s195 = smul.addr %s192, 2
      %s196 = sadd.s32 %s194, %s195
      %s197 = smul.addr %s196, 2
      %s198 = scalar_lea.vmem %s2, %s197
      %s199 = smul.u32 2, %s18
      %v200 = vld [vmem:[%s184] sm:$0x1f]
      %v201 = vld [vmem:[%s184 + $0x8] sm:$0x1f]
      %vm202 = vcmask 1044480
      %v203 = vsel %vm202, %v200, -inf
      %v204 = vrot.slane %v203, 4
      %v205 = vmax.f32 %v203, %v204
      %v206 = vrot.slane %v205, 2
      %v207 = vmax.f32 %v205, %v206
      %v208 = vrot.slane %v207, 1
      %v209 = vmax.f32 %v207, %v208
      %v210 = vsel %vm202, %v201, -inf
      %v211 = vrot.slane %v210, 4
      %v212 = vmax.f32 %v210, %v211
      %v213 = vrot.slane %v212, 2
      %v214 = vmax.f32 %v212, %v213
      %v215 = vrot.slane %v214, 1
      %v216 = vmax.f32 %v214, %v215
      %v217 = vsub.f32 %v200, %v209
      %v218 = vsub.f32 %v201, %v216
      %v219 = vmul.f32 %v217, 1.442695
      %v220 = vpow.pop %v219
      %v221 = vmul.f32 %v218, 1.442695
      %v222 = vpow.pop %v221
      %v223 = vsel %vm202, %v220, 0.0
      %v224 = vrot.slane %v223, 4
      %v225 = vadd.f32 %v223, %v224
      %v226 = vrot.slane %v225, 2
      %v227 = vadd.f32 %v225, %v226
      %v228 = vrot.slane %v227, 1
      %v229 = vadd.f32 %v227, %v228
      %v230 = vsel %vm202, %v222, 0.0
      %v231 = vrot.slane %v230, 4
      %v232 = vadd.f32 %v230, %v231
      %v233 = vrot.slane %v232, 2
      %v234 = vadd.f32 %v232, %v233
      %v235 = vrot.slane %v234, 1
      %v236 = vadd.f32 %v234, %v235
      %v237 = vrcp.pop %v229
      %v238 = vrcp.pop %v236
      %v239 = vmul.f32 %v220, %v237
      %v240 = vmul.f32 %v222, %v238
      %v241 = vld [vmem:[%s189] sm:$0x1f]
      %243 = vset.pattern.permute.xlu0 0
      %244 = vperm.xlu0 %243, %v241
      %v245 = vpop.permute.xlu0 %244
      %v247 = vmul.f32 %v239, %v245
      %v248 = vmul.f32 %v240, %v245
      %v249 = vsel %vm202, %v247, 0.0
      %v250 = vrot.slane %v249, 4
      %v251 = vadd.f32 %v249, %v250
      %v252 = vrot.slane %v251, 2
      %v253 = vadd.f32 %v251, %v252
      %v254 = vrot.slane %v253, 1
      %v255 = vadd.f32 %v253, %v254
      %v256 = vsel %vm202, %v248, 0.0
      %v257 = vrot.slane %v256, 4
      %v258 = vadd.f32 %v256, %v257
      %v259 = vrot.slane %v258, 2
      %v260 = vadd.f32 %v258, %v259
      %v261 = vrot.slane %v260, 1
      %v262 = vadd.f32 %v260, %v261
      %263 = vset.pattern.permute.xlu0 1
      %264 = vperm.xlu0 %263, %v241
      %v265 = vpop.permute.xlu0 %264
      %v267 = vmul.f32 %v239, %v265
      %v268 = vmul.f32 %v240, %v265
      %v269 = vsel %vm202, %v267, 0.0
      %v270 = vrot.slane %v269, 4
      %v271 = vadd.f32 %v269, %v270
      %v272 = vrot.slane %v271, 2
      %v273 = vadd.f32 %v271, %v272
      %v274 = vrot.slane %v273, 1
      %v275 = vadd.f32 %v273, %v274
      %v276 = vsel %vm202, %v268, 0.0
      %v277 = vrot.slane %v276, 4
      %v278 = vadd.f32 %v276, %v277
      %v279 = vrot.slane %v278, 2
      %v280 = vadd.f32 %v278, %v279
      %v281 = vrot.slane %v280, 1
      %v282 = vadd.f32 %v280, %v281
      %vm283 = vcmask 1040384
      %v284 = vsel %vm283, %v255, %v275
      %v285 = vsel %vm283, %v262, %v282
      %v288 = vcombine.low %v284, %v285
      %v290 = vunpack.c.l.s4 1983009808
      %v291 = vunpack.c.0.s8 %v290
      %v292 = vlaneseq
      %v293 = vshrl.u32 %v292, 7
      %v294 = vsub.s32 %v291, %v293
      %v295 = vrot.slane %v288, %v294
      %297 = vst [vmem:[%s198] sm:$0xf] %v295
      %s298 = smul.u32 2, %s18
      %p299 = scmp.lt.s32.totalorder %s17, 1
      %s300 = scalar_select %p299, %s17, 1
      %p301 = scmp.lt.s32.totalorder %s298, 1
      %s302 = scalar_select %p301, %s298, 1
      %s303 = smul.addr %s300, 2
      %s304 = sadd.s32 %s302, %s303
      %s305 = smul.addr %s304, 2
      %s306 = scalar_lea.vmem %s2, %s305
      // Predicated region
      $region29: #{_lambda_.13} parent=27 // pred_check
        %p307 = pneg %p99
      $region30: #{_lambda_.13} parent=27 // pred_check_branch
        %309 = sbr.rel (%p307) target = $region32
      $region31: #{_lambda_.13} parent=27 // pred_region
        %s310 = smul.u32 2, %s18
      $region32: #{_lambda_.13} parent=27 // pred_fallthru
        _
    $region28: #{_lambda_.13} parent=5 // pred_fallthru
      _
    %p311 = scmp.le.s32.totalorder 2, %s8
    // Predicated region
    $region33: #{_lambda_.13} parent=5 // pred_check
      %p312 = pneg %p311
    $region34: #{_lambda_.13} parent=5 // pred_check_branch
      %314 = sbr.rel (%p312) target = $region36
    $region35: #{_lambda_.13} parent=5 // pred_region
      %s315 = ssub.s32 %s8, 2
      // Predicated region
      $region37: #{_lambda_.13} parent=35 // pred_check
        %p316 = pneg %p105
      $region38: #{_lambda_.13} parent=35 // pred_check_branch
        %318 = sbr.rel (%p316) target = $region40
      $region39: #{_lambda_.13} parent=35 // pred_region
        %s319 = smul.u32 2, %s20
        %p320 = scmp.lt.s32.totalorder %s19, 1
        %s321 = scalar_select %p320, %s19, 1
        %p322 = scmp.lt.s32.totalorder %s319, 1
        %s323 = scalar_select %p322, %s319, 1
        %s324 = smul.addr %s321, 2
        %s325 = sadd.s32 %s323, %s324
        %s326 = smul.addr %s325, 2
        %s327 = scalar_lea.vmem %s2, %s326
      $region40: #{_lambda_.13} parent=35 // pred_fallthru
        _
    $region36: #{_lambda_.13} parent=5 // pred_fallthru
      _
  $region6: #{_lambda_.13} parent=0 // loop_footer
    %s12 = sadd.s32 1, %s8
  $region7: #{_lambda_.13} parent=0 // loop_footer_branch
    %7 = sbr.rel target = $region3
  $region8: #{_lambda_.13} parent=0 // loop_exit
    _

</llo_original>
